<compile_context>
chip_gen: v5e
topology: v5e:2x2
jax: 0.10.0
libtpu: 0.0.40
codegen_flags: <defaults>
</compile_context>

<pallas_src>
import jax
import jax.numpy as jnp
from jax import lax
from jax.experimental import pallas as pl
from jax.experimental.pallas import tpu as pltpu


def _round_up(x: int, m: int) -> int:
    return (x + m - 1) // m * m


# -----------------------------------------------------------------------------
# VMEM budgeting helpers.
# -----------------------------------------------------------------------------
def _vmem_bytes(n_layers, hp, ipmax, t_blk, tb, weight_bufs=2):
    # bf16 matmul weights (fused h-path + W_ih) + small f32 rows.
    w = n_layers * (hp * (ipmax + 4 * hp) + ipmax * 4 * hp) * 2
    w += n_layers * (3 * ipmax + 4 * hp) * 4
    # double-buffered streamed chunks: x(bf16) + dl(f32) + out(bf16)
    stream = 2 * t_blk * tb * (ipmax * 2 + 2 * 4 + hp * 2)
    # scratch: act + mod_add (f32) + per-layer h/c state
    scratch = 2 * t_blk * tb * ipmax * 4 + 2 * n_layers * tb * hp * 4
    return weight_bufs * w + stream + scratch


def _vmem_limit(n_layers, hp, ipmax, t_blk, tb):
    # Conservative (weights x2) so the non-single-buffered fallback also fits.
    need = _vmem_bytes(n_layers, hp, ipmax, t_blk, tb, weight_bufs=2)
    return min(int(need * 1.25) + (4 << 20), 128 << 20)


def _auto_t_blk(t_blk, n_layers, hp, ipmax, tb):
    """Shrink the time chunk until the kernel fits this generation's VMEM."""
    try:
        cap = pltpu.get_tpu_info().vmem_capacity_bytes
    except Exception:
        cap = 64 << 20  # v7x-safe default
    budget = int(cap * 0.85)
    while t_blk > 8 and _vmem_bytes(n_layers, hp, ipmax, t_blk, tb) > budget:
        t_blk //= 2
    return max(1, t_blk)


# -----------------------------------------------------------------------------
# Kernel: the full QMogrifier stack over one (batch tile, time chunk).
# -----------------------------------------------------------------------------
def _make_stack_kernel(n_layers: int, ipmax: int, hp: int, t_blk: int, unroll):
    def sigmoid(z):
        # 0.5*tanh(0.5*z)+0.5: exact sigmoid, one EUP op; mul/add ride the VALU.
        return 0.5 * jnp.tanh(0.5 * z) + 0.5

    def kernel(x_ref, dl_ref, whf_ref, wdl_ref, bmod_ref, wih_ref, bias_ref,
               out_ref, act_ref, modadd_ref, h_sc, c_sc):
        # Reset per-layer recurrent state at the first time chunk of each
        # batch tile (time is the innermost grid axis).
        @pl.when(pl.program_id(1) == 0)
        def _():
            h_sc[...] = jnp.zeros_like(h_sc)
            c_sc[...] = jnp.zeros_like(c_sc)

        dl = dl_ref[...].astype(jnp.float32)          # (t_blk, TB, 2)

        for l in range(n_layers):                      # static layer loop
            w_h_fused = whf_ref[l]                     # (Hp, Ipmax+4Hp) bf16
            w_ih = wih_ref[l]                          # (Ipmax, 4Hp)    bf16
            wdl = wdl_ref[l]                           # (2, Ipmax)      f32
            b_mod = bmod_ref[l]                        # (1, Ipmax)      f32
            bias = bias_ref[l]                         # (1, 4Hp)        f32

            # dl-driven modulation hoisted off the serial h->h path: computed
            # for the whole chunk in one vectorized shot.
            modadd_ref[...] = (dl[:, :, 0:1] * wdl[0:1, :][None]
                               + dl[:, :, 1:2] * wdl[1:2, :][None]
                               + b_mod[None])

            first = (l == 0)
            last = (l == n_layers - 1)

            def step(t, carry):
                h, c = carry                           # f32 (TB, Hp)
                if first:
                    x = x_ref[t].astype(jnp.float32)   # (TB, Ipmax)
                else:
                    x = act_ref[t]                     # prev-layer output

                # Fused h-path matmul: [mogrifier | hh-gates] in one MXU pass.
                h_proj = jnp.dot(h.astype(jnp.bfloat16), w_h_fused,
                                 preferred_element_type=jnp.float32)

                mod = h_proj[:, :ipmax] + modadd_ref[t]
                xm = sigmoid(mod) * x                  # modulated input

                gates = (h_proj[:, ipmax:]
                         + jnp.dot(xm.astype(jnp.bfloat16), w_ih,
                                   preferred_element_type=jnp.float32)
                         + bias)                       # (TB, 4Hp)

                # PyTorch LSTMCell gate order i, f, g, o; each lane-aligned.
                i_g = sigmoid(gates[:, 0:hp])
                f_g = sigmoid(gates[:, hp:2 * hp])
                g_g = jnp.tanh(gates[:, 2 * hp:3 * hp])
                o_g = sigmoid(gates[:, 3 * hp:4 * hp])

                c_new = f_g * c + i_g * g_g
                h_new = o_g * jnp.tanh(c_new)

                if last:
                    out_ref[t] = h_new.astype(out_ref.dtype)
                else:
                    if ipmax == hp:
                        act_ref[t] = h_new
                    else:  # keep padded input lanes of the next layer at 0
                        act_ref[t] = jnp.concatenate(
                            [h_new,
                             jnp.zeros((h_new.shape[0], ipmax - hp),
                                       jnp.float32)], axis=1)
                return h_new, c_new

            h, c = lax.fori_loop(0, t_blk, step, (h_sc[l], c_sc[l]),
                                 unroll=unroll)
            h_sc[l] = h
            c_sc[l] = c

    return kernel


# -----------------------------------------------------------------------------
# Stack forward: single fused pallas_call over (batch tiles, time chunks).
# -----------------------------------------------------------------------------
def qmogrifier_stack_forward(seq, d_seq, lq_seq, params, *, t_blk=32,
                             tb_b=None):
    """PyTorch-facing API: seq (B,S,I), d_seq/lq_seq (B,S,1).
    Returns (out_seq (B,S,H) f32, last_h (B,H) f32)."""
    B, S, I = seq.shape
    L, H = params["n_layers"], params["h"]
    Hp, Ipmax = params["hp"], params["ip"]

    # Batch tile: >= 8 (f32 sublane), capped at the MXU M (256 on v6e/v7x).
    if tb_b is None:
        tb_b = min(_round_up(B, 8), 256)
    tb_b = _round_up(tb_b, 8)
    b_pad = _round_up(B, tb_b)
    n_b = b_pad // tb_b

    # Time chunk: amortize the per-grid-step pipeline overhead, re-derived
    # per generation against the VMEM budget (64 MiB v7x / 128 MiB v5e-v6e).
    t_blk = max(1, min(t_blk, S))
    t_blk = _auto_t_blk(t_blk, L, Hp, Ipmax, tb_b)
    s_pad = _round_up(S, t_blk)
    n_t = s_pad // t_blk
    unroll = True if t_blk <= 8 else 4

    # Time-major, padded, bf16-streamed inputs.
    x_tm = jnp.transpose(seq, (1, 0, 2)).astype(jnp.float32)
    x_tm = jnp.pad(x_tm, ((0, s_pad - S), (0, b_pad - B), (0, Ipmax - I)))
    x_tm = x_tm.astype(jnp.bfloat16)
    dl_tm = jnp.transpose(jnp.concatenate([d_seq, lq_seq], axis=-1),
                          (1, 0, 2)).astype(jnp.float32)
    dl_tm = jnp.pad(dl_tm, ((0, s_pad - S), (0, b_pad - B), (0, 0)))

    kernel = _make_stack_kernel(L, Ipmax, Hp, t_blk, unroll)

    def run(single_buffer_weights: bool):
        wkw = {}
        if single_buffer_weights:
            wkw["pipeline_mode"] = pl.Buffered(1)   # constants: 1 VMEM buffer

        def const_spec(arr):
            nd = arr.ndim
            return pl.BlockSpec(arr.shape,
                                lambda b, t, _nd=nd: (0,) * _nd, **wkw)

        grid_spec = pltpu.PrefetchScalarGridSpec(
            num_scalar_prefetch=0,
            grid=(n_b, n_t),                        # (batch tiles, time chunks)
            in_specs=[
                pl.BlockSpec((t_blk, tb_b, Ipmax), lambda b, t: (t, b, 0)),
                pl.BlockSpec((t_blk, tb_b, 2), lambda b, t: (t, b, 0)),
                const_spec(params["w_h_fused"]),    # (L, Hp, Ipmax+4Hp) bf16
                const_spec(params["w_mod_dl"]),     # (L, 2, Ipmax)      f32
                const_spec(params["b_mod"]),        # (L, 1, Ipmax)      f32
                const_spec(params["w_ih_t"]),       # (L, Ipmax, 4Hp)    bf16
                const_spec(params["bias"]),         # (L, 1, 4Hp)        f32
            ],
            out_specs=pl.BlockSpec((t_blk, tb_b, Hp), lambda b, t: (t, b, 0)),
            scratch_shapes=[
                pltpu.VMEM((t_blk, tb_b, Ipmax), jnp.float32),  # inter-layer act
                pltpu.VMEM((t_blk, tb_b, Ipmax), jnp.float32),  # dl modulation
                pltpu.VMEM((L, tb_b, Hp), jnp.float32),         # h per layer
                pltpu.VMEM((L, tb_b, Hp), jnp.float32),         # c per layer
            ],
        )
        return pl.pallas_call(
            kernel,
            grid_spec=grid_spec,
            out_shape=jax.ShapeDtypeStruct((s_pad, b_pad, Hp), jnp.bfloat16),
            compiler_params=pltpu.CompilerParams(
                dimension_semantics=("parallel", "arbitrary"),
                vmem_limit_bytes=_vmem_limit(L, Hp, Ipmax, t_blk, tb_b)),
        )(x_tm, dl_tm, params["w_h_fused"], params["w_mod_dl"],
          params["b_mod"], params["w_ih_t"], params["bias"])

    try:
        out_tm = run(True)
    except Exception:
        out_tm = run(False)   # JAX without Buffered(1) support: default buffers

    out = jnp.transpose(out_tm[:S, :B, :H], (1, 0, 2)).astype(jnp.float32)
    return out, out[:, -1, :]


# -----------------------------------------------------------------------------
# Parameters: raw (PyTorch layout) init + packing (padding / fusion / bf16).
# -----------------------------------------------------------------------------
def init_raw_cell_params(key, input_size, hidden_size):
    H, I = hidden_size, input_size
    ks = jax.random.split(key, 6)
    lim = 1.0 / float(H) ** 0.5
    w_ih = jax.random.uniform(ks[0], (4 * H, I), jnp.float32, -lim, lim)
    w_hh = jax.random.uniform(ks[1], (4 * H, H), jnp.float32, -lim, lim)
    b_ih = jax.random.uniform(ks[2], (4 * H,), jnp.float32, -lim, lim)
    b_hh = jax.random.uniform(ks[3], (4 * H,), jnp.float32, -lim, lim)
    lim_m = 1.0 / float(H + 2) ** 0.5
    w_mod = jax.random.uniform(ks[4], (I, H + 2), jnp.float32, -lim_m, lim_m)
    b_mod = jax.random.uniform(ks[5], (I,), jnp.float32, -lim_m, lim_m)
    return dict(w_ih=w_ih, w_hh=w_hh, b_ih=b_ih, b_hh=b_hh,
                w_mod=w_mod, b_mod=b_mod)


def pack_stack_params(raw_params, input_size, hidden_size):
    """Pad every layer to a common 128-lane-aligned input width, lay each LSTM
    gate block at k*Hp, fuse the h-driven weights, cast matmul weights to bf16,
    and stack across layers for the fused kernel."""
    L, H = len(raw_params), hidden_size
    Hp = _round_up(H, 128)
    Ipmax = max(_round_up(input_size, 128), Hp)

    whf, wih, wdl, bmod, bias = [], [], [], [], []
    for li, raw in enumerate(raw_params):
        I = input_size if li == 0 else hidden_size
        b = raw["b_ih"] + raw["b_hh"]
        w_ih_t = jnp.zeros((Ipmax, 4 * Hp), jnp.float32)
        w_hh_t = jnp.zeros((Hp, 4 * Hp), jnp.float32)
        bias_l = jnp.zeros((1, 4 * Hp), jnp.float32)
        for k in range(4):                     # gate order i, f, g, o
            w_ih_t = w_ih_t.at[:I, k * Hp:k * Hp + H].set(
                raw["w_ih"][k * H:(k + 1) * H, :].T)
            w_hh_t = w_hh_t.at[:H, k * Hp:k * Hp + H].set(
                raw["w_hh"][k * H:(k + 1) * H, :].T)
            bias_l = bias_l.at[0, k * Hp:k * Hp + H].set(b[k * H:(k + 1) * H])

        w_mod_t = raw["w_mod"].T               # (H+2, I)
        w_mod_h = jnp.zeros((Hp, Ipmax), jnp.float32).at[:H, :I].set(w_mod_t[:H])
        w_mod_dl = jnp.zeros((2, Ipmax), jnp.float32).at[:, :I].set(
            w_mod_t[H:H + 2])
        b_mod_l = jnp.zeros((1, Ipmax), jnp.float32).at[0, :I].set(raw["b_mod"])

        whf.append(jnp.concatenate([w_mod_h, w_hh_t], axis=1))  # (Hp, Ipmax+4Hp)
        wih.append(w_ih_t)
        wdl.append(w_mod_dl)
        bmod.append(b_mod_l)
        bias.append(bias_l)

    return {
        "n_layers": L, "h": H, "hp": Hp, "ip": Ipmax,
        "w_h_fused": jnp.stack(whf).astype(jnp.bfloat16),
        "w_ih_t": jnp.stack(wih).astype(jnp.bfloat16),
        "w_mod_dl": jnp.stack(wdl),
        "b_mod": jnp.stack(bmod),
        "bias": jnp.stack(bias),
    }


# -----------------------------------------------------------------------------
# Pure-JAX reference (mirrors PyTorch forward; matched bf16 weight precision).
# -----------------------------------------------------------------------------
def _ref_cell(seq, d_seq, lq_seq, raw):
    B, S, I = seq.shape
    H = raw["w_hh"].shape[1]
    w_mod_t = raw["w_mod"].T
    w_mod_h = w_mod_t[:H].astype(jnp.bfloat16)
    w_mod_dl = w_mod_t[H:H + 2]
    b_mod = raw["b_mod"][None, :]
    w_ih_t = raw["w_ih"].T.astype(jnp.bfloat16)
    w_hh_t = raw["w_hh"].T.astype(jnp.bfloat16)
    bias = (raw["b_ih"] + raw["b_hh"])[None, :]

    h = jnp.zeros((B, H), jnp.float32)
    c = jnp.zeros((B, H), jnp.float32)
    outs = []
    for t in range(S):
        mod = (jnp.dot(h.astype(jnp.bfloat16), w_mod_h,
                       preferred_element_type=jnp.float32)
               + d_seq[:, t] * w_mod_dl[0:1]
               + lq_seq[:, t] * w_mod_dl[1:2]
               + b_mod)
        xm = jax.nn.sigmoid(mod) * seq[:, t]
        gates = (jnp.dot(xm.astype(jnp.bfloat16), w_ih_t,
                         preferred_element_type=jnp.float32)
                 + jnp.dot(h.astype(jnp.bfloat16), w_hh_t,
                           preferred_element_type=jnp.float32)
                 + bias)
        i_g = jax.nn.sigmoid(gates[:, :H])
        f_g = jax.nn.sigmoid(gates[:, H:2 * H])
        g_g = jnp.tanh(gates[:, 2 * H:3 * H])
        o_g = jax.nn.sigmoid(gates[:, 3 * H:])
        c = f_g * c + i_g * g_g
        h = o_g * jnp.tanh(c)
        outs.append(h)
    return jnp.stack(outs, axis=1), h


def _ref_stack(seq, d_seq, lq_seq, raw_params):
    last_h = None
    for raw in raw_params:
        seq, last_h = _ref_cell(seq, d_seq, lq_seq, raw)
    return seq, last_h


# -----------------------------------------------------------------------------
if __name__ == "__main__":
    B, S = 2, 8
    INPUT, HIDDEN, LAYERS = 16, 32, 2

    key = jax.random.PRNGKey(0)
    k_seq, k_d, k_lq, k_par = jax.random.split(key, 4)
    seq = jax.random.normal(k_seq, (B, S, INPUT), jnp.float32)
    d_seq = jax.random.normal(k_d, (B, S, 1), jnp.float32)
    lq_seq = jax.random.normal(k_lq, (B, S, 1), jnp.float32)

    keys = jax.random.split(k_par, LAYERS)
    raw_params = [
        init_raw_cell_params(keys[i], INPUT if i == 0 else HIDDEN, HIDDEN)
        for i in range(LAYERS)
    ]
    packed_params = pack_stack_params(raw_params, INPUT, HIDDEN)

    out_seq, last_h = qmogrifier_stack_forward(seq, d_seq, lq_seq,
                                               packed_params)
    out_seq = jax.block_until_ready(out_seq)
    last_h = jax.block_until_ready(last_h)

    ref_seq, ref_h = _ref_stack(seq, d_seq, lq_seq, raw_params)
    assert out_seq.shape == (B, S, HIDDEN)
    assert last_h.shape == (B, HIDDEN)
    # bf16 weights + bf16 activation streaming -> compare at ~2e-2 tolerance.
    assert jnp.allclose(out_seq, ref_seq, rtol=2e-2, atol=2e-2), float(
        jnp.max(jnp.abs(out_seq - ref_seq)))
    assert jnp.allclose(last_h, ref_h, rtol=2e-2, atol=2e-2)

    print("KERNEL_OK")
</pallas_src>

<mosaic_0001>
module attributes {stable_mosaic.version = 11 : i64} {
  func.func @kernel(%arg0: i32, %arg1: i32, %arg2: memref<8x8x128xbf16, #tpu.memory_space<vmem>>, %arg3: memref<8x8x2xf32, #tpu.memory_space<vmem>>, %arg4: memref<2x128x640xbf16, #tpu.memory_space<vmem>>, %arg5: memref<2x2x128xf32, #tpu.memory_space<vmem>>, %arg6: memref<2x1x128xf32, #tpu.memory_space<vmem>>, %arg7: memref<2x128x512xbf16, #tpu.memory_space<vmem>>, %arg8: memref<2x1x512xf32, #tpu.memory_space<vmem>>, %arg9: memref<8x8x128xbf16, #tpu.memory_space<vmem>>, %arg10: memref<8x8x128xf32, #tpu.memory_space<vmem>>, %arg11: memref<8x8x128xf32, #tpu.memory_space<vmem>>, %arg12: memref<2x8x128xf32, #tpu.memory_space<vmem>>, %arg13: memref<2x8x128xf32, #tpu.memory_space<vmem>>) attributes {dimension_semantics = [#tpu.dimension_semantics<parallel>, #tpu.dimension_semantics<arbitrary>], iteration_bounds = array<i64: 1, 1>, scalar_prefetch = 0 : i64, scratch_operands = 4 : i64, tpu.core_type = #tpu.core_type<tc>, window_params = [{transform_indices = @transform_0, window_bounds = array<i64: 8, 8, 128>}, {transform_indices = @transform_1, window_bounds = array<i64: 8, 8, 2>}, {pipeline_mode = #tpu.pipeline_mode<synchronous>, transform_indices = @transform_2, window_bounds = array<i64: 2, 128, 640>}, {pipeline_mode = #tpu.pipeline_mode<synchronous>, transform_indices = @transform_3, window_bounds = array<i64: 2, 2, 128>}, {pipeline_mode = #tpu.pipeline_mode<synchronous>, transform_indices = @transform_4, window_bounds = array<i64: 2, 1, 128>}, {pipeline_mode = #tpu.pipeline_mode<synchronous>, transform_indices = @transform_5, window_bounds = array<i64: 2, 128, 512>}, {pipeline_mode = #tpu.pipeline_mode<synchronous>, transform_indices = @transform_6, window_bounds = array<i64: 2, 1, 512>}, {transform_indices = @transform_7, window_bounds = array<i64: 8, 8, 128>}]} {
    %c0_i32 = arith.constant 0 : i32
    %0 = arith.cmpi eq, %arg1, %c0_i32 : i32
    %1 = arith.extui %0 : i1 to i32
    %c0_i32_0 = arith.constant 0 : i32
    %2 = arith.cmpi ne, %1, %c0_i32_0 : i32
    scf.if %2 {
      %cst_391 = arith.constant 0.000000e+00 : f32
      %1038 = vector.broadcast %cst_391 : f32 to vector<2x8x128xf32>
      %c0_392 = arith.constant 0 : index
      %c0_393 = arith.constant 0 : index
      %c0_394 = arith.constant 0 : index
      %1039 = vector.load %arg12[%c0_392, %c0_393, %c0_394] : memref<2x8x128xf32, #tpu.memory_space<vmem>>, vector<2x8x128xf32>
      tpu.vector_store %arg12[%c0_392, %c0_393, %c0_394], %1038 {strides = array<i32>} : memref<2x8x128xf32, #tpu.memory_space<vmem>>, vector<2x8x128xf32>,
      %cst_395 = arith.constant 0.000000e+00 : f32
      %1040 = vector.broadcast %cst_395 : f32 to vector<2x8x128xf32>
      %c0_396 = arith.constant 0 : index
      %c0_397 = arith.constant 0 : index
      %c0_398 = arith.constant 0 : index
      %1041 = vector.load %arg13[%c0_396, %c0_397, %c0_398] : memref<2x8x128xf32, #tpu.memory_space<vmem>>, vector<2x8x128xf32>
      tpu.vector_store %arg13[%c0_396, %c0_397, %c0_398], %1040 {strides = array<i32>} : memref<2x8x128xf32, #tpu.memory_space<vmem>>, vector<2x8x128xf32>,
    } else {
    }
    %c0 = arith.constant 0 : index
    %c0_1 = arith.constant 0 : index
    %c0_2 = arith.constant 0 : index
    %3 = vector.load %arg3[%c0, %c0_1, %c0_2] : memref<8x8x2xf32, #tpu.memory_space<vmem>>, vector<8x8x2xf32>
    %c0_3 = arith.constant 0 : index
    %c0_4 = arith.constant 0 : index
    %c0_5 = arith.constant 0 : index
    %4 = vector.load %arg4[%c0_3, %c0_4, %c0_5] : memref<2x128x640xbf16, #tpu.memory_space<vmem>>, vector<1x128x640xbf16>
    %5 = vector.shape_cast %4 : vector<1x128x640xbf16> to vector<128x640xbf16>
    %c0_6 = arith.constant 0 : index
    %c0_7 = arith.constant 0 : index
    %c0_8 = arith.constant 0 : index
    %6 = vector.load %arg7[%c0_6, %c0_7, %c0_8] : memref<2x128x512xbf16, #tpu.memory_space<vmem>>, vector<1x128x512xbf16>
    %7 = vector.shape_cast %6 : vector<1x128x512xbf16> to vector<128x512xbf16>
    %c0_9 = arith.constant 0 : index
    %c0_10 = arith.constant 0 : index
    %c0_11 = arith.constant 0 : index
    %8 = vector.load %arg5[%c0_9, %c0_10, %c0_11] : memref<2x2x128xf32, #tpu.memory_space<vmem>>, vector<1x2x128xf32>
    %9 = vector.shape_cast %8 : vector<1x2x128xf32> to vector<2x128xf32>
    %c0_12 = arith.constant 0 : index
    %c0_13 = arith.constant 0 : index
    %c0_14 = arith.constant 0 : index
    %10 = vector.load %arg6[%c0_12, %c0_13, %c0_14] : memref<2x1x128xf32, #tpu.memory_space<vmem>>, vector<1x1x128xf32>
    %11 = vector.shape_cast %10 : vector<1x1x128xf32> to vector<1x128xf32>
    %c0_15 = arith.constant 0 : index
    %c0_16 = arith.constant 0 : index
    %c0_17 = arith.constant 0 : index
    %12 = vector.load %arg8[%c0_15, %c0_16, %c0_17] : memref<2x1x512xf32, #tpu.memory_space<vmem>>, vector<1x1x512xf32>
    %13 = vector.shape_cast %12 : vector<1x1x512xf32> to vector<1x512xf32>
    %14 = vector.extract_strided_slice %3 {offsets = [0, 0, 0], sizes = [8, 8, 1], strides = [1, 1, 1]} : vector<8x8x2xf32> to vector<8x8x1xf32>
    %15 = vector.extract_strided_slice %9 {offsets = [0, 0], sizes = [1, 128], strides = [1, 1]} : vector<2x128xf32> to vector<1x128xf32>
    %16 = vector.shape_cast %15 : vector<1x128xf32> to vector<1x1x128xf32>
    %17 = vector.broadcast %14 : vector<8x8x1xf32> to vector<8x8x128xf32>
    %18 = vector.broadcast %16 : vector<1x1x128xf32> to vector<8x8x128xf32>
    %19 = arith.mulf %17, %18 : vector<8x8x128xf32>
    %20 = vector.extract_strided_slice %3 {offsets = [0, 0, 1], sizes = [8, 8, 1], strides = [1, 1, 1]} : vector<8x8x2xf32> to vector<8x8x1xf32>
    %21 = vector.extract_strided_slice %9 {offsets = [1, 0], sizes = [1, 128], strides = [1, 1]} : vector<2x128xf32> to vector<1x128xf32>
    %22 = vector.shape_cast %21 : vector<1x128xf32> to vector<1x1x128xf32>
    %23 = vector.broadcast %20 : vector<8x8x1xf32> to vector<8x8x128xf32>
    %24 = vector.broadcast %22 : vector<1x1x128xf32> to vector<8x8x128xf32>
    %25 = arith.mulf %23, %24 : vector<8x8x128xf32>
    %26 = arith.addf %19, %25 : vector<8x8x128xf32>
    %27 = vector.shape_cast %11 : vector<1x128xf32> to vector<1x1x128xf32>
    %28 = vector.broadcast %27 : vector<1x1x128xf32> to vector<8x8x128xf32>
    %29 = arith.addf %26, %28 : vector<8x8x128xf32>
    %c0_18 = arith.constant 0 : index
    %c0_19 = arith.constant 0 : index
    %c0_20 = arith.constant 0 : index
    %30 = vector.load %arg11[%c0_18, %c0_19, %c0_20] : memref<8x8x128xf32, #tpu.memory_space<vmem>>, vector<8x8x128xf32>
    tpu.vector_store %arg11[%c0_18, %c0_19, %c0_20], %29 {strides = array<i32>} : memref<8x8x128xf32, #tpu.memory_space<vmem>>, vector<8x8x128xf32>,
    %c0_21 = arith.constant 0 : index
    %c0_22 = arith.constant 0 : index
    %c0_23 = arith.constant 0 : index
    %31 = vector.load %arg12[%c0_21, %c0_22, %c0_23] : memref<2x8x128xf32, #tpu.memory_space<vmem>>, vector<1x8x128xf32>
    %32 = vector.shape_cast %31 : vector<1x8x128xf32> to vector<8x128xf32>
    %c0_24 = arith.constant 0 : index
    %c0_25 = arith.constant 0 : index
    %c0_26 = arith.constant 0 : index
    %33 = vector.load %arg13[%c0_24, %c0_25, %c0_26] : memref<2x8x128xf32, #tpu.memory_space<vmem>>, vector<1x8x128xf32>
    %34 = vector.shape_cast %33 : vector<1x8x128xf32> to vector<8x128xf32>
    %c0_i32_27 = arith.constant 0 : i32
    %35 = arith.index_cast %c0_i32_27 : i32 to index
    %c0_28 = arith.constant 0 : index
    %c0_29 = arith.constant 0 : index
    %36 = vector.load %arg2[%35, %c0_28, %c0_29] : memref<8x8x128xbf16, #tpu.memory_space<vmem>>, vector<1x8x128xbf16>
    %37 = vector.shape_cast %36 : vector<1x8x128xbf16> to vector<8x128xbf16>
    %38 = arith.extf %37 : vector<8x128xbf16> to vector<8x128xf32>
    %39 = arith.truncf %32 : vector<8x128xf32> to vector<8x128xbf16>
    %cst = arith.constant dense<0.000000e+00> : vector<8x640xf32>
    %40 = tpu.matmul %39, %5, %cst {dimension_numbers = #tpu.dot_dimension_numbers<[1], [0], [0], [1], [0, 0, 1, 1], [], []>} : vector<8x128xbf16>, vector<128x640xbf16>, vector<8x640xf32> -> vector<8x640xf32>
    %41 = vector.extract_strided_slice %40 {offsets = [0, 0], sizes = [8, 128], strides = [1, 1]} : vector<8x640xf32> to vector<8x128xf32>
    %42 = arith.index_cast %c0_i32_27 : i32 to index
    %c0_30 = arith.constant 0 : index
    %c0_31 = arith.constant 0 : index
    %43 = vector.load %arg11[%42, %c0_30, %c0_31] : memref<8x8x128xf32, #tpu.memory_space<vmem>>, vector<1x8x128xf32>
    %44 = vector.shape_cast %43 : vector<1x8x128xf32> to vector<8x128xf32>
    %45 = arith.addf %41, %44 : vector<8x128xf32>
    %cst_32 = arith.constant 5.000000e-01 : f32
    %46 = vector.broadcast %cst_32 : f32 to vector<8x128xf32>
    %47 = arith.mulf %46, %45 : vector<8x128xf32>
    %48 = math.tanh %47 : vector<8x128xf32>
    %cst_33 = arith.constant 5.000000e-01 : f32
    %49 = vector.broadcast %cst_33 : f32 to vector<8x128xf32>
    %50 = arith.mulf %49, %48 : vector<8x128xf32>
    %cst_34 = arith.constant 5.000000e-01 : f32
    %51 = vector.broadcast %cst_34 : f32 to vector<8x128xf32>
    %52 = arith.addf %50, %51 : vector<8x128xf32>
    %53 = arith.mulf %52, %38 : vector<8x128xf32>
    %54 = vector.extract_strided_slice %40 {offsets = [0, 128], sizes = [8, 512], strides = [1, 1]} : vector<8x640xf32> to vector<8x512xf32>
    %55 = arith.truncf %53 : vector<8x128xf32> to vector<8x128xbf16>
    %cst_35 = arith.constant dense<0.000000e+00> : vector<8x512xf32>
    %56 = tpu.matmul %55, %7, %cst_35 {dimension_numbers = #tpu.dot_dimension_numbers<[1], [0], [0], [1], [0, 0, 1, 1], [], []>} : vector<8x128xbf16>, vector<128x512xbf16>, vector<8x512xf32> -> vector<8x512xf32>
    %57 = arith.addf %54, %56 : vector<8x512xf32>
    %58 = vector.broadcast %13 : vector<1x512xf32> to vector<8x512xf32>
    %59 = arith.addf %57, %58 : vector<8x512xf32>
    %60 = vector.extract_strided_slice %59 {offsets = [0, 0], sizes = [8, 128], strides = [1, 1]} : vector<8x512xf32> to vector<8x128xf32>
    %cst_36 = arith.constant 5.000000e-01 : f32
    %61 = vector.broadcast %cst_36 : f32 to vector<8x128xf32>
    %62 = arith.mulf %61, %60 : vector<8x128xf32>
    %63 = math.tanh %62 : vector<8x128xf32>
    %cst_37 = arith.constant 5.000000e-01 : f32
    %64 = vector.broadcast %cst_37 : f32 to vector<8x128xf32>
    %65 = arith.mulf %64, %63 : vector<8x128xf32>
    %cst_38 = arith.constant 5.000000e-01 : f32
    %66 = vector.broadcast %cst_38 : f32 to vector<8x128xf32>
    %67 = arith.addf %65, %66 : vector<8x128xf32>
    %68 = vector.extract_strided_slice %59 {offsets = [0, 128], sizes = [8, 128], strides = [1, 1]} : vector<8x512xf32> to vector<8x128xf32>
    %cst_39 = arith.constant 5.000000e-01 : f32
    %69 = vector.broadcast %cst_39 : f32 to vector<8x128xf32>
    %70 = arith.mulf %69, %68 : vector<8x128xf32>
    %71 = math.tanh %70 : vector<8x128xf32>
    %cst_40 = arith.constant 5.000000e-01 : f32
    %72 = vector.broadcast %cst_40 : f32 to vector<8x128xf32>
    %73 = arith.mulf %72, %71 : vector<8x128xf32>
    %cst_41 = arith.constant 5.000000e-01 : f32
    %74 = vector.broadcast %cst_41 : f32 to vector<8x128xf32>
    %75 = arith.addf %73, %74 : vector<8x128xf32>
    %76 = vector.extract_strided_slice %59 {offsets = [0, 256], sizes = [8, 128], strides = [1, 1]} : vector<8x512xf32> to vector<8x128xf32>
    %77 = math.tanh %76 : vector<8x128xf32>
    %78 = vector.extract_strided_slice %59 {offsets = [0, 384], sizes = [8, 128], strides = [1, 1]} : vector<8x512xf32> to vector<8x128xf32>
    %cst_42 = arith.constant 5.000000e-01 : f32
    %79 = vector.broadcast %cst_42 : f32 to vector<8x128xf32>
    %80 = arith.mulf %79, %78 : vector<8x128xf32>
    %81 = math.tanh %80 : vector<8x128xf32>
    %cst_43 = arith.constant 5.000000e-01 : f32
    %82 = vector.broadcast %cst_43 : f32 to vector<8x128xf32>
    %83 = arith.mulf %82, %81 : vector<8x128xf32>
    %cst_44 = arith.constant 5.000000e-01 : f32
    %84 = vector.broadcast %cst_44 : f32 to vector<8x128xf32>
    %85 = arith.addf %83, %84 : vector<8x128xf32>
    %86 = arith.mulf %75, %34 : vector<8x128xf32>
    %87 = arith.mulf %67, %77 : vector<8x128xf32>
    %88 = arith.addf %86, %87 : vector<8x128xf32>
    %89 = math.tanh %88 : vector<8x128xf32>
    %90 = arith.mulf %85, %89 : vector<8x128xf32>
    %91 = arith.index_cast %c0_i32_27 : i32 to index
    %c0_45 = arith.constant 0 : index
    %c0_46 = arith.constant 0 : index
    %92 = vector.load %arg10[%91, %c0_45, %c0_46] : memref<8x8x128xf32, #tpu.memory_space<vmem>>, vector<1x8x128xf32>
    %93 = vector.shape_cast %92 : vector<1x8x128xf32> to vector<8x128xf32>
    %94 = vector.shape_cast %90 : vector<8x128xf32> to vector<1x8x128xf32>
    tpu.vector_store %arg10[%91, %c0_45, %c0_46], %94 {strides = array<i32>} : memref<8x8x128xf32, #tpu.memory_space<vmem>>, vector<1x8x128xf32>,
    %c1_i32 = arith.constant 1 : i32
    %95 = arith.index_cast %c1_i32 : i32 to index
    %c0_47 = arith.constant 0 : index
    %c0_48 = arith.constant 0 : index
    %96 = vector.load %arg2[%95, %c0_47, %c0_48] : memref<8x8x128xbf16, #tpu.memory_space<vmem>>, vector<1x8x128xbf16>
    %97 = vector.shape_cast %96 : vector<1x8x128xbf16> to vector<8x128xbf16>
    %98 = arith.extf %97 : vector<8x128xbf16> to vector<8x128xf32>
    %99 = arith.truncf %90 : vector<8x128xf32> to vector<8x128xbf16>
    %cst_49 = arith.constant dense<0.000000e+00> : vector<8x640xf32>
    %100 = tpu.matmul %99, %5, %cst_49 {dimension_numbers = #tpu.dot_dimension_numbers<[1], [0], [0], [1], [0, 0, 1, 1], [], []>} : vector<8x128xbf16>, vector<128x640xbf16>, vector<8x640xf32> -> vector<8x640xf32>
    %101 = vector.extract_strided_slice %100 {offsets = [0, 0], sizes = [8, 128], strides = [1, 1]} : vector<8x640xf32> to vector<8x128xf32>
    %102 = arith.index_cast %c1_i32 : i32 to index
    %c0_50 = arith.constant 0 : index
    %c0_51 = arith.constant 0 : index
    %103 = vector.load %arg11[%102, %c0_50, %c0_51] : memref<8x8x128xf32, #tpu.memory_space<vmem>>, vector<1x8x128xf32>
    %104 = vector.shape_cast %103 : vector<1x8x128xf32> to vector<8x128xf32>
    %105 = arith.addf %101, %104 : vector<8x128xf32>
    %cst_52 = arith.constant 5.000000e-01 : f32
    %106 = vector.broadcast %cst_52 : f32 to vector<8x128xf32>
    %107 = arith.mulf %106, %105 : vector<8x128xf32>
    %108 = math.tanh %107 : vector<8x128xf32>
    %cst_53 = arith.constant 5.000000e-01 : f32
    %109 = vector.broadcast %cst_53 : f32 to vector<8x128xf32>
    %110 = arith.mulf %109, %108 : vector<8x128xf32>
    %cst_54 = arith.constant 5.000000e-01 : f32
    %111 = vector.broadcast %cst_54 : f32 to vector<8x128xf32>
    %112 = arith.addf %110, %111 : vector<8x128xf32>
    %113 = arith.mulf %112, %98 : vector<8x128xf32>
    %114 = vector.extract_strided_slice %100 {offsets = [0, 128], sizes = [8, 512], strides = [1, 1]} : vector<8x640xf32> to vector<8x512xf32>
    %115 = arith.truncf %113 : vector<8x128xf32> to vector<8x128xbf16>
    %cst_55 = arith.constant dense<0.000000e+00> : vector<8x512xf32>
    %116 = tpu.matmul %115, %7, %cst_55 {dimension_numbers = #tpu.dot_dimension_numbers<[1], [0], [0], [1], [0, 0, 1, 1], [], []>} : vector<8x128xbf16>, vector<128x512xbf16>, vector<8x512xf32> -> vector<8x512xf32>
    %117 = arith.addf %114, %116 : vector<8x512xf32>
    %118 = vector.broadcast %13 : vector<1x512xf32> to vector<8x512xf32>
    %119 = arith.addf %117, %118 : vector<8x512xf32>
    %120 = vector.extract_strided_slice %119 {offsets = [0, 0], sizes = [8, 128], strides = [1, 1]} : vector<8x512xf32> to vector<8x128xf32>
    %cst_56 = arith.constant 5.000000e-01 : f32
    %121 = vector.broadcast %cst_56 : f32 to vector<8x128xf32>
    %122 = arith.mulf %121, %120 : vector<8x128xf32>
    %123 = math.tanh %122 : vector<8x128xf32>
    %cst_57 = arith.constant 5.000000e-01 : f32
    %124 = vector.broadcast %cst_57 : f32 to vector<8x128xf32>
    %125 = arith.mulf %124, %123 : vector<8x128xf32>
    %cst_58 = arith.constant 5.000000e-01 : f32
    %126 = vector.broadcast %cst_58 : f32 to vector<8x128xf32>
    %127 = arith.addf %125, %126 : vector<8x128xf32>
    %128 = vector.extract_strided_slice %119 {offsets = [0, 128], sizes = [8, 128], strides = [1, 1]} : vector<8x512xf32> to vector<8x128xf32>
    %cst_59 = arith.constant 5.000000e-01 : f32
    %129 = vector.broadcast %cst_59 : f32 to vector<8x128xf32>
    %130 = arith.mulf %129, %128 : vector<8x128xf32>
    %131 = math.tanh %130 : vector<8x128xf32>
    %cst_60 = arith.constant 5.000000e-01 : f32
    %132 = vector.broadcast %cst_60 : f32 to vector<8x128xf32>
    %133 = arith.mulf %132, %131 : vector<8x128xf32>
    %cst_61 = arith.constant 5.000000e-01 : f32
    %134 = vector.broadcast %cst_61 : f32 to vector<8x128xf32>
    %135 = arith.addf %133, %134 : vector<8x128xf32>
    %136 = vector.extract_strided_slice %119 {offsets = [0, 256], sizes = [8, 128], strides = [1, 1]} : vector<8x512xf32> to vector<8x128xf32>
    %137 = math.tanh %136 : vector<8x128xf32>
    %138 = vector.extract_strided_slice %119 {offsets = [0, 384], sizes = [8, 128], strides = [1, 1]} : vector<8x512xf32> to vector<8x128xf32>
    %cst_62 = arith.constant 5.000000e-01 : f32
    %139 = vector.broadcast %cst_62 : f32 to vector<8x128xf32>
    %140 = arith.mulf %139, %138 : vector<8x128xf32>
    %141 = math.tanh %140 : vector<8x128xf32>
    %cst_63 = arith.constant 5.000000e-01 : f32
    %142 = vector.broadcast %cst_63 : f32 to vector<8x128xf32>
    %143 = arith.mulf %142, %141 : vector<8x128xf32>
    %cst_64 = arith.constant 5.000000e-01 : f32
    %144 = vector.broadcast %cst_64 : f32 to vector<8x128xf32>
    %145 = arith.addf %143, %144 : vector<8x128xf32>
    %146 = arith.mulf %135, %88 : vector<8x128xf32>
    %147 = arith.mulf %127, %137 : vector<8x128xf32>
    %148 = arith.addf %146, %147 : vector<8x128xf32>
    %149 = math.tanh %148 : vector<8x128xf32>
    %150 = arith.mulf %145, %149 : vector<8x128xf32>
    %151 = arith.index_cast %c1_i32 : i32 to index
    %c0_65 = arith.constant 0 : index
    %c0_66 = arith.constant 0 : index
    %152 = vector.load %arg10[%151, %c0_65, %c0_66] : memref<8x8x128xf32, #tpu.memory_space<vmem>>, vector<1x8x128xf32>
    %153 = vector.shape_cast %152 : vector<1x8x128xf32> to vector<8x128xf32>
    %154 = vector.shape_cast %150 : vector<8x128xf32> to vector<1x8x128xf32>
    tpu.vector_store %arg10[%151, %c0_65, %c0_66], %154 {strides = array<i32>} : memref<8x8x128xf32, #tpu.memory_space<vmem>>, vector<1x8x128xf32>,
    %c2_i32 = arith.constant 2 : i32
    %155 = arith.index_cast %c2_i32 : i32 to index
    %c0_67 = arith.constant 0 : index
    %c0_68 = arith.constant 0 : index
    %156 = vector.load %arg2[%155, %c0_67, %c0_68] : memref<8x8x128xbf16, #tpu.memory_space<vmem>>, vector<1x8x128xbf16>
    %157 = vector.shape_cast %156 : vector<1x8x128xbf16> to vector<8x128xbf16>
    %158 = arith.extf %157 : vector<8x128xbf16> to vector<8x128xf32>
    %159 = arith.truncf %150 : vector<8x128xf32> to vector<8x128xbf16>
    %cst_69 = arith.constant dense<0.000000e+00> : vector<8x640xf32>
    %160 = tpu.matmul %159, %5, %cst_69 {dimension_numbers = #tpu.dot_dimension_numbers<[1], [0], [0], [1], [0, 0, 1, 1], [], []>} : vector<8x128xbf16>, vector<128x640xbf16>, vector<8x640xf32> -> vector<8x640xf32>
    %161 = vector.extract_strided_slice %160 {offsets = [0, 0], sizes = [8, 128], strides = [1, 1]} : vector<8x640xf32> to vector<8x128xf32>
    %162 = arith.index_cast %c2_i32 : i32 to index
    %c0_70 = arith.constant 0 : index
    %c0_71 = arith.constant 0 : index
    %163 = vector.load %arg11[%162, %c0_70, %c0_71] : memref<8x8x128xf32, #tpu.memory_space<vmem>>, vector<1x8x128xf32>
    %164 = vector.shape_cast %163 : vector<1x8x128xf32> to vector<8x128xf32>
    %165 = arith.addf %161, %164 : vector<8x128xf32>
    %cst_72 = arith.constant 5.000000e-01 : f32
    %166 = vector.broadcast %cst_72 : f32 to vector<8x128xf32>
    %167 = arith.mulf %166, %165 : vector<8x128xf32>
    %168 = math.tanh %167 : vector<8x128xf32>
    %cst_73 = arith.constant 5.000000e-01 : f32
    %169 = vector.broadcast %cst_73 : f32 to vector<8x128xf32>
    %170 = arith.mulf %169, %168 : vector<8x128xf32>
    %cst_74 = arith.constant 5.000000e-01 : f32
    %171 = vector.broadcast %cst_74 : f32 to vector<8x128xf32>
    %172 = arith.addf %170, %171 : vector<8x128xf32>
    %173 = arith.mulf %172, %158 : vector<8x128xf32>
    %174 = vector.extract_strided_slice %160 {offsets = [0, 128], sizes = [8, 512], strides = [1, 1]} : vector<8x640xf32> to vector<8x512xf32>
    %175 = arith.truncf %173 : vector<8x128xf32> to vector<8x128xbf16>
    %cst_75 = arith.constant dense<0.000000e+00> : vector<8x512xf32>
    %176 = tpu.matmul %175, %7, %cst_75 {dimension_numbers = #tpu.dot_dimension_numbers<[1], [0], [0], [1], [0, 0, 1, 1], [], []>} : vector<8x128xbf16>, vector<128x512xbf16>, vector<8x512xf32> -> vector<8x512xf32>
    %177 = arith.addf %174, %176 : vector<8x512xf32>
    %178 = vector.broadcast %13 : vector<1x512xf32> to vector<8x512xf32>
    %179 = arith.addf %177, %178 : vector<8x512xf32>
    %180 = vector.extract_strided_slice %179 {offsets = [0, 0], sizes = [8, 128], strides = [1, 1]} : vector<8x512xf32> to vector<8x128xf32>
    %cst_76 = arith.constant 5.000000e-01 : f32
    %181 = vector.broadcast %cst_76 : f32 to vector<8x128xf32>
    %182 = arith.mulf %181, %180 : vector<8x128xf32>
    %183 = math.tanh %182 : vector<8x128xf32>
    %cst_77 = arith.constant 5.000000e-01 : f32
    %184 = vector.broadcast %cst_77 : f32 to vector<8x128xf32>
    %185 = arith.mulf %184, %183 : vector<8x128xf32>
    %cst_78 = arith.constant 5.000000e-01 : f32
    %186 = vector.broadcast %cst_78 : f32 to vector<8x128xf32>
    %187 = arith.addf %185, %186 : vector<8x128xf32>
    %188 = vector.extract_strided_slice %179 {offsets = [0, 128], sizes = [8, 128], strides = [1, 1]} : vector<8x512xf32> to vector<8x128xf32>
    %cst_79 = arith.constant 5.000000e-01 : f32
    %189 = vector.broadcast %cst_79 : f32 to vector<8x128xf32>
    %190 = arith.mulf %189, %188 : vector<8x128xf32>
    %191 = math.tanh %190 : vector<8x128xf32>
    %cst_80 = arith.constant 5.000000e-01 : f32
    %192 = vector.broadcast %cst_80 : f32 to vector<8x128xf32>
    %193 = arith.mulf %192, %191 : vector<8x128xf32>
    %cst_81 = arith.constant 5.000000e-01 : f32
    %194 = vector.broadcast %cst_81 : f32 to vector<8x128xf32>
    %195 = arith.addf %193, %194 : vector<8x128xf32>
    %196 = vector.extract_strided_slice %179 {offsets = [0, 256], sizes = [8, 128], strides = [1, 1]} : vector<8x512xf32> to vector<8x128xf32>
    %197 = math.tanh %196 : vector<8x128xf32>
    %198 = vector.extract_strided_slice %179 {offsets = [0, 384], sizes = [8, 128], strides = [1, 1]} : vector<8x512xf32> to vector<8x128xf32>
    %cst_82 = arith.constant 5.000000e-01 : f32
    %199 = vector.broadcast %cst_82 : f32 to vector<8x128xf32>
    %200 = arith.mulf %199, %198 : vector<8x128xf32>
    %201 = math.tanh %200 : vector<8x128xf32>
    %cst_83 = arith.constant 5.000000e-01 : f32
    %202 = vector.broadcast %cst_83 : f32 to vector<8x128xf32>
    %203 = arith.mulf %202, %201 : vector<8x128xf32>
    %cst_84 = arith.constant 5.000000e-01 : f32
    %204 = vector.broadcast %cst_84 : f32 to vector<8x128xf32>
    %205 = arith.addf %203, %204 : vector<8x128xf32>
    %206 = arith.mulf %195, %148 : vector<8x128xf32>
    %207 = arith.mulf %187, %197 : vector<8x128xf32>
    %208 = arith.addf %206, %207 : vector<8x128xf32>
    %209 = math.tanh %208 : vector<8x128xf32>
    %210 = arith.mulf %205, %209 : vector<8x128xf32>
    %211 = arith.index_cast %c2_i32 : i32 to index
    %c0_85 = arith.constant 0 : index
    %c0_86 = arith.constant 0 : index
    %212 = vector.load %arg10[%211, %c0_85, %c0_86] : memref<8x8x128xf32, #tpu.memory_space<vmem>>, vector<1x8x128xf32>
    %213 = vector.shape_cast %212 : vector<1x8x128xf32> to vector<8x128xf32>
    %214 = vector.shape_cast %210 : vector<8x128xf32> to vector<1x8x128xf32>
    tpu.vector_store %arg10[%211, %c0_85, %c0_86], %214 {strides = array<i32>} : memref<8x8x128xf32, #tpu.memory_space<vmem>>, vector<1x8x128xf32>,
    %c3_i32 = arith.constant 3 : i32
    %215 = arith.index_cast %c3_i32 : i32 to index
    %c0_87 = arith.constant 0 : index
    %c0_88 = arith.constant 0 : index
    %216 = vector.load %arg2[%215, %c0_87, %c0_88] : memref<8x8x128xbf16, #tpu.memory_space<vmem>>, vector<1x8x128xbf16>
    %217 = vector.shape_cast %216 : vector<1x8x128xbf16> to vector<8x128xbf16>
    %218 = arith.extf %217 : vector<8x128xbf16> to vector<8x128xf32>
    %219 = arith.truncf %210 : vector<8x128xf32> to vector<8x128xbf16>
    %cst_89 = arith.constant dense<0.000000e+00> : vector<8x640xf32>
    %220 = tpu.matmul %219, %5, %cst_89 {dimension_numbers = #tpu.dot_dimension_numbers<[1], [0], [0], [1], [0, 0, 1, 1], [], []>} : vector<8x128xbf16>, vector<128x640xbf16>, vector<8x640xf32> -> vector<8x640xf32>
    %221 = vector.extract_strided_slice %220 {offsets = [0, 0], sizes = [8, 128], strides = [1, 1]} : vector<8x640xf32> to vector<8x128xf32>
    %222 = arith.index_cast %c3_i32 : i32 to index
    %c0_90 = arith.constant 0 : index
    %c0_91 = arith.constant 0 : index
    %223 = vector.load %arg11[%222, %c0_90, %c0_91] : memref<8x8x128xf32, #tpu.memory_space<vmem>>, vector<1x8x128xf32>
    %224 = vector.shape_cast %223 : vector<1x8x128xf32> to vector<8x128xf32>
    %225 = arith.addf %221, %224 : vector<8x128xf32>
    %cst_92 = arith.constant 5.000000e-01 : f32
    %226 = vector.broadcast %cst_92 : f32 to vector<8x128xf32>
    %227 = arith.mulf %226, %225 : vector<8x128xf32>
    %228 = math.tanh %227 : vector<8x128xf32>
    %cst_93 = arith.constant 5.000000e-01 : f32
    %229 = vector.broadcast %cst_93 : f32 to vector<8x128xf32>
    %230 = arith.mulf %229, %228 : vector<8x128xf32>
    %cst_94 = arith.constant 5.000000e-01 : f32
    %231 = vector.broadcast %cst_94 : f32 to vector<8x128xf32>
    %232 = arith.addf %230, %231 : vector<8x128xf32>
    %233 = arith.mulf %232, %218 : vector<8x128xf32>
    %234 = vector.extract_strided_slice %220 {offsets = [0, 128], sizes = [8, 512], strides = [1, 1]} : vector<8x640xf32> to vector<8x512xf32>
    %235 = arith.truncf %233 : vector<8x128xf32> to vector<8x128xbf16>
    %cst_95 = arith.constant dense<0.000000e+00> : vector<8x512xf32>
    %236 = tpu.matmul %235, %7, %cst_95 {dimension_numbers = #tpu.dot_dimension_numbers<[1], [0], [0], [1], [0, 0, 1, 1], [], []>} : vector<8x128xbf16>, vector<128x512xbf16>, vector<8x512xf32> -> vector<8x512xf32>
    %237 = arith.addf %234, %236 : vector<8x512xf32>
    %238 = vector.broadcast %13 : vector<1x512xf32> to vector<8x512xf32>
    %239 = arith.addf %237, %238 : vector<8x512xf32>
    %240 = vector.extract_strided_slice %239 {offsets = [0, 0], sizes = [8, 128], strides = [1, 1]} : vector<8x512xf32> to vector<8x128xf32>
    %cst_96 = arith.constant 5.000000e-01 : f32
    %241 = vector.broadcast %cst_96 : f32 to vector<8x128xf32>
    %242 = arith.mulf %241, %240 : vector<8x128xf32>
    %243 = math.tanh %242 : vector<8x128xf32>
    %cst_97 = arith.constant 5.000000e-01 : f32
    %244 = vector.broadcast %cst_97 : f32 to vector<8x128xf32>
    %245 = arith.mulf %244, %243 : vector<8x128xf32>
    %cst_98 = arith.constant 5.000000e-01 : f32
    %246 = vector.broadcast %cst_98 : f32 to vector<8x128xf32>
    %247 = arith.addf %245, %246 : vector<8x128xf32>
    %248 = vector.extract_strided_slice %239 {offsets = [0, 128], sizes = [8, 128], strides = [1, 1]} : vector<8x512xf32> to vector<8x128xf32>
    %cst_99 = arith.constant 5.000000e-01 : f32
    %249 = vector.broadcast %cst_99 : f32 to vector<8x128xf32>
    %250 = arith.mulf %249, %248 : vector<8x128xf32>
    %251 = math.tanh %250 : vector<8x128xf32>
    %cst_100 = arith.constant 5.000000e-01 : f32
    %252 = vector.broadcast %cst_100 : f32 to vector<8x128xf32>
    %253 = arith.mulf %252, %251 : vector<8x128xf32>
    %cst_101 = arith.constant 5.000000e-01 : f32
    %254 = vector.broadcast %cst_101 : f32 to vector<8x128xf32>
    %255 = arith.addf %253, %254 : vector<8x128xf32>
    %256 = vector.extract_strided_slice %239 {offsets = [0, 256], sizes = [8, 128], strides = [1, 1]} : vector<8x512xf32> to vector<8x128xf32>
    %257 = math.tanh %256 : vector<8x128xf32>
    %258 = vector.extract_strided_slice %239 {offsets = [0, 384], sizes = [8, 128], strides = [1, 1]} : vector<8x512xf32> to vector<8x128xf32>
    %cst_102 = arith.constant 5.000000e-01 : f32
    %259 = vector.broadcast %cst_102 : f32 to vector<8x128xf32>
    %260 = arith.mulf %259, %258 : vector<8x128xf32>
    %261 = math.tanh %260 : vector<8x128xf32>
    %cst_103 = arith.constant 5.000000e-01 : f32
    %262 = vector.broadcast %cst_103 : f32 to vector<8x128xf32>
    %263 = arith.mulf %262, %261 : vector<8x128xf32>
    %cst_104 = arith.constant 5.000000e-01 : f32
    %264 = vector.broadcast %cst_104 : f32 to vector<8x128xf32>
    %265 = arith.addf %263, %264 : vector<8x128xf32>
    %266 = arith.mulf %255, %208 : vector<8x128xf32>
    %267 = arith.mulf %247, %257 : vector<8x128xf32>
    %268 = arith.addf %266, %267 : vector<8x128xf32>
    %269 = math.tanh %268 : vector<8x128xf32>
    %270 = arith.mulf %265, %269 : vector<8x128xf32>
    %271 = arith.index_cast %c3_i32 : i32 to index
    %c0_105 = arith.constant 0 : index
    %c0_106 = arith.constant 0 : index
    %272 = vector.load %arg10[%271, %c0_105, %c0_106] : memref<8x8x128xf32, #tpu.memory_space<vmem>>, vector<1x8x128xf32>
    %273 = vector.shape_cast %272 : vector<1x8x128xf32> to vector<8x128xf32>
    %274 = vector.shape_cast %270 : vector<8x128xf32> to vector<1x8x128xf32>
    tpu.vector_store %arg10[%271, %c0_105, %c0_106], %274 {strides = array<i32>} : memref<8x8x128xf32, #tpu.memory_space<vmem>>, vector<1x8x128xf32>,
    %c4_i32 = arith.constant 4 : i32
    %275 = arith.index_cast %c4_i32 : i32 to index
    %c0_107 = arith.constant 0 : index
    %c0_108 = arith.constant 0 : index
    %276 = vector.load %arg2[%275, %c0_107, %c0_108] : memref<8x8x128xbf16, #tpu.memory_space<vmem>>, vector<1x8x128xbf16>
    %277 = vector.shape_cast %276 : vector<1x8x128xbf16> to vector<8x128xbf16>
    %278 = arith.extf %277 : vector<8x128xbf16> to vector<8x128xf32>
    %279 = arith.truncf %270 : vector<8x128xf32> to vector<8x128xbf16>
    %cst_109 = arith.constant dense<0.000000e+00> : vector<8x640xf32>
    %280 = tpu.matmul %279, %5, %cst_109 {dimension_numbers = #tpu.dot_dimension_numbers<[1], [0], [0], [1], [0, 0, 1, 1], [], []>} : vector<8x128xbf16>, vector<128x640xbf16>, vector<8x640xf32> -> vector<8x640xf32>
    %281 = vector.extract_strided_slice %280 {offsets = [0, 0], sizes = [8, 128], strides = [1, 1]} : vector<8x640xf32> to vector<8x128xf32>
    %282 = arith.index_cast %c4_i32 : i32 to index
    %c0_110 = arith.constant 0 : index
    %c0_111 = arith.constant 0 : index
    %283 = vector.load %arg11[%282, %c0_110, %c0_111] : memref<8x8x128xf32, #tpu.memory_space<vmem>>, vector<1x8x128xf32>
    %284 = vector.shape_cast %283 : vector<1x8x128xf32> to vector<8x128xf32>
    %285 = arith.addf %281, %284 : vector<8x128xf32>
    %cst_112 = arith.constant 5.000000e-01 : f32
    %286 = vector.broadcast %cst_112 : f32 to vector<8x128xf32>
    %287 = arith.mulf %286, %285 : vector<8x128xf32>
    %288 = math.tanh %287 : vector<8x128xf32>
    %cst_113 = arith.constant 5.000000e-01 : f32
    %289 = vector.broadcast %cst_113 : f32 to vector<8x128xf32>
    %290 = arith.mulf %289, %288 : vector<8x128xf32>
    %cst_114 = arith.constant 5.000000e-01 : f32
    %291 = vector.broadcast %cst_114 : f32 to vector<8x128xf32>
    %292 = arith.addf %290, %291 : vector<8x128xf32>
    %293 = arith.mulf %292, %278 : vector<8x128xf32>
    %294 = vector.extract_strided_slice %280 {offsets = [0, 128], sizes = [8, 512], strides = [1, 1]} : vector<8x640xf32> to vector<8x512xf32>
    %295 = arith.truncf %293 : vector<8x128xf32> to vector<8x128xbf16>
    %cst_115 = arith.constant dense<0.000000e+00> : vector<8x512xf32>
    %296 = tpu.matmul %295, %7, %cst_115 {dimension_numbers = #tpu.dot_dimension_numbers<[1], [0], [0], [1], [0, 0, 1, 1], [], []>} : vector<8x128xbf16>, vector<128x512xbf16>, vector<8x512xf32> -> vector<8x512xf32>
    %297 = arith.addf %294, %296 : vector<8x512xf32>
    %298 = vector.broadcast %13 : vector<1x512xf32> to vector<8x512xf32>
    %299 = arith.addf %297, %298 : vector<8x512xf32>
    %300 = vector.extract_strided_slice %299 {offsets = [0, 0], sizes = [8, 128], strides = [1, 1]} : vector<8x512xf32> to vector<8x128xf32>
    %cst_116 = arith.constant 5.000000e-01 : f32
    %301 = vector.broadcast %cst_116 : f32 to vector<8x128xf32>
    %302 = arith.mulf %301, %300 : vector<8x128xf32>
    %303 = math.tanh %302 : vector<8x128xf32>
    %cst_117 = arith.constant 5.000000e-01 : f32
    %304 = vector.broadcast %cst_117 : f32 to vector<8x128xf32>
    %305 = arith.mulf %304, %303 : vector<8x128xf32>
    %cst_118 = arith.constant 5.000000e-01 : f32
    %306 = vector.broadcast %cst_118 : f32 to vector<8x128xf32>
    %307 = arith.addf %305, %306 : vector<8x128xf32>
    %308 = vector.extract_strided_slice %299 {offsets = [0, 128], sizes = [8, 128], strides = [1, 1]} : vector<8x512xf32> to vector<8x128xf32>
    %cst_119 = arith.constant 5.000000e-01 : f32
    %309 = vector.broadcast %cst_119 : f32 to vector<8x128xf32>
    %310 = arith.mulf %309, %308 : vector<8x128xf32>
    %311 = math.tanh %310 : vector<8x128xf32>
    %cst_120 = arith.constant 5.000000e-01 : f32
    %312 = vector.broadcast %cst_120 : f32 to vector<8x128xf32>
    %313 = arith.mulf %312, %311 : vector<8x128xf32>
    %cst_121 = arith.constant 5.000000e-01 : f32
    %314 = vector.broadcast %cst_121 : f32 to vector<8x128xf32>
    %315 = arith.addf %313, %314 : vector<8x128xf32>
    %316 = vector.extract_strided_slice %299 {offsets = [0, 256], sizes = [8, 128], strides = [1, 1]} : vector<8x512xf32> to vector<8x128xf32>
    %317 = math.tanh %316 : vector<8x128xf32>
    %318 = vector.extract_strided_slice %299 {offsets = [0, 384], sizes = [8, 128], strides = [1, 1]} : vector<8x512xf32> to vector<8x128xf32>
    %cst_122 = arith.constant 5.000000e-01 : f32
    %319 = vector.broadcast %cst_122 : f32 to vector<8x128xf32>
    %320 = arith.mulf %319, %318 : vector<8x128xf32>
    %321 = math.tanh %320 : vector<8x128xf32>
    %cst_123 = arith.constant 5.000000e-01 : f32
    %322 = vector.broadcast %cst_123 : f32 to vector<8x128xf32>
    %323 = arith.mulf %322, %321 : vector<8x128xf32>
    %cst_124 = arith.constant 5.000000e-01 : f32
    %324 = vector.broadcast %cst_124 : f32 to vector<8x128xf32>
    %325 = arith.addf %323, %324 : vector<8x128xf32>
    %326 = arith.mulf %315, %268 : vector<8x128xf32>
    %327 = arith.mulf %307, %317 : vector<8x128xf32>
    %328 = arith.addf %326, %327 : vector<8x128xf32>
    %329 = math.tanh %328 : vector<8x128xf32>
    %330 = arith.mulf %325, %329 : vector<8x128xf32>
    %331 = arith.index_cast %c4_i32 : i32 to index
    %c0_125 = arith.constant 0 : index
    %c0_126 = arith.constant 0 : index
    %332 = vector.load %arg10[%331, %c0_125, %c0_126] : memref<8x8x128xf32, #tpu.memory_space<vmem>>, vector<1x8x128xf32>
    %333 = vector.shape_cast %332 : vector<1x8x128xf32> to vector<8x128xf32>
    %334 = vector.shape_cast %330 : vector<8x128xf32> to vector<1x8x128xf32>
    tpu.vector_store %arg10[%331, %c0_125, %c0_126], %334 {strides = array<i32>} : memref<8x8x128xf32, #tpu.memory_space<vmem>>, vector<1x8x128xf32>,
    %c5_i32 = arith.constant 5 : i32
    %335 = arith.index_cast %c5_i32 : i32 to index
    %c0_127 = arith.constant 0 : index
    %c0_128 = arith.constant 0 : index
    %336 = vector.load %arg2[%335, %c0_127, %c0_128] : memref<8x8x128xbf16, #tpu.memory_space<vmem>>, vector<1x8x128xbf16>
    %337 = vector.shape_cast %336 : vector<1x8x128xbf16> to vector<8x128xbf16>
    %338 = arith.extf %337 : vector<8x128xbf16> to vector<8x128xf32>
    %339 = arith.truncf %330 : vector<8x128xf32> to vector<8x128xbf16>
    %cst_129 = arith.constant dense<0.000000e+00> : vector<8x640xf32>
    %340 = tpu.matmul %339, %5, %cst_129 {dimension_numbers = #tpu.dot_dimension_numbers<[1], [0], [0], [1], [0, 0, 1, 1], [], []>} : vector<8x128xbf16>, vector<128x640xbf16>, vector<8x640xf32> -> vector<8x640xf32>
    %341 = vector.extract_strided_slice %340 {offsets = [0, 0], sizes = [8, 128], strides = [1, 1]} : vector<8x640xf32> to vector<8x128xf32>
    %342 = arith.index_cast %c5_i32 : i32 to index
    %c0_130 = arith.constant 0 : index
    %c0_131 = arith.constant 0 : index
    %343 = vector.load %arg11[%342, %c0_130, %c0_131] : memref<8x8x128xf32, #tpu.memory_space<vmem>>, vector<1x8x128xf32>
    %344 = vector.shape_cast %343 : vector<1x8x128xf32> to vector<8x128xf32>
    %345 = arith.addf %341, %344 : vector<8x128xf32>
    %cst_132 = arith.constant 5.000000e-01 : f32
    %346 = vector.broadcast %cst_132 : f32 to vector<8x128xf32>
    %347 = arith.mulf %346, %345 : vector<8x128xf32>
    %348 = math.tanh %347 : vector<8x128xf32>
    %cst_133 = arith.constant 5.000000e-01 : f32
    %349 = vector.broadcast %cst_133 : f32 to vector<8x128xf32>
    %350 = arith.mulf %349, %348 : vector<8x128xf32>
    %cst_134 = arith.constant 5.000000e-01 : f32
    %351 = vector.broadcast %cst_134 : f32 to vector<8x128xf32>
    %352 = arith.addf %350, %351 : vector<8x128xf32>
    %353 = arith.mulf %352, %338 : vector<8x128xf32>
    %354 = vector.extract_strided_slice %340 {offsets = [0, 128], sizes = [8, 512], strides = [1, 1]} : vector<8x640xf32> to vector<8x512xf32>
    %355 = arith.truncf %353 : vector<8x128xf32> to vector<8x128xbf16>
    %cst_135 = arith.constant dense<0.000000e+00> : vector<8x512xf32>
    %356 = tpu.matmul %355, %7, %cst_135 {dimension_numbers = #tpu.dot_dimension_numbers<[1], [0], [0], [1], [0, 0, 1, 1], [], []>} : vector<8x128xbf16>, vector<128x512xbf16>, vector<8x512xf32> -> vector<8x512xf32>
    %357 = arith.addf %354, %356 : vector<8x512xf32>
    %358 = vector.broadcast %13 : vector<1x512xf32> to vector<8x512xf32>
    %359 = arith.addf %357, %358 : vector<8x512xf32>
    %360 = vector.extract_strided_slice %359 {offsets = [0, 0], sizes = [8, 128], strides = [1, 1]} : vector<8x512xf32> to vector<8x128xf32>
    %cst_136 = arith.constant 5.000000e-01 : f32
    %361 = vector.broadcast %cst_136 : f32 to vector<8x128xf32>
    %362 = arith.mulf %361, %360 : vector<8x128xf32>
    %363 = math.tanh %362 : vector<8x128xf32>
    %cst_137 = arith.constant 5.000000e-01 : f32
    %364 = vector.broadcast %cst_137 : f32 to vector<8x128xf32>
    %365 = arith.mulf %364, %363 : vector<8x128xf32>
    %cst_138 = arith.constant 5.000000e-01 : f32
    %366 = vector.broadcast %cst_138 : f32 to vector<8x128xf32>
    %367 = arith.addf %365, %366 : vector<8x128xf32>
    %368 = vector.extract_strided_slice %359 {offsets = [0, 128], sizes = [8, 128], strides = [1, 1]} : vector<8x512xf32> to vector<8x128xf32>
    %cst_139 = arith.constant 5.000000e-01 : f32
    %369 = vector.broadcast %cst_139 : f32 to vector<8x128xf32>
    %370 = arith.mulf %369, %368 : vector<8x128xf32>
    %371 = math.tanh %370 : vector<8x128xf32>
    %cst_140 = arith.constant 5.000000e-01 : f32
    %372 = vector.broadcast %cst_140 : f32 to vector<8x128xf32>
    %373 = arith.mulf %372, %371 : vector<8x128xf32>
    %cst_141 = arith.constant 5.000000e-01 : f32
    %374 = vector.broadcast %cst_141 : f32 to vector<8x128xf32>
    %375 = arith.addf %373, %374 : vector<8x128xf32>
    %376 = vector.extract_strided_slice %359 {offsets = [0, 256], sizes = [8, 128], strides = [1, 1]} : vector<8x512xf32> to vector<8x128xf32>
    %377 = math.tanh %376 : vector<8x128xf32>
    %378 = vector.extract_strided_slice %359 {offsets = [0, 384], sizes = [8, 128], strides = [1, 1]} : vector<8x512xf32> to vector<8x128xf32>
    %cst_142 = arith.constant 5.000000e-01 : f32
    %379 = vector.broadcast %cst_142 : f32 to vector<8x128xf32>
    %380 = arith.mulf %379, %378 : vector<8x128xf32>
    %381 = math.tanh %380 : vector<8x128xf32>
    %cst_143 = arith.constant 5.000000e-01 : f32
    %382 = vector.broadcast %cst_143 : f32 to vector<8x128xf32>
    %383 = arith.mulf %382, %381 : vector<8x128xf32>
    %cst_144 = arith.constant 5.000000e-01 : f32
    %384 = vector.broadcast %cst_144 : f32 to vector<8x128xf32>
    %385 = arith.addf %383, %384 : vector<8x128xf32>
    %386 = arith.mulf %375, %328 : vector<8x128xf32>
    %387 = arith.mulf %367, %377 : vector<8x128xf32>
    %388 = arith.addf %386, %387 : vector<8x128xf32>
    %389 = math.tanh %388 : vector<8x128xf32>
    %390 = arith.mulf %385, %389 : vector<8x128xf32>
    %391 = arith.index_cast %c5_i32 : i32 to index
    %c0_145 = arith.constant 0 : index
    %c0_146 = arith.constant 0 : index
    %392 = vector.load %arg10[%391, %c0_145, %c0_146] : memref<8x8x128xf32, #tpu.memory_space<vmem>>, vector<1x8x128xf32>
    %393 = vector.shape_cast %392 : vector<1x8x128xf32> to vector<8x128xf32>
    %394 = vector.shape_cast %390 : vector<8x128xf32> to vector<1x8x128xf32>
    tpu.vector_store %arg10[%391, %c0_145, %c0_146], %394 {strides = array<i32>} : memref<8x8x128xf32, #tpu.memory_space<vmem>>, vector<1x8x128xf32>,
    %c6_i32 = arith.constant 6 : i32
    %395 = arith.index_cast %c6_i32 : i32 to index
    %c0_147 = arith.constant 0 : index
    %c0_148 = arith.constant 0 : index
    %396 = vector.load %arg2[%395, %c0_147, %c0_148] : memref<8x8x128xbf16, #tpu.memory_space<vmem>>, vector<1x8x128xbf16>
    %397 = vector.shape_cast %396 : vector<1x8x128xbf16> to vector<8x128xbf16>
    %398 = arith.extf %397 : vector<8x128xbf16> to vector<8x128xf32>
    %399 = arith.truncf %390 : vector<8x128xf32> to vector<8x128xbf16>
    %cst_149 = arith.constant dense<0.000000e+00> : vector<8x640xf32>
    %400 = tpu.matmul %399, %5, %cst_149 {dimension_numbers = #tpu.dot_dimension_numbers<[1], [0], [0], [1], [0, 0, 1, 1], [], []>} : vector<8x128xbf16>, vector<128x640xbf16>, vector<8x640xf32> -> vector<8x640xf32>
    %401 = vector.extract_strided_slice %400 {offsets = [0, 0], sizes = [8, 128], strides = [1, 1]} : vector<8x640xf32> to vector<8x128xf32>
    %402 = arith.index_cast %c6_i32 : i32 to index
    %c0_150 = arith.constant 0 : index
    %c0_151 = arith.constant 0 : index
    %403 = vector.load %arg11[%402, %c0_150, %c0_151] : memref<8x8x128xf32, #tpu.memory_space<vmem>>, vector<1x8x128xf32>
    %404 = vector.shape_cast %403 : vector<1x8x128xf32> to vector<8x128xf32>
    %405 = arith.addf %401, %404 : vector<8x128xf32>
    %cst_152 = arith.constant 5.000000e-01 : f32
    %406 = vector.broadcast %cst_152 : f32 to vector<8x128xf32>
    %407 = arith.mulf %406, %405 : vector<8x128xf32>
    %408 = math.tanh %407 : vector<8x128xf32>
    %cst_153 = arith.constant 5.000000e-01 : f32
    %409 = vector.broadcast %cst_153 : f32 to vector<8x128xf32>
    %410 = arith.mulf %409, %408 : vector<8x128xf32>
    %cst_154 = arith.constant 5.000000e-01 : f32
    %411 = vector.broadcast %cst_154 : f32 to vector<8x128xf32>
    %412 = arith.addf %410, %411 : vector<8x128xf32>
    %413 = arith.mulf %412, %398 : vector<8x128xf32>
    %414 = vector.extract_strided_slice %400 {offsets = [0, 128], sizes = [8, 512], strides = [1, 1]} : vector<8x640xf32> to vector<8x512xf32>
    %415 = arith.truncf %413 : vector<8x128xf32> to vector<8x128xbf16>
    %cst_155 = arith.constant dense<0.000000e+00> : vector<8x512xf32>
    %416 = tpu.matmul %415, %7, %cst_155 {dimension_numbers = #tpu.dot_dimension_numbers<[1], [0], [0], [1], [0, 0, 1, 1], [], []>} : vector<8x128xbf16>, vector<128x512xbf16>, vector<8x512xf32> -> vector<8x512xf32>
    %417 = arith.addf %414, %416 : vector<8x512xf32>
    %418 = vector.broadcast %13 : vector<1x512xf32> to vector<8x512xf32>
    %419 = arith.addf %417, %418 : vector<8x512xf32>
    %420 = vector.extract_strided_slice %419 {offsets = [0, 0], sizes = [8, 128], strides = [1, 1]} : vector<8x512xf32> to vector<8x128xf32>
    %cst_156 = arith.constant 5.000000e-01 : f32
    %421 = vector.broadcast %cst_156 : f32 to vector<8x128xf32>
    %422 = arith.mulf %421, %420 : vector<8x128xf32>
    %423 = math.tanh %422 : vector<8x128xf32>
    %cst_157 = arith.constant 5.000000e-01 : f32
    %424 = vector.broadcast %cst_157 : f32 to vector<8x128xf32>
    %425 = arith.mulf %424, %423 : vector<8x128xf32>
    %cst_158 = arith.constant 5.000000e-01 : f32
    %426 = vector.broadcast %cst_158 : f32 to vector<8x128xf32>
    %427 = arith.addf %425, %426 : vector<8x128xf32>
    %428 = vector.extract_strided_slice %419 {offsets = [0, 128], sizes = [8, 128], strides = [1, 1]} : vector<8x512xf32> to vector<8x128xf32>
    %cst_159 = arith.constant 5.000000e-01 : f32
    %429 = vector.broadcast %cst_159 : f32 to vector<8x128xf32>
    %430 = arith.mulf %429, %428 : vector<8x128xf32>
    %431 = math.tanh %430 : vector<8x128xf32>
    %cst_160 = arith.constant 5.000000e-01 : f32
    %432 = vector.broadcast %cst_160 : f32 to vector<8x128xf32>
    %433 = arith.mulf %432, %431 : vector<8x128xf32>
    %cst_161 = arith.constant 5.000000e-01 : f32
    %434 = vector.broadcast %cst_161 : f32 to vector<8x128xf32>
    %435 = arith.addf %433, %434 : vector<8x128xf32>
    %436 = vector.extract_strided_slice %419 {offsets = [0, 256], sizes = [8, 128], strides = [1, 1]} : vector<8x512xf32> to vector<8x128xf32>
    %437 = math.tanh %436 : vector<8x128xf32>
    %438 = vector.extract_strided_slice %419 {offsets = [0, 384], sizes = [8, 128], strides = [1, 1]} : vector<8x512xf32> to vector<8x128xf32>
    %cst_162 = arith.constant 5.000000e-01 : f32
    %439 = vector.broadcast %cst_162 : f32 to vector<8x128xf32>
    %440 = arith.mulf %439, %438 : vector<8x128xf32>
    %441 = math.tanh %440 : vector<8x128xf32>
    %cst_163 = arith.constant 5.000000e-01 : f32
    %442 = vector.broadcast %cst_163 : f32 to vector<8x128xf32>
    %443 = arith.mulf %442, %441 : vector<8x128xf32>
    %cst_164 = arith.constant 5.000000e-01 : f32
    %444 = vector.broadcast %cst_164 : f32 to vector<8x128xf32>
    %445 = arith.addf %443, %444 : vector<8x128xf32>
    %446 = arith.mulf %435, %388 : vector<8x128xf32>
    %447 = arith.mulf %427, %437 : vector<8x128xf32>
    %448 = arith.addf %446, %447 : vector<8x128xf32>
    %449 = math.tanh %448 : vector<8x128xf32>
    %450 = arith.mulf %445, %449 : vector<8x128xf32>
    %451 = arith.index_cast %c6_i32 : i32 to index
    %c0_165 = arith.constant 0 : index
    %c0_166 = arith.constant 0 : index
    %452 = vector.load %arg10[%451, %c0_165, %c0_166] : memref<8x8x128xf32, #tpu.memory_space<vmem>>, vector<1x8x128xf32>
    %453 = vector.shape_cast %452 : vector<1x8x128xf32> to vector<8x128xf32>
    %454 = vector.shape_cast %450 : vector<8x128xf32> to vector<1x8x128xf32>
    tpu.vector_store %arg10[%451, %c0_165, %c0_166], %454 {strides = array<i32>} : memref<8x8x128xf32, #tpu.memory_space<vmem>>, vector<1x8x128xf32>,
    %c7_i32 = arith.constant 7 : i32
    %455 = arith.index_cast %c7_i32 : i32 to index
    %c0_167 = arith.constant 0 : index
    %c0_168 = arith.constant 0 : index
    %456 = vector.load %arg2[%455, %c0_167, %c0_168] : memref<8x8x128xbf16, #tpu.memory_space<vmem>>, vector<1x8x128xbf16>
    %457 = vector.shape_cast %456 : vector<1x8x128xbf16> to vector<8x128xbf16>
    %458 = arith.extf %457 : vector<8x128xbf16> to vector<8x128xf32>
    %459 = arith.truncf %450 : vector<8x128xf32> to vector<8x128xbf16>
    %cst_169 = arith.constant dense<0.000000e+00> : vector<8x640xf32>
    %460 = tpu.matmul %459, %5, %cst_169 {dimension_numbers = #tpu.dot_dimension_numbers<[1], [0], [0], [1], [0, 0, 1, 1], [], []>} : vector<8x128xbf16>, vector<128x640xbf16>, vector<8x640xf32> -> vector<8x640xf32>
    %461 = vector.extract_strided_slice %460 {offsets = [0, 0], sizes = [8, 128], strides = [1, 1]} : vector<8x640xf32> to vector<8x128xf32>
    %462 = arith.index_cast %c7_i32 : i32 to index
    %c0_170 = arith.constant 0 : index
    %c0_171 = arith.constant 0 : index
    %463 = vector.load %arg11[%462, %c0_170, %c0_171] : memref<8x8x128xf32, #tpu.memory_space<vmem>>, vector<1x8x128xf32>
    %464 = vector.shape_cast %463 : vector<1x8x128xf32> to vector<8x128xf32>
    %465 = arith.addf %461, %464 : vector<8x128xf32>
    %cst_172 = arith.constant 5.000000e-01 : f32
    %466 = vector.broadcast %cst_172 : f32 to vector<8x128xf32>
    %467 = arith.mulf %466, %465 : vector<8x128xf32>
    %468 = math.tanh %467 : vector<8x128xf32>
    %cst_173 = arith.constant 5.000000e-01 : f32
    %469 = vector.broadcast %cst_173 : f32 to vector<8x128xf32>
    %470 = arith.mulf %469, %468 : vector<8x128xf32>
    %cst_174 = arith.constant 5.000000e-01 : f32
    %471 = vector.broadcast %cst_174 : f32 to vector<8x128xf32>
    %472 = arith.addf %470, %471 : vector<8x128xf32>
    %473 = arith.mulf %472, %458 : vector<8x128xf32>
    %474 = vector.extract_strided_slice %460 {offsets = [0, 128], sizes = [8, 512], strides = [1, 1]} : vector<8x640xf32> to vector<8x512xf32>
    %475 = arith.truncf %473 : vector<8x128xf32> to vector<8x128xbf16>
    %cst_175 = arith.constant dense<0.000000e+00> : vector<8x512xf32>
    %476 = tpu.matmul %475, %7, %cst_175 {dimension_numbers = #tpu.dot_dimension_numbers<[1], [0], [0], [1], [0, 0, 1, 1], [], []>} : vector<8x128xbf16>, vector<128x512xbf16>, vector<8x512xf32> -> vector<8x512xf32>
    %477 = arith.addf %474, %476 : vector<8x512xf32>
    %478 = vector.broadcast %13 : vector<1x512xf32> to vector<8x512xf32>
    %479 = arith.addf %477, %478 : vector<8x512xf32>
    %480 = vector.extract_strided_slice %479 {offsets = [0, 0], sizes = [8, 128], strides = [1, 1]} : vector<8x512xf32> to vector<8x128xf32>
    %cst_176 = arith.constant 5.000000e-01 : f32
    %481 = vector.broadcast %cst_176 : f32 to vector<8x128xf32>
    %482 = arith.mulf %481, %480 : vector<8x128xf32>
    %483 = math.tanh %482 : vector<8x128xf32>
    %cst_177 = arith.constant 5.000000e-01 : f32
    %484 = vector.broadcast %cst_177 : f32 to vector<8x128xf32>
    %485 = arith.mulf %484, %483 : vector<8x128xf32>
    %cst_178 = arith.constant 5.000000e-01 : f32
    %486 = vector.broadcast %cst_178 : f32 to vector<8x128xf32>
    %487 = arith.addf %485, %486 : vector<8x128xf32>
    %488 = vector.extract_strided_slice %479 {offsets = [0, 128], sizes = [8, 128], strides = [1, 1]} : vector<8x512xf32> to vector<8x128xf32>
    %cst_179 = arith.constant 5.000000e-01 : f32
    %489 = vector.broadcast %cst_179 : f32 to vector<8x128xf32>
    %490 = arith.mulf %489, %488 : vector<8x128xf32>
    %491 = math.tanh %490 : vector<8x128xf32>
    %cst_180 = arith.constant 5.000000e-01 : f32
    %492 = vector.broadcast %cst_180 : f32 to vector<8x128xf32>
    %493 = arith.mulf %492, %491 : vector<8x128xf32>
    %cst_181 = arith.constant 5.000000e-01 : f32
    %494 = vector.broadcast %cst_181 : f32 to vector<8x128xf32>
    %495 = arith.addf %493, %494 : vector<8x128xf32>
    %496 = vector.extract_strided_slice %479 {offsets = [0, 256], sizes = [8, 128], strides = [1, 1]} : vector<8x512xf32> to vector<8x128xf32>
    %497 = math.tanh %496 : vector<8x128xf32>
    %498 = vector.extract_strided_slice %479 {offsets = [0, 384], sizes = [8, 128], strides = [1, 1]} : vector<8x512xf32> to vector<8x128xf32>
    %cst_182 = arith.constant 5.000000e-01 : f32
    %499 = vector.broadcast %cst_182 : f32 to vector<8x128xf32>
    %500 = arith.mulf %499, %498 : vector<8x128xf32>
    %501 = math.tanh %500 : vector<8x128xf32>
    %cst_183 = arith.constant 5.000000e-01 : f32
    %502 = vector.broadcast %cst_183 : f32 to vector<8x128xf32>
    %503 = arith.mulf %502, %501 : vector<8x128xf32>
    %cst_184 = arith.constant 5.000000e-01 : f32
    %504 = vector.broadcast %cst_184 : f32 to vector<8x128xf32>
    %505 = arith.addf %503, %504 : vector<8x128xf32>
    %506 = arith.mulf %495, %448 : vector<8x128xf32>
    %507 = arith.mulf %487, %497 : vector<8x128xf32>
    %508 = arith.addf %506, %507 : vector<8x128xf32>
    %509 = math.tanh %508 : vector<8x128xf32>
    %510 = arith.mulf %505, %509 : vector<8x128xf32>
    %511 = arith.index_cast %c7_i32 : i32 to index
    %c0_185 = arith.constant 0 : index
    %c0_186 = arith.constant 0 : index
    %512 = vector.load %arg10[%511, %c0_185, %c0_186] : memref<8x8x128xf32, #tpu.memory_space<vmem>>, vector<1x8x128xf32>
    %513 = vector.shape_cast %512 : vector<1x8x128xf32> to vector<8x128xf32>
    %514 = vector.shape_cast %510 : vector<8x128xf32> to vector<1x8x128xf32>
    tpu.vector_store %arg10[%511, %c0_185, %c0_186], %514 {strides = array<i32>} : memref<8x8x128xf32, #tpu.memory_space<vmem>>, vector<1x8x128xf32>,
    %c8_i32 = arith.constant 8 : i32
    %c0_187 = arith.constant 0 : index
    %c0_188 = arith.constant 0 : index
    %c0_189 = arith.constant 0 : index
    %515 = vector.load %arg12[%c0_187, %c0_188, %c0_189] : memref<2x8x128xf32, #tpu.memory_space<vmem>>, vector<1x8x128xf32>
    %516 = vector.shape_cast %515 : vector<1x8x128xf32> to vector<8x128xf32>
    %517 = vector.shape_cast %510 : vector<8x128xf32> to vector<1x8x128xf32>
    tpu.vector_store %arg12[%c0_187, %c0_188, %c0_189], %517 {strides = array<i32>} : memref<2x8x128xf32, #tpu.memory_space<vmem>>, vector<1x8x128xf32>,
    %c0_190 = arith.constant 0 : index
    %c0_191 = arith.constant 0 : index
    %c0_192 = arith.constant 0 : index
    %518 = vector.load %arg13[%c0_190, %c0_191, %c0_192] : memref<2x8x128xf32, #tpu.memory_space<vmem>>, vector<1x8x128xf32>
    %519 = vector.shape_cast %518 : vector<1x8x128xf32> to vector<8x128xf32>
    %520 = vector.shape_cast %508 : vector<8x128xf32> to vector<1x8x128xf32>
    tpu.vector_store %arg13[%c0_190, %c0_191, %c0_192], %520 {strides = array<i32>} : memref<2x8x128xf32, #tpu.memory_space<vmem>>, vector<1x8x128xf32>,
    %c1 = arith.constant 1 : index
    %c0_193 = arith.constant 0 : index
    %c0_194 = arith.constant 0 : index
    %521 = vector.load %arg4[%c1, %c0_193, %c0_194] : memref<2x128x640xbf16, #tpu.memory_space<vmem>>, vector<1x128x640xbf16>
    %522 = vector.shape_cast %521 : vector<1x128x640xbf16> to vector<128x640xbf16>
    %c1_195 = arith.constant 1 : index
    %c0_196 = arith.constant 0 : index
    %c0_197 = arith.constant 0 : index
    %523 = vector.load %arg7[%c1_195, %c0_196, %c0_197] : memref<2x128x512xbf16, #tpu.memory_space<vmem>>, vector<1x128x512xbf16>
    %524 = vector.shape_cast %523 : vector<1x128x512xbf16> to vector<128x512xbf16>
    %c1_198 = arith.constant 1 : index
    %c0_199 = arith.constant 0 : index
    %c0_200 = arith.constant 0 : index
    %525 = vector.load %arg5[%c1_198, %c0_199, %c0_200] : memref<2x2x128xf32, #tpu.memory_space<vmem>>, vector<1x2x128xf32>
    %526 = vector.shape_cast %525 : vector<1x2x128xf32> to vector<2x128xf32>
    %c1_201 = arith.constant 1 : index
    %c0_202 = arith.constant 0 : index
    %c0_203 = arith.constant 0 : index
    %527 = vector.load %arg6[%c1_201, %c0_202, %c0_203] : memref<2x1x128xf32, #tpu.memory_space<vmem>>, vector<1x1x128xf32>
    %528 = vector.shape_cast %527 : vector<1x1x128xf32> to vector<1x128xf32>
    %c1_204 = arith.constant 1 : index
    %c0_205 = arith.constant 0 : index
    %c0_206 = arith.constant 0 : index
    %529 = vector.load %arg8[%c1_204, %c0_205, %c0_206] : memref<2x1x512xf32, #tpu.memory_space<vmem>>, vector<1x1x512xf32>
    %530 = vector.shape_cast %529 : vector<1x1x512xf32> to vector<1x512xf32>
    %531 = vector.extract_strided_slice %3 {offsets = [0, 0, 0], sizes = [8, 8, 1], strides = [1, 1, 1]} : vector<8x8x2xf32> to vector<8x8x1xf32>
    %532 = vector.extract_strided_slice %526 {offsets = [0, 0], sizes = [1, 128], strides = [1, 1]} : vector<2x128xf32> to vector<1x128xf32>
    %533 = vector.shape_cast %532 : vector<1x128xf32> to vector<1x1x128xf32>
    %534 = vector.broadcast %531 : vector<8x8x1xf32> to vector<8x8x128xf32>
    %535 = vector.broadcast %533 : vector<1x1x128xf32> to vector<8x8x128xf32>
    %536 = arith.mulf %534, %535 : vector<8x8x128xf32>
    %537 = vector.extract_strided_slice %3 {offsets = [0, 0, 1], sizes = [8, 8, 1], strides = [1, 1, 1]} : vector<8x8x2xf32> to vector<8x8x1xf32>
    %538 = vector.extract_strided_slice %526 {offsets = [1, 0], sizes = [1, 128], strides = [1, 1]} : vector<2x128xf32> to vector<1x128xf32>
    %539 = vector.shape_cast %538 : vector<1x128xf32> to vector<1x1x128xf32>
    %540 = vector.broadcast %537 : vector<8x8x1xf32> to vector<8x8x128xf32>
    %541 = vector.broadcast %539 : vector<1x1x128xf32> to vector<8x8x128xf32>
    %542 = arith.mulf %540, %541 : vector<8x8x128xf32>
    %543 = arith.addf %536, %542 : vector<8x8x128xf32>
    %544 = vector.shape_cast %528 : vector<1x128xf32> to vector<1x1x128xf32>
    %545 = vector.broadcast %544 : vector<1x1x128xf32> to vector<8x8x128xf32>
    %546 = arith.addf %543, %545 : vector<8x8x128xf32>
    %c0_207 = arith.constant 0 : index
    %c0_208 = arith.constant 0 : index
    %c0_209 = arith.constant 0 : index
    %547 = vector.load %arg11[%c0_207, %c0_208, %c0_209] : memref<8x8x128xf32, #tpu.memory_space<vmem>>, vector<8x8x128xf32>
    tpu.vector_store %arg11[%c0_207, %c0_208, %c0_209], %546 {strides = array<i32>} : memref<8x8x128xf32, #tpu.memory_space<vmem>>, vector<8x8x128xf32>,
    %c1_210 = arith.constant 1 : index
    %c0_211 = arith.constant 0 : index
    %c0_212 = arith.constant 0 : index
    %548 = vector.load %arg12[%c1_210, %c0_211, %c0_212] : memref<2x8x128xf32, #tpu.memory_space<vmem>>, vector<1x8x128xf32>
    %549 = vector.shape_cast %548 : vector<1x8x128xf32> to vector<8x128xf32>
    %c1_213 = arith.constant 1 : index
    %c0_214 = arith.constant 0 : index
    %c0_215 = arith.constant 0 : index
    %550 = vector.load %arg13[%c1_213, %c0_214, %c0_215] : memref<2x8x128xf32, #tpu.memory_space<vmem>>, vector<1x8x128xf32>
    %551 = vector.shape_cast %550 : vector<1x8x128xf32> to vector<8x128xf32>
    %c0_i32_216 = arith.constant 0 : i32
    %552 = arith.index_cast %c0_i32_216 : i32 to index
    %c0_217 = arith.constant 0 : index
    %c0_218 = arith.constant 0 : index
    %553 = vector.load %arg10[%552, %c0_217, %c0_218] : memref<8x8x128xf32, #tpu.memory_space<vmem>>, vector<1x8x128xf32>
    %554 = vector.shape_cast %553 : vector<1x8x128xf32> to vector<8x128xf32>
    %555 = arith.truncf %549 : vector<8x128xf32> to vector<8x128xbf16>
    %cst_219 = arith.constant dense<0.000000e+00> : vector<8x640xf32>
    %556 = tpu.matmul %555, %522, %cst_219 {dimension_numbers = #tpu.dot_dimension_numbers<[1], [0], [0], [1], [0, 0, 1, 1], [], []>} : vector<8x128xbf16>, vector<128x640xbf16>, vector<8x640xf32> -> vector<8x640xf32>
    %557 = vector.extract_strided_slice %556 {offsets = [0, 0], sizes = [8, 128], strides = [1, 1]} : vector<8x640xf32> to vector<8x128xf32>
    %558 = arith.index_cast %c0_i32_216 : i32 to index
    %c0_220 = arith.constant 0 : index
    %c0_221 = arith.constant 0 : index
    %559 = vector.load %arg11[%558, %c0_220, %c0_221] : memref<8x8x128xf32, #tpu.memory_space<vmem>>, vector<1x8x128xf32>
    %560 = vector.shape_cast %559 : vector<1x8x128xf32> to vector<8x128xf32>
    %561 = arith.addf %557, %560 : vector<8x128xf32>
    %cst_222 = arith.constant 5.000000e-01 : f32
    %562 = vector.broadcast %cst_222 : f32 to vector<8x128xf32>
    %563 = arith.mulf %562, %561 : vector<8x128xf32>
    %564 = math.tanh %563 : vector<8x128xf32>
    %cst_223 = arith.constant 5.000000e-01 : f32
    %565 = vector.broadcast %cst_223 : f32 to vector<8x128xf32>
    %566 = arith.mulf %565, %564 : vector<8x128xf32>
    %cst_224 = arith.constant 5.000000e-01 : f32
    %567 = vector.broadcast %cst_224 : f32 to vector<8x128xf32>
    %568 = arith.addf %566, %567 : vector<8x128xf32>
    %569 = arith.mulf %568, %554 : vector<8x128xf32>
    %570 = vector.extract_strided_slice %556 {offsets = [0, 128], sizes = [8, 512], strides = [1, 1]} : vector<8x640xf32> to vector<8x512xf32>
    %571 = arith.truncf %569 : vector<8x128xf32> to vector<8x128xbf16>
    %cst_225 = arith.constant dense<0.000000e+00> : vector<8x512xf32>
    %572 = tpu.matmul %571, %524, %cst_225 {dimension_numbers = #tpu.dot_dimension_numbers<[1], [0], [0], [1], [0, 0, 1, 1], [], []>} : vector<8x128xbf16>, vector<128x512xbf16>, vector<8x512xf32> -> vector<8x512xf32>
    %573 = arith.addf %570, %572 : vector<8x512xf32>
    %574 = vector.broadcast %530 : vector<1x512xf32> to vector<8x512xf32>
    %575 = arith.addf %573, %574 : vector<8x512xf32>
    %576 = vector.extract_strided_slice %575 {offsets = [0, 0], sizes = [8, 128], strides = [1, 1]} : vector<8x512xf32> to vector<8x128xf32>
    %cst_226 = arith.constant 5.000000e-01 : f32
    %577 = vector.broadcast %cst_226 : f32 to vector<8x128xf32>
    %578 = arith.mulf %577, %576 : vector<8x128xf32>
    %579 = math.tanh %578 : vector<8x128xf32>
    %cst_227 = arith.constant 5.000000e-01 : f32
    %580 = vector.broadcast %cst_227 : f32 to vector<8x128xf32>
    %581 = arith.mulf %580, %579 : vector<8x128xf32>
    %cst_228 = arith.constant 5.000000e-01 : f32
    %582 = vector.broadcast %cst_228 : f32 to vector<8x128xf32>
    %583 = arith.addf %581, %582 : vector<8x128xf32>
    %584 = vector.extract_strided_slice %575 {offsets = [0, 128], sizes = [8, 128], strides = [1, 1]} : vector<8x512xf32> to vector<8x128xf32>
    %cst_229 = arith.constant 5.000000e-01 : f32
    %585 = vector.broadcast %cst_229 : f32 to vector<8x128xf32>
    %586 = arith.mulf %585, %584 : vector<8x128xf32>
    %587 = math.tanh %586 : vector<8x128xf32>
    %cst_230 = arith.constant 5.000000e-01 : f32
    %588 = vector.broadcast %cst_230 : f32 to vector<8x128xf32>
    %589 = arith.mulf %588, %587 : vector<8x128xf32>
    %cst_231 = arith.constant 5.000000e-01 : f32
    %590 = vector.broadcast %cst_231 : f32 to vector<8x128xf32>
    %591 = arith.addf %589, %590 : vector<8x128xf32>
    %592 = vector.extract_strided_slice %575 {offsets = [0, 256], sizes = [8, 128], strides = [1, 1]} : vector<8x512xf32> to vector<8x128xf32>
    %593 = math.tanh %592 : vector<8x128xf32>
    %594 = vector.extract_strided_slice %575 {offsets = [0, 384], sizes = [8, 128], strides = [1, 1]} : vector<8x512xf32> to vector<8x128xf32>
    %cst_232 = arith.constant 5.000000e-01 : f32
    %595 = vector.broadcast %cst_232 : f32 to vector<8x128xf32>
    %596 = arith.mulf %595, %594 : vector<8x128xf32>
    %597 = math.tanh %596 : vector<8x128xf32>
    %cst_233 = arith.constant 5.000000e-01 : f32
    %598 = vector.broadcast %cst_233 : f32 to vector<8x128xf32>
    %599 = arith.mulf %598, %597 : vector<8x128xf32>
    %cst_234 = arith.constant 5.000000e-01 : f32
    %600 = vector.broadcast %cst_234 : f32 to vector<8x128xf32>
    %601 = arith.addf %599, %600 : vector<8x128xf32>
    %602 = arith.mulf %591, %551 : vector<8x128xf32>
    %603 = arith.mulf %583, %593 : vector<8x128xf32>
    %604 = arith.addf %602, %603 : vector<8x128xf32>
    %605 = math.tanh %604 : vector<8x128xf32>
    %606 = arith.mulf %601, %605 : vector<8x128xf32>
    %607 = arith.truncf %606 : vector<8x128xf32> to vector<8x128xbf16>
    %608 = arith.index_cast %c0_i32_216 : i32 to index
    %c0_235 = arith.constant 0 : index
    %c0_236 = arith.constant 0 : index
    %609 = vector.load %arg9[%608, %c0_235, %c0_236] : memref<8x8x128xbf16, #tpu.memory_space<vmem>>, vector<1x8x128xbf16>
    %610 = vector.shape_cast %609 : vector<1x8x128xbf16> to vector<8x128xbf16>
    %611 = vector.shape_cast %607 : vector<8x128xbf16> to vector<1x8x128xbf16>
    tpu.vector_store %arg9[%608, %c0_235, %c0_236], %611 {strides = array<i32>} : memref<8x8x128xbf16, #tpu.memory_space<vmem>>, vector<1x8x128xbf16>,
    %c1_i32_237 = arith.constant 1 : i32
    %612 = arith.index_cast %c1_i32_237 : i32 to index
    %c0_238 = arith.constant 0 : index
    %c0_239 = arith.constant 0 : index
    %613 = vector.load %arg10[%612, %c0_238, %c0_239] : memref<8x8x128xf32, #tpu.memory_space<vmem>>, vector<1x8x128xf32>
    %614 = vector.shape_cast %613 : vector<1x8x128xf32> to vector<8x128xf32>
    %615 = arith.truncf %606 : vector<8x128xf32> to vector<8x128xbf16>
    %cst_240 = arith.constant dense<0.000000e+00> : vector<8x640xf32>
    %616 = tpu.matmul %615, %522, %cst_240 {dimension_numbers = #tpu.dot_dimension_numbers<[1], [0], [0], [1], [0, 0, 1, 1], [], []>} : vector<8x128xbf16>, vector<128x640xbf16>, vector<8x640xf32> -> vector<8x640xf32>
    %617 = vector.extract_strided_slice %616 {offsets = [0, 0], sizes = [8, 128], strides = [1, 1]} : vector<8x640xf32> to vector<8x128xf32>
    %618 = arith.index_cast %c1_i32_237 : i32 to index
    %c0_241 = arith.constant 0 : index
    %c0_242 = arith.constant 0 : index
    %619 = vector.load %arg11[%618, %c0_241, %c0_242] : memref<8x8x128xf32, #tpu.memory_space<vmem>>, vector<1x8x128xf32>
    %620 = vector.shape_cast %619 : vector<1x8x128xf32> to vector<8x128xf32>
    %621 = arith.addf %617, %620 : vector<8x128xf32>
    %cst_243 = arith.constant 5.000000e-01 : f32
    %622 = vector.broadcast %cst_243 : f32 to vector<8x128xf32>
    %623 = arith.mulf %622, %621 : vector<8x128xf32>
    %624 = math.tanh %623 : vector<8x128xf32>
    %cst_244 = arith.constant 5.000000e-01 : f32
    %625 = vector.broadcast %cst_244 : f32 to vector<8x128xf32>
    %626 = arith.mulf %625, %624 : vector<8x128xf32>
    %cst_245 = arith.constant 5.000000e-01 : f32
    %627 = vector.broadcast %cst_245 : f32 to vector<8x128xf32>
    %628 = arith.addf %626, %627 : vector<8x128xf32>
    %629 = arith.mulf %628, %614 : vector<8x128xf32>
    %630 = vector.extract_strided_slice %616 {offsets = [0, 128], sizes = [8, 512], strides = [1, 1]} : vector<8x640xf32> to vector<8x512xf32>
    %631 = arith.truncf %629 : vector<8x128xf32> to vector<8x128xbf16>
    %cst_246 = arith.constant dense<0.000000e+00> : vector<8x512xf32>
    %632 = tpu.matmul %631, %524, %cst_246 {dimension_numbers = #tpu.dot_dimension_numbers<[1], [0], [0], [1], [0, 0, 1, 1], [], []>} : vector<8x128xbf16>, vector<128x512xbf16>, vector<8x512xf32> -> vector<8x512xf32>
    %633 = arith.addf %630, %632 : vector<8x512xf32>
    %634 = vector.broadcast %530 : vector<1x512xf32> to vector<8x512xf32>
    %635 = arith.addf %633, %634 : vector<8x512xf32>
    %636 = vector.extract_strided_slice %635 {offsets = [0, 0], sizes = [8, 128], strides = [1, 1]} : vector<8x512xf32> to vector<8x128xf32>
    %cst_247 = arith.constant 5.000000e-01 : f32
    %637 = vector.broadcast %cst_247 : f32 to vector<8x128xf32>
    %638 = arith.mulf %637, %636 : vector<8x128xf32>
    %639 = math.tanh %638 : vector<8x128xf32>
    %cst_248 = arith.constant 5.000000e-01 : f32
    %640 = vector.broadcast %cst_248 : f32 to vector<8x128xf32>
    %641 = arith.mulf %640, %639 : vector<8x128xf32>
    %cst_249 = arith.constant 5.000000e-01 : f32
    %642 = vector.broadcast %cst_249 : f32 to vector<8x128xf32>
    %643 = arith.addf %641, %642 : vector<8x128xf32>
    %644 = vector.extract_strided_slice %635 {offsets = [0, 128], sizes = [8, 128], strides = [1, 1]} : vector<8x512xf32> to vector<8x128xf32>
    %cst_250 = arith.constant 5.000000e-01 : f32
    %645 = vector.broadcast %cst_250 : f32 to vector<8x128xf32>
    %646 = arith.mulf %645, %644 : vector<8x128xf32>
    %647 = math.tanh %646 : vector<8x128xf32>
    %cst_251 = arith.constant 5.000000e-01 : f32
    %648 = vector.broadcast %cst_251 : f32 to vector<8x128xf32>
    %649 = arith.mulf %648, %647 : vector<8x128xf32>
    %cst_252 = arith.constant 5.000000e-01 : f32
    %650 = vector.broadcast %cst_252 : f32 to vector<8x128xf32>
    %651 = arith.addf %649, %650 : vector<8x128xf32>
    %652 = vector.extract_strided_slice %635 {offsets = [0, 256], sizes = [8, 128], strides = [1, 1]} : vector<8x512xf32> to vector<8x128xf32>
    %653 = math.tanh %652 : vector<8x128xf32>
    %654 = vector.extract_strided_slice %635 {offsets = [0, 384], sizes = [8, 128], strides = [1, 1]} : vector<8x512xf32> to vector<8x128xf32>
    %cst_253 = arith.constant 5.000000e-01 : f32
    %655 = vector.broadcast %cst_253 : f32 to vector<8x128xf32>
    %656 = arith.mulf %655, %654 : vector<8x128xf32>
    %657 = math.tanh %656 : vector<8x128xf32>
    %cst_254 = arith.constant 5.000000e-01 : f32
    %658 = vector.broadcast %cst_254 : f32 to vector<8x128xf32>
    %659 = arith.mulf %658, %657 : vector<8x128xf32>
    %cst_255 = arith.constant 5.000000e-01 : f32
    %660 = vector.broadcast %cst_255 : f32 to vector<8x128xf32>
    %661 = arith.addf %659, %660 : vector<8x128xf32>
    %662 = arith.mulf %651, %604 : vector<8x128xf32>
    %663 = arith.mulf %643, %653 : vector<8x128xf32>
    %664 = arith.addf %662, %663 : vector<8x128xf32>
    %665 = math.tanh %664 : vector<8x128xf32>
    %666 = arith.mulf %661, %665 : vector<8x128xf32>
    %667 = arith.truncf %666 : vector<8x128xf32> to vector<8x128xbf16>
    %668 = arith.index_cast %c1_i32_237 : i32 to index
    %c0_256 = arith.constant 0 : index
    %c0_257 = arith.constant 0 : index
    %669 = vector.load %arg9[%668, %c0_256, %c0_257] : memref<8x8x128xbf16, #tpu.memory_space<vmem>>, vector<1x8x128xbf16>
    %670 = vector.shape_cast %669 : vector<1x8x128xbf16> to vector<8x128xbf16>
    %671 = vector.shape_cast %667 : vector<8x128xbf16> to vector<1x8x128xbf16>
    tpu.vector_store %arg9[%668, %c0_256, %c0_257], %671 {strides = array<i32>} : memref<8x8x128xbf16, #tpu.memory_space<vmem>>, vector<1x8x128xbf16>,
    %c2_i32_258 = arith.constant 2 : i32
    %672 = arith.index_cast %c2_i32_258 : i32 to index
    %c0_259 = arith.constant 0 : index
    %c0_260 = arith.constant 0 : index
    %673 = vector.load %arg10[%672, %c0_259, %c0_260] : memref<8x8x128xf32, #tpu.memory_space<vmem>>, vector<1x8x128xf32>
    %674 = vector.shape_cast %673 : vector<1x8x128xf32> to vector<8x128xf32>
    %675 = arith.truncf %666 : vector<8x128xf32> to vector<8x128xbf16>
    %cst_261 = arith.constant dense<0.000000e+00> : vector<8x640xf32>
    %676 = tpu.matmul %675, %522, %cst_261 {dimension_numbers = #tpu.dot_dimension_numbers<[1], [0], [0], [1], [0, 0, 1, 1], [], []>} : vector<8x128xbf16>, vector<128x640xbf16>, vector<8x640xf32> -> vector<8x640xf32>
    %677 = vector.extract_strided_slice %676 {offsets = [0, 0], sizes = [8, 128], strides = [1, 1]} : vector<8x640xf32> to vector<8x128xf32>
    %678 = arith.index_cast %c2_i32_258 : i32 to index
    %c0_262 = arith.constant 0 : index
    %c0_263 = arith.constant 0 : index
    %679 = vector.load %arg11[%678, %c0_262, %c0_263] : memref<8x8x128xf32, #tpu.memory_space<vmem>>, vector<1x8x128xf32>
    %680 = vector.shape_cast %679 : vector<1x8x128xf32> to vector<8x128xf32>
    %681 = arith.addf %677, %680 : vector<8x128xf32>
    %cst_264 = arith.constant 5.000000e-01 : f32
    %682 = vector.broadcast %cst_264 : f32 to vector<8x128xf32>
    %683 = arith.mulf %682, %681 : vector<8x128xf32>
    %684 = math.tanh %683 : vector<8x128xf32>
    %cst_265 = arith.constant 5.000000e-01 : f32
    %685 = vector.broadcast %cst_265 : f32 to vector<8x128xf32>
    %686 = arith.mulf %685, %684 : vector<8x128xf32>
    %cst_266 = arith.constant 5.000000e-01 : f32
    %687 = vector.broadcast %cst_266 : f32 to vector<8x128xf32>
    %688 = arith.addf %686, %687 : vector<8x128xf32>
    %689 = arith.mulf %688, %674 : vector<8x128xf32>
    %690 = vector.extract_strided_slice %676 {offsets = [0, 128], sizes = [8, 512], strides = [1, 1]} : vector<8x640xf32> to vector<8x512xf32>
    %691 = arith.truncf %689 : vector<8x128xf32> to vector<8x128xbf16>
    %cst_267 = arith.constant dense<0.000000e+00> : vector<8x512xf32>
    %692 = tpu.matmul %691, %524, %cst_267 {dimension_numbers = #tpu.dot_dimension_numbers<[1], [0], [0], [1], [0, 0, 1, 1], [], []>} : vector<8x128xbf16>, vector<128x512xbf16>, vector<8x512xf32> -> vector<8x512xf32>
    %693 = arith.addf %690, %692 : vector<8x512xf32>
    %694 = vector.broadcast %530 : vector<1x512xf32> to vector<8x512xf32>
    %695 = arith.addf %693, %694 : vector<8x512xf32>
    %696 = vector.extract_strided_slice %695 {offsets = [0, 0], sizes = [8, 128], strides = [1, 1]} : vector<8x512xf32> to vector<8x128xf32>
    %cst_268 = arith.constant 5.000000e-01 : f32
    %697 = vector.broadcast %cst_268 : f32 to vector<8x128xf32>
    %698 = arith.mulf %697, %696 : vector<8x128xf32>
    %699 = math.tanh %698 : vector<8x128xf32>
    %cst_269 = arith.constant 5.000000e-01 : f32
    %700 = vector.broadcast %cst_269 : f32 to vector<8x128xf32>
    %701 = arith.mulf %700, %699 : vector<8x128xf32>
    %cst_270 = arith.constant 5.000000e-01 : f32
    %702 = vector.broadcast %cst_270 : f32 to vector<8x128xf32>
    %703 = arith.addf %701, %702 : vector<8x128xf32>
    %704 = vector.extract_strided_slice %695 {offsets = [0, 128], sizes = [8, 128], strides = [1, 1]} : vector<8x512xf32> to vector<8x128xf32>
    %cst_271 = arith.constant 5.000000e-01 : f32
    %705 = vector.broadcast %cst_271 : f32 to vector<8x128xf32>
    %706 = arith.mulf %705, %704 : vector<8x128xf32>
    %707 = math.tanh %706 : vector<8x128xf32>
    %cst_272 = arith.constant 5.000000e-01 : f32
    %708 = vector.broadcast %cst_272 : f32 to vector<8x128xf32>
    %709 = arith.mulf %708, %707 : vector<8x128xf32>
    %cst_273 = arith.constant 5.000000e-01 : f32
    %710 = vector.broadcast %cst_273 : f32 to vector<8x128xf32>
    %711 = arith.addf %709, %710 : vector<8x128xf32>
    %712 = vector.extract_strided_slice %695 {offsets = [0, 256], sizes = [8, 128], strides = [1, 1]} : vector<8x512xf32> to vector<8x128xf32>
    %713 = math.tanh %712 : vector<8x128xf32>
    %714 = vector.extract_strided_slice %695 {offsets = [0, 384], sizes = [8, 128], strides = [1, 1]} : vector<8x512xf32> to vector<8x128xf32>
    %cst_274 = arith.constant 5.000000e-01 : f32
    %715 = vector.broadcast %cst_274 : f32 to vector<8x128xf32>
    %716 = arith.mulf %715, %714 : vector<8x128xf32>
    %717 = math.tanh %716 : vector<8x128xf32>
    %cst_275 = arith.constant 5.000000e-01 : f32
    %718 = vector.broadcast %cst_275 : f32 to vector<8x128xf32>
    %719 = arith.mulf %718, %717 : vector<8x128xf32>
    %cst_276 = arith.constant 5.000000e-01 : f32
    %720 = vector.broadcast %cst_276 : f32 to vector<8x128xf32>
    %721 = arith.addf %719, %720 : vector<8x128xf32>
    %722 = arith.mulf %711, %664 : vector<8x128xf32>
    %723 = arith.mulf %703, %713 : vector<8x128xf32>
    %724 = arith.addf %722, %723 : vector<8x128xf32>
    %725 = math.tanh %724 : vector<8x128xf32>
    %726 = arith.mulf %721, %725 : vector<8x128xf32>
    %727 = arith.truncf %726 : vector<8x128xf32> to vector<8x128xbf16>
    %728 = arith.index_cast %c2_i32_258 : i32 to index
    %c0_277 = arith.constant 0 : index
    %c0_278 = arith.constant 0 : index
    %729 = vector.load %arg9[%728, %c0_277, %c0_278] : memref<8x8x128xbf16, #tpu.memory_space<vmem>>, vector<1x8x128xbf16>
    %730 = vector.shape_cast %729 : vector<1x8x128xbf16> to vector<8x128xbf16>
    %731 = vector.shape_cast %727 : vector<8x128xbf16> to vector<1x8x128xbf16>
    tpu.vector_store %arg9[%728, %c0_277, %c0_278], %731 {strides = array<i32>} : memref<8x8x128xbf16, #tpu.memory_space<vmem>>, vector<1x8x128xbf16>,
    %c3_i32_279 = arith.constant 3 : i32
    %732 = arith.index_cast %c3_i32_279 : i32 to index
    %c0_280 = arith.constant 0 : index
    %c0_281 = arith.constant 0 : index
    %733 = vector.load %arg10[%732, %c0_280, %c0_281] : memref<8x8x128xf32, #tpu.memory_space<vmem>>, vector<1x8x128xf32>
    %734 = vector.shape_cast %733 : vector<1x8x128xf32> to vector<8x128xf32>
    %735 = arith.truncf %726 : vector<8x128xf32> to vector<8x128xbf16>
    %cst_282 = arith.constant dense<0.000000e+00> : vector<8x640xf32>
    %736 = tpu.matmul %735, %522, %cst_282 {dimension_numbers = #tpu.dot_dimension_numbers<[1], [0], [0], [1], [0, 0, 1, 1], [], []>} : vector<8x128xbf16>, vector<128x640xbf16>, vector<8x640xf32> -> vector<8x640xf32>
    %737 = vector.extract_strided_slice %736 {offsets = [0, 0], sizes = [8, 128], strides = [1, 1]} : vector<8x640xf32> to vector<8x128xf32>
    %738 = arith.index_cast %c3_i32_279 : i32 to index
    %c0_283 = arith.constant 0 : index
    %c0_284 = arith.constant 0 : index
    %739 = vector.load %arg11[%738, %c0_283, %c0_284] : memref<8x8x128xf32, #tpu.memory_space<vmem>>, vector<1x8x128xf32>
    %740 = vector.shape_cast %739 : vector<1x8x128xf32> to vector<8x128xf32>
    %741 = arith.addf %737, %740 : vector<8x128xf32>
    %cst_285 = arith.constant 5.000000e-01 : f32
    %742 = vector.broadcast %cst_285 : f32 to vector<8x128xf32>
    %743 = arith.mulf %742, %741 : vector<8x128xf32>
    %744 = math.tanh %743 : vector<8x128xf32>
    %cst_286 = arith.constant 5.000000e-01 : f32
    %745 = vector.broadcast %cst_286 : f32 to vector<8x128xf32>
    %746 = arith.mulf %745, %744 : vector<8x128xf32>
    %cst_287 = arith.constant 5.000000e-01 : f32
    %747 = vector.broadcast %cst_287 : f32 to vector<8x128xf32>
    %748 = arith.addf %746, %747 : vector<8x128xf32>
    %749 = arith.mulf %748, %734 : vector<8x128xf32>
    %750 = vector.extract_strided_slice %736 {offsets = [0, 128], sizes = [8, 512], strides = [1, 1]} : vector<8x640xf32> to vector<8x512xf32>
    %751 = arith.truncf %749 : vector<8x128xf32> to vector<8x128xbf16>
    %cst_288 = arith.constant dense<0.000000e+00> : vector<8x512xf32>
    %752 = tpu.matmul %751, %524, %cst_288 {dimension_numbers = #tpu.dot_dimension_numbers<[1], [0], [0], [1], [0, 0, 1, 1], [], []>} : vector<8x128xbf16>, vector<128x512xbf16>, vector<8x512xf32> -> vector<8x512xf32>
    %753 = arith.addf %750, %752 : vector<8x512xf32>
    %754 = vector.broadcast %530 : vector<1x512xf32> to vector<8x512xf32>
    %755 = arith.addf %753, %754 : vector<8x512xf32>
    %756 = vector.extract_strided_slice %755 {offsets = [0, 0], sizes = [8, 128], strides = [1, 1]} : vector<8x512xf32> to vector<8x128xf32>
    %cst_289 = arith.constant 5.000000e-01 : f32
    %757 = vector.broadcast %cst_289 : f32 to vector<8x128xf32>
    %758 = arith.mulf %757, %756 : vector<8x128xf32>
    %759 = math.tanh %758 : vector<8x128xf32>
    %cst_290 = arith.constant 5.000000e-01 : f32
    %760 = vector.broadcast %cst_290 : f32 to vector<8x128xf32>
    %761 = arith.mulf %760, %759 : vector<8x128xf32>
    %cst_291 = arith.constant 5.000000e-01 : f32
    %762 = vector.broadcast %cst_291 : f32 to vector<8x128xf32>
    %763 = arith.addf %761, %762 : vector<8x128xf32>
    %764 = vector.extract_strided_slice %755 {offsets = [0, 128], sizes = [8, 128], strides = [1, 1]} : vector<8x512xf32> to vector<8x128xf32>
    %cst_292 = arith.constant 5.000000e-01 : f32
    %765 = vector.broadcast %cst_292 : f32 to vector<8x128xf32>
    %766 = arith.mulf %765, %764 : vector<8x128xf32>
    %767 = math.tanh %766 : vector<8x128xf32>
    %cst_293 = arith.constant 5.000000e-01 : f32
    %768 = vector.broadcast %cst_293 : f32 to vector<8x128xf32>
    %769 = arith.mulf %768, %767 : vector<8x128xf32>
    %cst_294 = arith.constant 5.000000e-01 : f32
    %770 = vector.broadcast %cst_294 : f32 to vector<8x128xf32>
    %771 = arith.addf %769, %770 : vector<8x128xf32>
    %772 = vector.extract_strided_slice %755 {offsets = [0, 256], sizes = [8, 128], strides = [1, 1]} : vector<8x512xf32> to vector<8x128xf32>
    %773 = math.tanh %772 : vector<8x128xf32>
    %774 = vector.extract_strided_slice %755 {offsets = [0, 384], sizes = [8, 128], strides = [1, 1]} : vector<8x512xf32> to vector<8x128xf32>
    %cst_295 = arith.constant 5.000000e-01 : f32
    %775 = vector.broadcast %cst_295 : f32 to vector<8x128xf32>
    %776 = arith.mulf %775, %774 : vector<8x128xf32>
    %777 = math.tanh %776 : vector<8x128xf32>
    %cst_296 = arith.constant 5.000000e-01 : f32
    %778 = vector.broadcast %cst_296 : f32 to vector<8x128xf32>
    %779 = arith.mulf %778, %777 : vector<8x128xf32>
    %cst_297 = arith.constant 5.000000e-01 : f32
    %780 = vector.broadcast %cst_297 : f32 to vector<8x128xf32>
    %781 = arith.addf %779, %780 : vector<8x128xf32>
    %782 = arith.mulf %771, %724 : vector<8x128xf32>
    %783 = arith.mulf %763, %773 : vector<8x128xf32>
    %784 = arith.addf %782, %783 : vector<8x128xf32>
    %785 = math.tanh %784 : vector<8x128xf32>
    %786 = arith.mulf %781, %785 : vector<8x128xf32>
    %787 = arith.truncf %786 : vector<8x128xf32> to vector<8x128xbf16>
    %788 = arith.index_cast %c3_i32_279 : i32 to index
    %c0_298 = arith.constant 0 : index
    %c0_299 = arith.constant 0 : index
    %789 = vector.load %arg9[%788, %c0_298, %c0_299] : memref<8x8x128xbf16, #tpu.memory_space<vmem>>, vector<1x8x128xbf16>
    %790 = vector.shape_cast %789 : vector<1x8x128xbf16> to vector<8x128xbf16>
    %791 = vector.shape_cast %787 : vector<8x128xbf16> to vector<1x8x128xbf16>
    tpu.vector_store %arg9[%788, %c0_298, %c0_299], %791 {strides = array<i32>} : memref<8x8x128xbf16, #tpu.memory_space<vmem>>, vector<1x8x128xbf16>,
    %c4_i32_300 = arith.constant 4 : i32
    %792 = arith.index_cast %c4_i32_300 : i32 to index
    %c0_301 = arith.constant 0 : index
    %c0_302 = arith.constant 0 : index
    %793 = vector.load %arg10[%792, %c0_301, %c0_302] : memref<8x8x128xf32, #tpu.memory_space<vmem>>, vector<1x8x128xf32>
    %794 = vector.shape_cast %793 : vector<1x8x128xf32> to vector<8x128xf32>
    %795 = arith.truncf %786 : vector<8x128xf32> to vector<8x128xbf16>
    %cst_303 = arith.constant dense<0.000000e+00> : vector<8x640xf32>
    %796 = tpu.matmul %795, %522, %cst_303 {dimension_numbers = #tpu.dot_dimension_numbers<[1], [0], [0], [1], [0, 0, 1, 1], [], []>} : vector<8x128xbf16>, vector<128x640xbf16>, vector<8x640xf32> -> vector<8x640xf32>
    %797 = vector.extract_strided_slice %796 {offsets = [0, 0], sizes = [8, 128], strides = [1, 1]} : vector<8x640xf32> to vector<8x128xf32>
    %798 = arith.index_cast %c4_i32_300 : i32 to index
    %c0_304 = arith.constant 0 : index
    %c0_305 = arith.constant 0 : index
    %799 = vector.load %arg11[%798, %c0_304, %c0_305] : memref<8x8x128xf32, #tpu.memory_space<vmem>>, vector<1x8x128xf32>
    %800 = vector.shape_cast %799 : vector<1x8x128xf32> to vector<8x128xf32>
    %801 = arith.addf %797, %800 : vector<8x128xf32>
    %cst_306 = arith.constant 5.000000e-01 : f32
    %802 = vector.broadcast %cst_306 : f32 to vector<8x128xf32>
    %803 = arith.mulf %802, %801 : vector<8x128xf32>
    %804 = math.tanh %803 : vector<8x128xf32>
    %cst_307 = arith.constant 5.000000e-01 : f32
    %805 = vector.broadcast %cst_307 : f32 to vector<8x128xf32>
    %806 = arith.mulf %805, %804 : vector<8x128xf32>
    %cst_308 = arith.constant 5.000000e-01 : f32
    %807 = vector.broadcast %cst_308 : f32 to vector<8x128xf32>
    %808 = arith.addf %806, %807 : vector<8x128xf32>
    %809 = arith.mulf %808, %794 : vector<8x128xf32>
    %810 = vector.extract_strided_slice %796 {offsets = [0, 128], sizes = [8, 512], strides = [1, 1]} : vector<8x640xf32> to vector<8x512xf32>
    %811 = arith.truncf %809 : vector<8x128xf32> to vector<8x128xbf16>
    %cst_309 = arith.constant dense<0.000000e+00> : vector<8x512xf32>
    %812 = tpu.matmul %811, %524, %cst_309 {dimension_numbers = #tpu.dot_dimension_numbers<[1], [0], [0], [1], [0, 0, 1, 1], [], []>} : vector<8x128xbf16>, vector<128x512xbf16>, vector<8x512xf32> -> vector<8x512xf32>
    %813 = arith.addf %810, %812 : vector<8x512xf32>
    %814 = vector.broadcast %530 : vector<1x512xf32> to vector<8x512xf32>
    %815 = arith.addf %813, %814 : vector<8x512xf32>
    %816 = vector.extract_strided_slice %815 {offsets = [0, 0], sizes = [8, 128], strides = [1, 1]} : vector<8x512xf32> to vector<8x128xf32>
    %cst_310 = arith.constant 5.000000e-01 : f32
    %817 = vector.broadcast %cst_310 : f32 to vector<8x128xf32>
    %818 = arith.mulf %817, %816 : vector<8x128xf32>
    %819 = math.tanh %818 : vector<8x128xf32>
    %cst_311 = arith.constant 5.000000e-01 : f32
    %820 = vector.broadcast %cst_311 : f32 to vector<8x128xf32>
    %821 = arith.mulf %820, %819 : vector<8x128xf32>
    %cst_312 = arith.constant 5.000000e-01 : f32
    %822 = vector.broadcast %cst_312 : f32 to vector<8x128xf32>
    %823 = arith.addf %821, %822 : vector<8x128xf32>
    %824 = vector.extract_strided_slice %815 {offsets = [0, 128], sizes = [8, 128], strides = [1, 1]} : vector<8x512xf32> to vector<8x128xf32>
    %cst_313 = arith.constant 5.000000e-01 : f32
    %825 = vector.broadcast %cst_313 : f32 to vector<8x128xf32>
    %826 = arith.mulf %825, %824 : vector<8x128xf32>
    %827 = math.tanh %826 : vector<8x128xf32>
    %cst_314 = arith.constant 5.000000e-01 : f32
    %828 = vector.broadcast %cst_314 : f32 to vector<8x128xf32>
    %829 = arith.mulf %828, %827 : vector<8x128xf32>
    %cst_315 = arith.constant 5.000000e-01 : f32
    %830 = vector.broadcast %cst_315 : f32 to vector<8x128xf32>
    %831 = arith.addf %829, %830 : vector<8x128xf32>
    %832 = vector.extract_strided_slice %815 {offsets = [0, 256], sizes = [8, 128], strides = [1, 1]} : vector<8x512xf32> to vector<8x128xf32>
    %833 = math.tanh %832 : vector<8x128xf32>
    %834 = vector.extract_strided_slice %815 {offsets = [0, 384], sizes = [8, 128], strides = [1, 1]} : vector<8x512xf32> to vector<8x128xf32>
    %cst_316 = arith.constant 5.000000e-01 : f32
    %835 = vector.broadcast %cst_316 : f32 to vector<8x128xf32>
    %836 = arith.mulf %835, %834 : vector<8x128xf32>
    %837 = math.tanh %836 : vector<8x128xf32>
    %cst_317 = arith.constant 5.000000e-01 : f32
    %838 = vector.broadcast %cst_317 : f32 to vector<8x128xf32>
    %839 = arith.mulf %838, %837 : vector<8x128xf32>
    %cst_318 = arith.constant 5.000000e-01 : f32
    %840 = vector.broadcast %cst_318 : f32 to vector<8x128xf32>
    %841 = arith.addf %839, %840 : vector<8x128xf32>
    %842 = arith.mulf %831, %784 : vector<8x128xf32>
    %843 = arith.mulf %823, %833 : vector<8x128xf32>
    %844 = arith.addf %842, %843 : vector<8x128xf32>
    %845 = math.tanh %844 : vector<8x128xf32>
    %846 = arith.mulf %841, %845 : vector<8x128xf32>
    %847 = arith.truncf %846 : vector<8x128xf32> to vector<8x128xbf16>
    %848 = arith.index_cast %c4_i32_300 : i32 to index
    %c0_319 = arith.constant 0 : index
    %c0_320 = arith.constant 0 : index
    %849 = vector.load %arg9[%848, %c0_319, %c0_320] : memref<8x8x128xbf16, #tpu.memory_space<vmem>>, vector<1x8x128xbf16>
    %850 = vector.shape_cast %849 : vector<1x8x128xbf16> to vector<8x128xbf16>
    %851 = vector.shape_cast %847 : vector<8x128xbf16> to vector<1x8x128xbf16>
    tpu.vector_store %arg9[%848, %c0_319, %c0_320], %851 {strides = array<i32>} : memref<8x8x128xbf16, #tpu.memory_space<vmem>>, vector<1x8x128xbf16>,
    %c5_i32_321 = arith.constant 5 : i32
    %852 = arith.index_cast %c5_i32_321 : i32 to index
    %c0_322 = arith.constant 0 : index
    %c0_323 = arith.constant 0 : index
    %853 = vector.load %arg10[%852, %c0_322, %c0_323] : memref<8x8x128xf32, #tpu.memory_space<vmem>>, vector<1x8x128xf32>
    %854 = vector.shape_cast %853 : vector<1x8x128xf32> to vector<8x128xf32>
    %855 = arith.truncf %846 : vector<8x128xf32> to vector<8x128xbf16>
    %cst_324 = arith.constant dense<0.000000e+00> : vector<8x640xf32>
    %856 = tpu.matmul %855, %522, %cst_324 {dimension_numbers = #tpu.dot_dimension_numbers<[1], [0], [0], [1], [0, 0, 1, 1], [], []>} : vector<8x128xbf16>, vector<128x640xbf16>, vector<8x640xf32> -> vector<8x640xf32>
    %857 = vector.extract_strided_slice %856 {offsets = [0, 0], sizes = [8, 128], strides = [1, 1]} : vector<8x640xf32> to vector<8x128xf32>
    %858 = arith.index_cast %c5_i32_321 : i32 to index
    %c0_325 = arith.constant 0 : index
    %c0_326 = arith.constant 0 : index
    %859 = vector.load %arg11[%858, %c0_325, %c0_326] : memref<8x8x128xf32, #tpu.memory_space<vmem>>, vector<1x8x128xf32>
    %860 = vector.shape_cast %859 : vector<1x8x128xf32> to vector<8x128xf32>
    %861 = arith.addf %857, %860 : vector<8x128xf32>
    %cst_327 = arith.constant 5.000000e-01 : f32
    %862 = vector.broadcast %cst_327 : f32 to vector<8x128xf32>
    %863 = arith.mulf %862, %861 : vector<8x128xf32>
    %864 = math.tanh %863 : vector<8x128xf32>
    %cst_328 = arith.constant 5.000000e-01 : f32
    %865 = vector.broadcast %cst_328 : f32 to vector<8x128xf32>
    %866 = arith.mulf %865, %864 : vector<8x128xf32>
    %cst_329 = arith.constant 5.000000e-01 : f32
    %867 = vector.broadcast %cst_329 : f32 to vector<8x128xf32>
    %868 = arith.addf %866, %867 : vector<8x128xf32>
    %869 = arith.mulf %868, %854 : vector<8x128xf32>
    %870 = vector.extract_strided_slice %856 {offsets = [0, 128], sizes = [8, 512], strides = [1, 1]} : vector<8x640xf32> to vector<8x512xf32>
    %871 = arith.truncf %869 : vector<8x128xf32> to vector<8x128xbf16>
    %cst_330 = arith.constant dense<0.000000e+00> : vector<8x512xf32>
    %872 = tpu.matmul %871, %524, %cst_330 {dimension_numbers = #tpu.dot_dimension_numbers<[1], [0], [0], [1], [0, 0, 1, 1], [], []>} : vector<8x128xbf16>, vector<128x512xbf16>, vector<8x512xf32> -> vector<8x512xf32>
    %873 = arith.addf %870, %872 : vector<8x512xf32>
    %874 = vector.broadcast %530 : vector<1x512xf32> to vector<8x512xf32>
    %875 = arith.addf %873, %874 : vector<8x512xf32>
    %876 = vector.extract_strided_slice %875 {offsets = [0, 0], sizes = [8, 128], strides = [1, 1]} : vector<8x512xf32> to vector<8x128xf32>
    %cst_331 = arith.constant 5.000000e-01 : f32
    %877 = vector.broadcast %cst_331 : f32 to vector<8x128xf32>
    %878 = arith.mulf %877, %876 : vector<8x128xf32>
    %879 = math.tanh %878 : vector<8x128xf32>
    %cst_332 = arith.constant 5.000000e-01 : f32
    %880 = vector.broadcast %cst_332 : f32 to vector<8x128xf32>
    %881 = arith.mulf %880, %879 : vector<8x128xf32>
    %cst_333 = arith.constant 5.000000e-01 : f32
    %882 = vector.broadcast %cst_333 : f32 to vector<8x128xf32>
    %883 = arith.addf %881, %882 : vector<8x128xf32>
    %884 = vector.extract_strided_slice %875 {offsets = [0, 128], sizes = [8, 128], strides = [1, 1]} : vector<8x512xf32> to vector<8x128xf32>
    %cst_334 = arith.constant 5.000000e-01 : f32
    %885 = vector.broadcast %cst_334 : f32 to vector<8x128xf32>
    %886 = arith.mulf %885, %884 : vector<8x128xf32>
    %887 = math.tanh %886 : vector<8x128xf32>
    %cst_335 = arith.constant 5.000000e-01 : f32
    %888 = vector.broadcast %cst_335 : f32 to vector<8x128xf32>
    %889 = arith.mulf %888, %887 : vector<8x128xf32>
    %cst_336 = arith.constant 5.000000e-01 : f32
    %890 = vector.broadcast %cst_336 : f32 to vector<8x128xf32>
    %891 = arith.addf %889, %890 : vector<8x128xf32>
    %892 = vector.extract_strided_slice %875 {offsets = [0, 256], sizes = [8, 128], strides = [1, 1]} : vector<8x512xf32> to vector<8x128xf32>
    %893 = math.tanh %892 : vector<8x128xf32>
    %894 = vector.extract_strided_slice %875 {offsets = [0, 384], sizes = [8, 128], strides = [1, 1]} : vector<8x512xf32> to vector<8x128xf32>
    %cst_337 = arith.constant 5.000000e-01 : f32
    %895 = vector.broadcast %cst_337 : f32 to vector<8x128xf32>
    %896 = arith.mulf %895, %894 : vector<8x128xf32>
    %897 = math.tanh %896 : vector<8x128xf32>
    %cst_338 = arith.constant 5.000000e-01 : f32
    %898 = vector.broadcast %cst_338 : f32 to vector<8x128xf32>
    %899 = arith.mulf %898, %897 : vector<8x128xf32>
    %cst_339 = arith.constant 5.000000e-01 : f32
    %900 = vector.broadcast %cst_339 : f32 to vector<8x128xf32>
    %901 = arith.addf %899, %900 : vector<8x128xf32>
    %902 = arith.mulf %891, %844 : vector<8x128xf32>
    %903 = arith.mulf %883, %893 : vector<8x128xf32>
    %904 = arith.addf %902, %903 : vector<8x128xf32>
    %905 = math.tanh %904 : vector<8x128xf32>
    %906 = arith.mulf %901, %905 : vector<8x128xf32>
    %907 = arith.truncf %906 : vector<8x128xf32> to vector<8x128xbf16>
    %908 = arith.index_cast %c5_i32_321 : i32 to index
    %c0_340 = arith.constant 0 : index
    %c0_341 = arith.constant 0 : index
    %909 = vector.load %arg9[%908, %c0_340, %c0_341] : memref<8x8x128xbf16, #tpu.memory_space<vmem>>, vector<1x8x128xbf16>
    %910 = vector.shape_cast %909 : vector<1x8x128xbf16> to vector<8x128xbf16>
    %911 = vector.shape_cast %907 : vector<8x128xbf16> to vector<1x8x128xbf16>
    tpu.vector_store %arg9[%908, %c0_340, %c0_341], %911 {strides = array<i32>} : memref<8x8x128xbf16, #tpu.memory_space<vmem>>, vector<1x8x128xbf16>,
    %c6_i32_342 = arith.constant 6 : i32
    %912 = arith.index_cast %c6_i32_342 : i32 to index
    %c0_343 = arith.constant 0 : index
    %c0_344 = arith.constant 0 : index
    %913 = vector.load %arg10[%912, %c0_343, %c0_344] : memref<8x8x128xf32, #tpu.memory_space<vmem>>, vector<1x8x128xf32>
    %914 = vector.shape_cast %913 : vector<1x8x128xf32> to vector<8x128xf32>
    %915 = arith.truncf %906 : vector<8x128xf32> to vector<8x128xbf16>
    %cst_345 = arith.constant dense<0.000000e+00> : vector<8x640xf32>
    %916 = tpu.matmul %915, %522, %cst_345 {dimension_numbers = #tpu.dot_dimension_numbers<[1], [0], [0], [1], [0, 0, 1, 1], [], []>} : vector<8x128xbf16>, vector<128x640xbf16>, vector<8x640xf32> -> vector<8x640xf32>
    %917 = vector.extract_strided_slice %916 {offsets = [0, 0], sizes = [8, 128], strides = [1, 1]} : vector<8x640xf32> to vector<8x128xf32>
    %918 = arith.index_cast %c6_i32_342 : i32 to index
    %c0_346 = arith.constant 0 : index
    %c0_347 = arith.constant 0 : index
    %919 = vector.load %arg11[%918, %c0_346, %c0_347] : memref<8x8x128xf32, #tpu.memory_space<vmem>>, vector<1x8x128xf32>
    %920 = vector.shape_cast %919 : vector<1x8x128xf32> to vector<8x128xf32>
    %921 = arith.addf %917, %920 : vector<8x128xf32>
    %cst_348 = arith.constant 5.000000e-01 : f32
    %922 = vector.broadcast %cst_348 : f32 to vector<8x128xf32>
    %923 = arith.mulf %922, %921 : vector<8x128xf32>
    %924 = math.tanh %923 : vector<8x128xf32>
    %cst_349 = arith.constant 5.000000e-01 : f32
    %925 = vector.broadcast %cst_349 : f32 to vector<8x128xf32>
    %926 = arith.mulf %925, %924 : vector<8x128xf32>
    %cst_350 = arith.constant 5.000000e-01 : f32
    %927 = vector.broadcast %cst_350 : f32 to vector<8x128xf32>
    %928 = arith.addf %926, %927 : vector<8x128xf32>
    %929 = arith.mulf %928, %914 : vector<8x128xf32>
    %930 = vector.extract_strided_slice %916 {offsets = [0, 128], sizes = [8, 512], strides = [1, 1]} : vector<8x640xf32> to vector<8x512xf32>
    %931 = arith.truncf %929 : vector<8x128xf32> to vector<8x128xbf16>
    %cst_351 = arith.constant dense<0.000000e+00> : vector<8x512xf32>
    %932 = tpu.matmul %931, %524, %cst_351 {dimension_numbers = #tpu.dot_dimension_numbers<[1], [0], [0], [1], [0, 0, 1, 1], [], []>} : vector<8x128xbf16>, vector<128x512xbf16>, vector<8x512xf32> -> vector<8x512xf32>
    %933 = arith.addf %930, %932 : vector<8x512xf32>
    %934 = vector.broadcast %530 : vector<1x512xf32> to vector<8x512xf32>
    %935 = arith.addf %933, %934 : vector<8x512xf32>
    %936 = vector.extract_strided_slice %935 {offsets = [0, 0], sizes = [8, 128], strides = [1, 1]} : vector<8x512xf32> to vector<8x128xf32>
    %cst_352 = arith.constant 5.000000e-01 : f32
    %937 = vector.broadcast %cst_352 : f32 to vector<8x128xf32>
    %938 = arith.mulf %937, %936 : vector<8x128xf32>
    %939 = math.tanh %938 : vector<8x128xf32>
    %cst_353 = arith.constant 5.000000e-01 : f32
    %940 = vector.broadcast %cst_353 : f32 to vector<8x128xf32>
    %941 = arith.mulf %940, %939 : vector<8x128xf32>
    %cst_354 = arith.constant 5.000000e-01 : f32
    %942 = vector.broadcast %cst_354 : f32 to vector<8x128xf32>
    %943 = arith.addf %941, %942 : vector<8x128xf32>
    %944 = vector.extract_strided_slice %935 {offsets = [0, 128], sizes = [8, 128], strides = [1, 1]} : vector<8x512xf32> to vector<8x128xf32>
    %cst_355 = arith.constant 5.000000e-01 : f32
    %945 = vector.broadcast %cst_355 : f32 to vector<8x128xf32>
    %946 = arith.mulf %945, %944 : vector<8x128xf32>
    %947 = math.tanh %946 : vector<8x128xf32>
    %cst_356 = arith.constant 5.000000e-01 : f32
    %948 = vector.broadcast %cst_356 : f32 to vector<8x128xf32>
    %949 = arith.mulf %948, %947 : vector<8x128xf32>
    %cst_357 = arith.constant 5.000000e-01 : f32
    %950 = vector.broadcast %cst_357 : f32 to vector<8x128xf32>
    %951 = arith.addf %949, %950 : vector<8x128xf32>
    %952 = vector.extract_strided_slice %935 {offsets = [0, 256], sizes = [8, 128], strides = [1, 1]} : vector<8x512xf32> to vector<8x128xf32>
    %953 = math.tanh %952 : vector<8x128xf32>
    %954 = vector.extract_strided_slice %935 {offsets = [0, 384], sizes = [8, 128], strides = [1, 1]} : vector<8x512xf32> to vector<8x128xf32>
    %cst_358 = arith.constant 5.000000e-01 : f32
    %955 = vector.broadcast %cst_358 : f32 to vector<8x128xf32>
    %956 = arith.mulf %955, %954 : vector<8x128xf32>
    %957 = math.tanh %956 : vector<8x128xf32>
    %cst_359 = arith.constant 5.000000e-01 : f32
    %958 = vector.broadcast %cst_359 : f32 to vector<8x128xf32>
    %959 = arith.mulf %958, %957 : vector<8x128xf32>
    %cst_360 = arith.constant 5.000000e-01 : f32
    %960 = vector.broadcast %cst_360 : f32 to vector<8x128xf32>
    %961 = arith.addf %959, %960 : vector<8x128xf32>
    %962 = arith.mulf %951, %904 : vector<8x128xf32>
    %963 = arith.mulf %943, %953 : vector<8x128xf32>
    %964 = arith.addf %962, %963 : vector<8x128xf32>
    %965 = math.tanh %964 : vector<8x128xf32>
    %966 = arith.mulf %961, %965 : vector<8x128xf32>
    %967 = arith.truncf %966 : vector<8x128xf32> to vector<8x128xbf16>
    %968 = arith.index_cast %c6_i32_342 : i32 to index
    %c0_361 = arith.constant 0 : index
    %c0_362 = arith.constant 0 : index
    %969 = vector.load %arg9[%968, %c0_361, %c0_362] : memref<8x8x128xbf16, #tpu.memory_space<vmem>>, vector<1x8x128xbf16>
    %970 = vector.shape_cast %969 : vector<1x8x128xbf16> to vector<8x128xbf16>
    %971 = vector.shape_cast %967 : vector<8x128xbf16> to vector<1x8x128xbf16>
    tpu.vector_store %arg9[%968, %c0_361, %c0_362], %971 {strides = array<i32>} : memref<8x8x128xbf16, #tpu.memory_space<vmem>>, vector<1x8x128xbf16>,
    %c7_i32_363 = arith.constant 7 : i32
    %972 = arith.index_cast %c7_i32_363 : i32 to index
    %c0_364 = arith.constant 0 : index
    %c0_365 = arith.constant 0 : index
    %973 = vector.load %arg10[%972, %c0_364, %c0_365] : memref<8x8x128xf32, #tpu.memory_space<vmem>>, vector<1x8x128xf32>
    %974 = vector.shape_cast %973 : vector<1x8x128xf32> to vector<8x128xf32>
    %975 = arith.truncf %966 : vector<8x128xf32> to vector<8x128xbf16>
    %cst_366 = arith.constant dense<0.000000e+00> : vector<8x640xf32>
    %976 = tpu.matmul %975, %522, %cst_366 {dimension_numbers = #tpu.dot_dimension_numbers<[1], [0], [0], [1], [0, 0, 1, 1], [], []>} : vector<8x128xbf16>, vector<128x640xbf16>, vector<8x640xf32> -> vector<8x640xf32>
    %977 = vector.extract_strided_slice %976 {offsets = [0, 0], sizes = [8, 128], strides = [1, 1]} : vector<8x640xf32> to vector<8x128xf32>
    %978 = arith.index_cast %c7_i32_363 : i32 to index
    %c0_367 = arith.constant 0 : index
    %c0_368 = arith.constant 0 : index
    %979 = vector.load %arg11[%978, %c0_367, %c0_368] : memref<8x8x128xf32, #tpu.memory_space<vmem>>, vector<1x8x128xf32>
    %980 = vector.shape_cast %979 : vector<1x8x128xf32> to vector<8x128xf32>
    %981 = arith.addf %977, %980 : vector<8x128xf32>
    %cst_369 = arith.constant 5.000000e-01 : f32
    %982 = vector.broadcast %cst_369 : f32 to vector<8x128xf32>
    %983 = arith.mulf %982, %981 : vector<8x128xf32>
    %984 = math.tanh %983 : vector<8x128xf32>
    %cst_370 = arith.constant 5.000000e-01 : f32
    %985 = vector.broadcast %cst_370 : f32 to vector<8x128xf32>
    %986 = arith.mulf %985, %984 : vector<8x128xf32>
    %cst_371 = arith.constant 5.000000e-01 : f32
    %987 = vector.broadcast %cst_371 : f32 to vector<8x128xf32>
    %988 = arith.addf %986, %987 : vector<8x128xf32>
    %989 = arith.mulf %988, %974 : vector<8x128xf32>
    %990 = vector.extract_strided_slice %976 {offsets = [0, 128], sizes = [8, 512], strides = [1, 1]} : vector<8x640xf32> to vector<8x512xf32>
    %991 = arith.truncf %989 : vector<8x128xf32> to vector<8x128xbf16>
    %cst_372 = arith.constant dense<0.000000e+00> : vector<8x512xf32>
    %992 = tpu.matmul %991, %524, %cst_372 {dimension_numbers = #tpu.dot_dimension_numbers<[1], [0], [0], [1], [0, 0, 1, 1], [], []>} : vector<8x128xbf16>, vector<128x512xbf16>, vector<8x512xf32> -> vector<8x512xf32>
    %993 = arith.addf %990, %992 : vector<8x512xf32>
    %994 = vector.broadcast %530 : vector<1x512xf32> to vector<8x512xf32>
    %995 = arith.addf %993, %994 : vector<8x512xf32>
    %996 = vector.extract_strided_slice %995 {offsets = [0, 0], sizes = [8, 128], strides = [1, 1]} : vector<8x512xf32> to vector<8x128xf32>
    %cst_373 = arith.constant 5.000000e-01 : f32
    %997 = vector.broadcast %cst_373 : f32 to vector<8x128xf32>
    %998 = arith.mulf %997, %996 : vector<8x128xf32>
    %999 = math.tanh %998 : vector<8x128xf32>
    %cst_374 = arith.constant 5.000000e-01 : f32
    %1000 = vector.broadcast %cst_374 : f32 to vector<8x128xf32>
    %1001 = arith.mulf %1000, %999 : vector<8x128xf32>
    %cst_375 = arith.constant 5.000000e-01 : f32
    %1002 = vector.broadcast %cst_375 : f32 to vector<8x128xf32>
    %1003 = arith.addf %1001, %1002 : vector<8x128xf32>
    %1004 = vector.extract_strided_slice %995 {offsets = [0, 128], sizes = [8, 128], strides = [1, 1]} : vector<8x512xf32> to vector<8x128xf32>
    %cst_376 = arith.constant 5.000000e-01 : f32
    %1005 = vector.broadcast %cst_376 : f32 to vector<8x128xf32>
    %1006 = arith.mulf %1005, %1004 : vector<8x128xf32>
    %1007 = math.tanh %1006 : vector<8x128xf32>
    %cst_377 = arith.constant 5.000000e-01 : f32
    %1008 = vector.broadcast %cst_377 : f32 to vector<8x128xf32>
    %1009 = arith.mulf %1008, %1007 : vector<8x128xf32>
    %cst_378 = arith.constant 5.000000e-01 : f32
    %1010 = vector.broadcast %cst_378 : f32 to vector<8x128xf32>
    %1011 = arith.addf %1009, %1010 : vector<8x128xf32>
    %1012 = vector.extract_strided_slice %995 {offsets = [0, 256], sizes = [8, 128], strides = [1, 1]} : vector<8x512xf32> to vector<8x128xf32>
    %1013 = math.tanh %1012 : vector<8x128xf32>
    %1014 = vector.extract_strided_slice %995 {offsets = [0, 384], sizes = [8, 128], strides = [1, 1]} : vector<8x512xf32> to vector<8x128xf32>
    %cst_379 = arith.constant 5.000000e-01 : f32
    %1015 = vector.broadcast %cst_379 : f32 to vector<8x128xf32>
    %1016 = arith.mulf %1015, %1014 : vector<8x128xf32>
    %1017 = math.tanh %1016 : vector<8x128xf32>
    %cst_380 = arith.constant 5.000000e-01 : f32
    %1018 = vector.broadcast %cst_380 : f32 to vector<8x128xf32>
    %1019 = arith.mulf %1018, %1017 : vector<8x128xf32>
    %cst_381 = arith.constant 5.000000e-01 : f32
    %1020 = vector.broadcast %cst_381 : f32 to vector<8x128xf32>
    %1021 = arith.addf %1019, %1020 : vector<8x128xf32>
    %1022 = arith.mulf %1011, %964 : vector<8x128xf32>
    %1023 = arith.mulf %1003, %1013 : vector<8x128xf32>
    %1024 = arith.addf %1022, %1023 : vector<8x128xf32>
    %1025 = math.tanh %1024 : vector<8x128xf32>
    %1026 = arith.mulf %1021, %1025 : vector<8x128xf32>
    %1027 = arith.truncf %1026 : vector<8x128xf32> to vector<8x128xbf16>
    %1028 = arith.index_cast %c7_i32_363 : i32 to index
    %c0_382 = arith.constant 0 : index
    %c0_383 = arith.constant 0 : index
    %1029 = vector.load %arg9[%1028, %c0_382, %c0_383] : memref<8x8x128xbf16, #tpu.memory_space<vmem>>, vector<1x8x128xbf16>
    %1030 = vector.shape_cast %1029 : vector<1x8x128xbf16> to vector<8x128xbf16>
    %1031 = vector.shape_cast %1027 : vector<8x128xbf16> to vector<1x8x128xbf16>
    tpu.vector_store %arg9[%1028, %c0_382, %c0_383], %1031 {strides = array<i32>} : memref<8x8x128xbf16, #tpu.memory_space<vmem>>, vector<1x8x128xbf16>,
    %c8_i32_384 = arith.constant 8 : i32
    %c1_385 = arith.constant 1 : index
    %c0_386 = arith.constant 0 : index
    %c0_387 = arith.constant 0 : index
    %1032 = vector.load %arg12[%c1_385, %c0_386, %c0_387] : memref<2x8x128xf32, #tpu.memory_space<vmem>>, vector<1x8x128xf32>
    %1033 = vector.shape_cast %1032 : vector<1x8x128xf32> to vector<8x128xf32>
    %1034 = vector.shape_cast %1026 : vector<8x128xf32> to vector<1x8x128xf32>
    tpu.vector_store %arg12[%c1_385, %c0_386, %c0_387], %1034 {strides = array<i32>} : memref<2x8x128xf32, #tpu.memory_space<vmem>>, vector<1x8x128xf32>,
    %c1_388 = arith.constant 1 : index
    %c0_389 = arith.constant 0 : index
    %c0_390 = arith.constant 0 : index
    %1035 = vector.load %arg13[%c1_388, %c0_389, %c0_390] : memref<2x8x128xf32, #tpu.memory_space<vmem>>, vector<1x8x128xf32>
    %1036 = vector.shape_cast %1035 : vector<1x8x128xf32> to vector<8x128xf32>
    %1037 = vector.shape_cast %1024 : vector<8x128xf32> to vector<1x8x128xf32>
    tpu.vector_store %arg13[%c1_388, %c0_389, %c0_390], %1037 {strides = array<i32>} : memref<2x8x128xf32, #tpu.memory_space<vmem>>, vector<1x8x128xf32>,
    return
  }
  func.func @transform_0(%arg0: i32, %arg1: i32) -> (i32, i32, i32) {
    %c0_i32 = arith.constant 0 : i32
    %c0_i32_0 = arith.constant 0 : i32
    return %arg1, %arg0, %c0_i32 : i32, i32, i32
  }
  func.func @transform_1(%arg0: i32, %arg1: i32) -> (i32, i32, i32) {
    %c0_i32 = arith.constant 0 : i32
    %c0_i32_0 = arith.constant 0 : i32
    return %arg1, %arg0, %c0_i32 : i32, i32, i32
  }
  func.func @transform_2(%arg0: i32, %arg1: i32) -> (i32, i32, i32) {
    %c0_i32 = arith.constant 0 : i32
    %c0_i32_0 = arith.constant 0 : i32
    %c0_i32_1 = arith.constant 0 : i32
    %c0_i32_2 = arith.constant 0 : i32
    return %c0_i32, %c0_i32_0, %c0_i32_1 : i32, i32, i32
  }
  func.func @transform_3(%arg0: i32, %arg1: i32) -> (i32, i32, i32) {
    %c0_i32 = arith.constant 0 : i32
    %c0_i32_0 = arith.constant 0 : i32
    %c0_i32_1 = arith.constant 0 : i32
    %c0_i32_2 = arith.constant 0 : i32
    return %c0_i32, %c0_i32_0, %c0_i32_1 : i32, i32, i32
  }
  func.func @transform_4(%arg0: i32, %arg1: i32) -> (i32, i32, i32) {
    %c0_i32 = arith.constant 0 : i32
    %c0_i32_0 = arith.constant 0 : i32
    %c0_i32_1 = arith.constant 0 : i32
    %c0_i32_2 = arith.constant 0 : i32
    return %c0_i32, %c0_i32_0, %c0_i32_1 : i32, i32, i32
  }
  func.func @transform_5(%arg0: i32, %arg1: i32) -> (i32, i32, i32) {
    %c0_i32 = arith.constant 0 : i32
    %c0_i32_0 = arith.constant 0 : i32
    %c0_i32_1 = arith.constant 0 : i32
    %c0_i32_2 = arith.constant 0 : i32
    return %c0_i32, %c0_i32_0, %c0_i32_1 : i32, i32, i32
  }
  func.func @transform_6(%arg0: i32, %arg1: i32) -> (i32, i32, i32) {
    %c0_i32 = arith.constant 0 : i32
    %c0_i32_0 = arith.constant 0 : i32
    %c0_i32_1 = arith.constant 0 : i32
    %c0_i32_2 = arith.constant 0 : i32
    return %c0_i32, %c0_i32_0, %c0_i32_1 : i32, i32, i32
  }
  func.func @transform_7(%arg0: i32, %arg1: i32) -> (i32, i32, i32) {
    %c0_i32 = arith.constant 0 : i32
    %c0_i32_0 = arith.constant 0 : i32
    return %arg1, %arg0, %c0_i32 : i32, i32, i32
  }
}

module attributes {stable_mosaic.version = 11 : i64} {
  func.func @kernel(%arg0: i32, %arg1: i32, %arg2: memref<8x8x128xbf16, #tpu.memory_space<vmem>>, %arg3: memref<8x8x2xf32, #tpu.memory_space<vmem>>, %arg4: memref<2x128x640xbf16, #tpu.memory_space<vmem>>, %arg5: memref<2x2x128xf32, #tpu.memory_space<vmem>>, %arg6: memref<2x1x128xf32, #tpu.memory_space<vmem>>, %arg7: memref<2x128x512xbf16, #tpu.memory_space<vmem>>, %arg8: memref<2x1x512xf32, #tpu.memory_space<vmem>>, %arg9: memref<8x8x128xbf16, #tpu.memory_space<vmem>>, %arg10: memref<8x8x128xf32, #tpu.memory_space<vmem>>, %arg11: memref<8x8x128xf32, #tpu.memory_space<vmem>>, %arg12: memref<2x8x128xf32, #tpu.memory_space<vmem>>, %arg13: memref<2x8x128xf32, #tpu.memory_space<vmem>>) attributes {dimension_semantics = [#tpu.dimension_semantics<parallel>, #tpu.dimension_semantics<arbitrary>], iteration_bounds = array<i64: 1, 1>, scalar_prefetch = 0 : i64, scratch_operands = 4 : i64, tpu.core_type = #tpu.core_type<tc>, window_params = [{transform_indices = @transform_0, window_bounds = array<i64: 8, 8, 128>}, {transform_indices = @transform_1, window_bounds = array<i64: 8, 8, 2>}, {pipeline_mode = #tpu.pipeline_mode<synchronous>, transform_indices = @transform_2, window_bounds = array<i64: 2, 128, 640>}, {pipeline_mode = #tpu.pipeline_mode<synchronous>, transform_indices = @transform_3, window_bounds = array<i64: 2, 2, 128>}, {pipeline_mode = #tpu.pipeline_mode<synchronous>, transform_indices = @transform_4, window_bounds = array<i64: 2, 1, 128>}, {pipeline_mode = #tpu.pipeline_mode<synchronous>, transform_indices = @transform_5, window_bounds = array<i64: 2, 128, 512>}, {pipeline_mode = #tpu.pipeline_mode<synchronous>, transform_indices = @transform_6, window_bounds = array<i64: 2, 1, 512>}, {transform_indices = @transform_7, window_bounds = array<i64: 8, 8, 128>}]} {
    %c0_i32 = arith.constant 0 : i32
    %0 = arith.cmpi eq, %arg1, %c0_i32 : i32
    %1 = arith.extui %0 : i1 to i32
    %c0_i32_0 = arith.constant 0 : i32
    %2 = arith.cmpi ne, %1, %c0_i32_0 : i32
    scf.if %2 {
      %cst_391 = arith.constant 0.000000e+00 : f32
      %1038 = vector.broadcast %cst_391 : f32 to vector<2x8x128xf32>
      %c0_392 = arith.constant 0 : index
      %c0_393 = arith.constant 0 : index
      %c0_394 = arith.constant 0 : index
      %1039 = vector.load %arg12[%c0_392, %c0_393, %c0_394] : memref<2x8x128xf32, #tpu.memory_space<vmem>>, vector<2x8x128xf32>
      tpu.vector_store %arg12[%c0_392, %c0_393, %c0_394], %1038 {strides = array<i32>} : memref<2x8x128xf32, #tpu.memory_space<vmem>>, vector<2x8x128xf32>,
      %cst_395 = arith.constant 0.000000e+00 : f32
      %1040 = vector.broadcast %cst_395 : f32 to vector<2x8x128xf32>
      %c0_396 = arith.constant 0 : index
      %c0_397 = arith.constant 0 : index
      %c0_398 = arith.constant 0 : index
      %1041 = vector.load %arg13[%c0_396, %c0_397, %c0_398] : memref<2x8x128xf32, #tpu.memory_space<vmem>>, vector<2x8x128xf32>
      tpu.vector_store %arg13[%c0_396, %c0_397, %c0_398], %1040 {strides = array<i32>} : memref<2x8x128xf32, #tpu.memory_space<vmem>>, vector<2x8x128xf32>,
    } else {
    }
    %c0 = arith.constant 0 : index
    %c0_1 = arith.constant 0 : index
    %c0_2 = arith.constant 0 : index
    %3 = vector.load %arg3[%c0, %c0_1, %c0_2] : memref<8x8x2xf32, #tpu.memory_space<vmem>>, vector<8x8x2xf32>
    %c0_3 = arith.constant 0 : index
    %c0_4 = arith.constant 0 : index
    %c0_5 = arith.constant 0 : index
    %4 = vector.load %arg4[%c0_3, %c0_4, %c0_5] : memref<2x128x640xbf16, #tpu.memory_space<vmem>>, vector<1x128x640xbf16>
    %5 = vector.shape_cast %4 : vector<1x128x640xbf16> to vector<128x640xbf16>
    %c0_6 = arith.constant 0 : index
    %c0_7 = arith.constant 0 : index
    %c0_8 = arith.constant 0 : index
    %6 = vector.load %arg7[%c0_6, %c0_7, %c0_8] : memref<2x128x512xbf16, #tpu.memory_space<vmem>>, vector<1x128x512xbf16>
    %7 = vector.shape_cast %6 : vector<1x128x512xbf16> to vector<128x512xbf16>
    %c0_9 = arith.constant 0 : index
    %c0_10 = arith.constant 0 : index
    %c0_11 = arith.constant 0 : index
    %8 = vector.load %arg5[%c0_9, %c0_10, %c0_11] : memref<2x2x128xf32, #tpu.memory_space<vmem>>, vector<1x2x128xf32>
    %9 = vector.shape_cast %8 : vector<1x2x128xf32> to vector<2x128xf32>
    %c0_12 = arith.constant 0 : index
    %c0_13 = arith.constant 0 : index
    %c0_14 = arith.constant 0 : index
    %10 = vector.load %arg6[%c0_12, %c0_13, %c0_14] : memref<2x1x128xf32, #tpu.memory_space<vmem>>, vector<1x1x128xf32>
    %11 = vector.shape_cast %10 : vector<1x1x128xf32> to vector<1x128xf32>
    %c0_15 = arith.constant 0 : index
    %c0_16 = arith.constant 0 : index
    %c0_17 = arith.constant 0 : index
    %12 = vector.load %arg8[%c0_15, %c0_16, %c0_17] : memref<2x1x512xf32, #tpu.memory_space<vmem>>, vector<1x1x512xf32>
    %13 = vector.shape_cast %12 : vector<1x1x512xf32> to vector<1x512xf32>
    %14 = vector.extract_strided_slice %3 {offsets = [0, 0, 0], sizes = [8, 8, 1], strides = [1, 1, 1]} : vector<8x8x2xf32> to vector<8x8x1xf32>
    %15 = vector.extract_strided_slice %9 {offsets = [0, 0], sizes = [1, 128], strides = [1, 1]} : vector<2x128xf32> to vector<1x128xf32>
    %16 = vector.shape_cast %15 : vector<1x128xf32> to vector<1x1x128xf32>
    %17 = vector.broadcast %14 : vector<8x8x1xf32> to vector<8x8x128xf32>
    %18 = vector.broadcast %16 : vector<1x1x128xf32> to vector<8x8x128xf32>
    %19 = arith.mulf %17, %18 : vector<8x8x128xf32>
    %20 = vector.extract_strided_slice %3 {offsets = [0, 0, 1], sizes = [8, 8, 1], strides = [1, 1, 1]} : vector<8x8x2xf32> to vector<8x8x1xf32>
    %21 = vector.extract_strided_slice %9 {offsets = [1, 0], sizes = [1, 128], strides = [1, 1]} : vector<2x128xf32> to vector<1x128xf32>
    %22 = vector.shape_cast %21 : vector<1x128xf32> to vector<1x1x128xf32>
    %23 = vector.broadcast %20 : vector<8x8x1xf32> to vector<8x8x128xf32>
    %24 = vector.broadcast %22 : vector<1x1x128xf32> to vector<8x8x128xf32>
    %25 = arith.mulf %23, %24 : vector<8x8x128xf32>
    %26 = arith.addf %19, %25 : vector<8x8x128xf32>
    %27 = vector.shape_cast %11 : vector<1x128xf32> to vector<1x1x128xf32>
    %28 = vector.broadcast %27 : vector<1x1x128xf32> to vector<8x8x128xf32>
    %29 = arith.addf %26, %28 : vector<8x8x128xf32>
    %c0_18 = arith.constant 0 : index
    %c0_19 = arith.constant 0 : index
    %c0_20 = arith.constant 0 : index
    %30 = vector.load %arg11[%c0_18, %c0_19, %c0_20] : memref<8x8x128xf32, #tpu.memory_space<vmem>>, vector<8x8x128xf32>
    tpu.vector_store %arg11[%c0_18, %c0_19, %c0_20], %29 {strides = array<i32>} : memref<8x8x128xf32, #tpu.memory_space<vmem>>, vector<8x8x128xf32>,
    %c0_21 = arith.constant 0 : index
    %c0_22 = arith.constant 0 : index
    %c0_23 = arith.constant 0 : index
    %31 = vector.load %arg12[%c0_21, %c0_22, %c0_23] : memref<2x8x128xf32, #tpu.memory_space<vmem>>, vector<1x8x128xf32>
    %32 = vector.shape_cast %31 : vector<1x8x128xf32> to vector<8x128xf32>
    %c0_24 = arith.constant 0 : index
    %c0_25 = arith.constant 0 : index
    %c0_26 = arith.constant 0 : index
    %33 = vector.load %arg13[%c0_24, %c0_25, %c0_26] : memref<2x8x128xf32, #tpu.memory_space<vmem>>, vector<1x8x128xf32>
    %34 = vector.shape_cast %33 : vector<1x8x128xf32> to vector<8x128xf32>
    %c0_i32_27 = arith.constant 0 : i32
    %35 = arith.index_cast %c0_i32_27 : i32 to index
    %c0_28 = arith.constant 0 : index
    %c0_29 = arith.constant 0 : index
    %36 = vector.load %arg2[%35, %c0_28, %c0_29] : memref<8x8x128xbf16, #tpu.memory_space<vmem>>, vector<1x8x128xbf16>
    %37 = vector.shape_cast %36 : vector<1x8x128xbf16> to vector<8x128xbf16>
    %38 = arith.extf %37 : vector<8x128xbf16> to vector<8x128xf32>
    %39 = arith.truncf %32 : vector<8x128xf32> to vector<8x128xbf16>
    %cst = arith.constant dense<0.000000e+00> : vector<8x640xf32>
    %40 = tpu.matmul %39, %5, %cst {dimension_numbers = #tpu.dot_dimension_numbers<[1], [0], [0], [1], [0, 0, 1, 1], [], []>} : vector<8x128xbf16>, vector<128x640xbf16>, vector<8x640xf32> -> vector<8x640xf32>
    %41 = vector.extract_strided_slice %40 {offsets = [0, 0], sizes = [8, 128], strides = [1, 1]} : vector<8x640xf32> to vector<8x128xf32>
    %42 = arith.index_cast %c0_i32_27 : i32 to index
    %c0_30 = arith.constant 0 : index
    %c0_31 = arith.constant 0 : index
    %43 = vector.load %arg11[%42, %c0_30, %c0_31] : memref<8x8x128xf32, #tpu.memory_space<vmem>>, vector<1x8x128xf32>
    %44 = vector.shape_cast %43 : vector<1x8x128xf32> to vector<8x128xf32>
    %45 = arith.addf %41, %44 : vector<8x128xf32>
    %cst_32 = arith.constant 5.000000e-01 : f32
    %46 = vector.broadcast %cst_32 : f32 to vector<8x128xf32>
    %47 = arith.mulf %46, %45 : vector<8x128xf32>
    %48 = math.tanh %47 : vector<8x128xf32>
    %cst_33 = arith.constant 5.000000e-01 : f32
    %49 = vector.broadcast %cst_33 : f32 to vector<8x128xf32>
    %50 = arith.mulf %49, %48 : vector<8x128xf32>
    %cst_34 = arith.constant 5.000000e-01 : f32
    %51 = vector.broadcast %cst_34 : f32 to vector<8x128xf32>
    %52 = arith.addf %50, %51 : vector<8x128xf32>
    %53 = arith.mulf %52, %38 : vector<8x128xf32>
    %54 = vector.extract_strided_slice %40 {offsets = [0, 128], sizes = [8, 512], strides = [1, 1]} : vector<8x640xf32> to vector<8x512xf32>
    %55 = arith.truncf %53 : vector<8x128xf32> to vector<8x128xbf16>
    %cst_35 = arith.constant dense<0.000000e+00> : vector<8x512xf32>
    %56 = tpu.matmul %55, %7, %cst_35 {dimension_numbers = #tpu.dot_dimension_numbers<[1], [0], [0], [1], [0, 0, 1, 1], [], []>} : vector<8x128xbf16>, vector<128x512xbf16>, vector<8x512xf32> -> vector<8x512xf32>
    %57 = arith.addf %54, %56 : vector<8x512xf32>
    %58 = vector.broadcast %13 : vector<1x512xf32> to vector<8x512xf32>
    %59 = arith.addf %57, %58 : vector<8x512xf32>
    %60 = vector.extract_strided_slice %59 {offsets = [0, 0], sizes = [8, 128], strides = [1, 1]} : vector<8x512xf32> to vector<8x128xf32>
    %cst_36 = arith.constant 5.000000e-01 : f32
    %61 = vector.broadcast %cst_36 : f32 to vector<8x128xf32>
    %62 = arith.mulf %61, %60 : vector<8x128xf32>
    %63 = math.tanh %62 : vector<8x128xf32>
    %cst_37 = arith.constant 5.000000e-01 : f32
    %64 = vector.broadcast %cst_37 : f32 to vector<8x128xf32>
    %65 = arith.mulf %64, %63 : vector<8x128xf32>
    %cst_38 = arith.constant 5.000000e-01 : f32
    %66 = vector.broadcast %cst_38 : f32 to vector<8x128xf32>
    %67 = arith.addf %65, %66 : vector<8x128xf32>
    %68 = vector.extract_strided_slice %59 {offsets = [0, 128], sizes = [8, 128], strides = [1, 1]} : vector<8x512xf32> to vector<8x128xf32>
    %cst_39 = arith.constant 5.000000e-01 : f32
    %69 = vector.broadcast %cst_39 : f32 to vector<8x128xf32>
    %70 = arith.mulf %69, %68 : vector<8x128xf32>
    %71 = math.tanh %70 : vector<8x128xf32>
    %cst_40 = arith.constant 5.000000e-01 : f32
    %72 = vector.broadcast %cst_40 : f32 to vector<8x128xf32>
    %73 = arith.mulf %72, %71 : vector<8x128xf32>
    %cst_41 = arith.constant 5.000000e-01 : f32
    %74 = vector.broadcast %cst_41 : f32 to vector<8x128xf32>
    %75 = arith.addf %73, %74 : vector<8x128xf32>
    %76 = vector.extract_strided_slice %59 {offsets = [0, 256], sizes = [8, 128], strides = [1, 1]} : vector<8x512xf32> to vector<8x128xf32>
    %77 = math.tanh %76 : vector<8x128xf32>
    %78 = vector.extract_strided_slice %59 {offsets = [0, 384], sizes = [8, 128], strides = [1, 1]} : vector<8x512xf32> to vector<8x128xf32>
    %cst_42 = arith.constant 5.000000e-01 : f32
    %79 = vector.broadcast %cst_42 : f32 to vector<8x128xf32>
    %80 = arith.mulf %79, %78 : vector<8x128xf32>
    %81 = math.tanh %80 : vector<8x128xf32>
    %cst_43 = arith.constant 5.000000e-01 : f32
    %82 = vector.broadcast %cst_43 : f32 to vector<8x128xf32>
    %83 = arith.mulf %82, %81 : vector<8x128xf32>
    %cst_44 = arith.constant 5.000000e-01 : f32
    %84 = vector.broadcast %cst_44 : f32 to vector<8x128xf32>
    %85 = arith.addf %83, %84 : vector<8x128xf32>
    %86 = arith.mulf %75, %34 : vector<8x128xf32>
    %87 = arith.mulf %67, %77 : vector<8x128xf32>
    %88 = arith.addf %86, %87 : vector<8x128xf32>
    %89 = math.tanh %88 : vector<8x128xf32>
    %90 = arith.mulf %85, %89 : vector<8x128xf32>
    %91 = arith.index_cast %c0_i32_27 : i32 to index
    %c0_45 = arith.constant 0 : index
    %c0_46 = arith.constant 0 : index
    %92 = vector.load %arg10[%91, %c0_45, %c0_46] : memref<8x8x128xf32, #tpu.memory_space<vmem>>, vector<1x8x128xf32>
    %93 = vector.shape_cast %92 : vector<1x8x128xf32> to vector<8x128xf32>
    %94 = vector.shape_cast %90 : vector<8x128xf32> to vector<1x8x128xf32>
    tpu.vector_store %arg10[%91, %c0_45, %c0_46], %94 {strides = array<i32>} : memref<8x8x128xf32, #tpu.memory_space<vmem>>, vector<1x8x128xf32>,
    %c1_i32 = arith.constant 1 : i32
    %95 = arith.index_cast %c1_i32 : i32 to index
    %c0_47 = arith.constant 0 : index
    %c0_48 = arith.constant 0 : index
    %96 = vector.load %arg2[%95, %c0_47, %c0_48] : memref<8x8x128xbf16, #tpu.memory_space<vmem>>, vector<1x8x128xbf16>
    %97 = vector.shape_cast %96 : vector<1x8x128xbf16> to vector<8x128xbf16>
    %98 = arith.extf %97 : vector<8x128xbf16> to vector<8x128xf32>
    %99 = arith.truncf %90 : vector<8x128xf32> to vector<8x128xbf16>
    %cst_49 = arith.constant dense<0.000000e+00> : vector<8x640xf32>
    %100 = tpu.matmul %99, %5, %cst_49 {dimension_numbers = #tpu.dot_dimension_numbers<[1], [0], [0], [1], [0, 0, 1, 1], [], []>} : vector<8x128xbf16>, vector<128x640xbf16>, vector<8x640xf32> -> vector<8x640xf32>
    %101 = vector.extract_strided_slice %100 {offsets = [0, 0], sizes = [8, 128], strides = [1, 1]} : vector<8x640xf32> to vector<8x128xf32>
    %102 = arith.index_cast %c1_i32 : i32 to index
    %c0_50 = arith.constant 0 : index
    %c0_51 = arith.constant 0 : index
    %103 = vector.load %arg11[%102, %c0_50, %c0_51] : memref<8x8x128xf32, #tpu.memory_space<vmem>>, vector<1x8x128xf32>
    %104 = vector.shape_cast %103 : vector<1x8x128xf32> to vector<8x128xf32>
    %105 = arith.addf %101, %104 : vector<8x128xf32>
    %cst_52 = arith.constant 5.000000e-01 : f32
    %106 = vector.broadcast %cst_52 : f32 to vector<8x128xf32>
    %107 = arith.mulf %106, %105 : vector<8x128xf32>
    %108 = math.tanh %107 : vector<8x128xf32>
    %cst_53 = arith.constant 5.000000e-01 : f32
    %109 = vector.broadcast %cst_53 : f32 to vector<8x128xf32>
    %110 = arith.mulf %109, %108 : vector<8x128xf32>
    %cst_54 = arith.constant 5.000000e-01 : f32
    %111 = vector.broadcast %cst_54 : f32 to vector<8x128xf32>
    %112 = arith.addf %110, %111 : vector<8x128xf32>
    %113 = arith.mulf %112, %98 : vector<8x128xf32>
    %114 = vector.extract_strided_slice %100 {offsets = [0, 128], sizes = [8, 512], strides = [1, 1]} : vector<8x640xf32> to vector<8x512xf32>
    %115 = arith.truncf %113 : vector<8x128xf32> to vector<8x128xbf16>
    %cst_55 = arith.constant dense<0.000000e+00> : vector<8x512xf32>
    %116 = tpu.matmul %115, %7, %cst_55 {dimension_numbers = #tpu.dot_dimension_numbers<[1], [0], [0], [1], [0, 0, 1, 1], [], []>} : vector<8x128xbf16>, vector<128x512xbf16>, vector<8x512xf32> -> vector<8x512xf32>
    %117 = arith.addf %114, %116 : vector<8x512xf32>
    %118 = vector.broadcast %13 : vector<1x512xf32> to vector<8x512xf32>
    %119 = arith.addf %117, %118 : vector<8x512xf32>
    %120 = vector.extract_strided_slice %119 {offsets = [0, 0], sizes = [8, 128], strides = [1, 1]} : vector<8x512xf32> to vector<8x128xf32>
    %cst_56 = arith.constant 5.000000e-01 : f32
    %121 = vector.broadcast %cst_56 : f32 to vector<8x128xf32>
    %122 = arith.mulf %121, %120 : vector<8x128xf32>
    %123 = math.tanh %122 : vector<8x128xf32>
    %cst_57 = arith.constant 5.000000e-01 : f32
    %124 = vector.broadcast %cst_57 : f32 to vector<8x128xf32>
    %125 = arith.mulf %124, %123 : vector<8x128xf32>
    %cst_58 = arith.constant 5.000000e-01 : f32
    %126 = vector.broadcast %cst_58 : f32 to vector<8x128xf32>
    %127 = arith.addf %125, %126 : vector<8x128xf32>
    %128 = vector.extract_strided_slice %119 {offsets = [0, 128], sizes = [8, 128], strides = [1, 1]} : vector<8x512xf32> to vector<8x128xf32>
    %cst_59 = arith.constant 5.000000e-01 : f32
    %129 = vector.broadcast %cst_59 : f32 to vector<8x128xf32>
    %130 = arith.mulf %129, %128 : vector<8x128xf32>
    %131 = math.tanh %130 : vector<8x128xf32>
    %cst_60 = arith.constant 5.000000e-01 : f32
    %132 = vector.broadcast %cst_60 : f32 to vector<8x128xf32>
    %133 = arith.mulf %132, %131 : vector<8x128xf32>
    %cst_61 = arith.constant 5.000000e-01 : f32
    %134 = vector.broadcast %cst_61 : f32 to vector<8x128xf32>
    %135 = arith.addf %133, %134 : vector<8x128xf32>
    %136 = vector.extract_strided_slice %119 {offsets = [0, 256], sizes = [8, 128], strides = [1, 1]} : vector<8x512xf32> to vector<8x128xf32>
    %137 = math.tanh %136 : vector<8x128xf32>
    %138 = vector.extract_strided_slice %119 {offsets = [0, 384], sizes = [8, 128], strides = [1, 1]} : vector<8x512xf32> to vector<8x128xf32>
    %cst_62 = arith.constant 5.000000e-01 : f32
    %139 = vector.broadcast %cst_62 : f32 to vector<8x128xf32>
    %140 = arith.mulf %139, %138 : vector<8x128xf32>
    %141 = math.tanh %140 : vector<8x128xf32>
    %cst_63 = arith.constant 5.000000e-01 : f32
    %142 = vector.broadcast %cst_63 : f32 to vector<8x128xf32>
    %143 = arith.mulf %142, %141 : vector<8x128xf32>
    %cst_64 = arith.constant 5.000000e-01 : f32
    %144 = vector.broadcast %cst_64 : f32 to vector<8x128xf32>
    %145 = arith.addf %143, %144 : vector<8x128xf32>
    %146 = arith.mulf %135, %88 : vector<8x128xf32>
    %147 = arith.mulf %127, %137 : vector<8x128xf32>
    %148 = arith.addf %146, %147 : vector<8x128xf32>
    %149 = math.tanh %148 : vector<8x128xf32>
    %150 = arith.mulf %145, %149 : vector<8x128xf32>
    %151 = arith.index_cast %c1_i32 : i32 to index
    %c0_65 = arith.constant 0 : index
    %c0_66 = arith.constant 0 : index
    %152 = vector.load %arg10[%151, %c0_65, %c0_66] : memref<8x8x128xf32, #tpu.memory_space<vmem>>, vector<1x8x128xf32>
    %153 = vector.shape_cast %152 : vector<1x8x128xf32> to vector<8x128xf32>
    %154 = vector.shape_cast %150 : vector<8x128xf32> to vector<1x8x128xf32>
    tpu.vector_store %arg10[%151, %c0_65, %c0_66], %154 {strides = array<i32>} : memref<8x8x128xf32, #tpu.memory_space<vmem>>, vector<1x8x128xf32>,
    %c2_i32 = arith.constant 2 : i32
    %155 = arith.index_cast %c2_i32 : i32 to index
    %c0_67 = arith.constant 0 : index
    %c0_68 = arith.constant 0 : index
    %156 = vector.load %arg2[%155, %c0_67, %c0_68] : memref<8x8x128xbf16, #tpu.memory_space<vmem>>, vector<1x8x128xbf16>
    %157 = vector.shape_cast %156 : vector<1x8x128xbf16> to vector<8x128xbf16>
    %158 = arith.extf %157 : vector<8x128xbf16> to vector<8x128xf32>
    %159 = arith.truncf %150 : vector<8x128xf32> to vector<8x128xbf16>
    %cst_69 = arith.constant dense<0.000000e+00> : vector<8x640xf32>
    %160 = tpu.matmul %159, %5, %cst_69 {dimension_numbers = #tpu.dot_dimension_numbers<[1], [0], [0], [1], [0, 0, 1, 1], [], []>} : vector<8x128xbf16>, vector<128x640xbf16>, vector<8x640xf32> -> vector<8x640xf32>
    %161 = vector.extract_strided_slice %160 {offsets = [0, 0], sizes = [8, 128], strides = [1, 1]} : vector<8x640xf32> to vector<8x128xf32>
    %162 = arith.index_cast %c2_i32 : i32 to index
    %c0_70 = arith.constant 0 : index
    %c0_71 = arith.constant 0 : index
    %163 = vector.load %arg11[%162, %c0_70, %c0_71] : memref<8x8x128xf32, #tpu.memory_space<vmem>>, vector<1x8x128xf32>
    %164 = vector.shape_cast %163 : vector<1x8x128xf32> to vector<8x128xf32>
    %165 = arith.addf %161, %164 : vector<8x128xf32>
    %cst_72 = arith.constant 5.000000e-01 : f32
    %166 = vector.broadcast %cst_72 : f32 to vector<8x128xf32>
    %167 = arith.mulf %166, %165 : vector<8x128xf32>
    %168 = math.tanh %167 : vector<8x128xf32>
    %cst_73 = arith.constant 5.000000e-01 : f32
    %169 = vector.broadcast %cst_73 : f32 to vector<8x128xf32>
    %170 = arith.mulf %169, %168 : vector<8x128xf32>
    %cst_74 = arith.constant 5.000000e-01 : f32
    %171 = vector.broadcast %cst_74 : f32 to vector<8x128xf32>
    %172 = arith.addf %170, %171 : vector<8x128xf32>
    %173 = arith.mulf %172, %158 : vector<8x128xf32>
    %174 = vector.extract_strided_slice %160 {offsets = [0, 128], sizes = [8, 512], strides = [1, 1]} : vector<8x640xf32> to vector<8x512xf32>
    %175 = arith.truncf %173 : vector<8x128xf32> to vector<8x128xbf16>
    %cst_75 = arith.constant dense<0.000000e+00> : vector<8x512xf32>
    %176 = tpu.matmul %175, %7, %cst_75 {dimension_numbers = #tpu.dot_dimension_numbers<[1], [0], [0], [1], [0, 0, 1, 1], [], []>} : vector<8x128xbf16>, vector<128x512xbf16>, vector<8x512xf32> -> vector<8x512xf32>
    %177 = arith.addf %174, %176 : vector<8x512xf32>
    %178 = vector.broadcast %13 : vector<1x512xf32> to vector<8x512xf32>
    %179 = arith.addf %177, %178 : vector<8x512xf32>
    %180 = vector.extract_strided_slice %179 {offsets = [0, 0], sizes = [8, 128], strides = [1, 1]} : vector<8x512xf32> to vector<8x128xf32>
    %cst_76 = arith.constant 5.000000e-01 : f32
    %181 = vector.broadcast %cst_76 : f32 to vector<8x128xf32>
    %182 = arith.mulf %181, %180 : vector<8x128xf32>
    %183 = math.tanh %182 : vector<8x128xf32>
    %cst_77 = arith.constant 5.000000e-01 : f32
    %184 = vector.broadcast %cst_77 : f32 to vector<8x128xf32>
    %185 = arith.mulf %184, %183 : vector<8x128xf32>
    %cst_78 = arith.constant 5.000000e-01 : f32
    %186 = vector.broadcast %cst_78 : f32 to vector<8x128xf32>
    %187 = arith.addf %185, %186 : vector<8x128xf32>
    %188 = vector.extract_strided_slice %179 {offsets = [0, 128], sizes = [8, 128], strides = [1, 1]} : vector<8x512xf32> to vector<8x128xf32>
    %cst_79 = arith.constant 5.000000e-01 : f32
    %189 = vector.broadcast %cst_79 : f32 to vector<8x128xf32>
    %190 = arith.mulf %189, %188 : vector<8x128xf32>
    %191 = math.tanh %190 : vector<8x128xf32>
    %cst_80 = arith.constant 5.000000e-01 : f32
    %192 = vector.broadcast %cst_80 : f32 to vector<8x128xf32>
    %193 = arith.mulf %192, %191 : vector<8x128xf32>
    %cst_81 = arith.constant 5.000000e-01 : f32
    %194 = vector.broadcast %cst_81 : f32 to vector<8x128xf32>
    %195 = arith.addf %193, %194 : vector<8x128xf32>
    %196 = vector.extract_strided_slice %179 {offsets = [0, 256], sizes = [8, 128], strides = [1, 1]} : vector<8x512xf32> to vector<8x128xf32>
    %197 = math.tanh %196 : vector<8x128xf32>
    %198 = vector.extract_strided_slice %179 {offsets = [0, 384], sizes = [8, 128], strides = [1, 1]} : vector<8x512xf32> to vector<8x128xf32>
    %cst_82 = arith.constant 5.000000e-01 : f32
    %199 = vector.broadcast %cst_82 : f32 to vector<8x128xf32>
    %200 = arith.mulf %199, %198 : vector<8x128xf32>
    %201 = math.tanh %200 : vector<8x128xf32>
    %cst_83 = arith.constant 5.000000e-01 : f32
    %202 = vector.broadcast %cst_83 : f32 to vector<8x128xf32>
    %203 = arith.mulf %202, %201 : vector<8x128xf32>
    %cst_84 = arith.constant 5.000000e-01 : f32
    %204 = vector.broadcast %cst_84 : f32 to vector<8x128xf32>
    %205 = arith.addf %203, %204 : vector<8x128xf32>
    %206 = arith.mulf %195, %148 : vector<8x128xf32>
    %207 = arith.mulf %187, %197 : vector<8x128xf32>
    %208 = arith.addf %206, %207 : vector<8x128xf32>
    %209 = math.tanh %208 : vector<8x128xf32>
    %210 = arith.mulf %205, %209 : vector<8x128xf32>
    %211 = arith.index_cast %c2_i32 : i32 to index
    %c0_85 = arith.constant 0 : index
    %c0_86 = arith.constant 0 : index
    %212 = vector.load %arg10[%211, %c0_85, %c0_86] : memref<8x8x128xf32, #tpu.memory_space<vmem>>, vector<1x8x128xf32>
    %213 = vector.shape_cast %212 : vector<1x8x128xf32> to vector<8x128xf32>
    %214 = vector.shape_cast %210 : vector<8x128xf32> to vector<1x8x128xf32>
    tpu.vector_store %arg10[%211, %c0_85, %c0_86], %214 {strides = array<i32>} : memref<8x8x128xf32, #tpu.memory_space<vmem>>, vector<1x8x128xf32>,
    %c3_i32 = arith.constant 3 : i32
    %215 = arith.index_cast %c3_i32 : i32 to index
    %c0_87 = arith.constant 0 : index
    %c0_88 = arith.constant 0 : index
    %216 = vector.load %arg2[%215, %c0_87, %c0_88] : memref<8x8x128xbf16, #tpu.memory_space<vmem>>, vector<1x8x128xbf16>
    %217 = vector.shape_cast %216 : vector<1x8x128xbf16> to vector<8x128xbf16>
    %218 = arith.extf %217 : vector<8x128xbf16> to vector<8x128xf32>
    %219 = arith.truncf %210 : vector<8x128xf32> to vector<8x128xbf16>
    %cst_89 = arith.constant dense<0.000000e+00> : vector<8x640xf32>
    %220 = tpu.matmul %219, %5, %cst_89 {dimension_numbers = #tpu.dot_dimension_numbers<[1], [0], [0], [1], [0, 0, 1, 1], [], []>} : vector<8x128xbf16>, vector<128x640xbf16>, vector<8x640xf32> -> vector<8x640xf32>
    %221 = vector.extract_strided_slice %220 {offsets = [0, 0], sizes = [8, 128], strides = [1, 1]} : vector<8x640xf32> to vector<8x128xf32>
    %222 = arith.index_cast %c3_i32 : i32 to index
    %c0_90 = arith.constant 0 : index
    %c0_91 = arith.constant 0 : index
    %223 = vector.load %arg11[%222, %c0_90, %c0_91] : memref<8x8x128xf32, #tpu.memory_space<vmem>>, vector<1x8x128xf32>
    %224 = vector.shape_cast %223 : vector<1x8x128xf32> to vector<8x128xf32>
    %225 = arith.addf %221, %224 : vector<8x128xf32>
    %cst_92 = arith.constant 5.000000e-01 : f32
    %226 = vector.broadcast %cst_92 : f32 to vector<8x128xf32>
    %227 = arith.mulf %226, %225 : vector<8x128xf32>
    %228 = math.tanh %227 : vector<8x128xf32>
    %cst_93 = arith.constant 5.000000e-01 : f32
    %229 = vector.broadcast %cst_93 : f32 to vector<8x128xf32>
    %230 = arith.mulf %229, %228 : vector<8x128xf32>
    %cst_94 = arith.constant 5.000000e-01 : f32
    %231 = vector.broadcast %cst_94 : f32 to vector<8x128xf32>
    %232 = arith.addf %230, %231 : vector<8x128xf32>
    %233 = arith.mulf %232, %218 : vector<8x128xf32>
    %234 = vector.extract_strided_slice %220 {offsets = [0, 128], sizes = [8, 512], strides = [1, 1]} : vector<8x640xf32> to vector<8x512xf32>
    %235 = arith.truncf %233 : vector<8x128xf32> to vector<8x128xbf16>
    %cst_95 = arith.constant dense<0.000000e+00> : vector<8x512xf32>
    %236 = tpu.matmul %235, %7, %cst_95 {dimension_numbers = #tpu.dot_dimension_numbers<[1], [0], [0], [1], [0, 0, 1, 1], [], []>} : vector<8x128xbf16>, vector<128x512xbf16>, vector<8x512xf32> -> vector<8x512xf32>
    %237 = arith.addf %234, %236 : vector<8x512xf32>
    %238 = vector.broadcast %13 : vector<1x512xf32> to vector<8x512xf32>
    %239 = arith.addf %237, %238 : vector<8x512xf32>
    %240 = vector.extract_strided_slice %239 {offsets = [0, 0], sizes = [8, 128], strides = [1, 1]} : vector<8x512xf32> to vector<8x128xf32>
    %cst_96 = arith.constant 5.000000e-01 : f32
    %241 = vector.broadcast %cst_96 : f32 to vector<8x128xf32>
    %242 = arith.mulf %241, %240 : vector<8x128xf32>
    %243 = math.tanh %242 : vector<8x128xf32>
    %cst_97 = arith.constant 5.000000e-01 : f32
    %244 = vector.broadcast %cst_97 : f32 to vector<8x128xf32>
    %245 = arith.mulf %244, %243 : vector<8x128xf32>
    %cst_98 = arith.constant 5.000000e-01 : f32
    %246 = vector.broadcast %cst_98 : f32 to vector<8x128xf32>
    %247 = arith.addf %245, %246 : vector<8x128xf32>
    %248 = vector.extract_strided_slice %239 {offsets = [0, 128], sizes = [8, 128], strides = [1, 1]} : vector<8x512xf32> to vector<8x128xf32>
    %cst_99 = arith.constant 5.000000e-01 : f32
    %249 = vector.broadcast %cst_99 : f32 to vector<8x128xf32>
    %250 = arith.mulf %249, %248 : vector<8x128xf32>
    %251 = math.tanh %250 : vector<8x128xf32>
    %cst_100 = arith.constant 5.000000e-01 : f32
    %252 = vector.broadcast %cst_100 : f32 to vector<8x128xf32>
    %253 = arith.mulf %252, %251 : vector<8x128xf32>
    %cst_101 = arith.constant 5.000000e-01 : f32
    %254 = vector.broadcast %cst_101 : f32 to vector<8x128xf32>
    %255 = arith.addf %253, %254 : vector<8x128xf32>
    %256 = vector.extract_strided_slice %239 {offsets = [0, 256], sizes = [8, 128], strides = [1, 1]} : vector<8x512xf32> to vector<8x128xf32>
    %257 = math.tanh %256 : vector<8x128xf32>
    %258 = vector.extract_strided_slice %239 {offsets = [0, 384], sizes = [8, 128], strides = [1, 1]} : vector<8x512xf32> to vector<8x128xf32>
    %cst_102 = arith.constant 5.000000e-01 : f32
    %259 = vector.broadcast %cst_102 : f32 to vector<8x128xf32>
    %260 = arith.mulf %259, %258 : vector<8x128xf32>
    %261 = math.tanh %260 : vector<8x128xf32>
    %cst_103 = arith.constant 5.000000e-01 : f32
    %262 = vector.broadcast %cst_103 : f32 to vector<8x128xf32>
    %263 = arith.mulf %262, %261 : vector<8x128xf32>
    %cst_104 = arith.constant 5.000000e-01 : f32
    %264 = vector.broadcast %cst_104 : f32 to vector<8x128xf32>
    %265 = arith.addf %263, %264 : vector<8x128xf32>
    %266 = arith.mulf %255, %208 : vector<8x128xf32>
    %267 = arith.mulf %247, %257 : vector<8x128xf32>
    %268 = arith.addf %266, %267 : vector<8x128xf32>
    %269 = math.tanh %268 : vector<8x128xf32>
    %270 = arith.mulf %265, %269 : vector<8x128xf32>
    %271 = arith.index_cast %c3_i32 : i32 to index
    %c0_105 = arith.constant 0 : index
    %c0_106 = arith.constant 0 : index
    %272 = vector.load %arg10[%271, %c0_105, %c0_106] : memref<8x8x128xf32, #tpu.memory_space<vmem>>, vector<1x8x128xf32>
    %273 = vector.shape_cast %272 : vector<1x8x128xf32> to vector<8x128xf32>
    %274 = vector.shape_cast %270 : vector<8x128xf32> to vector<1x8x128xf32>
    tpu.vector_store %arg10[%271, %c0_105, %c0_106], %274 {strides = array<i32>} : memref<8x8x128xf32, #tpu.memory_space<vmem>>, vector<1x8x128xf32>,
    %c4_i32 = arith.constant 4 : i32
    %275 = arith.index_cast %c4_i32 : i32 to index
    %c0_107 = arith.constant 0 : index
    %c0_108 = arith.constant 0 : index
    %276 = vector.load %arg2[%275, %c0_107, %c0_108] : memref<8x8x128xbf16, #tpu.memory_space<vmem>>, vector<1x8x128xbf16>
    %277 = vector.shape_cast %276 : vector<1x8x128xbf16> to vector<8x128xbf16>
    %278 = arith.extf %277 : vector<8x128xbf16> to vector<8x128xf32>
    %279 = arith.truncf %270 : vector<8x128xf32> to vector<8x128xbf16>
    %cst_109 = arith.constant dense<0.000000e+00> : vector<8x640xf32>
    %280 = tpu.matmul %279, %5, %cst_109 {dimension_numbers = #tpu.dot_dimension_numbers<[1], [0], [0], [1], [0, 0, 1, 1], [], []>} : vector<8x128xbf16>, vector<128x640xbf16>, vector<8x640xf32> -> vector<8x640xf32>
    %281 = vector.extract_strided_slice %280 {offsets = [0, 0], sizes = [8, 128], strides = [1, 1]} : vector<8x640xf32> to vector<8x128xf32>
    %282 = arith.index_cast %c4_i32 : i32 to index
    %c0_110 = arith.constant 0 : index
    %c0_111 = arith.constant 0 : index
    %283 = vector.load %arg11[%282, %c0_110, %c0_111] : memref<8x8x128xf32, #tpu.memory_space<vmem>>, vector<1x8x128xf32>
    %284 = vector.shape_cast %283 : vector<1x8x128xf32> to vector<8x128xf32>
    %285 = arith.addf %281, %284 : vector<8x128xf32>
    %cst_112 = arith.constant 5.000000e-01 : f32
    %286 = vector.broadcast %cst_112 : f32 to vector<8x128xf32>
    %287 = arith.mulf %286, %285 : vector<8x128xf32>
    %288 = math.tanh %287 : vector<8x128xf32>
    %cst_113 = arith.constant 5.000000e-01 : f32
    %289 = vector.broadcast %cst_113 : f32 to vector<8x128xf32>
    %290 = arith.mulf %289, %288 : vector<8x128xf32>
    %cst_114 = arith.constant 5.000000e-01 : f32
    %291 = vector.broadcast %cst_114 : f32 to vector<8x128xf32>
    %292 = arith.addf %290, %291 : vector<8x128xf32>
    %293 = arith.mulf %292, %278 : vector<8x128xf32>
    %294 = vector.extract_strided_slice %280 {offsets = [0, 128], sizes = [8, 512], strides = [1, 1]} : vector<8x640xf32> to vector<8x512xf32>
    %295 = arith.truncf %293 : vector<8x128xf32> to vector<8x128xbf16>
    %cst_115 = arith.constant dense<0.000000e+00> : vector<8x512xf32>
    %296 = tpu.matmul %295, %7, %cst_115 {dimension_numbers = #tpu.dot_dimension_numbers<[1], [0], [0], [1], [0, 0, 1, 1], [], []>} : vector<8x128xbf16>, vector<128x512xbf16>, vector<8x512xf32> -> vector<8x512xf32>
    %297 = arith.addf %294, %296 : vector<8x512xf32>
    %298 = vector.broadcast %13 : vector<1x512xf32> to vector<8x512xf32>
    %299 = arith.addf %297, %298 : vector<8x512xf32>
    %300 = vector.extract_strided_slice %299 {offsets = [0, 0], sizes = [8, 128], strides = [1, 1]} : vector<8x512xf32> to vector<8x128xf32>
    %cst_116 = arith.constant 5.000000e-01 : f32
    %301 = vector.broadcast %cst_116 : f32 to vector<8x128xf32>
    %302 = arith.mulf %301, %300 : vector<8x128xf32>
    %303 = math.tanh %302 : vector<8x128xf32>
    %cst_117 = arith.constant 5.000000e-01 : f32
    %304 = vector.broadcast %cst_117 : f32 to vector<8x128xf32>
    %305 = arith.mulf %304, %303 : vector<8x128xf32>
    %cst_118 = arith.constant 5.000000e-01 : f32
    %306 = vector.broadcast %cst_118 : f32 to vector<8x128xf32>
    %307 = arith.addf %305, %306 : vector<8x128xf32>
    %308 = vector.extract_strided_slice %299 {offsets = [0, 128], sizes = [8, 128], strides = [1, 1]} : vector<8x512xf32> to vector<8x128xf32>
    %cst_119 = arith.constant 5.000000e-01 : f32
    %309 = vector.broadcast %cst_119 : f32 to vector<8x128xf32>
    %310 = arith.mulf %309, %308 : vector<8x128xf32>
    %311 = math.tanh %310 : vector<8x128xf32>
    %cst_120 = arith.constant 5.000000e-01 : f32
    %312 = vector.broadcast %cst_120 : f32 to vector<8x128xf32>
    %313 = arith.mulf %312, %311 : vector<8x128xf32>
    %cst_121 = arith.constant 5.000000e-01 : f32
    %314 = vector.broadcast %cst_121 : f32 to vector<8x128xf32>
    %315 = arith.addf %313, %314 : vector<8x128xf32>
    %316 = vector.extract_strided_slice %299 {offsets = [0, 256], sizes = [8, 128], strides = [1, 1]} : vector<8x512xf32> to vector<8x128xf32>
    %317 = math.tanh %316 : vector<8x128xf32>
    %318 = vector.extract_strided_slice %299 {offsets = [0, 384], sizes = [8, 128], strides = [1, 1]} : vector<8x512xf32> to vector<8x128xf32>
    %cst_122 = arith.constant 5.000000e-01 : f32
    %319 = vector.broadcast %cst_122 : f32 to vector<8x128xf32>
    %320 = arith.mulf %319, %318 : vector<8x128xf32>
    %321 = math.tanh %320 : vector<8x128xf32>
    %cst_123 = arith.constant 5.000000e-01 : f32
    %322 = vector.broadcast %cst_123 : f32 to vector<8x128xf32>
    %323 = arith.mulf %322, %321 : vector<8x128xf32>
    %cst_124 = arith.constant 5.000000e-01 : f32
    %324 = vector.broadcast %cst_124 : f32 to vector<8x128xf32>
    %325 = arith.addf %323, %324 : vector<8x128xf32>
    %326 = arith.mulf %315, %268 : vector<8x128xf32>
    %327 = arith.mulf %307, %317 : vector<8x128xf32>
    %328 = arith.addf %326, %327 : vector<8x128xf32>
    %329 = math.tanh %328 : vector<8x128xf32>
    %330 = arith.mulf %325, %329 : vector<8x128xf32>
    %331 = arith.index_cast %c4_i32 : i32 to index
    %c0_125 = arith.constant 0 : index
    %c0_126 = arith.constant 0 : index
    %332 = vector.load %arg10[%331, %c0_125, %c0_126] : memref<8x8x128xf32, #tpu.memory_space<vmem>>, vector<1x8x128xf32>
    %333 = vector.shape_cast %332 : vector<1x8x128xf32> to vector<8x128xf32>
    %334 = vector.shape_cast %330 : vector<8x128xf32> to vector<1x8x128xf32>
    tpu.vector_store %arg10[%331, %c0_125, %c0_126], %334 {strides = array<i32>} : memref<8x8x128xf32, #tpu.memory_space<vmem>>, vector<1x8x128xf32>,
    %c5_i32 = arith.constant 5 : i32
    %335 = arith.index_cast %c5_i32 : i32 to index
    %c0_127 = arith.constant 0 : index
    %c0_128 = arith.constant 0 : index
    %336 = vector.load %arg2[%335, %c0_127, %c0_128] : memref<8x8x128xbf16, #tpu.memory_space<vmem>>, vector<1x8x128xbf16>
    %337 = vector.shape_cast %336 : vector<1x8x128xbf16> to vector<8x128xbf16>
    %338 = arith.extf %337 : vector<8x128xbf16> to vector<8x128xf32>
    %339 = arith.truncf %330 : vector<8x128xf32> to vector<8x128xbf16>
    %cst_129 = arith.constant dense<0.000000e+00> : vector<8x640xf32>
    %340 = tpu.matmul %339, %5, %cst_129 {dimension_numbers = #tpu.dot_dimension_numbers<[1], [0], [0], [1], [0, 0, 1, 1], [], []>} : vector<8x128xbf16>, vector<128x640xbf16>, vector<8x640xf32> -> vector<8x640xf32>
    %341 = vector.extract_strided_slice %340 {offsets = [0, 0], sizes = [8, 128], strides = [1, 1]} : vector<8x640xf32> to vector<8x128xf32>
    %342 = arith.index_cast %c5_i32 : i32 to index
    %c0_130 = arith.constant 0 : index
    %c0_131 = arith.constant 0 : index
    %343 = vector.load %arg11[%342, %c0_130, %c0_131] : memref<8x8x128xf32, #tpu.memory_space<vmem>>, vector<1x8x128xf32>
    %344 = vector.shape_cast %343 : vector<1x8x128xf32> to vector<8x128xf32>
    %345 = arith.addf %341, %344 : vector<8x128xf32>
    %cst_132 = arith.constant 5.000000e-01 : f32
    %346 = vector.broadcast %cst_132 : f32 to vector<8x128xf32>
    %347 = arith.mulf %346, %345 : vector<8x128xf32>
    %348 = math.tanh %347 : vector<8x128xf32>
    %cst_133 = arith.constant 5.000000e-01 : f32
    %349 = vector.broadcast %cst_133 : f32 to vector<8x128xf32>
    %350 = arith.mulf %349, %348 : vector<8x128xf32>
    %cst_134 = arith.constant 5.000000e-01 : f32
    %351 = vector.broadcast %cst_134 : f32 to vector<8x128xf32>
    %352 = arith.addf %350, %351 : vector<8x128xf32>
    %353 = arith.mulf %352, %338 : vector<8x128xf32>
    %354 = vector.extract_strided_slice %340 {offsets = [0, 128], sizes = [8, 512], strides = [1, 1]} : vector<8x640xf32> to vector<8x512xf32>
    %355 = arith.truncf %353 : vector<8x128xf32> to vector<8x128xbf16>
    %cst_135 = arith.constant dense<0.000000e+00> : vector<8x512xf32>
    %356 = tpu.matmul %355, %7, %cst_135 {dimension_numbers = #tpu.dot_dimension_numbers<[1], [0], [0], [1], [0, 0, 1, 1], [], []>} : vector<8x128xbf16>, vector<128x512xbf16>, vector<8x512xf32> -> vector<8x512xf32>
    %357 = arith.addf %354, %356 : vector<8x512xf32>
    %358 = vector.broadcast %13 : vector<1x512xf32> to vector<8x512xf32>
    %359 = arith.addf %357, %358 : vector<8x512xf32>
    %360 = vector.extract_strided_slice %359 {offsets = [0, 0], sizes = [8, 128], strides = [1, 1]} : vector<8x512xf32> to vector<8x128xf32>
    %cst_136 = arith.constant 5.000000e-01 : f32
    %361 = vector.broadcast %cst_136 : f32 to vector<8x128xf32>
    %362 = arith.mulf %361, %360 : vector<8x128xf32>
    %363 = math.tanh %362 : vector<8x128xf32>
    %cst_137 = arith.constant 5.000000e-01 : f32
    %364 = vector.broadcast %cst_137 : f32 to vector<8x128xf32>
    %365 = arith.mulf %364, %363 : vector<8x128xf32>
    %cst_138 = arith.constant 5.000000e-01 : f32
    %366 = vector.broadcast %cst_138 : f32 to vector<8x128xf32>
    %367 = arith.addf %365, %366 : vector<8x128xf32>
    %368 = vector.extract_strided_slice %359 {offsets = [0, 128], sizes = [8, 128], strides = [1, 1]} : vector<8x512xf32> to vector<8x128xf32>
    %cst_139 = arith.constant 5.000000e-01 : f32
    %369 = vector.broadcast %cst_139 : f32 to vector<8x128xf32>
    %370 = arith.mulf %369, %368 : vector<8x128xf32>
    %371 = math.tanh %370 : vector<8x128xf32>
    %cst_140 = arith.constant 5.000000e-01 : f32
    %372 = vector.broadcast %cst_140 : f32 to vector<8x128xf32>
    %373 = arith.mulf %372, %371 : vector<8x128xf32>
    %cst_141 = arith.constant 5.000000e-01 : f32
    %374 = vector.broadcast %cst_141 : f32 to vector<8x128xf32>
    %375 = arith.addf %373, %374 : vector<8x128xf32>
    %376 = vector.extract_strided_slice %359 {offsets = [0, 256], sizes = [8, 128], strides = [1, 1]} : vector<8x512xf32> to vector<8x128xf32>
    %377 = math.tanh %376 : vector<8x128xf32>
    %378 = vector.extract_strided_slice %359 {offsets = [0, 384], sizes = [8, 128], strides = [1, 1]} : vector<8x512xf32> to vector<8x128xf32>
    %cst_142 = arith.constant 5.000000e-01 : f32
    %379 = vector.broadcast %cst_142 : f32 to vector<8x128xf32>
    %380 = arith.mulf %379, %378 : vector<8x128xf32>
    %381 = math.tanh %380 : vector<8x128xf32>
    %cst_143 = arith.constant 5.000000e-01 : f32
    %382 = vector.broadcast %cst_143 : f32 to vector<8x128xf32>
    %383 = arith.mulf %382, %381 : vector<8x128xf32>
    %cst_144 = arith.constant 5.000000e-01 : f32
    %384 = vector.broadcast %cst_144 : f32 to vector<8x128xf32>
    %385 = arith.addf %383, %384 : vector<8x128xf32>
    %386 = arith.mulf %375, %328 : vector<8x128xf32>
    %387 = arith.mulf %367, %377 : vector<8x128xf32>
    %388 = arith.addf %386, %387 : vector<8x128xf32>
    %389 = math.tanh %388 : vector<8x128xf32>
    %390 = arith.mulf %385, %389 : vector<8x128xf32>
    %391 = arith.index_cast %c5_i32 : i32 to index
    %c0_145 = arith.constant 0 : index
    %c0_146 = arith.constant 0 : index
    %392 = vector.load %arg10[%391, %c0_145, %c0_146] : memref<8x8x128xf32, #tpu.memory_space<vmem>>, vector<1x8x128xf32>
    %393 = vector.shape_cast %392 : vector<1x8x128xf32> to vector<8x128xf32>
    %394 = vector.shape_cast %390 : vector<8x128xf32> to vector<1x8x128xf32>
    tpu.vector_store %arg10[%391, %c0_145, %c0_146], %394 {strides = array<i32>} : memref<8x8x128xf32, #tpu.memory_space<vmem>>, vector<1x8x128xf32>,
    %c6_i32 = arith.constant 6 : i32
    %395 = arith.index_cast %c6_i32 : i32 to index
    %c0_147 = arith.constant 0 : index
    %c0_148 = arith.constant 0 : index
    %396 = vector.load %arg2[%395, %c0_147, %c0_148] : memref<8x8x128xbf16, #tpu.memory_space<vmem>>, vector<1x8x128xbf16>
    %397 = vector.shape_cast %396 : vector<1x8x128xbf16> to vector<8x128xbf16>
    %398 = arith.extf %397 : vector<8x128xbf16> to vector<8x128xf32>
    %399 = arith.truncf %390 : vector<8x128xf32> to vector<8x128xbf16>
    %cst_149 = arith.constant dense<0.000000e+00> : vector<8x640xf32>
    %400 = tpu.matmul %399, %5, %cst_149 {dimension_numbers = #tpu.dot_dimension_numbers<[1], [0], [0], [1], [0, 0, 1, 1], [], []>} : vector<8x128xbf16>, vector<128x640xbf16>, vector<8x640xf32> -> vector<8x640xf32>
    %401 = vector.extract_strided_slice %400 {offsets = [0, 0], sizes = [8, 128], strides = [1, 1]} : vector<8x640xf32> to vector<8x128xf32>
    %402 = arith.index_cast %c6_i32 : i32 to index
    %c0_150 = arith.constant 0 : index
    %c0_151 = arith.constant 0 : index
    %403 = vector.load %arg11[%402, %c0_150, %c0_151] : memref<8x8x128xf32, #tpu.memory_space<vmem>>, vector<1x8x128xf32>
    %404 = vector.shape_cast %403 : vector<1x8x128xf32> to vector<8x128xf32>
    %405 = arith.addf %401, %404 : vector<8x128xf32>
    %cst_152 = arith.constant 5.000000e-01 : f32
    %406 = vector.broadcast %cst_152 : f32 to vector<8x128xf32>
    %407 = arith.mulf %406, %405 : vector<8x128xf32>
    %408 = math.tanh %407 : vector<8x128xf32>
    %cst_153 = arith.constant 5.000000e-01 : f32
    %409 = vector.broadcast %cst_153 : f32 to vector<8x128xf32>
    %410 = arith.mulf %409, %408 : vector<8x128xf32>
    %cst_154 = arith.constant 5.000000e-01 : f32
    %411 = vector.broadcast %cst_154 : f32 to vector<8x128xf32>
    %412 = arith.addf %410, %411 : vector<8x128xf32>
    %413 = arith.mulf %412, %398 : vector<8x128xf32>
    %414 = vector.extract_strided_slice %400 {offsets = [0, 128], sizes = [8, 512], strides = [1, 1]} : vector<8x640xf32> to vector<8x512xf32>
    %415 = arith.truncf %413 : vector<8x128xf32> to vector<8x128xbf16>
    %cst_155 = arith.constant dense<0.000000e+00> : vector<8x512xf32>
    %416 = tpu.matmul %415, %7, %cst_155 {dimension_numbers = #tpu.dot_dimension_numbers<[1], [0], [0], [1], [0, 0, 1, 1], [], []>} : vector<8x128xbf16>, vector<128x512xbf16>, vector<8x512xf32> -> vector<8x512xf32>
    %417 = arith.addf %414, %416 : vector<8x512xf32>
    %418 = vector.broadcast %13 : vector<1x512xf32> to vector<8x512xf32>
    %419 = arith.addf %417, %418 : vector<8x512xf32>
    %420 = vector.extract_strided_slice %419 {offsets = [0, 0], sizes = [8, 128], strides = [1, 1]} : vector<8x512xf32> to vector<8x128xf32>
    %cst_156 = arith.constant 5.000000e-01 : f32
    %421 = vector.broadcast %cst_156 : f32 to vector<8x128xf32>
    %422 = arith.mulf %421, %420 : vector<8x128xf32>
    %423 = math.tanh %422 : vector<8x128xf32>
    %cst_157 = arith.constant 5.000000e-01 : f32
    %424 = vector.broadcast %cst_157 : f32 to vector<8x128xf32>
    %425 = arith.mulf %424, %423 : vector<8x128xf32>
    %cst_158 = arith.constant 5.000000e-01 : f32
    %426 = vector.broadcast %cst_158 : f32 to vector<8x128xf32>
    %427 = arith.addf %425, %426 : vector<8x128xf32>
    %428 = vector.extract_strided_slice %419 {offsets = [0, 128], sizes = [8, 128], strides = [1, 1]} : vector<8x512xf32> to vector<8x128xf32>
    %cst_159 = arith.constant 5.000000e-01 : f32
    %429 = vector.broadcast %cst_159 : f32 to vector<8x128xf32>
    %430 = arith.mulf %429, %428 : vector<8x128xf32>
    %431 = math.tanh %430 : vector<8x128xf32>
    %cst_160 = arith.constant 5.000000e-01 : f32
    %432 = vector.broadcast %cst_160 : f32 to vector<8x128xf32>
    %433 = arith.mulf %432, %431 : vector<8x128xf32>
    %cst_161 = arith.constant 5.000000e-01 : f32
    %434 = vector.broadcast %cst_161 : f32 to vector<8x128xf32>
    %435 = arith.addf %433, %434 : vector<8x128xf32>
    %436 = vector.extract_strided_slice %419 {offsets = [0, 256], sizes = [8, 128], strides = [1, 1]} : vector<8x512xf32> to vector<8x128xf32>
    %437 = math.tanh %436 : vector<8x128xf32>
    %438 = vector.extract_strided_slice %419 {offsets = [0, 384], sizes = [8, 128], strides = [1, 1]} : vector<8x512xf32> to vector<8x128xf32>
    %cst_162 = arith.constant 5.000000e-01 : f32
    %439 = vector.broadcast %cst_162 : f32 to vector<8x128xf32>
    %440 = arith.mulf %439, %438 : vector<8x128xf32>
    %441 = math.tanh %440 : vector<8x128xf32>
    %cst_163 = arith.constant 5.000000e-01 : f32
    %442 = vector.broadcast %cst_163 : f32 to vector<8x128xf32>
    %443 = arith.mulf %442, %441 : vector<8x128xf32>
    %cst_164 = arith.constant 5.000000e-01 : f32
    %444 = vector.broadcast %cst_164 : f32 to vector<8x128xf32>
    %445 = arith.addf %443, %444 : vector<8x128xf32>
    %446 = arith.mulf %435, %388 : vector<8x128xf32>
    %447 = arith.mulf %427, %437 : vector<8x128xf32>
    %448 = arith.addf %446, %447 : vector<8x128xf32>
    %449 = math.tanh %448 : vector<8x128xf32>
    %450 = arith.mulf %445, %449 : vector<8x128xf32>
    %451 = arith.index_cast %c6_i32 : i32 to index
    %c0_165 = arith.constant 0 : index
    %c0_166 = arith.constant 0 : index
    %452 = vector.load %arg10[%451, %c0_165, %c0_166] : memref<8x8x128xf32, #tpu.memory_space<vmem>>, vector<1x8x128xf32>
    %453 = vector.shape_cast %452 : vector<1x8x128xf32> to vector<8x128xf32>
    %454 = vector.shape_cast %450 : vector<8x128xf32> to vector<1x8x128xf32>
    tpu.vector_store %arg10[%451, %c0_165, %c0_166], %454 {strides = array<i32>} : memref<8x8x128xf32, #tpu.memory_space<vmem>>, vector<1x8x128xf32>,
    %c7_i32 = arith.constant 7 : i32
    %455 = arith.index_cast %c7_i32 : i32 to index
    %c0_167 = arith.constant 0 : index
    %c0_168 = arith.constant 0 : index
    %456 = vector.load %arg2[%455, %c0_167, %c0_168] : memref<8x8x128xbf16, #tpu.memory_space<vmem>>, vector<1x8x128xbf16>
    %457 = vector.shape_cast %456 : vector<1x8x128xbf16> to vector<8x128xbf16>
    %458 = arith.extf %457 : vector<8x128xbf16> to vector<8x128xf32>
    %459 = arith.truncf %450 : vector<8x128xf32> to vector<8x128xbf16>
    %cst_169 = arith.constant dense<0.000000e+00> : vector<8x640xf32>
    %460 = tpu.matmul %459, %5, %cst_169 {dimension_numbers = #tpu.dot_dimension_numbers<[1], [0], [0], [1], [0, 0, 1, 1], [], []>} : vector<8x128xbf16>, vector<128x640xbf16>, vector<8x640xf32> -> vector<8x640xf32>
    %461 = vector.extract_strided_slice %460 {offsets = [0, 0], sizes = [8, 128], strides = [1, 1]} : vector<8x640xf32> to vector<8x128xf32>
    %462 = arith.index_cast %c7_i32 : i32 to index
    %c0_170 = arith.constant 0 : index
    %c0_171 = arith.constant 0 : index
    %463 = vector.load %arg11[%462, %c0_170, %c0_171] : memref<8x8x128xf32, #tpu.memory_space<vmem>>, vector<1x8x128xf32>
    %464 = vector.shape_cast %463 : vector<1x8x128xf32> to vector<8x128xf32>
    %465 = arith.addf %461, %464 : vector<8x128xf32>
    %cst_172 = arith.constant 5.000000e-01 : f32
    %466 = vector.broadcast %cst_172 : f32 to vector<8x128xf32>
    %467 = arith.mulf %466, %465 : vector<8x128xf32>
    %468 = math.tanh %467 : vector<8x128xf32>
    %cst_173 = arith.constant 5.000000e-01 : f32
    %469 = vector.broadcast %cst_173 : f32 to vector<8x128xf32>
    %470 = arith.mulf %469, %468 : vector<8x128xf32>
    %cst_174 = arith.constant 5.000000e-01 : f32
    %471 = vector.broadcast %cst_174 : f32 to vector<8x128xf32>
    %472 = arith.addf %470, %471 : vector<8x128xf32>
    %473 = arith.mulf %472, %458 : vector<8x128xf32>
    %474 = vector.extract_strided_slice %460 {offsets = [0, 128], sizes = [8, 512], strides = [1, 1]} : vector<8x640xf32> to vector<8x512xf32>
    %475 = arith.truncf %473 : vector<8x128xf32> to vector<8x128xbf16>
    %cst_175 = arith.constant dense<0.000000e+00> : vector<8x512xf32>
    %476 = tpu.matmul %475, %7, %cst_175 {dimension_numbers = #tpu.dot_dimension_numbers<[1], [0], [0], [1], [0, 0, 1, 1], [], []>} : vector<8x128xbf16>, vector<128x512xbf16>, vector<8x512xf32> -> vector<8x512xf32>
    %477 = arith.addf %474, %476 : vector<8x512xf32>
    %478 = vector.broadcast %13 : vector<1x512xf32> to vector<8x512xf32>
    %479 = arith.addf %477, %478 : vector<8x512xf32>
    %480 = vector.extract_strided_slice %479 {offsets = [0, 0], sizes = [8, 128], strides = [1, 1]} : vector<8x512xf32> to vector<8x128xf32>
    %cst_176 = arith.constant 5.000000e-01 : f32
    %481 = vector.broadcast %cst_176 : f32 to vector<8x128xf32>
    %482 = arith.mulf %481, %480 : vector<8x128xf32>
    %483 = math.tanh %482 : vector<8x128xf32>
    %cst_177 = arith.constant 5.000000e-01 : f32
    %484 = vector.broadcast %cst_177 : f32 to vector<8x128xf32>
    %485 = arith.mulf %484, %483 : vector<8x128xf32>
    %cst_178 = arith.constant 5.000000e-01 : f32
    %486 = vector.broadcast %cst_178 : f32 to vector<8x128xf32>
    %487 = arith.addf %485, %486 : vector<8x128xf32>
    %488 = vector.extract_strided_slice %479 {offsets = [0, 128], sizes = [8, 128], strides = [1, 1]} : vector<8x512xf32> to vector<8x128xf32>
    %cst_179 = arith.constant 5.000000e-01 : f32
    %489 = vector.broadcast %cst_179 : f32 to vector<8x128xf32>
    %490 = arith.mulf %489, %488 : vector<8x128xf32>
    %491 = math.tanh %490 : vector<8x128xf32>
    %cst_180 = arith.constant 5.000000e-01 : f32
    %492 = vector.broadcast %cst_180 : f32 to vector<8x128xf32>
    %493 = arith.mulf %492, %491 : vector<8x128xf32>
    %cst_181 = arith.constant 5.000000e-01 : f32
    %494 = vector.broadcast %cst_181 : f32 to vector<8x128xf32>
    %495 = arith.addf %493, %494 : vector<8x128xf32>
    %496 = vector.extract_strided_slice %479 {offsets = [0, 256], sizes = [8, 128], strides = [1, 1]} : vector<8x512xf32> to vector<8x128xf32>
    %497 = math.tanh %496 : vector<8x128xf32>
    %498 = vector.extract_strided_slice %479 {offsets = [0, 384], sizes = [8, 128], strides = [1, 1]} : vector<8x512xf32> to vector<8x128xf32>
    %cst_182 = arith.constant 5.000000e-01 : f32
    %499 = vector.broadcast %cst_182 : f32 to vector<8x128xf32>
    %500 = arith.mulf %499, %498 : vector<8x128xf32>
    %501 = math.tanh %500 : vector<8x128xf32>
    %cst_183 = arith.constant 5.000000e-01 : f32
    %502 = vector.broadcast %cst_183 : f32 to vector<8x128xf32>
    %503 = arith.mulf %502, %501 : vector<8x128xf32>
    %cst_184 = arith.constant 5.000000e-01 : f32
    %504 = vector.broadcast %cst_184 : f32 to vector<8x128xf32>
    %505 = arith.addf %503, %504 : vector<8x128xf32>
    %506 = arith.mulf %495, %448 : vector<8x128xf32>
    %507 = arith.mulf %487, %497 : vector<8x128xf32>
    %508 = arith.addf %506, %507 : vector<8x128xf32>
    %509 = math.tanh %508 : vector<8x128xf32>
    %510 = arith.mulf %505, %509 : vector<8x128xf32>
    %511 = arith.index_cast %c7_i32 : i32 to index
    %c0_185 = arith.constant 0 : index
    %c0_186 = arith.constant 0 : index
    %512 = vector.load %arg10[%511, %c0_185, %c0_186] : memref<8x8x128xf32, #tpu.memory_space<vmem>>, vector<1x8x128xf32>
    %513 = vector.shape_cast %512 : vector<1x8x128xf32> to vector<8x128xf32>
    %514 = vector.shape_cast %510 : vector<8x128xf32> to vector<1x8x128xf32>
    tpu.vector_store %arg10[%511, %c0_185, %c0_186], %514 {strides = array<i32>} : memref<8x8x128xf32, #tpu.memory_space<vmem>>, vector<1x8x128xf32>,
    %c8_i32 = arith.constant 8 : i32
    %c0_187 = arith.constant 0 : index
    %c0_188 = arith.constant 0 : index
    %c0_189 = arith.constant 0 : index
    %515 = vector.load %arg12[%c0_187, %c0_188, %c0_189] : memref<2x8x128xf32, #tpu.memory_space<vmem>>, vector<1x8x128xf32>
    %516 = vector.shape_cast %515 : vector<1x8x128xf32> to vector<8x128xf32>
    %517 = vector.shape_cast %510 : vector<8x128xf32> to vector<1x8x128xf32>
    tpu.vector_store %arg12[%c0_187, %c0_188, %c0_189], %517 {strides = array<i32>} : memref<2x8x128xf32, #tpu.memory_space<vmem>>, vector<1x8x128xf32>,
    %c0_190 = arith.constant 0 : index
    %c0_191 = arith.constant 0 : index
    %c0_192 = arith.constant 0 : index
    %518 = vector.load %arg13[%c0_190, %c0_191, %c0_192] : memref<2x8x128xf32, #tpu.memory_space<vmem>>, vector<1x8x128xf32>
    %519 = vector.shape_cast %518 : vector<1x8x128xf32> to vector<8x128xf32>
    %520 = vector.shape_cast %508 : vector<8x128xf32> to vector<1x8x128xf32>
    tpu.vector_store %arg13[%c0_190, %c0_191, %c0_192], %520 {strides = array<i32>} : memref<2x8x128xf32, #tpu.memory_space<vmem>>, vector<1x8x128xf32>,
    %c1 = arith.constant 1 : index
    %c0_193 = arith.constant 0 : index
    %c0_194 = arith.constant 0 : index
    %521 = vector.load %arg4[%c1, %c0_193, %c0_194] : memref<2x128x640xbf16, #tpu.memory_space<vmem>>, vector<1x128x640xbf16>
    %522 = vector.shape_cast %521 : vector<1x128x640xbf16> to vector<128x640xbf16>
    %c1_195 = arith.constant 1 : index
    %c0_196 = arith.constant 0 : index
    %c0_197 = arith.constant 0 : index
    %523 = vector.load %arg7[%c1_195, %c0_196, %c0_197] : memref<2x128x512xbf16, #tpu.memory_space<vmem>>, vector<1x128x512xbf16>
    %524 = vector.shape_cast %523 : vector<1x128x512xbf16> to vector<128x512xbf16>
    %c1_198 = arith.constant 1 : index
    %c0_199 = arith.constant 0 : index
    %c0_200 = arith.constant 0 : index
    %525 = vector.load %arg5[%c1_198, %c0_199, %c0_200] : memref<2x2x128xf32, #tpu.memory_space<vmem>>, vector<1x2x128xf32>
    %526 = vector.shape_cast %525 : vector<1x2x128xf32> to vector<2x128xf32>
    %c1_201 = arith.constant 1 : index
    %c0_202 = arith.constant 0 : index
    %c0_203 = arith.constant 0 : index
    %527 = vector.load %arg6[%c1_201, %c0_202, %c0_203] : memref<2x1x128xf32, #tpu.memory_space<vmem>>, vector<1x1x128xf32>
    %528 = vector.shape_cast %527 : vector<1x1x128xf32> to vector<1x128xf32>
    %c1_204 = arith.constant 1 : index
    %c0_205 = arith.constant 0 : index
    %c0_206 = arith.constant 0 : index
    %529 = vector.load %arg8[%c1_204, %c0_205, %c0_206] : memref<2x1x512xf32, #tpu.memory_space<vmem>>, vector<1x1x512xf32>
    %530 = vector.shape_cast %529 : vector<1x1x512xf32> to vector<1x512xf32>
    %531 = vector.extract_strided_slice %3 {offsets = [0, 0, 0], sizes = [8, 8, 1], strides = [1, 1, 1]} : vector<8x8x2xf32> to vector<8x8x1xf32>
    %532 = vector.extract_strided_slice %526 {offsets = [0, 0], sizes = [1, 128], strides = [1, 1]} : vector<2x128xf32> to vector<1x128xf32>
    %533 = vector.shape_cast %532 : vector<1x128xf32> to vector<1x1x128xf32>
    %534 = vector.broadcast %531 : vector<8x8x1xf32> to vector<8x8x128xf32>
    %535 = vector.broadcast %533 : vector<1x1x128xf32> to vector<8x8x128xf32>
    %536 = arith.mulf %534, %535 : vector<8x8x128xf32>
    %537 = vector.extract_strided_slice %3 {offsets = [0, 0, 1], sizes = [8, 8, 1], strides = [1, 1, 1]} : vector<8x8x2xf32> to vector<8x8x1xf32>
    %538 = vector.extract_strided_slice %526 {offsets = [1, 0], sizes = [1, 128], strides = [1, 1]} : vector<2x128xf32> to vector<1x128xf32>
    %539 = vector.shape_cast %538 : vector<1x128xf32> to vector<1x1x128xf32>
    %540 = vector.broadcast %537 : vector<8x8x1xf32> to vector<8x8x128xf32>
    %541 = vector.broadcast %539 : vector<1x1x128xf32> to vector<8x8x128xf32>
    %542 = arith.mulf %540, %541 : vector<8x8x128xf32>
    %543 = arith.addf %536, %542 : vector<8x8x128xf32>
    %544 = vector.shape_cast %528 : vector<1x128xf32> to vector<1x1x128xf32>
    %545 = vector.broadcast %544 : vector<1x1x128xf32> to vector<8x8x128xf32>
    %546 = arith.addf %543, %545 : vector<8x8x128xf32>
    %c0_207 = arith.constant 0 : index
    %c0_208 = arith.constant 0 : index
    %c0_209 = arith.constant 0 : index
    %547 = vector.load %arg11[%c0_207, %c0_208, %c0_209] : memref<8x8x128xf32, #tpu.memory_space<vmem>>, vector<8x8x128xf32>
    tpu.vector_store %arg11[%c0_207, %c0_208, %c0_209], %546 {strides = array<i32>} : memref<8x8x128xf32, #tpu.memory_space<vmem>>, vector<8x8x128xf32>,
    %c1_210 = arith.constant 1 : index
    %c0_211 = arith.constant 0 : index
    %c0_212 = arith.constant 0 : index
    %548 = vector.load %arg12[%c1_210, %c0_211, %c0_212] : memref<2x8x128xf32, #tpu.memory_space<vmem>>, vector<1x8x128xf32>
    %549 = vector.shape_cast %548 : vector<1x8x128xf32> to vector<8x128xf32>
    %c1_213 = arith.constant 1 : index
    %c0_214 = arith.constant 0 : index
    %c0_215 = arith.constant 0 : index
    %550 = vector.load %arg13[%c1_213, %c0_214, %c0_215] : memref<2x8x128xf32, #tpu.memory_space<vmem>>, vector<1x8x128xf32>
    %551 = vector.shape_cast %550 : vector<1x8x128xf32> to vector<8x128xf32>
    %c0_i32_216 = arith.constant 0 : i32
    %552 = arith.index_cast %c0_i32_216 : i32 to index
    %c0_217 = arith.constant 0 : index
    %c0_218 = arith.constant 0 : index
    %553 = vector.load %arg10[%552, %c0_217, %c0_218] : memref<8x8x128xf32, #tpu.memory_space<vmem>>, vector<1x8x128xf32>
    %554 = vector.shape_cast %553 : vector<1x8x128xf32> to vector<8x128xf32>
    %555 = arith.truncf %549 : vector<8x128xf32> to vector<8x128xbf16>
    %cst_219 = arith.constant dense<0.000000e+00> : vector<8x640xf32>
    %556 = tpu.matmul %555, %522, %cst_219 {dimension_numbers = #tpu.dot_dimension_numbers<[1], [0], [0], [1], [0, 0, 1, 1], [], []>} : vector<8x128xbf16>, vector<128x640xbf16>, vector<8x640xf32> -> vector<8x640xf32>
    %557 = vector.extract_strided_slice %556 {offsets = [0, 0], sizes = [8, 128], strides = [1, 1]} : vector<8x640xf32> to vector<8x128xf32>
    %558 = arith.index_cast %c0_i32_216 : i32 to index
    %c0_220 = arith.constant 0 : index
    %c0_221 = arith.constant 0 : index
    %559 = vector.load %arg11[%558, %c0_220, %c0_221] : memref<8x8x128xf32, #tpu.memory_space<vmem>>, vector<1x8x128xf32>
    %560 = vector.shape_cast %559 : vector<1x8x128xf32> to vector<8x128xf32>
    %561 = arith.addf %557, %560 : vector<8x128xf32>
    %cst_222 = arith.constant 5.000000e-01 : f32
    %562 = vector.broadcast %cst_222 : f32 to vector<8x128xf32>
    %563 = arith.mulf %562, %561 : vector<8x128xf32>
    %564 = math.tanh %563 : vector<8x128xf32>
    %cst_223 = arith.constant 5.000000e-01 : f32
    %565 = vector.broadcast %cst_223 : f32 to vector<8x128xf32>
    %566 = arith.mulf %565, %564 : vector<8x128xf32>
    %cst_224 = arith.constant 5.000000e-01 : f32
    %567 = vector.broadcast %cst_224 : f32 to vector<8x128xf32>
    %568 = arith.addf %566, %567 : vector<8x128xf32>
    %569 = arith.mulf %568, %554 : vector<8x128xf32>
    %570 = vector.extract_strided_slice %556 {offsets = [0, 128], sizes = [8, 512], strides = [1, 1]} : vector<8x640xf32> to vector<8x512xf32>
    %571 = arith.truncf %569 : vector<8x128xf32> to vector<8x128xbf16>
    %cst_225 = arith.constant dense<0.000000e+00> : vector<8x512xf32>
    %572 = tpu.matmul %571, %524, %cst_225 {dimension_numbers = #tpu.dot_dimension_numbers<[1], [0], [0], [1], [0, 0, 1, 1], [], []>} : vector<8x128xbf16>, vector<128x512xbf16>, vector<8x512xf32> -> vector<8x512xf32>
    %573 = arith.addf %570, %572 : vector<8x512xf32>
    %574 = vector.broadcast %530 : vector<1x512xf32> to vector<8x512xf32>
    %575 = arith.addf %573, %574 : vector<8x512xf32>
    %576 = vector.extract_strided_slice %575 {offsets = [0, 0], sizes = [8, 128], strides = [1, 1]} : vector<8x512xf32> to vector<8x128xf32>
    %cst_226 = arith.constant 5.000000e-01 : f32
    %577 = vector.broadcast %cst_226 : f32 to vector<8x128xf32>
    %578 = arith.mulf %577, %576 : vector<8x128xf32>
    %579 = math.tanh %578 : vector<8x128xf32>
    %cst_227 = arith.constant 5.000000e-01 : f32
    %580 = vector.broadcast %cst_227 : f32 to vector<8x128xf32>
    %581 = arith.mulf %580, %579 : vector<8x128xf32>
    %cst_228 = arith.constant 5.000000e-01 : f32
    %582 = vector.broadcast %cst_228 : f32 to vector<8x128xf32>
    %583 = arith.addf %581, %582 : vector<8x128xf32>
    %584 = vector.extract_strided_slice %575 {offsets = [0, 128], sizes = [8, 128], strides = [1, 1]} : vector<8x512xf32> to vector<8x128xf32>
    %cst_229 = arith.constant 5.000000e-01 : f32
    %585 = vector.broadcast %cst_229 : f32 to vector<8x128xf32>
    %586 = arith.mulf %585, %584 : vector<8x128xf32>
    %587 = math.tanh %586 : vector<8x128xf32>
    %cst_230 = arith.constant 5.000000e-01 : f32
    %588 = vector.broadcast %cst_230 : f32 to vector<8x128xf32>
    %589 = arith.mulf %588, %587 : vector<8x128xf32>
    %cst_231 = arith.constant 5.000000e-01 : f32
    %590 = vector.broadcast %cst_231 : f32 to vector<8x128xf32>
    %591 = arith.addf %589, %590 : vector<8x128xf32>
    %592 = vector.extract_strided_slice %575 {offsets = [0, 256], sizes = [8, 128], strides = [1, 1]} : vector<8x512xf32> to vector<8x128xf32>
    %593 = math.tanh %592 : vector<8x128xf32>
    %594 = vector.extract_strided_slice %575 {offsets = [0, 384], sizes = [8, 128], strides = [1, 1]} : vector<8x512xf32> to vector<8x128xf32>
    %cst_232 = arith.constant 5.000000e-01 : f32
    %595 = vector.broadcast %cst_232 : f32 to vector<8x128xf32>
    %596 = arith.mulf %595, %594 : vector<8x128xf32>
    %597 = math.tanh %596 : vector<8x128xf32>
    %cst_233 = arith.constant 5.000000e-01 : f32
    %598 = vector.broadcast %cst_233 : f32 to vector<8x128xf32>
    %599 = arith.mulf %598, %597 : vector<8x128xf32>
    %cst_234 = arith.constant 5.000000e-01 : f32
    %600 = vector.broadcast %cst_234 : f32 to vector<8x128xf32>
    %601 = arith.addf %599, %600 : vector<8x128xf32>
    %602 = arith.mulf %591, %551 : vector<8x128xf32>
    %603 = arith.mulf %583, %593 : vector<8x128xf32>
    %604 = arith.addf %602, %603 : vector<8x128xf32>
    %605 = math.tanh %604 : vector<8x128xf32>
    %606 = arith.mulf %601, %605 : vector<8x128xf32>
    %607 = arith.truncf %606 : vector<8x128xf32> to vector<8x128xbf16>
    %608 = arith.index_cast %c0_i32_216 : i32 to index
    %c0_235 = arith.constant 0 : index
    %c0_236 = arith.constant 0 : index
    %609 = vector.load %arg9[%608, %c0_235, %c0_236] : memref<8x8x128xbf16, #tpu.memory_space<vmem>>, vector<1x8x128xbf16>
    %610 = vector.shape_cast %609 : vector<1x8x128xbf16> to vector<8x128xbf16>
    %611 = vector.shape_cast %607 : vector<8x128xbf16> to vector<1x8x128xbf16>
    tpu.vector_store %arg9[%608, %c0_235, %c0_236], %611 {strides = array<i32>} : memref<8x8x128xbf16, #tpu.memory_space<vmem>>, vector<1x8x128xbf16>,
    %c1_i32_237 = arith.constant 1 : i32
    %612 = arith.index_cast %c1_i32_237 : i32 to index
    %c0_238 = arith.constant 0 : index
    %c0_239 = arith.constant 0 : index
    %613 = vector.load %arg10[%612, %c0_238, %c0_239] : memref<8x8x128xf32, #tpu.memory_space<vmem>>, vector<1x8x128xf32>
    %614 = vector.shape_cast %613 : vector<1x8x128xf32> to vector<8x128xf32>
    %615 = arith.truncf %606 : vector<8x128xf32> to vector<8x128xbf16>
    %cst_240 = arith.constant dense<0.000000e+00> : vector<8x640xf32>
    %616 = tpu.matmul %615, %522, %cst_240 {dimension_numbers = #tpu.dot_dimension_numbers<[1], [0], [0], [1], [0, 0, 1, 1], [], []>} : vector<8x128xbf16>, vector<128x640xbf16>, vector<8x640xf32> -> vector<8x640xf32>
    %617 = vector.extract_strided_slice %616 {offsets = [0, 0], sizes = [8, 128], strides = [1, 1]} : vector<8x640xf32> to vector<8x128xf32>
    %618 = arith.index_cast %c1_i32_237 : i32 to index
    %c0_241 = arith.constant 0 : index
    %c0_242 = arith.constant 0 : index
    %619 = vector.load %arg11[%618, %c0_241, %c0_242] : memref<8x8x128xf32, #tpu.memory_space<vmem>>, vector<1x8x128xf32>
    %620 = vector.shape_cast %619 : vector<1x8x128xf32> to vector<8x128xf32>
    %621 = arith.addf %617, %620 : vector<8x128xf32>
    %cst_243 = arith.constant 5.000000e-01 : f32
    %622 = vector.broadcast %cst_243 : f32 to vector<8x128xf32>
    %623 = arith.mulf %622, %621 : vector<8x128xf32>
    %624 = math.tanh %623 : vector<8x128xf32>
    %cst_244 = arith.constant 5.000000e-01 : f32
    %625 = vector.broadcast %cst_244 : f32 to vector<8x128xf32>
    %626 = arith.mulf %625, %624 : vector<8x128xf32>
    %cst_245 = arith.constant 5.000000e-01 : f32
    %627 = vector.broadcast %cst_245 : f32 to vector<8x128xf32>
    %628 = arith.addf %626, %627 : vector<8x128xf32>
    %629 = arith.mulf %628, %614 : vector<8x128xf32>
    %630 = vector.extract_strided_slice %616 {offsets = [0, 128], sizes = [8, 512], strides = [1, 1]} : vector<8x640xf32> to vector<8x512xf32>
    %631 = arith.truncf %629 : vector<8x128xf32> to vector<8x128xbf16>
    %cst_246 = arith.constant dense<0.000000e+00> : vector<8x512xf32>
    %632 = tpu.matmul %631, %524, %cst_246 {dimension_numbers = #tpu.dot_dimension_numbers<[1], [0], [0], [1], [0, 0, 1, 1], [], []>} : vector<8x128xbf16>, vector<128x512xbf16>, vector<8x512xf32> -> vector<8x512xf32>
    %633 = arith.addf %630, %632 : vector<8x512xf32>
    %634 = vector.broadcast %530 : vector<1x512xf32> to vector<8x512xf32>
    %635 = arith.addf %633, %634 : vector<8x512xf32>
    %636 = vector.extract_strided_slice %635 {offsets = [0, 0], sizes = [8, 128], strides = [1, 1]} : vector<8x512xf32> to vector<8x128xf32>
    %cst_247 = arith.constant 5.000000e-01 : f32
    %637 = vector.broadcast %cst_247 : f32 to vector<8x128xf32>
    %638 = arith.mulf %637, %636 : vector<8x128xf32>
    %639 = math.tanh %638 : vector<8x128xf32>
    %cst_248 = arith.constant 5.000000e-01 : f32
    %640 = vector.broadcast %cst_248 : f32 to vector<8x128xf32>
    %641 = arith.mulf %640, %639 : vector<8x128xf32>
    %cst_249 = arith.constant 5.000000e-01 : f32
    %642 = vector.broadcast %cst_249 : f32 to vector<8x128xf32>
    %643 = arith.addf %641, %642 : vector<8x128xf32>
    %644 = vector.extract_strided_slice %635 {offsets = [0, 128], sizes = [8, 128], strides = [1, 1]} : vector<8x512xf32> to vector<8x128xf32>
    %cst_250 = arith.constant 5.000000e-01 : f32
    %645 = vector.broadcast %cst_250 : f32 to vector<8x128xf32>
    %646 = arith.mulf %645, %644 : vector<8x128xf32>
    %647 = math.tanh %646 : vector<8x128xf32>
    %cst_251 = arith.constant 5.000000e-01 : f32
    %648 = vector.broadcast %cst_251 : f32 to vector<8x128xf32>
    %649 = arith.mulf %648, %647 : vector<8x128xf32>
    %cst_252 = arith.constant 5.000000e-01 : f32
    %650 = vector.broadcast %cst_252 : f32 to vector<8x128xf32>
    %651 = arith.addf %649, %650 : vector<8x128xf32>
    %652 = vector.extract_strided_slice %635 {offsets = [0, 256], sizes = [8, 128], strides = [1, 1]} : vector<8x512xf32> to vector<8x128xf32>
    %653 = math.tanh %652 : vector<8x128xf32>
    %654 = vector.extract_strided_slice %635 {offsets = [0, 384], sizes = [8, 128], strides = [1, 1]} : vector<8x512xf32> to vector<8x128xf32>
    %cst_253 = arith.constant 5.000000e-01 : f32
    %655 = vector.broadcast %cst_253 : f32 to vector<8x128xf32>
    %656 = arith.mulf %655, %654 : vector<8x128xf32>
    %657 = math.tanh %656 : vector<8x128xf32>
    %cst_254 = arith.constant 5.000000e-01 : f32
    %658 = vector.broadcast %cst_254 : f32 to vector<8x128xf32>
    %659 = arith.mulf %658, %657 : vector<8x128xf32>
    %cst_255 = arith.constant 5.000000e-01 : f32
    %660 = vector.broadcast %cst_255 : f32 to vector<8x128xf32>
    %661 = arith.addf %659, %660 : vector<8x128xf32>
    %662 = arith.mulf %651, %604 : vector<8x128xf32>
    %663 = arith.mulf %643, %653 : vector<8x128xf32>
    %664 = arith.addf %662, %663 : vector<8x128xf32>
    %665 = math.tanh %664 : vector<8x128xf32>
    %666 = arith.mulf %661, %665 : vector<8x128xf32>
    %667 = arith.truncf %666 : vector<8x128xf32> to vector<8x128xbf16>
    %668 = arith.index_cast %c1_i32_237 : i32 to index
    %c0_256 = arith.constant 0 : index
    %c0_257 = arith.constant 0 : index
    %669 = vector.load %arg9[%668, %c0_256, %c0_257] : memref<8x8x128xbf16, #tpu.memory_space<vmem>>, vector<1x8x128xbf16>
    %670 = vector.shape_cast %669 : vector<1x8x128xbf16> to vector<8x128xbf16>
    %671 = vector.shape_cast %667 : vector<8x128xbf16> to vector<1x8x128xbf16>
    tpu.vector_store %arg9[%668, %c0_256, %c0_257], %671 {strides = array<i32>} : memref<8x8x128xbf16, #tpu.memory_space<vmem>>, vector<1x8x128xbf16>,
    %c2_i32_258 = arith.constant 2 : i32
    %672 = arith.index_cast %c2_i32_258 : i32 to index
    %c0_259 = arith.constant 0 : index
    %c0_260 = arith.constant 0 : index
    %673 = vector.load %arg10[%672, %c0_259, %c0_260] : memref<8x8x128xf32, #tpu.memory_space<vmem>>, vector<1x8x128xf32>
    %674 = vector.shape_cast %673 : vector<1x8x128xf32> to vector<8x128xf32>
    %675 = arith.truncf %666 : vector<8x128xf32> to vector<8x128xbf16>
    %cst_261 = arith.constant dense<0.000000e+00> : vector<8x640xf32>
    %676 = tpu.matmul %675, %522, %cst_261 {dimension_numbers = #tpu.dot_dimension_numbers<[1], [0], [0], [1], [0, 0, 1, 1], [], []>} : vector<8x128xbf16>, vector<128x640xbf16>, vector<8x640xf32> -> vector<8x640xf32>
    %677 = vector.extract_strided_slice %676 {offsets = [0, 0], sizes = [8, 128], strides = [1, 1]} : vector<8x640xf32> to vector<8x128xf32>
    %678 = arith.index_cast %c2_i32_258 : i32 to index
    %c0_262 = arith.constant 0 : index
    %c0_263 = arith.constant 0 : index
    %679 = vector.load %arg11[%678, %c0_262, %c0_263] : memref<8x8x128xf32, #tpu.memory_space<vmem>>, vector<1x8x128xf32>
    %680 = vector.shape_cast %679 : vector<1x8x128xf32> to vector<8x128xf32>
    %681 = arith.addf %677, %680 : vector<8x128xf32>
    %cst_264 = arith.constant 5.000000e-01 : f32
    %682 = vector.broadcast %cst_264 : f32 to vector<8x128xf32>
    %683 = arith.mulf %682, %681 : vector<8x128xf32>
    %684 = math.tanh %683 : vector<8x128xf32>
    %cst_265 = arith.constant 5.000000e-01 : f32
    %685 = vector.broadcast %cst_265 : f32 to vector<8x128xf32>
    %686 = arith.mulf %685, %684 : vector<8x128xf32>
    %cst_266 = arith.constant 5.000000e-01 : f32
    %687 = vector.broadcast %cst_266 : f32 to vector<8x128xf32>
    %688 = arith.addf %686, %687 : vector<8x128xf32>
    %689 = arith.mulf %688, %674 : vector<8x128xf32>
    %690 = vector.extract_strided_slice %676 {offsets = [0, 128], sizes = [8, 512], strides = [1, 1]} : vector<8x640xf32> to vector<8x512xf32>
    %691 = arith.truncf %689 : vector<8x128xf32> to vector<8x128xbf16>
    %cst_267 = arith.constant dense<0.000000e+00> : vector<8x512xf32>
    %692 = tpu.matmul %691, %524, %cst_267 {dimension_numbers = #tpu.dot_dimension_numbers<[1], [0], [0], [1], [0, 0, 1, 1], [], []>} : vector<8x128xbf16>, vector<128x512xbf16>, vector<8x512xf32> -> vector<8x512xf32>
    %693 = arith.addf %690, %692 : vector<8x512xf32>
    %694 = vector.broadcast %530 : vector<1x512xf32> to vector<8x512xf32>
    %695 = arith.addf %693, %694 : vector<8x512xf32>
    %696 = vector.extract_strided_slice %695 {offsets = [0, 0], sizes = [8, 128], strides = [1, 1]} : vector<8x512xf32> to vector<8x128xf32>
    %cst_268 = arith.constant 5.000000e-01 : f32
    %697 = vector.broadcast %cst_268 : f32 to vector<8x128xf32>
    %698 = arith.mulf %697, %696 : vector<8x128xf32>
    %699 = math.tanh %698 : vector<8x128xf32>
    %cst_269 = arith.constant 5.000000e-01 : f32
    %700 = vector.broadcast %cst_269 : f32 to vector<8x128xf32>
    %701 = arith.mulf %700, %699 : vector<8x128xf32>
    %cst_270 = arith.constant 5.000000e-01 : f32
    %702 = vector.broadcast %cst_270 : f32 to vector<8x128xf32>
    %703 = arith.addf %701, %702 : vector<8x128xf32>
    %704 = vector.extract_strided_slice %695 {offsets = [0, 128], sizes = [8, 128], strides = [1, 1]} : vector<8x512xf32> to vector<8x128xf32>
    %cst_271 = arith.constant 5.000000e-01 : f32
    %705 = vector.broadcast %cst_271 : f32 to vector<8x128xf32>
    %706 = arith.mulf %705, %704 : vector<8x128xf32>
    %707 = math.tanh %706 : vector<8x128xf32>
    %cst_272 = arith.constant 5.000000e-01 : f32
    %708 = vector.broadcast %cst_272 : f32 to vector<8x128xf32>
    %709 = arith.mulf %708, %707 : vector<8x128xf32>
    %cst_273 = arith.constant 5.000000e-01 : f32
    %710 = vector.broadcast %cst_273 : f32 to vector<8x128xf32>
    %711 = arith.addf %709, %710 : vector<8x128xf32>
    %712 = vector.extract_strided_slice %695 {offsets = [0, 256], sizes = [8, 128], strides = [1, 1]} : vector<8x512xf32> to vector<8x128xf32>
    %713 = math.tanh %712 : vector<8x128xf32>
    %714 = vector.extract_strided_slice %695 {offsets = [0, 384], sizes = [8, 128], strides = [1, 1]} : vector<8x512xf32> to vector<8x128xf32>
    %cst_274 = arith.constant 5.000000e-01 : f32
    %715 = vector.broadcast %cst_274 : f32 to vector<8x128xf32>
    %716 = arith.mulf %715, %714 : vector<8x128xf32>
    %717 = math.tanh %716 : vector<8x128xf32>
    %cst_275 = arith.constant 5.000000e-01 : f32
    %718 = vector.broadcast %cst_275 : f32 to vector<8x128xf32>
    %719 = arith.mulf %718, %717 : vector<8x128xf32>
    %cst_276 = arith.constant 5.000000e-01 : f32
    %720 = vector.broadcast %cst_276 : f32 to vector<8x128xf32>
    %721 = arith.addf %719, %720 : vector<8x128xf32>
    %722 = arith.mulf %711, %664 : vector<8x128xf32>
    %723 = arith.mulf %703, %713 : vector<8x128xf32>
    %724 = arith.addf %722, %723 : vector<8x128xf32>
    %725 = math.tanh %724 : vector<8x128xf32>
    %726 = arith.mulf %721, %725 : vector<8x128xf32>
    %727 = arith.truncf %726 : vector<8x128xf32> to vector<8x128xbf16>
    %728 = arith.index_cast %c2_i32_258 : i32 to index
    %c0_277 = arith.constant 0 : index
    %c0_278 = arith.constant 0 : index
    %729 = vector.load %arg9[%728, %c0_277, %c0_278] : memref<8x8x128xbf16, #tpu.memory_space<vmem>>, vector<1x8x128xbf16>
    %730 = vector.shape_cast %729 : vector<1x8x128xbf16> to vector<8x128xbf16>
    %731 = vector.shape_cast %727 : vector<8x128xbf16> to vector<1x8x128xbf16>
    tpu.vector_store %arg9[%728, %c0_277, %c0_278], %731 {strides = array<i32>} : memref<8x8x128xbf16, #tpu.memory_space<vmem>>, vector<1x8x128xbf16>,
    %c3_i32_279 = arith.constant 3 : i32
    %732 = arith.index_cast %c3_i32_279 : i32 to index
    %c0_280 = arith.constant 0 : index
    %c0_281 = arith.constant 0 : index
    %733 = vector.load %arg10[%732, %c0_280, %c0_281] : memref<8x8x128xf32, #tpu.memory_space<vmem>>, vector<1x8x128xf32>
    %734 = vector.shape_cast %733 : vector<1x8x128xf32> to vector<8x128xf32>
    %735 = arith.truncf %726 : vector<8x128xf32> to vector<8x128xbf16>
    %cst_282 = arith.constant dense<0.000000e+00> : vector<8x640xf32>
    %736 = tpu.matmul %735, %522, %cst_282 {dimension_numbers = #tpu.dot_dimension_numbers<[1], [0], [0], [1], [0, 0, 1, 1], [], []>} : vector<8x128xbf16>, vector<128x640xbf16>, vector<8x640xf32> -> vector<8x640xf32>
    %737 = vector.extract_strided_slice %736 {offsets = [0, 0], sizes = [8, 128], strides = [1, 1]} : vector<8x640xf32> to vector<8x128xf32>
    %738 = arith.index_cast %c3_i32_279 : i32 to index
    %c0_283 = arith.constant 0 : index
    %c0_284 = arith.constant 0 : index
    %739 = vector.load %arg11[%738, %c0_283, %c0_284] : memref<8x8x128xf32, #tpu.memory_space<vmem>>, vector<1x8x128xf32>
    %740 = vector.shape_cast %739 : vector<1x8x128xf32> to vector<8x128xf32>
    %741 = arith.addf %737, %740 : vector<8x128xf32>
    %cst_285 = arith.constant 5.000000e-01 : f32
    %742 = vector.broadcast %cst_285 : f32 to vector<8x128xf32>
    %743 = arith.mulf %742, %741 : vector<8x128xf32>
    %744 = math.tanh %743 : vector<8x128xf32>
    %cst_286 = arith.constant 5.000000e-01 : f32
    %745 = vector.broadcast %cst_286 : f32 to vector<8x128xf32>
    %746 = arith.mulf %745, %744 : vector<8x128xf32>
    %cst_287 = arith.constant 5.000000e-01 : f32
    %747 = vector.broadcast %cst_287 : f32 to vector<8x128xf32>
    %748 = arith.addf %746, %747 : vector<8x128xf32>
    %749 = arith.mulf %748, %734 : vector<8x128xf32>
    %750 = vector.extract_strided_slice %736 {offsets = [0, 128], sizes = [8, 512], strides = [1, 1]} : vector<8x640xf32> to vector<8x512xf32>
    %751 = arith.truncf %749 : vector<8x128xf32> to vector<8x128xbf16>
    %cst_288 = arith.constant dense<0.000000e+00> : vector<8x512xf32>
    %752 = tpu.matmul %751, %524, %cst_288 {dimension_numbers = #tpu.dot_dimension_numbers<[1], [0], [0], [1], [0, 0, 1, 1], [], []>} : vector<8x128xbf16>, vector<128x512xbf16>, vector<8x512xf32> -> vector<8x512xf32>
    %753 = arith.addf %750, %752 : vector<8x512xf32>
    %754 = vector.broadcast %530 : vector<1x512xf32> to vector<8x512xf32>
    %755 = arith.addf %753, %754 : vector<8x512xf32>
    %756 = vector.extract_strided_slice %755 {offsets = [0, 0], sizes = [8, 128], strides = [1, 1]} : vector<8x512xf32> to vector<8x128xf32>
    %cst_289 = arith.constant 5.000000e-01 : f32
    %757 = vector.broadcast %cst_289 : f32 to vector<8x128xf32>
    %758 = arith.mulf %757, %756 : vector<8x128xf32>
    %759 = math.tanh %758 : vector<8x128xf32>
    %cst_290 = arith.constant 5.000000e-01 : f32
    %760 = vector.broadcast %cst_290 : f32 to vector<8x128xf32>
    %761 = arith.mulf %760, %759 : vector<8x128xf32>
    %cst_291 = arith.constant 5.000000e-01 : f32
    %762 = vector.broadcast %cst_291 : f32 to vector<8x128xf32>
    %763 = arith.addf %761, %762 : vector<8x128xf32>
    %764 = vector.extract_strided_slice %755 {offsets = [0, 128], sizes = [8, 128], strides = [1, 1]} : vector<8x512xf32> to vector<8x128xf32>
    %cst_292 = arith.constant 5.000000e-01 : f32
    %765 = vector.broadcast %cst_292 : f32 to vector<8x128xf32>
    %766 = arith.mulf %765, %764 : vector<8x128xf32>
    %767 = math.tanh %766 : vector<8x128xf32>
    %cst_293 = arith.constant 5.000000e-01 : f32
    %768 = vector.broadcast %cst_293 : f32 to vector<8x128xf32>
    %769 = arith.mulf %768, %767 : vector<8x128xf32>
    %cst_294 = arith.constant 5.000000e-01 : f32
    %770 = vector.broadcast %cst_294 : f32 to vector<8x128xf32>
    %771 = arith.addf %769, %770 : vector<8x128xf32>
    %772 = vector.extract_strided_slice %755 {offsets = [0, 256], sizes = [8, 128], strides = [1, 1]} : vector<8x512xf32> to vector<8x128xf32>
    %773 = math.tanh %772 : vector<8x128xf32>
    %774 = vector.extract_strided_slice %755 {offsets = [0, 384], sizes = [8, 128], strides = [1, 1]} : vector<8x512xf32> to vector<8x128xf32>
    %cst_295 = arith.constant 5.000000e-01 : f32
    %775 = vector.broadcast %cst_295 : f32 to vector<8x128xf32>
    %776 = arith.mulf %775, %774 : vector<8x128xf32>
    %777 = math.tanh %776 : vector<8x128xf32>
    %cst_296 = arith.constant 5.000000e-01 : f32
    %778 = vector.broadcast %cst_296 : f32 to vector<8x128xf32>
    %779 = arith.mulf %778, %777 : vector<8x128xf32>
    %cst_297 = arith.constant 5.000000e-01 : f32
    %780 = vector.broadcast %cst_297 : f32 to vector<8x128xf32>
    %781 = arith.addf %779, %780 : vector<8x128xf32>
    %782 = arith.mulf %771, %724 : vector<8x128xf32>
    %783 = arith.mulf %763, %773 : vector<8x128xf32>
    %784 = arith.addf %782, %783 : vector<8x128xf32>
    %785 = math.tanh %784 : vector<8x128xf32>
    %786 = arith.mulf %781, %785 : vector<8x128xf32>
    %787 = arith.truncf %786 : vector<8x128xf32> to vector<8x128xbf16>
    %788 = arith.index_cast %c3_i32_279 : i32 to index
    %c0_298 = arith.constant 0 : index
    %c0_299 = arith.constant 0 : index
    %789 = vector.load %arg9[%788, %c0_298, %c0_299] : memref<8x8x128xbf16, #tpu.memory_space<vmem>>, vector<1x8x128xbf16>
    %790 = vector.shape_cast %789 : vector<1x8x128xbf16> to vector<8x128xbf16>
    %791 = vector.shape_cast %787 : vector<8x128xbf16> to vector<1x8x128xbf16>
    tpu.vector_store %arg9[%788, %c0_298, %c0_299], %791 {strides = array<i32>} : memref<8x8x128xbf16, #tpu.memory_space<vmem>>, vector<1x8x128xbf16>,
    %c4_i32_300 = arith.constant 4 : i32
    %792 = arith.index_cast %c4_i32_300 : i32 to index
    %c0_301 = arith.constant 0 : index
    %c0_302 = arith.constant 0 : index
    %793 = vector.load %arg10[%792, %c0_301, %c0_302] : memref<8x8x128xf32, #tpu.memory_space<vmem>>, vector<1x8x128xf32>
    %794 = vector.shape_cast %793 : vector<1x8x128xf32> to vector<8x128xf32>
    %795 = arith.truncf %786 : vector<8x128xf32> to vector<8x128xbf16>
    %cst_303 = arith.constant dense<0.000000e+00> : vector<8x640xf32>
    %796 = tpu.matmul %795, %522, %cst_303 {dimension_numbers = #tpu.dot_dimension_numbers<[1], [0], [0], [1], [0, 0, 1, 1], [], []>} : vector<8x128xbf16>, vector<128x640xbf16>, vector<8x640xf32> -> vector<8x640xf32>
    %797 = vector.extract_strided_slice %796 {offsets = [0, 0], sizes = [8, 128], strides = [1, 1]} : vector<8x640xf32> to vector<8x128xf32>
    %798 = arith.index_cast %c4_i32_300 : i32 to index
    %c0_304 = arith.constant 0 : index
    %c0_305 = arith.constant 0 : index
    %799 = vector.load %arg11[%798, %c0_304, %c0_305] : memref<8x8x128xf32, #tpu.memory_space<vmem>>, vector<1x8x128xf32>
    %800 = vector.shape_cast %799 : vector<1x8x128xf32> to vector<8x128xf32>
    %801 = arith.addf %797, %800 : vector<8x128xf32>
    %cst_306 = arith.constant 5.000000e-01 : f32
    %802 = vector.broadcast %cst_306 : f32 to vector<8x128xf32>
    %803 = arith.mulf %802, %801 : vector<8x128xf32>
    %804 = math.tanh %803 : vector<8x128xf32>
    %cst_307 = arith.constant 5.000000e-01 : f32
    %805 = vector.broadcast %cst_307 : f32 to vector<8x128xf32>
    %806 = arith.mulf %805, %804 : vector<8x128xf32>
    %cst_308 = arith.constant 5.000000e-01 : f32
    %807 = vector.broadcast %cst_308 : f32 to vector<8x128xf32>
    %808 = arith.addf %806, %807 : vector<8x128xf32>
    %809 = arith.mulf %808, %794 : vector<8x128xf32>
    %810 = vector.extract_strided_slice %796 {offsets = [0, 128], sizes = [8, 512], strides = [1, 1]} : vector<8x640xf32> to vector<8x512xf32>
    %811 = arith.truncf %809 : vector<8x128xf32> to vector<8x128xbf16>
    %cst_309 = arith.constant dense<0.000000e+00> : vector<8x512xf32>
    %812 = tpu.matmul %811, %524, %cst_309 {dimension_numbers = #tpu.dot_dimension_numbers<[1], [0], [0], [1], [0, 0, 1, 1], [], []>} : vector<8x128xbf16>, vector<128x512xbf16>, vector<8x512xf32> -> vector<8x512xf32>
    %813 = arith.addf %810, %812 : vector<8x512xf32>
    %814 = vector.broadcast %530 : vector<1x512xf32> to vector<8x512xf32>
    %815 = arith.addf %813, %814 : vector<8x512xf32>
    %816 = vector.extract_strided_slice %815 {offsets = [0, 0], sizes = [8, 128], strides = [1, 1]} : vector<8x512xf32> to vector<8x128xf32>
    %cst_310 = arith.constant 5.000000e-01 : f32
    %817 = vector.broadcast %cst_310 : f32 to vector<8x128xf32>
    %818 = arith.mulf %817, %816 : vector<8x128xf32>
    %819 = math.tanh %818 : vector<8x128xf32>
    %cst_311 = arith.constant 5.000000e-01 : f32
    %820 = vector.broadcast %cst_311 : f32 to vector<8x128xf32>
    %821 = arith.mulf %820, %819 : vector<8x128xf32>
    %cst_312 = arith.constant 5.000000e-01 : f32
    %822 = vector.broadcast %cst_312 : f32 to vector<8x128xf32>
    %823 = arith.addf %821, %822 : vector<8x128xf32>
    %824 = vector.extract_strided_slice %815 {offsets = [0, 128], sizes = [8, 128], strides = [1, 1]} : vector<8x512xf32> to vector<8x128xf32>
    %cst_313 = arith.constant 5.000000e-01 : f32
    %825 = vector.broadcast %cst_313 : f32 to vector<8x128xf32>
    %826 = arith.mulf %825, %824 : vector<8x128xf32>
    %827 = math.tanh %826 : vector<8x128xf32>
    %cst_314 = arith.constant 5.000000e-01 : f32
    %828 = vector.broadcast %cst_314 : f32 to vector<8x128xf32>
    %829 = arith.mulf %828, %827 : vector<8x128xf32>
    %cst_315 = arith.constant 5.000000e-01 : f32
    %830 = vector.broadcast %cst_315 : f32 to vector<8x128xf32>
    %831 = arith.addf %829, %830 : vector<8x128xf32>
    %832 = vector.extract_strided_slice %815 {offsets = [0, 256], sizes = [8, 128], strides = [1, 1]} : vector<8x512xf32> to vector<8x128xf32>
    %833 = math.tanh %832 : vector<8x128xf32>
    %834 = vector.extract_strided_slice %815 {offsets = [0, 384], sizes = [8, 128], strides = [1, 1]} : vector<8x512xf32> to vector<8x128xf32>
    %cst_316 = arith.constant 5.000000e-01 : f32
    %835 = vector.broadcast %cst_316 : f32 to vector<8x128xf32>
    %836 = arith.mulf %835, %834 : vector<8x128xf32>
    %837 = math.tanh %836 : vector<8x128xf32>
    %cst_317 = arith.constant 5.000000e-01 : f32
    %838 = vector.broadcast %cst_317 : f32 to vector<8x128xf32>
    %839 = arith.mulf %838, %837 : vector<8x128xf32>
    %cst_318 = arith.constant 5.000000e-01 : f32
    %840 = vector.broadcast %cst_318 : f32 to vector<8x128xf32>
    %841 = arith.addf %839, %840 : vector<8x128xf32>
    %842 = arith.mulf %831, %784 : vector<8x128xf32>
    %843 = arith.mulf %823, %833 : vector<8x128xf32>
    %844 = arith.addf %842, %843 : vector<8x128xf32>
    %845 = math.tanh %844 : vector<8x128xf32>
    %846 = arith.mulf %841, %845 : vector<8x128xf32>
    %847 = arith.truncf %846 : vector<8x128xf32> to vector<8x128xbf16>
    %848 = arith.index_cast %c4_i32_300 : i32 to index
    %c0_319 = arith.constant 0 : index
    %c0_320 = arith.constant 0 : index
    %849 = vector.load %arg9[%848, %c0_319, %c0_320] : memref<8x8x128xbf16, #tpu.memory_space<vmem>>, vector<1x8x128xbf16>
    %850 = vector.shape_cast %849 : vector<1x8x128xbf16> to vector<8x128xbf16>
    %851 = vector.shape_cast %847 : vector<8x128xbf16> to vector<1x8x128xbf16>
    tpu.vector_store %arg9[%848, %c0_319, %c0_320], %851 {strides = array<i32>} : memref<8x8x128xbf16, #tpu.memory_space<vmem>>, vector<1x8x128xbf16>,
    %c5_i32_321 = arith.constant 5 : i32
    %852 = arith.index_cast %c5_i32_321 : i32 to index
    %c0_322 = arith.constant 0 : index
    %c0_323 = arith.constant 0 : index
    %853 = vector.load %arg10[%852, %c0_322, %c0_323] : memref<8x8x128xf32, #tpu.memory_space<vmem>>, vector<1x8x128xf32>
    %854 = vector.shape_cast %853 : vector<1x8x128xf32> to vector<8x128xf32>
    %855 = arith.truncf %846 : vector<8x128xf32> to vector<8x128xbf16>
    %cst_324 = arith.constant dense<0.000000e+00> : vector<8x640xf32>
    %856 = tpu.matmul %855, %522, %cst_324 {dimension_numbers = #tpu.dot_dimension_numbers<[1], [0], [0], [1], [0, 0, 1, 1], [], []>} : vector<8x128xbf16>, vector<128x640xbf16>, vector<8x640xf32> -> vector<8x640xf32>
    %857 = vector.extract_strided_slice %856 {offsets = [0, 0], sizes = [8, 128], strides = [1, 1]} : vector<8x640xf32> to vector<8x128xf32>
    %858 = arith.index_cast %c5_i32_321 : i32 to index
    %c0_325 = arith.constant 0 : index
    %c0_326 = arith.constant 0 : index
    %859 = vector.load %arg11[%858, %c0_325, %c0_326] : memref<8x8x128xf32, #tpu.memory_space<vmem>>, vector<1x8x128xf32>
    %860 = vector.shape_cast %859 : vector<1x8x128xf32> to vector<8x128xf32>
    %861 = arith.addf %857, %860 : vector<8x128xf32>
    %cst_327 = arith.constant 5.000000e-01 : f32
    %862 = vector.broadcast %cst_327 : f32 to vector<8x128xf32>
    %863 = arith.mulf %862, %861 : vector<8x128xf32>
    %864 = math.tanh %863 : vector<8x128xf32>
    %cst_328 = arith.constant 5.000000e-01 : f32
    %865 = vector.broadcast %cst_328 : f32 to vector<8x128xf32>
    %866 = arith.mulf %865, %864 : vector<8x128xf32>
    %cst_329 = arith.constant 5.000000e-01 : f32
    %867 = vector.broadcast %cst_329 : f32 to vector<8x128xf32>
    %868 = arith.addf %866, %867 : vector<8x128xf32>
    %869 = arith.mulf %868, %854 : vector<8x128xf32>
    %870 = vector.extract_strided_slice %856 {offsets = [0, 128], sizes = [8, 512], strides = [1, 1]} : vector<8x640xf32> to vector<8x512xf32>
    %871 = arith.truncf %869 : vector<8x128xf32> to vector<8x128xbf16>
    %cst_330 = arith.constant dense<0.000000e+00> : vector<8x512xf32>
    %872 = tpu.matmul %871, %524, %cst_330 {dimension_numbers = #tpu.dot_dimension_numbers<[1], [0], [0], [1], [0, 0, 1, 1], [], []>} : vector<8x128xbf16>, vector<128x512xbf16>, vector<8x512xf32> -> vector<8x512xf32>
    %873 = arith.addf %870, %872 : vector<8x512xf32>
    %874 = vector.broadcast %530 : vector<1x512xf32> to vector<8x512xf32>
    %875 = arith.addf %873, %874 : vector<8x512xf32>
    %876 = vector.extract_strided_slice %875 {offsets = [0, 0], sizes = [8, 128], strides = [1, 1]} : vector<8x512xf32> to vector<8x128xf32>
    %cst_331 = arith.constant 5.000000e-01 : f32
    %877 = vector.broadcast %cst_331 : f32 to vector<8x128xf32>
    %878 = arith.mulf %877, %876 : vector<8x128xf32>
    %879 = math.tanh %878 : vector<8x128xf32>
    %cst_332 = arith.constant 5.000000e-01 : f32
    %880 = vector.broadcast %cst_332 : f32 to vector<8x128xf32>
    %881 = arith.mulf %880, %879 : vector<8x128xf32>
    %cst_333 = arith.constant 5.000000e-01 : f32
    %882 = vector.broadcast %cst_333 : f32 to vector<8x128xf32>
    %883 = arith.addf %881, %882 : vector<8x128xf32>
    %884 = vector.extract_strided_slice %875 {offsets = [0, 128], sizes = [8, 128], strides = [1, 1]} : vector<8x512xf32> to vector<8x128xf32>
    %cst_334 = arith.constant 5.000000e-01 : f32
    %885 = vector.broadcast %cst_334 : f32 to vector<8x128xf32>
    %886 = arith.mulf %885, %884 : vector<8x128xf32>
    %887 = math.tanh %886 : vector<8x128xf32>
    %cst_335 = arith.constant 5.000000e-01 : f32
    %888 = vector.broadcast %cst_335 : f32 to vector<8x128xf32>
    %889 = arith.mulf %888, %887 : vector<8x128xf32>
    %cst_336 = arith.constant 5.000000e-01 : f32
    %890 = vector.broadcast %cst_336 : f32 to vector<8x128xf32>
    %891 = arith.addf %889, %890 : vector<8x128xf32>
    %892 = vector.extract_strided_slice %875 {offsets = [0, 256], sizes = [8, 128], strides = [1, 1]} : vector<8x512xf32> to vector<8x128xf32>
    %893 = math.tanh %892 : vector<8x128xf32>
    %894 = vector.extract_strided_slice %875 {offsets = [0, 384], sizes = [8, 128], strides = [1, 1]} : vector<8x512xf32> to vector<8x128xf32>
    %cst_337 = arith.constant 5.000000e-01 : f32
    %895 = vector.broadcast %cst_337 : f32 to vector<8x128xf32>
    %896 = arith.mulf %895, %894 : vector<8x128xf32>
    %897 = math.tanh %896 : vector<8x128xf32>
    %cst_338 = arith.constant 5.000000e-01 : f32
    %898 = vector.broadcast %cst_338 : f32 to vector<8x128xf32>
    %899 = arith.mulf %898, %897 : vector<8x128xf32>
    %cst_339 = arith.constant 5.000000e-01 : f32
    %900 = vector.broadcast %cst_339 : f32 to vector<8x128xf32>
    %901 = arith.addf %899, %900 : vector<8x128xf32>
    %902 = arith.mulf %891, %844 : vector<8x128xf32>
    %903 = arith.mulf %883, %893 : vector<8x128xf32>
    %904 = arith.addf %902, %903 : vector<8x128xf32>
    %905 = math.tanh %904 : vector<8x128xf32>
    %906 = arith.mulf %901, %905 : vector<8x128xf32>
    %907 = arith.truncf %906 : vector<8x128xf32> to vector<8x128xbf16>
    %908 = arith.index_cast %c5_i32_321 : i32 to index
    %c0_340 = arith.constant 0 : index
    %c0_341 = arith.constant 0 : index
    %909 = vector.load %arg9[%908, %c0_340, %c0_341] : memref<8x8x128xbf16, #tpu.memory_space<vmem>>, vector<1x8x128xbf16>
    %910 = vector.shape_cast %909 : vector<1x8x128xbf16> to vector<8x128xbf16>
    %911 = vector.shape_cast %907 : vector<8x128xbf16> to vector<1x8x128xbf16>
    tpu.vector_store %arg9[%908, %c0_340, %c0_341], %911 {strides = array<i32>} : memref<8x8x128xbf16, #tpu.memory_space<vmem>>, vector<1x8x128xbf16>,
    %c6_i32_342 = arith.constant 6 : i32
    %912 = arith.index_cast %c6_i32_342 : i32 to index
    %c0_343 = arith.constant 0 : index
    %c0_344 = arith.constant 0 : index
    %913 = vector.load %arg10[%912, %c0_343, %c0_344] : memref<8x8x128xf32, #tpu.memory_space<vmem>>, vector<1x8x128xf32>
    %914 = vector.shape_cast %913 : vector<1x8x128xf32> to vector<8x128xf32>
    %915 = arith.truncf %906 : vector<8x128xf32> to vector<8x128xbf16>
    %cst_345 = arith.constant dense<0.000000e+00> : vector<8x640xf32>
    %916 = tpu.matmul %915, %522, %cst_345 {dimension_numbers = #tpu.dot_dimension_numbers<[1], [0], [0], [1], [0, 0, 1, 1], [], []>} : vector<8x128xbf16>, vector<128x640xbf16>, vector<8x640xf32> -> vector<8x640xf32>
    %917 = vector.extract_strided_slice %916 {offsets = [0, 0], sizes = [8, 128], strides = [1, 1]} : vector<8x640xf32> to vector<8x128xf32>
    %918 = arith.index_cast %c6_i32_342 : i32 to index
    %c0_346 = arith.constant 0 : index
    %c0_347 = arith.constant 0 : index
    %919 = vector.load %arg11[%918, %c0_346, %c0_347] : memref<8x8x128xf32, #tpu.memory_space<vmem>>, vector<1x8x128xf32>
    %920 = vector.shape_cast %919 : vector<1x8x128xf32> to vector<8x128xf32>
    %921 = arith.addf %917, %920 : vector<8x128xf32>
    %cst_348 = arith.constant 5.000000e-01 : f32
    %922 = vector.broadcast %cst_348 : f32 to vector<8x128xf32>
    %923 = arith.mulf %922, %921 : vector<8x128xf32>
    %924 = math.tanh %923 : vector<8x128xf32>
    %cst_349 = arith.constant 5.000000e-01 : f32
    %925 = vector.broadcast %cst_349 : f32 to vector<8x128xf32>
    %926 = arith.mulf %925, %924 : vector<8x128xf32>
    %cst_350 = arith.constant 5.000000e-01 : f32
    %927 = vector.broadcast %cst_350 : f32 to vector<8x128xf32>
    %928 = arith.addf %926, %927 : vector<8x128xf32>
    %929 = arith.mulf %928, %914 : vector<8x128xf32>
    %930 = vector.extract_strided_slice %916 {offsets = [0, 128], sizes = [8, 512], strides = [1, 1]} : vector<8x640xf32> to vector<8x512xf32>
    %931 = arith.truncf %929 : vector<8x128xf32> to vector<8x128xbf16>
    %cst_351 = arith.constant dense<0.000000e+00> : vector<8x512xf32>
    %932 = tpu.matmul %931, %524, %cst_351 {dimension_numbers = #tpu.dot_dimension_numbers<[1], [0], [0], [1], [0, 0, 1, 1], [], []>} : vector<8x128xbf16>, vector<128x512xbf16>, vector<8x512xf32> -> vector<8x512xf32>
    %933 = arith.addf %930, %932 : vector<8x512xf32>
    %934 = vector.broadcast %530 : vector<1x512xf32> to vector<8x512xf32>
    %935 = arith.addf %933, %934 : vector<8x512xf32>
    %936 = vector.extract_strided_slice %935 {offsets = [0, 0], sizes = [8, 128], strides = [1, 1]} : vector<8x512xf32> to vector<8x128xf32>
    %cst_352 = arith.constant 5.000000e-01 : f32
    %937 = vector.broadcast %cst_352 : f32 to vector<8x128xf32>
    %938 = arith.mulf %937, %936 : vector<8x128xf32>
    %939 = math.tanh %938 : vector<8x128xf32>
    %cst_353 = arith.constant 5.000000e-01 : f32
    %940 = vector.broadcast %cst_353 : f32 to vector<8x128xf32>
    %941 = arith.mulf %940, %939 : vector<8x128xf32>
    %cst_354 = arith.constant 5.000000e-01 : f32
    %942 = vector.broadcast %cst_354 : f32 to vector<8x128xf32>
    %943 = arith.addf %941, %942 : vector<8x128xf32>
    %944 = vector.extract_strided_slice %935 {offsets = [0, 128], sizes = [8, 128], strides = [1, 1]} : vector<8x512xf32> to vector<8x128xf32>
    %cst_355 = arith.constant 5.000000e-01 : f32
    %945 = vector.broadcast %cst_355 : f32 to vector<8x128xf32>
    %946 = arith.mulf %945, %944 : vector<8x128xf32>
    %947 = math.tanh %946 : vector<8x128xf32>
    %cst_356 = arith.constant 5.000000e-01 : f32
    %948 = vector.broadcast %cst_356 : f32 to vector<8x128xf32>
    %949 = arith.mulf %948, %947 : vector<8x128xf32>
    %cst_357 = arith.constant 5.000000e-01 : f32
    %950 = vector.broadcast %cst_357 : f32 to vector<8x128xf32>
    %951 = arith.addf %949, %950 : vector<8x128xf32>
    %952 = vector.extract_strided_slice %935 {offsets = [0, 256], sizes = [8, 128], strides = [1, 1]} : vector<8x512xf32> to vector<8x128xf32>
    %953 = math.tanh %952 : vector<8x128xf32>
    %954 = vector.extract_strided_slice %935 {offsets = [0, 384], sizes = [8, 128], strides = [1, 1]} : vector<8x512xf32> to vector<8x128xf32>
    %cst_358 = arith.constant 5.000000e-01 : f32
    %955 = vector.broadcast %cst_358 : f32 to vector<8x128xf32>
    %956 = arith.mulf %955, %954 : vector<8x128xf32>
    %957 = math.tanh %956 : vector<8x128xf32>
    %cst_359 = arith.constant 5.000000e-01 : f32
    %958 = vector.broadcast %cst_359 : f32 to vector<8x128xf32>
    %959 = arith.mulf %958, %957 : vector<8x128xf32>
    %cst_360 = arith.constant 5.000000e-01 : f32
    %960 = vector.broadcast %cst_360 : f32 to vector<8x128xf32>
    %961 = arith.addf %959, %960 : vector<8x128xf32>
    %962 = arith.mulf %951, %904 : vector<8x128xf32>
    %963 = arith.mulf %943, %953 : vector<8x128xf32>
    %964 = arith.addf %962, %963 : vector<8x128xf32>
    %965 = math.tanh %964 : vector<8x128xf32>
    %966 = arith.mulf %961, %965 : vector<8x128xf32>
    %967 = arith.truncf %966 : vector<8x128xf32> to vector<8x128xbf16>
    %968 = arith.index_cast %c6_i32_342 : i32 to index
    %c0_361 = arith.constant 0 : index
    %c0_362 = arith.constant 0 : index
    %969 = vector.load %arg9[%968, %c0_361, %c0_362] : memref<8x8x128xbf16, #tpu.memory_space<vmem>>, vector<1x8x128xbf16>
    %970 = vector.shape_cast %969 : vector<1x8x128xbf16> to vector<8x128xbf16>
    %971 = vector.shape_cast %967 : vector<8x128xbf16> to vector<1x8x128xbf16>
    tpu.vector_store %arg9[%968, %c0_361, %c0_362], %971 {strides = array<i32>} : memref<8x8x128xbf16, #tpu.memory_space<vmem>>, vector<1x8x128xbf16>,
    %c7_i32_363 = arith.constant 7 : i32
    %972 = arith.index_cast %c7_i32_363 : i32 to index
    %c0_364 = arith.constant 0 : index
    %c0_365 = arith.constant 0 : index
    %973 = vector.load %arg10[%972, %c0_364, %c0_365] : memref<8x8x128xf32, #tpu.memory_space<vmem>>, vector<1x8x128xf32>
    %974 = vector.shape_cast %973 : vector<1x8x128xf32> to vector<8x128xf32>
    %975 = arith.truncf %966 : vector<8x128xf32> to vector<8x128xbf16>
    %cst_366 = arith.constant dense<0.000000e+00> : vector<8x640xf32>
    %976 = tpu.matmul %975, %522, %cst_366 {dimension_numbers = #tpu.dot_dimension_numbers<[1], [0], [0], [1], [0, 0, 1, 1], [], []>} : vector<8x128xbf16>, vector<128x640xbf16>, vector<8x640xf32> -> vector<8x640xf32>
    %977 = vector.extract_strided_slice %976 {offsets = [0, 0], sizes = [8, 128], strides = [1, 1]} : vector<8x640xf32> to vector<8x128xf32>
    %978 = arith.index_cast %c7_i32_363 : i32 to index
    %c0_367 = arith.constant 0 : index
    %c0_368 = arith.constant 0 : index
    %979 = vector.load %arg11[%978, %c0_367, %c0_368] : memref<8x8x128xf32, #tpu.memory_space<vmem>>, vector<1x8x128xf32>
    %980 = vector.shape_cast %979 : vector<1x8x128xf32> to vector<8x128xf32>
    %981 = arith.addf %977, %980 : vector<8x128xf32>
    %cst_369 = arith.constant 5.000000e-01 : f32
    %982 = vector.broadcast %cst_369 : f32 to vector<8x128xf32>
    %983 = arith.mulf %982, %981 : vector<8x128xf32>
    %984 = math.tanh %983 : vector<8x128xf32>
    %cst_370 = arith.constant 5.000000e-01 : f32
    %985 = vector.broadcast %cst_370 : f32 to vector<8x128xf32>
    %986 = arith.mulf %985, %984 : vector<8x128xf32>
    %cst_371 = arith.constant 5.000000e-01 : f32
    %987 = vector.broadcast %cst_371 : f32 to vector<8x128xf32>
    %988 = arith.addf %986, %987 : vector<8x128xf32>
    %989 = arith.mulf %988, %974 : vector<8x128xf32>
    %990 = vector.extract_strided_slice %976 {offsets = [0, 128], sizes = [8, 512], strides = [1, 1]} : vector<8x640xf32> to vector<8x512xf32>
    %991 = arith.truncf %989 : vector<8x128xf32> to vector<8x128xbf16>
    %cst_372 = arith.constant dense<0.000000e+00> : vector<8x512xf32>
    %992 = tpu.matmul %991, %524, %cst_372 {dimension_numbers = #tpu.dot_dimension_numbers<[1], [0], [0], [1], [0, 0, 1, 1], [], []>} : vector<8x128xbf16>, vector<128x512xbf16>, vector<8x512xf32> -> vector<8x512xf32>
    %993 = arith.addf %990, %992 : vector<8x512xf32>
    %994 = vector.broadcast %530 : vector<1x512xf32> to vector<8x512xf32>
    %995 = arith.addf %993, %994 : vector<8x512xf32>
    %996 = vector.extract_strided_slice %995 {offsets = [0, 0], sizes = [8, 128], strides = [1, 1]} : vector<8x512xf32> to vector<8x128xf32>
    %cst_373 = arith.constant 5.000000e-01 : f32
    %997 = vector.broadcast %cst_373 : f32 to vector<8x128xf32>
    %998 = arith.mulf %997, %996 : vector<8x128xf32>
    %999 = math.tanh %998 : vector<8x128xf32>
    %cst_374 = arith.constant 5.000000e-01 : f32
    %1000 = vector.broadcast %cst_374 : f32 to vector<8x128xf32>
    %1001 = arith.mulf %1000, %999 : vector<8x128xf32>
    %cst_375 = arith.constant 5.000000e-01 : f32
    %1002 = vector.broadcast %cst_375 : f32 to vector<8x128xf32>
    %1003 = arith.addf %1001, %1002 : vector<8x128xf32>
    %1004 = vector.extract_strided_slice %995 {offsets = [0, 128], sizes = [8, 128], strides = [1, 1]} : vector<8x512xf32> to vector<8x128xf32>
    %cst_376 = arith.constant 5.000000e-01 : f32
    %1005 = vector.broadcast %cst_376 : f32 to vector<8x128xf32>
    %1006 = arith.mulf %1005, %1004 : vector<8x128xf32>
    %1007 = math.tanh %1006 : vector<8x128xf32>
    %cst_377 = arith.constant 5.000000e-01 : f32
    %1008 = vector.broadcast %cst_377 : f32 to vector<8x128xf32>
    %1009 = arith.mulf %1008, %1007 : vector<8x128xf32>
    %cst_378 = arith.constant 5.000000e-01 : f32
    %1010 = vector.broadcast %cst_378 : f32 to vector<8x128xf32>
    %1011 = arith.addf %1009, %1010 : vector<8x128xf32>
    %1012 = vector.extract_strided_slice %995 {offsets = [0, 256], sizes = [8, 128], strides = [1, 1]} : vector<8x512xf32> to vector<8x128xf32>
    %1013 = math.tanh %1012 : vector<8x128xf32>
    %1014 = vector.extract_strided_slice %995 {offsets = [0, 384], sizes = [8, 128], strides = [1, 1]} : vector<8x512xf32> to vector<8x128xf32>
    %cst_379 = arith.constant 5.000000e-01 : f32
    %1015 = vector.broadcast %cst_379 : f32 to vector<8x128xf32>
    %1016 = arith.mulf %1015, %1014 : vector<8x128xf32>
    %1017 = math.tanh %1016 : vector<8x128xf32>
    %cst_380 = arith.constant 5.000000e-01 : f32
    %1018 = vector.broadcast %cst_380 : f32 to vector<8x128xf32>
    %1019 = arith.mulf %1018, %1017 : vector<8x128xf32>
    %cst_381 = arith.constant 5.000000e-01 : f32
    %1020 = vector.broadcast %cst_381 : f32 to vector<8x128xf32>
    %1021 = arith.addf %1019, %1020 : vector<8x128xf32>
    %1022 = arith.mulf %1011, %964 : vector<8x128xf32>
    %1023 = arith.mulf %1003, %1013 : vector<8x128xf32>
    %1024 = arith.addf %1022, %1023 : vector<8x128xf32>
    %1025 = math.tanh %1024 : vector<8x128xf32>
    %1026 = arith.mulf %1021, %1025 : vector<8x128xf32>
    %1027 = arith.truncf %1026 : vector<8x128xf32> to vector<8x128xbf16>
    %1028 = arith.index_cast %c7_i32_363 : i32 to index
    %c0_382 = arith.constant 0 : index
    %c0_383 = arith.constant 0 : index
    %1029 = vector.load %arg9[%1028, %c0_382, %c0_383] : memref<8x8x128xbf16, #tpu.memory_space<vmem>>, vector<1x8x128xbf16>
    %1030 = vector.shape_cast %1029 : vector<1x8x128xbf16> to vector<8x128xbf16>
    %1031 = vector.shape_cast %1027 : vector<8x128xbf16> to vector<1x8x128xbf16>
    tpu.vector_store %arg9[%1028, %c0_382, %c0_383], %1031 {strides = array<i32>} : memref<8x8x128xbf16, #tpu.memory_space<vmem>>, vector<1x8x128xbf16>,
    %c8_i32_384 = arith.constant 8 : i32
    %c1_385 = arith.constant 1 : index
    %c0_386 = arith.constant 0 : index
    %c0_387 = arith.constant 0 : index
    %1032 = vector.load %arg12[%c1_385, %c0_386, %c0_387] : memref<2x8x128xf32, #tpu.memory_space<vmem>>, vector<1x8x128xf32>
    %1033 = vector.shape_cast %1032 : vector<1x8x128xf32> to vector<8x128xf32>
    %1034 = vector.shape_cast %1026 : vector<8x128xf32> to vector<1x8x128xf32>
    tpu.vector_store %arg12[%c1_385, %c0_386, %c0_387], %1034 {strides = array<i32>} : memref<2x8x128xf32, #tpu.memory_space<vmem>>, vector<1x8x128xf32>,
    %c1_388 = arith.constant 1 : index
    %c0_389 = arith.constant 0 : index
    %c0_390 = arith.constant 0 : index
    %1035 = vector.load %arg13[%c1_388, %c0_389, %c0_390] : memref<2x8x128xf32, #tpu.memory_space<vmem>>, vector<1x8x128xf32>
    %1036 = vector.shape_cast %1035 : vector<1x8x128xf32> to vector<8x128xf32>
    %1037 = vector.shape_cast %1024 : vector<8x128xf32> to vector<1x8x128xf32>
    tpu.vector_store %arg13[%c1_388, %c0_389, %c0_390], %1037 {strides = array<i32>} : memref<2x8x128xf32, #tpu.memory_space<vmem>>, vector<1x8x128xf32>,
    return
  }
  func.func @transform_0(%arg0: i32, %arg1: i32) -> (i32, i32, i32) {
    %c0_i32 = arith.constant 0 : i32
    %c0_i32_0 = arith.constant 0 : i32
    return %arg1, %arg0, %c0_i32 : i32, i32, i32
  }
  func.func @transform_1(%arg0: i32, %arg1: i32) -> (i32, i32, i32) {
    %c0_i32 = arith.constant 0 : i32
    %c0_i32_0 = arith.constant 0 : i32
    return %arg1, %arg0, %c0_i32 : i32, i32, i32
  }
  func.func @transform_2(%arg0: i32, %arg1: i32) -> (i32, i32, i32) {
    %c0_i32 = arith.constant 0 : i32
    %c0_i32_0 = arith.constant 0 : i32
    %c0_i32_1 = arith.constant 0 : i32
    %c0_i32_2 = arith.constant 0 : i32
    return %c0_i32, %c0_i32_0, %c0_i32_1 : i32, i32, i32
  }
  func.func @transform_3(%arg0: i32, %arg1: i32) -> (i32, i32, i32) {
    %c0_i32 = arith.constant 0 : i32
    %c0_i32_0 = arith.constant 0 : i32
    %c0_i32_1 = arith.constant 0 : i32
    %c0_i32_2 = arith.constant 0 : i32
    return %c0_i32, %c0_i32_0, %c0_i32_1 : i32, i32, i32
  }
  func.func @transform_4(%arg0: i32, %arg1: i32) -> (i32, i32, i32) {
    %c0_i32 = arith.constant 0 : i32
    %c0_i32_0 = arith.constant 0 : i32
    %c0_i32_1 = arith.constant 0 : i32
    %c0_i32_2 = arith.constant 0 : i32
    return %c0_i32, %c0_i32_0, %c0_i32_1 : i32, i32, i32
  }
  func.func @transform_5(%arg0: i32, %arg1: i32) -> (i32, i32, i32) {
    %c0_i32 = arith.constant 0 : i32
    %c0_i32_0 = arith.constant 0 : i32
    %c0_i32_1 = arith.constant 0 : i32
    %c0_i32_2 = arith.constant 0 : i32
    return %c0_i32, %c0_i32_0, %c0_i32_1 : i32, i32, i32
  }
  func.func @transform_6(%arg0: i32, %arg1: i32) -> (i32, i32, i32) {
    %c0_i32 = arith.constant 0 : i32
    %c0_i32_0 = arith.constant 0 : i32
    %c0_i32_1 = arith.constant 0 : i32
    %c0_i32_2 = arith.constant 0 : i32
    return %c0_i32, %c0_i32_0, %c0_i32_1 : i32, i32, i32
  }
  func.func @transform_7(%arg0: i32, %arg1: i32) -> (i32, i32, i32) {
    %c0_i32 = arith.constant 0 : i32
    %c0_i32_0 = arith.constant 0 : i32
    return %arg1, %arg0, %c0_i32 : i32, i32, i32
  }
}

</mosaic_0001>

<llo_original>
// kernel: tpu_custom_call.1
$region0: #{tpu_custom_call.1}
  #allocation0 [shape = 'u32[]', space=smem, size = 0x4, offset = 0x4, fixed_abs, tag = 'smem constant byte address 0x4 - core index']
  #allocation1 [shape = 'u32[72,128]{1,0:T(1,128)}', space=vmem, size = 0x9000, scoped, tag = 'internal scratch']
  #allocation2 [shape = 'f32[8,8,128]{2,1,0:T(8,128)}', space=vmem, size = 0x8000, scoped, tag = 'scratch operand']
  #allocation3 [shape = 'f32[8,8,128]{2,1,0:T(8,128)}', space=vmem, size = 0x8000, scoped, tag = 'scratch operand']
  #allocation4 [shape = 'f32[2,8,128]{2,1,0:T(8,128)}', space=vmem, size = 0x2000, scoped, tag = 'scratch operand']
  #allocation5 [shape = 'f32[2,8,128]{2,1,0:T(8,128)}', space=vmem, size = 0x2000, scoped, tag = 'scratch operand']
  %s0 = inlined_call_operand.vmem [shape: bf16[8,8,128], index: 0, kind: input, shape index: {}]
  %s1 = inlined_call_operand.vmem [shape: f32[8,8,2], index: 1, kind: input, shape index: {}]
  %s2 = inlined_call_operand.hbm [shape: bf16[2,128,640], index: 2, kind: input, shape index: {}]
  %s3 = inlined_call_operand.vmem [shape: f32[2,2,128], index: 3, kind: input, shape index: {}]
  %s4 = inlined_call_operand.vmem [shape: f32[2,1,128], index: 4, kind: input, shape index: {}]
  %s5 = inlined_call_operand.hbm [shape: bf16[2,128,512], index: 5, kind: input, shape index: {}]
  %s6 = inlined_call_operand.vmem [shape: f32[2,1,512], index: 6, kind: input, shape index: {}]
  %s7 = inlined_call_operand.hbm [shape: bf16[8,8,128], index: 7, kind: output, shape index: {}]
  %s8 = sld [smem:[#allocation0]]
  $region50: #{tpu_custom_call.1} parent=0
    _
  %s10 = ssub.s32 1, %s8
  %s11 = scalar_select 0, %s10, %s8
  $region1: #{tpu_custom_call.1} parent=0
    #allocation6 [shape = 'u8[327680]{0}', space=vmem, size = 0x50000, scoped, tag = 'input window, operand 2, single buffered']
    #allocation7 [shape = 's32[1]{0}', space=sflag, size = 0x4, scoped, tag = 'scoped memory for tpu_custom_call.1']
    #allocation8 [shape = 's32[1]{0}', space=sflag, size = 0x4, scoped, tag = 'scoped memory for tpu_custom_call.1']
    #allocation9 [shape = 'u8[262144]{0}', space=vmem, size = 0x40000, scoped, tag = 'input window, operand 5, single buffered']
    #allocation10 [shape = 's32[1]{0}', space=sflag, size = 0x4, scoped, tag = 'scoped memory for tpu_custom_call.1']
    #allocation11 [shape = 'u8[16384]{0}', space=vmem, size = 0x4000, scoped, tag = 'output window, operand 0, single buffered']
    %12 = vsyncpa [#allocation7], 0
    %13 = vsyncpa [#allocation10], 0
    %14 = vsyncpa [#allocation8], 0
    // Predicated region
    $region2: #{tpu_custom_call.1} parent=1 // pred_check
      _
    $region3: #{tpu_custom_call.1} parent=1 // pred_check_branch
      %16 = sbr.rel (0) target = $region5
    $region4: #{tpu_custom_call.1} parent=1 // pred_region
      _
    $region5: #{tpu_custom_call.1} parent=1 // pred_fallthru
      _
    // Predicated region
    $region6: #{tpu_custom_call.1} parent=1 // pred_check
      _
    $region7: #{tpu_custom_call.1} parent=1 // pred_check_branch
      %18 = sbr.rel (0) target = $region9
    $region8: #{tpu_custom_call.1} parent=1 // pred_region
      _
    $region9: #{tpu_custom_call.1} parent=1 // pred_fallthru
      _
    // Predicated region
    $region10: #{tpu_custom_call.1} parent=1 // pred_check
      _
    $region11: #{tpu_custom_call.1} parent=1 // pred_check_branch
      %20 = sbr.rel (0) target = $region13
    $region12: #{tpu_custom_call.1} parent=1 // pred_region
      %22 = vsyncadd [#allocation7], 0
      %s23 = sshll.u32 %s2, 4
      %s24 = int_to_ptr.hbm [resolvable:$true] %s23
      %s25 = sshll.u32 [#allocation6], 4
      %s26 = int_to_ptr.vmem [resolvable:$true] %s25
      %31 = dma.hbm_to_vmem [thread:$0]  %s24, 10240, %s26, [#allocation7], 320, 320, 20
    $region13: #{tpu_custom_call.1} parent=1 // pred_fallthru
      _
    // Predicated region
    $region14: #{tpu_custom_call.1} parent=1 // pred_check
      _
    $region15: #{tpu_custom_call.1} parent=1 // pred_check_branch
      %33 = sbr.rel (0) target = $region17
    $region16: #{tpu_custom_call.1} parent=1 // pred_region
      _
    $region17: #{tpu_custom_call.1} parent=1 // pred_fallthru
      _
    // Predicated region
    $region18: #{tpu_custom_call.1} parent=1 // pred_check
      _
    $region19: #{tpu_custom_call.1} parent=1 // pred_check_branch
      %35 = sbr.rel (0) target = $region21
    $region20: #{tpu_custom_call.1} parent=1 // pred_region
      _
    $region21: #{tpu_custom_call.1} parent=1 // pred_fallthru
      _
    // Predicated region
    $region22: #{tpu_custom_call.1} parent=1 // pred_check
      _
    $region23: #{tpu_custom_call.1} parent=1 // pred_check_branch
      %37 = sbr.rel (0) target = $region25
    $region24: #{tpu_custom_call.1} parent=1 // pred_region
      %39 = vsyncadd [#allocation10], 0
      %s40 = sshll.u32 %s5, 4
      %s41 = int_to_ptr.hbm [resolvable:$true] %s40
      %s42 = sshll.u32 [#allocation9], 4
      %s43 = int_to_ptr.vmem [resolvable:$true] %s42
      %48 = dma.hbm_to_vmem [thread:$0]  %s41, 8192, %s43, [#allocation10], 256, 256, 16
    $region25: #{tpu_custom_call.1} parent=1 // pred_fallthru
      _
    // Predicated region
    $region26: #{tpu_custom_call.1} parent=1 // pred_check
      _
    $region27: #{tpu_custom_call.1} parent=1 // pred_check_branch
      %50 = sbr.rel (0) target = $region29
    $region28: #{tpu_custom_call.1} parent=1 // pred_region
      _
    $region29: #{tpu_custom_call.1} parent=1 // pred_fallthru
      _
    // Predicated region
    $region30: #{tpu_custom_call.1} parent=1 // pred_check
      _
    $region31: #{tpu_custom_call.1} parent=1 // pred_check_branch
      %52 = sbr.rel (0) target = $region33
    $region32: #{tpu_custom_call.1} parent=1 // pred_region
      %54 = dma.done [#allocation7], 10240
    $region33: #{tpu_custom_call.1} parent=1 // pred_fallthru
      _
    // Predicated region
    $region34: #{tpu_custom_call.1} parent=1 // pred_check
      _
    $region35: #{tpu_custom_call.1} parent=1 // pred_check_branch
      %56 = sbr.rel (0) target = $region37
    $region36: #{tpu_custom_call.1} parent=1 // pred_region
      %58 = dma.done [#allocation10], 8192
    $region37: #{tpu_custom_call.1} parent=1 // pred_fallthru
      _
    %p59 = scmp.eq.s32.totalorder 0, 0
    // Predicated region
    $region38: #{tpu_custom_call.1} parent=1 // pred_check
      %p60 = pneg %p59
    $region39: #{tpu_custom_call.1} parent=1 // pred_check_branch
      %62 = sbr.rel (%p60) target = $region41
    $region40: #{tpu_custom_call.1} parent=1 // pred_region
      %63 = vst [vmem:[#allocation4] sm:$0xff] 0.0
      %64 = vst [vmem:[#allocation4 + $0x8] sm:$0xff] 0.0
      %65 = vst [vmem:[#allocation5] sm:$0xff] 0.0
      %66 = vst [vmem:[#allocation5 + $0x8] sm:$0xff] 0.0
    $region41: #{tpu_custom_call.1} parent=1 // pred_fallthru
      _
    %v67 = vld [vmem:[%s1] sm:$0xff]
    %v68 = vld [vmem:[%s1 + $0x8] sm:$0xff]
    %v69 = vld [vmem:[%s1 + $0x10] sm:$0xff]
    %v70 = vld [vmem:[%s1 + $0x18] sm:$0xff]
    %v71 = vld [vmem:[%s1 + $0x20] sm:$0xff]
    %v72 = vld [vmem:[%s1 + $0x28] sm:$0xff]
    %v73 = vld [vmem:[%s1 + $0x30] sm:$0xff]
    %v74 = vld [vmem:[%s1 + $0x38] sm:$0xff]
    %v75 = vld [vmem:[#allocation6] sm:$0xff]
    %v76 = vld [vmem:[#allocation6 + $0x8] sm:$0xff]
    %v77 = vld [vmem:[#allocation6 + $0x10] sm:$0xf]
    %v78 = vld [vmem:[#allocation6 + $0x14] sm:$0xff]
    %v79 = vld [vmem:[#allocation6 + $0x1c] sm:$0xff]
    %v80 = vld [vmem:[#allocation6 + $0x24] sm:$0xf]
    %v81 = vld [vmem:[#allocation6 + $0x28] sm:$0xff]
    %v82 = vld [vmem:[#allocation6 + $0x30] sm:$0xff]
    %v83 = vld [vmem:[#allocation6 + $0x38] sm:$0xf]
    %v84 = vld [vmem:[#allocation6 + $0x3c] sm:$0xff]
    %v85 = vld [vmem:[#allocation6 + $0x44] sm:$0xff]
    %v86 = vld [vmem:[#allocation6 + $0x4c] sm:$0xf]
    %v87 = vld [vmem:[#allocation6 + $0x50] sm:$0xff]
    %v88 = vld [vmem:[#allocation6 + $0x58] sm:$0xff]
    %v89 = vld [vmem:[#allocation6 + $0x60] sm:$0xf]
    %v90 = vld [vmem:[#allocation6 + $0x64] sm:$0xff]
    %v91 = vld [vmem:[#allocation6 + $0x6c] sm:$0xff]
    %v92 = vld [vmem:[#allocation6 + $0x74] sm:$0xf]
    %v93 = vld [vmem:[#allocation6 + $0x78] sm:$0xff]
    %v94 = vld [vmem:[#allocation6 + $0x80] sm:$0xff]
    %v95 = vld [vmem:[#allocation6 + $0x88] sm:$0xf]
    %v96 = vld [vmem:[#allocation6 + $0x8c] sm:$0xff]
    %v97 = vld [vmem:[#allocation6 + $0x94] sm:$0xff]
    %v98 = vld [vmem:[#allocation6 + $0x9c] sm:$0xf]
    %v99 = vld [vmem:[#allocation6 + $0xa0] sm:$0xff]
    %v100 = vld [vmem:[#allocation6 + $0xa8] sm:$0xff]
    %v101 = vld [vmem:[#allocation6 + $0xb0] sm:$0xf]
    %v102 = vld [vmem:[#allocation6 + $0xb4] sm:$0xff]
    %v103 = vld [vmem:[#allocation6 + $0xbc] sm:$0xff]
    %v104 = vld [vmem:[#allocation6 + $0xc4] sm:$0xf]
    %v105 = vld [vmem:[#allocation6 + $0xc8] sm:$0xff]
    %v106 = vld [vmem:[#allocation6 + $0xd0] sm:$0xff]
    %v107 = vld [vmem:[#allocation6 + $0xd8] sm:$0xf]
    %v108 = vld [vmem:[#allocation6 + $0xdc] sm:$0xff]
    %v109 = vld [vmem:[#allocation6 + $0xe4] sm:$0xff]
    %v110 = vld [vmem:[#allocation6 + $0xec] sm:$0xf]
    %v111 = vld [vmem:[#allocation6 + $0xf0] sm:$0xff]
    %v112 = vld [vmem:[#allocation6 + $0xf8] sm:$0xff]
    %v113 = vld [vmem:[#allocation6 + $0x100] sm:$0xf]
    %v114 = vld [vmem:[#allocation6 + $0x104] sm:$0xff]
    %v115 = vld [vmem:[#allocation6 + $0x10c] sm:$0xff]
    %v116 = vld [vmem:[#allocation6 + $0x114] sm:$0xf]
    %v117 = vld [vmem:[#allocation6 + $0x118] sm:$0xff]
    %v118 = vld [vmem:[#allocation6 + $0x120] sm:$0xff]
    %v119 = vld [vmem:[#allocation6 + $0x128] sm:$0xf]
    %v120 = vld [vmem:[#allocation6 + $0x12c] sm:$0xff]
    %v121 = vld [vmem:[#allocation6 + $0x134] sm:$0xff]
    %v122 = vld [vmem:[#allocation6 + $0x13c] sm:$0xf]
    %v123 = vld [vmem:[#allocation9] sm:$0xff]
    %v124 = vld [vmem:[#allocation9 + $0x8] sm:$0xff]
    %v125 = vld [vmem:[#allocation9 + $0x10] sm:$0xff]
    %v126 = vld [vmem:[#allocation9 + $0x18] sm:$0xff]
    %v127 = vld [vmem:[#allocation9 + $0x20] sm:$0xff]
    %v128 = vld [vmem:[#allocation9 + $0x28] sm:$0xff]
    %v129 = vld [vmem:[#allocation9 + $0x30] sm:$0xff]
    %v130 = vld [vmem:[#allocation9 + $0x38] sm:$0xff]
    %v131 = vld [vmem:[#allocation9 + $0x40] sm:$0xff]
    %v132 = vld [vmem:[#allocation9 + $0x48] sm:$0xff]
    %v133 = vld [vmem:[#allocation9 + $0x50] sm:$0xff]
    %v134 = vld [vmem:[#allocation9 + $0x58] sm:$0xff]
    %v135 = vld [vmem:[#allocation9 + $0x60] sm:$0xff]
    %v136 = vld [vmem:[#allocation9 + $0x68] sm:$0xff]
    %v137 = vld [vmem:[#allocation9 + $0x70] sm:$0xff]
    %v138 = vld [vmem:[#allocation9 + $0x78] sm:$0xff]
    %v139 = vld [vmem:[#allocation9 + $0x80] sm:$0xff]
    %v140 = vld [vmem:[#allocation9 + $0x88] sm:$0xff]
    %v141 = vld [vmem:[#allocation9 + $0x90] sm:$0xff]
    %v142 = vld [vmem:[#allocation9 + $0x98] sm:$0xff]
    %v143 = vld [vmem:[#allocation9 + $0xa0] sm:$0xff]
    %v144 = vld [vmem:[#allocation9 + $0xa8] sm:$0xff]
    %v145 = vld [vmem:[#allocation9 + $0xb0] sm:$0xff]
    %v146 = vld [vmem:[#allocation9 + $0xb8] sm:$0xff]
    %v147 = vld [vmem:[#allocation9 + $0xc0] sm:$0xff]
    %v148 = vld [vmem:[#allocation9 + $0xc8] sm:$0xff]
    %v149 = vld [vmem:[#allocation9 + $0xd0] sm:$0xff]
    %v150 = vld [vmem:[#allocation9 + $0xd8] sm:$0xff]
    %v151 = vld [vmem:[#allocation9 + $0xe0] sm:$0xff]
    %v152 = vld [vmem:[#allocation9 + $0xe8] sm:$0xff]
    %v153 = vld [vmem:[#allocation9 + $0xf0] sm:$0xff]
    %v154 = vld [vmem:[#allocation9 + $0xf8] sm:$0xff]
    %v155 = vld [vmem:[%s3] sm:$0x3]
    %v156 = vld [vmem:[%s4] sm:$0x1]
    %v157 = vld [vmem:[%s6] sm:$0xf]
    %159 = vset.pattern.permute.xlu0 0
    %160 = vperm.xlu0 %159, %v67
    %v161 = vpop.permute.xlu0 %160
    %164 = vset.pattern.permute.xlu0 0
    %165 = vperm.xlu0 %164, %v68
    %v166 = vpop.permute.xlu0 %165
    %169 = vset.pattern.permute.xlu0 0
    %170 = vperm.xlu0 %169, %v69
    %v171 = vpop.permute.xlu0 %170
    %174 = vset.pattern.permute.xlu0 0
    %175 = vperm.xlu0 %174, %v70
    %v176 = vpop.permute.xlu0 %175
    %179 = vset.pattern.permute.xlu0 0
    %180 = vperm.xlu0 %179, %v71
    %v181 = vpop.permute.xlu0 %180
    %184 = vset.pattern.permute.xlu0 0
    %185 = vperm.xlu0 %184, %v72
    %v186 = vpop.permute.xlu0 %185
    %189 = vset.pattern.permute.xlu0 0
    %190 = vperm.xlu0 %189, %v73
    %v191 = vpop.permute.xlu0 %190
    %194 = vset.pattern.permute.xlu0 0
    %195 = vperm.xlu0 %194, %v74
    %v196 = vpop.permute.xlu0 %195
    %v198 = vperm.slane %v155, 0
    %v199 = vmul.f32 %v161, %v198
    %v200 = vmul.f32 %v166, %v198
    %v201 = vmul.f32 %v171, %v198
    %v202 = vmul.f32 %v176, %v198
    %v203 = vmul.f32 %v181, %v198
    %v204 = vmul.f32 %v186, %v198
    %v205 = vmul.f32 %v191, %v198
    %v206 = vmul.f32 %v196, %v198
    %207 = vset.pattern.permute.xlu0 1
    %208 = vperm.xlu0 %207, %v67
    %v209 = vpop.permute.xlu0 %208
    %211 = vset.pattern.permute.xlu0 1
    %212 = vperm.xlu0 %211, %v68
    %v213 = vpop.permute.xlu0 %212
    %215 = vset.pattern.permute.xlu0 1
    %216 = vperm.xlu0 %215, %v69
    %v217 = vpop.permute.xlu0 %216
    %219 = vset.pattern.permute.xlu0 1
    %220 = vperm.xlu0 %219, %v70
    %v221 = vpop.permute.xlu0 %220
    %223 = vset.pattern.permute.xlu0 1
    %224 = vperm.xlu0 %223, %v71
    %v225 = vpop.permute.xlu0 %224
    %227 = vset.pattern.permute.xlu0 1
    %228 = vperm.xlu0 %227, %v72
    %v229 = vpop.permute.xlu0 %228
    %231 = vset.pattern.permute.xlu0 1
    %232 = vperm.xlu0 %231, %v73
    %v233 = vpop.permute.xlu0 %232
    %235 = vset.pattern.permute.xlu0 1
    %236 = vperm.xlu0 %235, %v74
    %v237 = vpop.permute.xlu0 %236
    %v239 = vperm.slane %v155, 1
    %v240 = vmul.f32 %v209, %v239
    %v241 = vmul.f32 %v213, %v239
    %v242 = vmul.f32 %v217, %v239
    %v243 = vmul.f32 %v221, %v239
    %v244 = vmul.f32 %v225, %v239
    %v245 = vmul.f32 %v229, %v239
    %v246 = vmul.f32 %v233, %v239
    %v247 = vmul.f32 %v237, %v239
    %v248 = vadd.f32 %v199, %v240
    %v249 = vadd.f32 %v200, %v241
    %v250 = vadd.f32 %v201, %v242
    %v251 = vadd.f32 %v202, %v243
    %v252 = vadd.f32 %v203, %v244
    %v253 = vadd.f32 %v204, %v245
    %v254 = vadd.f32 %v205, %v246
    %v255 = vadd.f32 %v206, %v247
    %v257 = vperm.slane %v156, 0
    %v259 = vadd.f32 %v248, %v257
    %v260 = vadd.f32 %v249, %v257
    %v261 = vadd.f32 %v250, %v257
    %v262 = vadd.f32 %v251, %v257
    %v263 = vadd.f32 %v252, %v257
    %v264 = vadd.f32 %v253, %v257
    %v265 = vadd.f32 %v254, %v257
    %v266 = vadd.f32 %v255, %v257
    %267 = vst [vmem:[#allocation3] sm:$0xff] %v259
    %268 = vst [vmem:[#allocation3 + $0x8] sm:$0xff] %v260
    %269 = vst [vmem:[#allocation3 + $0x10] sm:$0xff] %v261
    %270 = vst [vmem:[#allocation3 + $0x18] sm:$0xff] %v262
    %271 = vst [vmem:[#allocation3 + $0x20] sm:$0xff] %v263
    %272 = vst [vmem:[#allocation3 + $0x28] sm:$0xff] %v264
    %273 = vst [vmem:[#allocation3 + $0x30] sm:$0xff] %v265
    %274 = vst [vmem:[#allocation3 + $0x38] sm:$0xff] %v266
    %v275 = vld [vmem:[#allocation4] sm:$0xff]
    %v276 = vld [vmem:[#allocation5] sm:$0xff]
    %v277 = vld [vmem:[%s0] sm:$0xf]
    %v278 = vunpack.c.l.bf16 %v277
    %v279 = vpack.c.bf16 %v275, %v275
    %v328 = vunpack.c.l.b16 %v75
    %v329 = vunpack.c.h.b16 %v75
    %v330 = vunpack.c.l.b16 %v76
    %v331 = vunpack.c.h.b16 %v76
    %v332 = vunpack.c.l.b16 %v77
    %v333 = vunpack.c.l.b16 %v78
    %v334 = vunpack.c.h.b16 %v78
    %v335 = vunpack.c.l.b16 %v79
    %v336 = vunpack.c.h.b16 %v79
    %v337 = vunpack.c.l.b16 %v80
    %v338 = vunpack.c.l.b16 %v81
    %v339 = vunpack.c.h.b16 %v81
    %v340 = vunpack.c.l.b16 %v82
    %v341 = vunpack.c.h.b16 %v82
    %v342 = vunpack.c.l.b16 %v83
    %v343 = vunpack.c.l.b16 %v84
    %v344 = vunpack.c.h.b16 %v84
    %v345 = vunpack.c.l.b16 %v85
    %v346 = vunpack.c.h.b16 %v85
    %v347 = vunpack.c.l.b16 %v86
    %v348 = vunpack.c.l.b16 %v87
    %v349 = vunpack.c.h.b16 %v87
    %v350 = vunpack.c.l.b16 %v88
    %v351 = vunpack.c.h.b16 %v88
    %v352 = vunpack.c.l.b16 %v89
    %v353 = vunpack.c.l.b16 %v90
    %v354 = vunpack.c.h.b16 %v90
    %v355 = vunpack.c.l.b16 %v91
    %v356 = vunpack.c.h.b16 %v91
    %v357 = vunpack.c.l.b16 %v92
    %v358 = vunpack.c.l.b16 %v93
    %v359 = vunpack.c.h.b16 %v93
    %v360 = vunpack.c.l.b16 %v94
    %v361 = vunpack.c.h.b16 %v94
    %v362 = vunpack.c.l.b16 %v95
    %v363 = vunpack.c.l.b16 %v96
    %v364 = vunpack.c.h.b16 %v96
    %v365 = vunpack.c.l.b16 %v97
    %v366 = vunpack.c.h.b16 %v97
    %v367 = vunpack.c.l.b16 %v98
    %v368 = vunpack.c.l.b16 %v99
    %v369 = vunpack.c.h.b16 %v99
    %v370 = vunpack.c.l.b16 %v100
    %v371 = vunpack.c.h.b16 %v100
    %v372 = vunpack.c.l.b16 %v101
    %v373 = vunpack.c.l.b16 %v102
    %v374 = vunpack.c.h.b16 %v102
    %v375 = vunpack.c.l.b16 %v103
    %v376 = vunpack.c.h.b16 %v103
    %v377 = vunpack.c.l.b16 %v104
    %v378 = vunpack.c.l.b16 %v105
    %v379 = vunpack.c.h.b16 %v105
    %v380 = vunpack.c.l.b16 %v106
    %v381 = vunpack.c.h.b16 %v106
    %v382 = vunpack.c.l.b16 %v107
    %v383 = vunpack.c.l.b16 %v108
    %v384 = vunpack.c.h.b16 %v108
    %v385 = vunpack.c.l.b16 %v109
    %v386 = vunpack.c.h.b16 %v109
    %v387 = vunpack.c.l.b16 %v110
    %v388 = vunpack.c.l.b16 %v111
    %v389 = vunpack.c.h.b16 %v111
    %v390 = vunpack.c.l.b16 %v112
    %v391 = vunpack.c.h.b16 %v112
    %v392 = vunpack.c.l.b16 %v113
    %v393 = vunpack.c.l.b16 %v114
    %v394 = vunpack.c.h.b16 %v114
    %v395 = vunpack.c.l.b16 %v115
    %v396 = vunpack.c.h.b16 %v115
    %v397 = vunpack.c.l.b16 %v116
    %v398 = vunpack.c.l.b16 %v117
    %v399 = vunpack.c.h.b16 %v117
    %v400 = vunpack.c.l.b16 %v118
    %v401 = vunpack.c.h.b16 %v118
    %v402 = vunpack.c.l.b16 %v119
    %v403 = vunpack.c.l.b16 %v120
    %v404 = vunpack.c.h.b16 %v120
    %v405 = vunpack.c.l.b16 %v121
    %v406 = vunpack.c.h.b16 %v121
    %v407 = vunpack.c.l.b16 %v122
    %v408 = vpack.c.b16 %v333, %v328
    %v409 = vpack.c.b16 %v334, %v329
    %v410 = vpack.c.b16 %v335, %v330
    %v411 = vpack.c.b16 %v336, %v331
    %v412 = vpack.c.b16 %v337, %v332
    %v413 = vpack.c.b16 %v343, %v338
    %v414 = vpack.c.b16 %v344, %v339
    %v415 = vpack.c.b16 %v345, %v340
    %v416 = vpack.c.b16 %v346, %v341
    %v417 = vpack.c.b16 %v347, %v342
    %v418 = vpack.c.b16 %v353, %v348
    %v419 = vpack.c.b16 %v354, %v349
    %v420 = vpack.c.b16 %v355, %v350
    %v421 = vpack.c.b16 %v356, %v351
    %v422 = vpack.c.b16 %v357, %v352
    %v423 = vpack.c.b16 %v363, %v358
    %v424 = vpack.c.b16 %v364, %v359
    %v425 = vpack.c.b16 %v365, %v360
    %v426 = vpack.c.b16 %v366, %v361
    %v427 = vpack.c.b16 %v367, %v362
    %v428 = vpack.c.b16 %v373, %v368
    %v429 = vpack.c.b16 %v374, %v369
    %v430 = vpack.c.b16 %v375, %v370
    %v431 = vpack.c.b16 %v376, %v371
    %v432 = vpack.c.b16 %v377, %v372
    %v433 = vpack.c.b16 %v383, %v378
    %v434 = vpack.c.b16 %v384, %v379
    %v435 = vpack.c.b16 %v385, %v380
    %v436 = vpack.c.b16 %v386, %v381
    %v437 = vpack.c.b16 %v387, %v382
    %v438 = vpack.c.b16 %v393, %v388
    %v439 = vpack.c.b16 %v394, %v389
    %v440 = vpack.c.b16 %v395, %v390
    %v441 = vpack.c.b16 %v396, %v391
    %v442 = vpack.c.b16 %v397, %v392
    %v443 = vpack.c.b16 %v403, %v398
    %v444 = vpack.c.b16 %v404, %v399
    %v445 = vpack.c.b16 %v405, %v400
    %v446 = vpack.c.b16 %v406, %v401
    %v447 = vpack.c.b16 %v407, %v402
    %488 = vmatpush.bf16.msra.mxu0 %v443
    %489 = vmatpush.bf16.msra.mxu0 %v438
    %490 = vmatpush.bf16.msra.mxu0 %v433
    %491 = vmatpush.bf16.msra.mxu0 %v428
    %492 = vmatpush.bf16.msra.mxu0 %v423
    %493 = vmatpush.bf16.msra.mxu0 %v418
    %494 = vmatpush.bf16.msra.mxu0 %v413
    %495 = vmatpush.bf16.msra.mxu0 %v408
    %496 = vmatmul.bf16.gmra.mxu0 %v279
    %v497 = vpop.f32.mrf.mxu0
    %v498 = vadd.f32 0.0, %v497
    %v499 = vpop.f32.mrf.mxu0
    %500 = vdwg.mxu0
    %501 = vmatpush.bf16.msra.mxu0 %v444
    %502 = vmatpush.bf16.msra.mxu0 %v439
    %503 = vmatpush.bf16.msra.mxu0 %v434
    %504 = vmatpush.bf16.msra.mxu0 %v429
    %505 = vmatpush.bf16.msra.mxu0 %v424
    %506 = vmatpush.bf16.msra.mxu0 %v419
    %507 = vmatpush.bf16.msra.mxu0 %v414
    %508 = vmatpush.bf16.msra.mxu0 %v409
    %509 = vmatmul.bf16.gmra.mxu0 %v279
    %v510 = vpop.f32.mrf.mxu0
    %v511 = vadd.f32 0.0, %v510
    %v512 = vpop.f32.mrf.mxu0
    %513 = vdwg.mxu0
    %514 = vmatpush.bf16.msra.mxu0 %v445
    %515 = vmatpush.bf16.msra.mxu0 %v440
    %516 = vmatpush.bf16.msra.mxu0 %v435
    %517 = vmatpush.bf16.msra.mxu0 %v430
    %518 = vmatpush.bf16.msra.mxu0 %v425
    %519 = vmatpush.bf16.msra.mxu0 %v420
    %520 = vmatpush.bf16.msra.mxu0 %v415
    %521 = vmatpush.bf16.msra.mxu0 %v410
    %522 = vmatmul.bf16.gmra.mxu0 %v279
    %v523 = vpop.f32.mrf.mxu0
    %v524 = vadd.f32 0.0, %v523
    %v525 = vpop.f32.mrf.mxu0
    %526 = vdwg.mxu0
    %527 = vmatpush.bf16.msra.mxu0 %v446
    %528 = vmatpush.bf16.msra.mxu0 %v441
    %529 = vmatpush.bf16.msra.mxu0 %v436
    %530 = vmatpush.bf16.msra.mxu0 %v431
    %531 = vmatpush.bf16.msra.mxu0 %v426
    %532 = vmatpush.bf16.msra.mxu0 %v421
    %533 = vmatpush.bf16.msra.mxu0 %v416
    %534 = vmatpush.bf16.msra.mxu0 %v411
    %535 = vmatmul.bf16.gmra.mxu0 %v279
    %v536 = vpop.f32.mrf.mxu0
    %v537 = vadd.f32 0.0, %v536
    %v538 = vpop.f32.mrf.mxu0
    %539 = vdwg.mxu0
    %540 = vmatpush.bf16.msra.mxu0 %v447
    %541 = vmatpush.bf16.msra.mxu0 %v442
    %542 = vmatpush.bf16.msra.mxu0 %v437
    %543 = vmatpush.bf16.msra.mxu0 %v432
    %544 = vmatpush.bf16.msra.mxu0 %v427
    %545 = vmatpush.bf16.msra.mxu0 %v422
    %546 = vmatpush.bf16.msra.mxu0 %v417
    %547 = vmatpush.bf16.msra.mxu0 %v412
    %548 = vmatmul.bf16.gmra.mxu0 %v279
    %v549 = vpop.f32.mrf.mxu0
    %v550 = vadd.f32 0.0, %v549
    %v551 = vpop.f32.mrf.mxu0
    %552 = vdwg.mxu0
    %v553 = vld [vmem:[#allocation3] sm:$0xff]
    %v554 = vadd.f32 %v498, %v553
    %v555 = vmul.f32 %v554, 0.5
    %v556 = vtanh.pop %v555
    %v557 = vmul.f32 %v556, 0.5
    %v558 = vadd.f32 %v557, 0.5
    %v559 = vmul.f32 %v558, %v278
    %v560 = vpack.c.bf16 %v559, %v559
    %v593 = vunpack.c.l.b16 %v123
    %v594 = vunpack.c.h.b16 %v123
    %v595 = vunpack.c.l.b16 %v124
    %v596 = vunpack.c.h.b16 %v124
    %v597 = vunpack.c.l.b16 %v125
    %v598 = vunpack.c.h.b16 %v125
    %v599 = vunpack.c.l.b16 %v126
    %v600 = vunpack.c.h.b16 %v126
    %v601 = vunpack.c.l.b16 %v127
    %v602 = vunpack.c.h.b16 %v127
    %v603 = vunpack.c.l.b16 %v128
    %v604 = vunpack.c.h.b16 %v128
    %v605 = vunpack.c.l.b16 %v129
    %v606 = vunpack.c.h.b16 %v129
    %v607 = vunpack.c.l.b16 %v130
    %v608 = vunpack.c.h.b16 %v130
    %v609 = vunpack.c.l.b16 %v131
    %v610 = vunpack.c.h.b16 %v131
    %v611 = vunpack.c.l.b16 %v132
    %v612 = vunpack.c.h.b16 %v132
    %v613 = vunpack.c.l.b16 %v133
    %v614 = vunpack.c.h.b16 %v133
    %v615 = vunpack.c.l.b16 %v134
    %v616 = vunpack.c.h.b16 %v134
    %v617 = vunpack.c.l.b16 %v135
    %v618 = vunpack.c.h.b16 %v135
    %v619 = vunpack.c.l.b16 %v136
    %v620 = vunpack.c.h.b16 %v136
    %v621 = vunpack.c.l.b16 %v137
    %v622 = vunpack.c.h.b16 %v137
    %v623 = vunpack.c.l.b16 %v138
    %v624 = vunpack.c.h.b16 %v138
    %v625 = vunpack.c.l.b16 %v139
    %v626 = vunpack.c.h.b16 %v139
    %v627 = vunpack.c.l.b16 %v140
    %v628 = vunpack.c.h.b16 %v140
    %v629 = vunpack.c.l.b16 %v141
    %v630 = vunpack.c.h.b16 %v141
    %v631 = vunpack.c.l.b16 %v142
    %v632 = vunpack.c.h.b16 %v142
    %v633 = vunpack.c.l.b16 %v143
    %v634 = vunpack.c.h.b16 %v143
    %v635 = vunpack.c.l.b16 %v144
    %v636 = vunpack.c.h.b16 %v144
    %v637 = vunpack.c.l.b16 %v145
    %v638 = vunpack.c.h.b16 %v145
    %v639 = vunpack.c.l.b16 %v146
    %v640 = vunpack.c.h.b16 %v146
    %v641 = vunpack.c.l.b16 %v147
    %v642 = vunpack.c.h.b16 %v147
    %v643 = vunpack.c.l.b16 %v148
    %v644 = vunpack.c.h.b16 %v148
    %v645 = vunpack.c.l.b16 %v149
    %v646 = vunpack.c.h.b16 %v149
    %v647 = vunpack.c.l.b16 %v150
    %v648 = vunpack.c.h.b16 %v150
    %v649 = vunpack.c.l.b16 %v151
    %v650 = vunpack.c.h.b16 %v151
    %v651 = vunpack.c.l.b16 %v152
    %v652 = vunpack.c.h.b16 %v152
    %v653 = vunpack.c.l.b16 %v153
    %v654 = vunpack.c.h.b16 %v153
    %v655 = vunpack.c.l.b16 %v154
    %v656 = vunpack.c.h.b16 %v154
    %v657 = vpack.c.b16 %v597, %v593
    %v658 = vpack.c.b16 %v598, %v594
    %v659 = vpack.c.b16 %v599, %v595
    %v660 = vpack.c.b16 %v600, %v596
    %v661 = vpack.c.b16 %v605, %v601
    %v662 = vpack.c.b16 %v606, %v602
    %v663 = vpack.c.b16 %v607, %v603
    %v664 = vpack.c.b16 %v608, %v604
    %v665 = vpack.c.b16 %v613, %v609
    %v666 = vpack.c.b16 %v614, %v610
    %v667 = vpack.c.b16 %v615, %v611
    %v668 = vpack.c.b16 %v616, %v612
    %v669 = vpack.c.b16 %v621, %v617
    %v670 = vpack.c.b16 %v622, %v618
    %v671 = vpack.c.b16 %v623, %v619
    %v672 = vpack.c.b16 %v624, %v620
    %v673 = vpack.c.b16 %v629, %v625
    %v674 = vpack.c.b16 %v630, %v626
    %v675 = vpack.c.b16 %v631, %v627
    %v676 = vpack.c.b16 %v632, %v628
    %v677 = vpack.c.b16 %v637, %v633
    %v678 = vpack.c.b16 %v638, %v634
    %v679 = vpack.c.b16 %v639, %v635
    %v680 = vpack.c.b16 %v640, %v636
    %v681 = vpack.c.b16 %v645, %v641
    %v682 = vpack.c.b16 %v646, %v642
    %v683 = vpack.c.b16 %v647, %v643
    %v684 = vpack.c.b16 %v648, %v644
    %v685 = vpack.c.b16 %v653, %v649
    %v686 = vpack.c.b16 %v654, %v650
    %v687 = vpack.c.b16 %v655, %v651
    %v688 = vpack.c.b16 %v656, %v652
    %721 = vmatpush.bf16.msra.mxu0 %v685
    %722 = vmatpush.bf16.msra.mxu0 %v681
    %723 = vmatpush.bf16.msra.mxu0 %v677
    %724 = vmatpush.bf16.msra.mxu0 %v673
    %725 = vmatpush.bf16.msra.mxu0 %v669
    %726 = vmatpush.bf16.msra.mxu0 %v665
    %727 = vmatpush.bf16.msra.mxu0 %v661
    %728 = vmatpush.bf16.msra.mxu0 %v657
    %729 = vmatmul.bf16.gmra.mxu0 %v560
    %v730 = vpop.f32.mrf.mxu0
    %v731 = vadd.f32 0.0, %v730
    %v732 = vpop.f32.mrf.mxu0
    %733 = vdwg.mxu0
    %734 = vmatpush.bf16.msra.mxu0 %v686
    %735 = vmatpush.bf16.msra.mxu0 %v682
    %736 = vmatpush.bf16.msra.mxu0 %v678
    %737 = vmatpush.bf16.msra.mxu0 %v674
    %738 = vmatpush.bf16.msra.mxu0 %v670
    %739 = vmatpush.bf16.msra.mxu0 %v666
    %740 = vmatpush.bf16.msra.mxu0 %v662
    %741 = vmatpush.bf16.msra.mxu0 %v658
    %742 = vmatmul.bf16.gmra.mxu0 %v560
    %v743 = vpop.f32.mrf.mxu0
    %v744 = vadd.f32 0.0, %v743
    %v745 = vpop.f32.mrf.mxu0
    %746 = vdwg.mxu0
    %747 = vmatpush.bf16.msra.mxu0 %v687
    %748 = vmatpush.bf16.msra.mxu0 %v683
    %749 = vmatpush.bf16.msra.mxu0 %v679
    %750 = vmatpush.bf16.msra.mxu0 %v675
    %751 = vmatpush.bf16.msra.mxu0 %v671
    %752 = vmatpush.bf16.msra.mxu0 %v667
    %753 = vmatpush.bf16.msra.mxu0 %v663
    %754 = vmatpush.bf16.msra.mxu0 %v659
    %755 = vmatmul.bf16.gmra.mxu0 %v560
    %v756 = vpop.f32.mrf.mxu0
    %v757 = vadd.f32 0.0, %v756
    %v758 = vpop.f32.mrf.mxu0
    %759 = vdwg.mxu0
    %760 = vmatpush.bf16.msra.mxu0 %v688
    %761 = vmatpush.bf16.msra.mxu0 %v684
    %762 = vmatpush.bf16.msra.mxu0 %v680
    %763 = vmatpush.bf16.msra.mxu0 %v676
    %764 = vmatpush.bf16.msra.mxu0 %v672
    %765 = vmatpush.bf16.msra.mxu0 %v668
    %766 = vmatpush.bf16.msra.mxu0 %v664
    %767 = vmatpush.bf16.msra.mxu0 %v660
    %768 = vmatmul.bf16.gmra.mxu0 %v560
    %v769 = vpop.f32.mrf.mxu0
    %v770 = vadd.f32 0.0, %v769
    %v771 = vpop.f32.mrf.mxu0
    %772 = vdwg.mxu0
    %v773 = vadd.f32 %v511, %v731
    %v774 = vadd.f32 %v524, %v744
    %v775 = vadd.f32 %v537, %v757
    %v776 = vadd.f32 %v550, %v770
    %v778 = vperm.slane %v157, 0
    %v779 = vperm.slane %v157, 1
    %v780 = vperm.slane %v157, 2
    %v781 = vperm.slane %v157, 3
    %v786 = vadd.f32 %v773, %v778
    %v787 = vadd.f32 %v774, %v779
    %v788 = vadd.f32 %v775, %v780
    %v789 = vadd.f32 %v776, %v781
    %v790 = vmul.f32 %v786, 0.5
    %v791 = vtanh.pop %v790
    %v792 = vmul.f32 %v791, 0.5
    %v793 = vadd.f32 %v792, 0.5
    %v794 = vmul.f32 %v787, 0.5
    %v795 = vtanh.pop %v794
    %v796 = vmul.f32 %v795, 0.5
    %v797 = vadd.f32 %v796, 0.5
    %v798 = vtanh.pop %v788
    %v799 = vmul.f32 %v789, 0.5
    %v800 = vtanh.pop %v799
    %v801 = vmul.f32 %v800, 0.5
    %v802 = vadd.f32 %v801, 0.5
    %v803 = vmul.f32 %v797, %v276
    %v804 = vmul.f32 %v793, %v798
    %v805 = vadd.f32 %v803, %v804
    %v806 = vtanh.pop %v805
    %v807 = vmul.f32 %v802, %v806
    %808 = vst [vmem:[#allocation2] sm:$0xff] %v807
    %s809 = scalar_lea.vmem %s0, 4
    %v810 = vld [vmem:[%s809] sm:$0xf]
    %v811 = vunpack.c.l.bf16 %v810
    %v812 = vpack.c.bf16 %v807, %v807
    %813 = vmatpush.bf16.msra.mxu0 %v443
    %814 = vmatpush.bf16.msra.mxu0 %v438
    %815 = vmatpush.bf16.msra.mxu0 %v433
    %816 = vmatpush.bf16.msra.mxu0 %v428
    %817 = vmatpush.bf16.msra.mxu0 %v423
    %818 = vmatpush.bf16.msra.mxu0 %v418
    %819 = vmatpush.bf16.msra.mxu0 %v413
    %820 = vmatpush.bf16.msra.mxu0 %v408
    %821 = vmatmul.bf16.gmra.mxu0 %v812
    %v822 = vpop.f32.mrf.mxu0
    %v823 = vadd.f32 0.0, %v822
    %v824 = vpop.f32.mrf.mxu0
    %825 = vdwg.mxu0
    %826 = vmatpush.bf16.msra.mxu0 %v444
    %827 = vmatpush.bf16.msra.mxu0 %v439
    %828 = vmatpush.bf16.msra.mxu0 %v434
    %829 = vmatpush.bf16.msra.mxu0 %v429
    %830 = vmatpush.bf16.msra.mxu0 %v424
    %831 = vmatpush.bf16.msra.mxu0 %v419
    %832 = vmatpush.bf16.msra.mxu0 %v414
    %833 = vmatpush.bf16.msra.mxu0 %v409
    %834 = vmatmul.bf16.gmra.mxu0 %v812
    %v835 = vpop.f32.mrf.mxu0
    %v836 = vadd.f32 0.0, %v835
    %v837 = vpop.f32.mrf.mxu0
    %838 = vdwg.mxu0
    %839 = vmatpush.bf16.msra.mxu0 %v445
    %840 = vmatpush.bf16.msra.mxu0 %v440
    %841 = vmatpush.bf16.msra.mxu0 %v435
    %842 = vmatpush.bf16.msra.mxu0 %v430
    %843 = vmatpush.bf16.msra.mxu0 %v425
    %844 = vmatpush.bf16.msra.mxu0 %v420
    %845 = vmatpush.bf16.msra.mxu0 %v415
    %846 = vmatpush.bf16.msra.mxu0 %v410
    %847 = vmatmul.bf16.gmra.mxu0 %v812
    %v848 = vpop.f32.mrf.mxu0
    %v849 = vadd.f32 0.0, %v848
    %v850 = vpop.f32.mrf.mxu0
    %851 = vdwg.mxu0
    %852 = vmatpush.bf16.msra.mxu0 %v446
    %853 = vmatpush.bf16.msra.mxu0 %v441
    %854 = vmatpush.bf16.msra.mxu0 %v436
    %855 = vmatpush.bf16.msra.mxu0 %v431
    %856 = vmatpush.bf16.msra.mxu0 %v426
    %857 = vmatpush.bf16.msra.mxu0 %v421
    %858 = vmatpush.bf16.msra.mxu0 %v416
    %859 = vmatpush.bf16.msra.mxu0 %v411
    %860 = vmatmul.bf16.gmra.mxu0 %v812
    %v861 = vpop.f32.mrf.mxu0
    %v862 = vadd.f32 0.0, %v861
    %v863 = vpop.f32.mrf.mxu0
    %864 = vdwg.mxu0
    %865 = vmatpush.bf16.msra.mxu0 %v447
    %866 = vmatpush.bf16.msra.mxu0 %v442
    %867 = vmatpush.bf16.msra.mxu0 %v437
    %868 = vmatpush.bf16.msra.mxu0 %v432
    %869 = vmatpush.bf16.msra.mxu0 %v427
    %870 = vmatpush.bf16.msra.mxu0 %v422
    %871 = vmatpush.bf16.msra.mxu0 %v417
    %872 = vmatpush.bf16.msra.mxu0 %v412
    %873 = vmatmul.bf16.gmra.mxu0 %v812
    %v874 = vpop.f32.mrf.mxu0
    %v875 = vadd.f32 0.0, %v874
    %v876 = vpop.f32.mrf.mxu0
    %877 = vdwg.mxu0
    %s878 = scalar_lea.vmem [#allocation3], 8
    %v879 = vld [vmem:[%s878] sm:$0xff]
    %v880 = vadd.f32 %v823, %v879
    %v881 = vmul.f32 %v880, 0.5
    %v882 = vtanh.pop %v881
    %v883 = vmul.f32 %v882, 0.5
    %v884 = vadd.f32 %v883, 0.5
    %v885 = vmul.f32 %v884, %v811
    %v886 = vpack.c.bf16 %v885, %v885
    %887 = vmatpush.bf16.msra.mxu0 %v685
    %888 = vmatpush.bf16.msra.mxu0 %v681
    %889 = vmatpush.bf16.msra.mxu0 %v677
    %890 = vmatpush.bf16.msra.mxu0 %v673
    %891 = vmatpush.bf16.msra.mxu0 %v669
    %892 = vmatpush.bf16.msra.mxu0 %v665
    %893 = vmatpush.bf16.msra.mxu0 %v661
    %894 = vmatpush.bf16.msra.mxu0 %v657
    %895 = vmatmul.bf16.gmra.mxu0 %v886
    %v896 = vpop.f32.mrf.mxu0
    %v897 = vadd.f32 0.0, %v896
    %v898 = vpop.f32.mrf.mxu0
    %899 = vdwg.mxu0
    %900 = vmatpush.bf16.msra.mxu0 %v686
    %901 = vmatpush.bf16.msra.mxu0 %v682
    %902 = vmatpush.bf16.msra.mxu0 %v678
    %903 = vmatpush.bf16.msra.mxu0 %v674
    %904 = vmatpush.bf16.msra.mxu0 %v670
    %905 = vmatpush.bf16.msra.mxu0 %v666
    %906 = vmatpush.bf16.msra.mxu0 %v662
    %907 = vmatpush.bf16.msra.mxu0 %v658
    %908 = vmatmul.bf16.gmra.mxu0 %v886
    %v909 = vpop.f32.mrf.mxu0
    %v910 = vadd.f32 0.0, %v909
    %v911 = vpop.f32.mrf.mxu0
    %912 = vdwg.mxu0
    %913 = vmatpush.bf16.msra.mxu0 %v687
    %914 = vmatpush.bf16.msra.mxu0 %v683
    %915 = vmatpush.bf16.msra.mxu0 %v679
    %916 = vmatpush.bf16.msra.mxu0 %v675
    %917 = vmatpush.bf16.msra.mxu0 %v671
    %918 = vmatpush.bf16.msra.mxu0 %v667
    %919 = vmatpush.bf16.msra.mxu0 %v663
    %920 = vmatpush.bf16.msra.mxu0 %v659
    %921 = vmatmul.bf16.gmra.mxu0 %v886
    %v922 = vpop.f32.mrf.mxu0
    %v923 = vadd.f32 0.0, %v922
    %v924 = vpop.f32.mrf.mxu0
    %925 = vdwg.mxu0
    %926 = vmatpush.bf16.msra.mxu0 %v688
    %927 = vmatpush.bf16.msra.mxu0 %v684
    %928 = vmatpush.bf16.msra.mxu0 %v680
    %929 = vmatpush.bf16.msra.mxu0 %v676
    %930 = vmatpush.bf16.msra.mxu0 %v672
    %931 = vmatpush.bf16.msra.mxu0 %v668
    %932 = vmatpush.bf16.msra.mxu0 %v664
    %933 = vmatpush.bf16.msra.mxu0 %v660
    %934 = vmatmul.bf16.gmra.mxu0 %v886
    %v935 = vpop.f32.mrf.mxu0
    %v936 = vadd.f32 0.0, %v935
    %v937 = vpop.f32.mrf.mxu0
    %938 = vdwg.mxu0
    %v939 = vadd.f32 %v836, %v897
    %v940 = vadd.f32 %v849, %v910
    %v941 = vadd.f32 %v862, %v923
    %v942 = vadd.f32 %v875, %v936
    %v943 = vadd.f32 %v939, %v778
    %v944 = vadd.f32 %v940, %v779
    %v945 = vadd.f32 %v941, %v780
    %v946 = vadd.f32 %v942, %v781
    %v947 = vmul.f32 %v943, 0.5
    %v948 = vtanh.pop %v947
    %v949 = vmul.f32 %v948, 0.5
    %v950 = vadd.f32 %v949, 0.5
    %v951 = vmul.f32 %v944, 0.5
    %v952 = vtanh.pop %v951
    %v953 = vmul.f32 %v952, 0.5
    %v954 = vadd.f32 %v953, 0.5
    %v955 = vtanh.pop %v945
    %v956 = vmul.f32 %v946, 0.5
    %v957 = vtanh.pop %v956
    %v958 = vmul.f32 %v957, 0.5
    %v959 = vadd.f32 %v958, 0.5
    %v960 = vmul.f32 %v954, %v805
    %v961 = vmul.f32 %v950, %v955
    %v962 = vadd.f32 %v960, %v961
    %v963 = vtanh.pop %v962
    %v964 = vmul.f32 %v959, %v963
    %s965 = scalar_lea.vmem [#allocation2], 8
    %966 = vst [vmem:[%s965] sm:$0xff] %v964
    %s967 = scalar_lea.vmem %s0, 8
    %v968 = vld [vmem:[%s967] sm:$0xf]
    %v969 = vunpack.c.l.bf16 %v968
    %v970 = vpack.c.bf16 %v964, %v964
    %971 = vmatpush.bf16.msra.mxu0 %v443
    %972 = vmatpush.bf16.msra.mxu0 %v438
    %973 = vmatpush.bf16.msra.mxu0 %v433
    %974 = vmatpush.bf16.msra.mxu0 %v428
    %975 = vmatpush.bf16.msra.mxu0 %v423
    %976 = vmatpush.bf16.msra.mxu0 %v418
    %977 = vmatpush.bf16.msra.mxu0 %v413
    %978 = vmatpush.bf16.msra.mxu0 %v408
    %979 = vmatmul.bf16.gmra.mxu0 %v970
    %v980 = vpop.f32.mrf.mxu0
    %v981 = vadd.f32 0.0, %v980
    %v982 = vpop.f32.mrf.mxu0
    %983 = vdwg.mxu0
    %984 = vmatpush.bf16.msra.mxu0 %v444
    %985 = vmatpush.bf16.msra.mxu0 %v439
    %986 = vmatpush.bf16.msra.mxu0 %v434
    %987 = vmatpush.bf16.msra.mxu0 %v429
    %988 = vmatpush.bf16.msra.mxu0 %v424
    %989 = vmatpush.bf16.msra.mxu0 %v419
    %990 = vmatpush.bf16.msra.mxu0 %v414
    %991 = vmatpush.bf16.msra.mxu0 %v409
    %992 = vmatmul.bf16.gmra.mxu0 %v970
    %v993 = vpop.f32.mrf.mxu0
    %v994 = vadd.f32 0.0, %v993
    %v995 = vpop.f32.mrf.mxu0
    %996 = vdwg.mxu0
    %997 = vmatpush.bf16.msra.mxu0 %v445
    %998 = vmatpush.bf16.msra.mxu0 %v440
    %999 = vmatpush.bf16.msra.mxu0 %v435
    %1000 = vmatpush.bf16.msra.mxu0 %v430
    %1001 = vmatpush.bf16.msra.mxu0 %v425
    %1002 = vmatpush.bf16.msra.mxu0 %v420
    %1003 = vmatpush.bf16.msra.mxu0 %v415
    %1004 = vmatpush.bf16.msra.mxu0 %v410
    %1005 = vmatmul.bf16.gmra.mxu0 %v970
    %v1006 = vpop.f32.mrf.mxu0
    %v1007 = vadd.f32 0.0, %v1006
    %v1008 = vpop.f32.mrf.mxu0
    %1009 = vdwg.mxu0
    %1010 = vmatpush.bf16.msra.mxu0 %v446
    %1011 = vmatpush.bf16.msra.mxu0 %v441
    %1012 = vmatpush.bf16.msra.mxu0 %v436
    %1013 = vmatpush.bf16.msra.mxu0 %v431
    %1014 = vmatpush.bf16.msra.mxu0 %v426
    %1015 = vmatpush.bf16.msra.mxu0 %v421
    %1016 = vmatpush.bf16.msra.mxu0 %v416
    %1017 = vmatpush.bf16.msra.mxu0 %v411
    %1018 = vmatmul.bf16.gmra.mxu0 %v970
    %v1019 = vpop.f32.mrf.mxu0
    %v1020 = vadd.f32 0.0, %v1019
    %v1021 = vpop.f32.mrf.mxu0
    %1022 = vdwg.mxu0
    %1023 = vmatpush.bf16.msra.mxu0 %v447
    %1024 = vmatpush.bf16.msra.mxu0 %v442
    %1025 = vmatpush.bf16.msra.mxu0 %v437
    %1026 = vmatpush.bf16.msra.mxu0 %v432
    %1027 = vmatpush.bf16.msra.mxu0 %v427
    %1028 = vmatpush.bf16.msra.mxu0 %v422
    %1029 = vmatpush.bf16.msra.mxu0 %v417
    %1030 = vmatpush.bf16.msra.mxu0 %v412
    %1031 = vmatmul.bf16.gmra.mxu0 %v970
    %v1032 = vpop.f32.mrf.mxu0
    %v1033 = vadd.f32 0.0, %v1032
    %v1034 = vpop.f32.mrf.mxu0
    %1035 = vdwg.mxu0
    %s1036 = scalar_lea.vmem [#allocation3], 16
    %v1037 = vld [vmem:[%s1036] sm:$0xff]
    %v1038 = vadd.f32 %v981, %v1037
    %v1039 = vmul.f32 %v1038, 0.5
    %v1040 = vtanh.pop %v1039
    %v1041 = vmul.f32 %v1040, 0.5
    %v1042 = vadd.f32 %v1041, 0.5
    %v1043 = vmul.f32 %v1042, %v969
    %v1044 = vpack.c.bf16 %v1043, %v1043
    %1045 = vmatpush.bf16.msra.mxu0 %v685
    %1046 = vmatpush.bf16.msra.mxu0 %v681
    %1047 = vmatpush.bf16.msra.mxu0 %v677
    %1048 = vmatpush.bf16.msra.mxu0 %v673
    %1049 = vmatpush.bf16.msra.mxu0 %v669
    %1050 = vmatpush.bf16.msra.mxu0 %v665
    %1051 = vmatpush.bf16.msra.mxu0 %v661
    %1052 = vmatpush.bf16.msra.mxu0 %v657
    %1053 = vmatmul.bf16.gmra.mxu0 %v1044
    %v1054 = vpop.f32.mrf.mxu0
    %v1055 = vadd.f32 0.0, %v1054
    %v1056 = vpop.f32.mrf.mxu0
    %1057 = vdwg.mxu0
    %1058 = vmatpush.bf16.msra.mxu0 %v686
    %1059 = vmatpush.bf16.msra.mxu0 %v682
    %1060 = vmatpush.bf16.msra.mxu0 %v678
    %1061 = vmatpush.bf16.msra.mxu0 %v674
    %1062 = vmatpush.bf16.msra.mxu0 %v670
    %1063 = vmatpush.bf16.msra.mxu0 %v666
    %1064 = vmatpush.bf16.msra.mxu0 %v662
    %1065 = vmatpush.bf16.msra.mxu0 %v658
    %1066 = vmatmul.bf16.gmra.mxu0 %v1044
    %v1067 = vpop.f32.mrf.mxu0
    %v1068 = vadd.f32 0.0, %v1067
    %v1069 = vpop.f32.mrf.mxu0
    %1070 = vdwg.mxu0
    %1071 = vmatpush.bf16.msra.mxu0 %v687
    %1072 = vmatpush.bf16.msra.mxu0 %v683
    %1073 = vmatpush.bf16.msra.mxu0 %v679
    %1074 = vmatpush.bf16.msra.mxu0 %v675
    %1075 = vmatpush.bf16.msra.mxu0 %v671
    %1076 = vmatpush.bf16.msra.mxu0 %v667
    %1077 = vmatpush.bf16.msra.mxu0 %v663
    %1078 = vmatpush.bf16.msra.mxu0 %v659
    %1079 = vmatmul.bf16.gmra.mxu0 %v1044
    %v1080 = vpop.f32.mrf.mxu0
    %v1081 = vadd.f32 0.0, %v1080
    %v1082 = vpop.f32.mrf.mxu0
    %1083 = vdwg.mxu0
    %1084 = vmatpush.bf16.msra.mxu0 %v688
    %1085 = vmatpush.bf16.msra.mxu0 %v684
    %1086 = vmatpush.bf16.msra.mxu0 %v680
    %1087 = vmatpush.bf16.msra.mxu0 %v676
    %1088 = vmatpush.bf16.msra.mxu0 %v672
    %1089 = vmatpush.bf16.msra.mxu0 %v668
    %1090 = vmatpush.bf16.msra.mxu0 %v664
    %1091 = vmatpush.bf16.msra.mxu0 %v660
    %1092 = vmatmul.bf16.gmra.mxu0 %v1044
    %v1093 = vpop.f32.mrf.mxu0
    %v1094 = vadd.f32 0.0, %v1093
    %v1095 = vpop.f32.mrf.mxu0
    %1096 = vdwg.mxu0
    %v1097 = vadd.f32 %v994, %v1055
    %v1098 = vadd.f32 %v1007, %v1068
    %v1099 = vadd.f32 %v1020, %v1081
    %v1100 = vadd.f32 %v1033, %v1094
    %v1101 = vadd.f32 %v1097, %v778
    %v1102 = vadd.f32 %v1098, %v779
    %v1103 = vadd.f32 %v1099, %v780
    %v1104 = vadd.f32 %v1100, %v781
    %v1105 = vmul.f32 %v1101, 0.5
    %v1106 = vtanh.pop %v1105
    %v1107 = vmul.f32 %v1106, 0.5
    %v1108 = vadd.f32 %v1107, 0.5
    %v1109 = vmul.f32 %v1102, 0.5
    %v1110 = vtanh.pop %v1109
    %v1111 = vmul.f32 %v1110, 0.5
    %v1112 = vadd.f32 %v1111, 0.5
    %v1113 = vtanh.pop %v1103
    %v1114 = vmul.f32 %v1104, 0.5
    %v1115 = vtanh.pop %v1114
    %v1116 = vmul.f32 %v1115, 0.5
    %v1117 = vadd.f32 %v1116, 0.5
    %v1118 = vmul.f32 %v1112, %v962
    %v1119 = vmul.f32 %v1108, %v1113
    %v1120 = vadd.f32 %v1118, %v1119
    %v1121 = vtanh.pop %v1120
    %v1122 = vmul.f32 %v1117, %v1121
    %s1123 = scalar_lea.vmem [#allocation2], 16
    %1124 = vst [vmem:[%s1123] sm:$0xff] %v1122
    %s1125 = scalar_lea.vmem %s0, 12
    %v1126 = vld [vmem:[%s1125] sm:$0xf]
    %v1127 = vunpack.c.l.bf16 %v1126
    %v1128 = vpack.c.bf16 %v1122, %v1122
    %1129 = vmatpush.bf16.msra.mxu0 %v443
    %1130 = vmatpush.bf16.msra.mxu0 %v438
    %1131 = vmatpush.bf16.msra.mxu0 %v433
    %1132 = vmatpush.bf16.msra.mxu0 %v428
    %1133 = vmatpush.bf16.msra.mxu0 %v423
    %1134 = vmatpush.bf16.msra.mxu0 %v418
    %1135 = vmatpush.bf16.msra.mxu0 %v413
    %1136 = vmatpush.bf16.msra.mxu0 %v408
    %1137 = vmatmul.bf16.gmra.mxu0 %v1128
    %v1138 = vpop.f32.mrf.mxu0
    %v1139 = vadd.f32 0.0, %v1138
    %v1140 = vpop.f32.mrf.mxu0
    %1141 = vdwg.mxu0
    %1142 = vmatpush.bf16.msra.mxu0 %v444
    %1143 = vmatpush.bf16.msra.mxu0 %v439
    %1144 = vmatpush.bf16.msra.mxu0 %v434
    %1145 = vmatpush.bf16.msra.mxu0 %v429
    %1146 = vmatpush.bf16.msra.mxu0 %v424
    %1147 = vmatpush.bf16.msra.mxu0 %v419
    %1148 = vmatpush.bf16.msra.mxu0 %v414
    %1149 = vmatpush.bf16.msra.mxu0 %v409
    %1150 = vmatmul.bf16.gmra.mxu0 %v1128
    %v1151 = vpop.f32.mrf.mxu0
    %v1152 = vadd.f32 0.0, %v1151
    %v1153 = vpop.f32.mrf.mxu0
    %1154 = vdwg.mxu0
    %1155 = vmatpush.bf16.msra.mxu0 %v445
    %1156 = vmatpush.bf16.msra.mxu0 %v440
    %1157 = vmatpush.bf16.msra.mxu0 %v435
    %1158 = vmatpush.bf16.msra.mxu0 %v430
    %1159 = vmatpush.bf16.msra.mxu0 %v425
    %1160 = vmatpush.bf16.msra.mxu0 %v420
    %1161 = vmatpush.bf16.msra.mxu0 %v415
    %1162 = vmatpush.bf16.msra.mxu0 %v410
    %1163 = vmatmul.bf16.gmra.mxu0 %v1128
    %v1164 = vpop.f32.mrf.mxu0
    %v1165 = vadd.f32 0.0, %v1164
    %v1166 = vpop.f32.mrf.mxu0
    %1167 = vdwg.mxu0
    %1168 = vmatpush.bf16.msra.mxu0 %v446
    %1169 = vmatpush.bf16.msra.mxu0 %v441
    %1170 = vmatpush.bf16.msra.mxu0 %v436
    %1171 = vmatpush.bf16.msra.mxu0 %v431
    %1172 = vmatpush.bf16.msra.mxu0 %v426
    %1173 = vmatpush.bf16.msra.mxu0 %v421
    %1174 = vmatpush.bf16.msra.mxu0 %v416
    %1175 = vmatpush.bf16.msra.mxu0 %v411
    %1176 = vmatmul.bf16.gmra.mxu0 %v1128
    %v1177 = vpop.f32.mrf.mxu0
    %v1178 = vadd.f32 0.0, %v1177
    %v1179 = vpop.f32.mrf.mxu0
    %1180 = vdwg.mxu0
    %1181 = vmatpush.bf16.msra.mxu0 %v447
    %1182 = vmatpush.bf16.msra.mxu0 %v442
    %1183 = vmatpush.bf16.msra.mxu0 %v437
    %1184 = vmatpush.bf16.msra.mxu0 %v432
    %1185 = vmatpush.bf16.msra.mxu0 %v427
    %1186 = vmatpush.bf16.msra.mxu0 %v422
    %1187 = vmatpush.bf16.msra.mxu0 %v417
    %1188 = vmatpush.bf16.msra.mxu0 %v412
    %1189 = vmatmul.bf16.gmra.mxu0 %v1128
    %v1190 = vpop.f32.mrf.mxu0
    %v1191 = vadd.f32 0.0, %v1190
    %v1192 = vpop.f32.mrf.mxu0
    %1193 = vdwg.mxu0
    %s1194 = scalar_lea.vmem [#allocation3], 24
    %v1195 = vld [vmem:[%s1194] sm:$0xff]
    %v1196 = vadd.f32 %v1139, %v1195
    %v1197 = vmul.f32 %v1196, 0.5
    %v1198 = vtanh.pop %v1197
    %v1199 = vmul.f32 %v1198, 0.5
    %v1200 = vadd.f32 %v1199, 0.5
    %v1201 = vmul.f32 %v1200, %v1127
    %v1202 = vpack.c.bf16 %v1201, %v1201
    %1203 = vmatpush.bf16.msra.mxu0 %v685
    %1204 = vmatpush.bf16.msra.mxu0 %v681
    %1205 = vmatpush.bf16.msra.mxu0 %v677
    %1206 = vmatpush.bf16.msra.mxu0 %v673
    %1207 = vmatpush.bf16.msra.mxu0 %v669
    %1208 = vmatpush.bf16.msra.mxu0 %v665
    %1209 = vmatpush.bf16.msra.mxu0 %v661
    %1210 = vmatpush.bf16.msra.mxu0 %v657
    %1211 = vmatmul.bf16.gmra.mxu0 %v1202
    %v1212 = vpop.f32.mrf.mxu0
    %v1213 = vadd.f32 0.0, %v1212
    %v1214 = vpop.f32.mrf.mxu0
    %1215 = vdwg.mxu0
    %1216 = vmatpush.bf16.msra.mxu0 %v686
    %1217 = vmatpush.bf16.msra.mxu0 %v682
    %1218 = vmatpush.bf16.msra.mxu0 %v678
    %1219 = vmatpush.bf16.msra.mxu0 %v674
    %1220 = vmatpush.bf16.msra.mxu0 %v670
    %1221 = vmatpush.bf16.msra.mxu0 %v666
    %1222 = vmatpush.bf16.msra.mxu0 %v662
    %1223 = vmatpush.bf16.msra.mxu0 %v658
    %1224 = vmatmul.bf16.gmra.mxu0 %v1202
    %v1225 = vpop.f32.mrf.mxu0
    %v1226 = vadd.f32 0.0, %v1225
    %v1227 = vpop.f32.mrf.mxu0
    %1228 = vdwg.mxu0
    %1229 = vmatpush.bf16.msra.mxu0 %v687
    %1230 = vmatpush.bf16.msra.mxu0 %v683
    %1231 = vmatpush.bf16.msra.mxu0 %v679
    %1232 = vmatpush.bf16.msra.mxu0 %v675
    %1233 = vmatpush.bf16.msra.mxu0 %v671
    %1234 = vmatpush.bf16.msra.mxu0 %v667
    %1235 = vmatpush.bf16.msra.mxu0 %v663
    %1236 = vmatpush.bf16.msra.mxu0 %v659
    %1237 = vmatmul.bf16.gmra.mxu0 %v1202
    %v1238 = vpop.f32.mrf.mxu0
    %v1239 = vadd.f32 0.0, %v1238
    %v1240 = vpop.f32.mrf.mxu0
    %1241 = vdwg.mxu0
    %1242 = vmatpush.bf16.msra.mxu0 %v688
    %1243 = vmatpush.bf16.msra.mxu0 %v684
    %1244 = vmatpush.bf16.msra.mxu0 %v680
    %1245 = vmatpush.bf16.msra.mxu0 %v676
    %1246 = vmatpush.bf16.msra.mxu0 %v672
    %1247 = vmatpush.bf16.msra.mxu0 %v668
    %1248 = vmatpush.bf16.msra.mxu0 %v664
    %1249 = vmatpush.bf16.msra.mxu0 %v660
    %1250 = vmatmul.bf16.gmra.mxu0 %v1202
    %v1251 = vpop.f32.mrf.mxu0
    %v1252 = vadd.f32 0.0, %v1251
    %v1253 = vpop.f32.mrf.mxu0
    %1254 = vdwg.mxu0
    %v1255 = vadd.f32 %v1152, %v1213
    %v1256 = vadd.f32 %v1165, %v1226
    %v1257 = vadd.f32 %v1178, %v1239
    %v1258 = vadd.f32 %v1191, %v1252
    %v1259 = vadd.f32 %v1255, %v778
    %v1260 = vadd.f32 %v1256, %v779
    %v1261 = vadd.f32 %v1257, %v780
    %v1262 = vadd.f32 %v1258, %v781
    %v1263 = vmul.f32 %v1259, 0.5
    %v1264 = vtanh.pop %v1263
    %v1265 = vmul.f32 %v1264, 0.5
    %v1266 = vadd.f32 %v1265, 0.5
    %v1267 = vmul.f32 %v1260, 0.5
    %v1268 = vtanh.pop %v1267
    %v1269 = vmul.f32 %v1268, 0.5
    %v1270 = vadd.f32 %v1269, 0.5
    %v1271 = vtanh.pop %v1261
    %v1272 = vmul.f32 %v1262, 0.5
    %v1273 = vtanh.pop %v1272
    %v1274 = vmul.f32 %v1273, 0.5
    %v1275 = vadd.f32 %v1274, 0.5
    %v1276 = vmul.f32 %v1270, %v1120
    %v1277 = vmul.f32 %v1266, %v1271
    %v1278 = vadd.f32 %v1276, %v1277
    %v1279 = vtanh.pop %v1278
    %v1280 = vmul.f32 %v1275, %v1279
    %s1281 = scalar_lea.vmem [#allocation2], 24
    %1282 = vst [vmem:[%s1281] sm:$0xff] %v1280
    %s1283 = scalar_lea.vmem %s0, 16
    %v1284 = vld [vmem:[%s1283] sm:$0xf]
    %v1285 = vunpack.c.l.bf16 %v1284
    %v1286 = vpack.c.bf16 %v1280, %v1280
    %1287 = vmatpush.bf16.msra.mxu0 %v443
    %1288 = vmatpush.bf16.msra.mxu0 %v438
    %1289 = vmatpush.bf16.msra.mxu0 %v433
    %1290 = vmatpush.bf16.msra.mxu0 %v428
    %1291 = vmatpush.bf16.msra.mxu0 %v423
    %1292 = vmatpush.bf16.msra.mxu0 %v418
    %1293 = vmatpush.bf16.msra.mxu0 %v413
    %1294 = vmatpush.bf16.msra.mxu0 %v408
    %1295 = vmatmul.bf16.gmra.mxu0 %v1286
    %v1296 = vpop.f32.mrf.mxu0
    %v1297 = vadd.f32 0.0, %v1296
    %v1298 = vpop.f32.mrf.mxu0
    %1299 = vdwg.mxu0
    %1300 = vmatpush.bf16.msra.mxu0 %v444
    %1301 = vmatpush.bf16.msra.mxu0 %v439
    %1302 = vmatpush.bf16.msra.mxu0 %v434
    %1303 = vmatpush.bf16.msra.mxu0 %v429
    %1304 = vmatpush.bf16.msra.mxu0 %v424
    %1305 = vmatpush.bf16.msra.mxu0 %v419
    %1306 = vmatpush.bf16.msra.mxu0 %v414
    %1307 = vmatpush.bf16.msra.mxu0 %v409
    %1308 = vmatmul.bf16.gmra.mxu0 %v1286
    %v1309 = vpop.f32.mrf.mxu0
    %v1310 = vadd.f32 0.0, %v1309
    %v1311 = vpop.f32.mrf.mxu0
    %1312 = vdwg.mxu0
    %1313 = vmatpush.bf16.msra.mxu0 %v445
    %1314 = vmatpush.bf16.msra.mxu0 %v440
    %1315 = vmatpush.bf16.msra.mxu0 %v435
    %1316 = vmatpush.bf16.msra.mxu0 %v430
    %1317 = vmatpush.bf16.msra.mxu0 %v425
    %1318 = vmatpush.bf16.msra.mxu0 %v420
    %1319 = vmatpush.bf16.msra.mxu0 %v415
    %1320 = vmatpush.bf16.msra.mxu0 %v410
    %1321 = vmatmul.bf16.gmra.mxu0 %v1286
    %v1322 = vpop.f32.mrf.mxu0
    %v1323 = vadd.f32 0.0, %v1322
    %v1324 = vpop.f32.mrf.mxu0
    %1325 = vdwg.mxu0
    %1326 = vmatpush.bf16.msra.mxu0 %v446
    %1327 = vmatpush.bf16.msra.mxu0 %v441
    %1328 = vmatpush.bf16.msra.mxu0 %v436
    %1329 = vmatpush.bf16.msra.mxu0 %v431
    %1330 = vmatpush.bf16.msra.mxu0 %v426
    %1331 = vmatpush.bf16.msra.mxu0 %v421
    %1332 = vmatpush.bf16.msra.mxu0 %v416
    %1333 = vmatpush.bf16.msra.mxu0 %v411
    %1334 = vmatmul.bf16.gmra.mxu0 %v1286
    %v1335 = vpop.f32.mrf.mxu0
    %v1336 = vadd.f32 0.0, %v1335
    %v1337 = vpop.f32.mrf.mxu0
    %1338 = vdwg.mxu0
    %1339 = vmatpush.bf16.msra.mxu0 %v447
    %1340 = vmatpush.bf16.msra.mxu0 %v442
    %1341 = vmatpush.bf16.msra.mxu0 %v437
    %1342 = vmatpush.bf16.msra.mxu0 %v432
    %1343 = vmatpush.bf16.msra.mxu0 %v427
    %1344 = vmatpush.bf16.msra.mxu0 %v422
    %1345 = vmatpush.bf16.msra.mxu0 %v417
    %1346 = vmatpush.bf16.msra.mxu0 %v412
    %1347 = vmatmul.bf16.gmra.mxu0 %v1286
    %v1348 = vpop.f32.mrf.mxu0
    %v1349 = vadd.f32 0.0, %v1348
    %v1350 = vpop.f32.mrf.mxu0
    %1351 = vdwg.mxu0
    %s1352 = scalar_lea.vmem [#allocation3], 32
    %v1353 = vld [vmem:[%s1352] sm:$0xff]
    %v1354 = vadd.f32 %v1297, %v1353
    %v1355 = vmul.f32 %v1354, 0.5
    %v1356 = vtanh.pop %v1355
    %v1357 = vmul.f32 %v1356, 0.5
    %v1358 = vadd.f32 %v1357, 0.5
    %v1359 = vmul.f32 %v1358, %v1285
    %v1360 = vpack.c.bf16 %v1359, %v1359
    %1361 = vmatpush.bf16.msra.mxu0 %v685
    %1362 = vmatpush.bf16.msra.mxu0 %v681
    %1363 = vmatpush.bf16.msra.mxu0 %v677
    %1364 = vmatpush.bf16.msra.mxu0 %v673
    %1365 = vmatpush.bf16.msra.mxu0 %v669
    %1366 = vmatpush.bf16.msra.mxu0 %v665
    %1367 = vmatpush.bf16.msra.mxu0 %v661
    %1368 = vmatpush.bf16.msra.mxu0 %v657
    %1369 = vmatmul.bf16.gmra.mxu0 %v1360
    %v1370 = vpop.f32.mrf.mxu0
    %v1371 = vadd.f32 0.0, %v1370
    %v1372 = vpop.f32.mrf.mxu0
    %1373 = vdwg.mxu0
    %1374 = vmatpush.bf16.msra.mxu0 %v686
    %1375 = vmatpush.bf16.msra.mxu0 %v682
    %1376 = vmatpush.bf16.msra.mxu0 %v678
    %1377 = vmatpush.bf16.msra.mxu0 %v674
    %1378 = vmatpush.bf16.msra.mxu0 %v670
    %1379 = vmatpush.bf16.msra.mxu0 %v666
    %1380 = vmatpush.bf16.msra.mxu0 %v662
    %1381 = vmatpush.bf16.msra.mxu0 %v658
    %1382 = vmatmul.bf16.gmra.mxu0 %v1360
    %v1383 = vpop.f32.mrf.mxu0
    %v1384 = vadd.f32 0.0, %v1383
    %v1385 = vpop.f32.mrf.mxu0
    %1386 = vdwg.mxu0
    %1387 = vmatpush.bf16.msra.mxu0 %v687
    %1388 = vmatpush.bf16.msra.mxu0 %v683
    %1389 = vmatpush.bf16.msra.mxu0 %v679
    %1390 = vmatpush.bf16.msra.mxu0 %v675
    %1391 = vmatpush.bf16.msra.mxu0 %v671
    %1392 = vmatpush.bf16.msra.mxu0 %v667
    %1393 = vmatpush.bf16.msra.mxu0 %v663
    %1394 = vmatpush.bf16.msra.mxu0 %v659
    %1395 = vmatmul.bf16.gmra.mxu0 %v1360
    %v1396 = vpop.f32.mrf.mxu0
    %v1397 = vadd.f32 0.0, %v1396
    %v1398 = vpop.f32.mrf.mxu0
    %1399 = vdwg.mxu0
    %1400 = vmatpush.bf16.msra.mxu0 %v688
    %1401 = vmatpush.bf16.msra.mxu0 %v684
    %1402 = vmatpush.bf16.msra.mxu0 %v680
    %1403 = vmatpush.bf16.msra.mxu0 %v676
    %1404 = vmatpush.bf16.msra.mxu0 %v672
    %1405 = vmatpush.bf16.msra.mxu0 %v668
    %1406 = vmatpush.bf16.msra.mxu0 %v664
    %1407 = vmatpush.bf16.msra.mxu0 %v660
    %1408 = vmatmul.bf16.gmra.mxu0 %v1360
    %v1409 = vpop.f32.mrf.mxu0
    %v1410 = vadd.f32 0.0, %v1409
    %v1411 = vpop.f32.mrf.mxu0
    %1412 = vdwg.mxu0
    %v1413 = vadd.f32 %v1310, %v1371
    %v1414 = vadd.f32 %v1323, %v1384
    %v1415 = vadd.f32 %v1336, %v1397
    %v1416 = vadd.f32 %v1349, %v1410
    %v1417 = vadd.f32 %v1413, %v778
    %v1418 = vadd.f32 %v1414, %v779
    %v1419 = vadd.f32 %v1415, %v780
    %v1420 = vadd.f32 %v1416, %v781
    %v1421 = vmul.f32 %v1417, 0.5
    %v1422 = vtanh.pop %v1421
    %v1423 = vmul.f32 %v1422, 0.5
    %v1424 = vadd.f32 %v1423, 0.5
    %v1425 = vmul.f32 %v1418, 0.5
    %v1426 = vtanh.pop %v1425
    %v1427 = vmul.f32 %v1426, 0.5
    %v1428 = vadd.f32 %v1427, 0.5
    %v1429 = vtanh.pop %v1419
    %v1430 = vmul.f32 %v1420, 0.5
    %v1431 = vtanh.pop %v1430
    %v1432 = vmul.f32 %v1431, 0.5
    %v1433 = vadd.f32 %v1432, 0.5
    %v1434 = vmul.f32 %v1428, %v1278
    %v1435 = vmul.f32 %v1424, %v1429
    %v1436 = vadd.f32 %v1434, %v1435
    %v1437 = vtanh.pop %v1436
    %v1438 = vmul.f32 %v1433, %v1437
    %s1439 = scalar_lea.vmem [#allocation2], 32
    %1440 = vst [vmem:[%s1439] sm:$0xff] %v1438
    %s1441 = scalar_lea.vmem %s0, 20
    %v1442 = vld [vmem:[%s1441] sm:$0xf]
    %v1443 = vunpack.c.l.bf16 %v1442
    %v1444 = vpack.c.bf16 %v1438, %v1438
    %1445 = vmatpush.bf16.msra.mxu0 %v443
    %1446 = vmatpush.bf16.msra.mxu0 %v438
    %1447 = vmatpush.bf16.msra.mxu0 %v433
    %1448 = vmatpush.bf16.msra.mxu0 %v428
    %1449 = vmatpush.bf16.msra.mxu0 %v423
    %1450 = vmatpush.bf16.msra.mxu0 %v418
    %1451 = vmatpush.bf16.msra.mxu0 %v413
    %1452 = vmatpush.bf16.msra.mxu0 %v408
    %1453 = vmatmul.bf16.gmra.mxu0 %v1444
    %v1454 = vpop.f32.mrf.mxu0
    %v1455 = vadd.f32 0.0, %v1454
    %v1456 = vpop.f32.mrf.mxu0
    %1457 = vdwg.mxu0
    %1458 = vmatpush.bf16.msra.mxu0 %v444
    %1459 = vmatpush.bf16.msra.mxu0 %v439
    %1460 = vmatpush.bf16.msra.mxu0 %v434
    %1461 = vmatpush.bf16.msra.mxu0 %v429
    %1462 = vmatpush.bf16.msra.mxu0 %v424
    %1463 = vmatpush.bf16.msra.mxu0 %v419
    %1464 = vmatpush.bf16.msra.mxu0 %v414
    %1465 = vmatpush.bf16.msra.mxu0 %v409
    %1466 = vmatmul.bf16.gmra.mxu0 %v1444
    %v1467 = vpop.f32.mrf.mxu0
    %v1468 = vadd.f32 0.0, %v1467
    %v1469 = vpop.f32.mrf.mxu0
    %1470 = vdwg.mxu0
    %1471 = vmatpush.bf16.msra.mxu0 %v445
    %1472 = vmatpush.bf16.msra.mxu0 %v440
    %1473 = vmatpush.bf16.msra.mxu0 %v435
    %1474 = vmatpush.bf16.msra.mxu0 %v430
    %1475 = vmatpush.bf16.msra.mxu0 %v425
    %1476 = vmatpush.bf16.msra.mxu0 %v420
    %1477 = vmatpush.bf16.msra.mxu0 %v415
    %1478 = vmatpush.bf16.msra.mxu0 %v410
    %1479 = vmatmul.bf16.gmra.mxu0 %v1444
    %v1480 = vpop.f32.mrf.mxu0
    %v1481 = vadd.f32 0.0, %v1480
    %v1482 = vpop.f32.mrf.mxu0
    %1483 = vdwg.mxu0
    %1484 = vmatpush.bf16.msra.mxu0 %v446
    %1485 = vmatpush.bf16.msra.mxu0 %v441
    %1486 = vmatpush.bf16.msra.mxu0 %v436
    %1487 = vmatpush.bf16.msra.mxu0 %v431
    %1488 = vmatpush.bf16.msra.mxu0 %v426
    %1489 = vmatpush.bf16.msra.mxu0 %v421
    %1490 = vmatpush.bf16.msra.mxu0 %v416
    %1491 = vmatpush.bf16.msra.mxu0 %v411
    %1492 = vmatmul.bf16.gmra.mxu0 %v1444
    %v1493 = vpop.f32.mrf.mxu0
    %v1494 = vadd.f32 0.0, %v1493
    %v1495 = vpop.f32.mrf.mxu0
    %1496 = vdwg.mxu0
    %1497 = vmatpush.bf16.msra.mxu0 %v447
    %1498 = vmatpush.bf16.msra.mxu0 %v442
    %1499 = vmatpush.bf16.msra.mxu0 %v437
    %1500 = vmatpush.bf16.msra.mxu0 %v432
    %1501 = vmatpush.bf16.msra.mxu0 %v427
    %1502 = vmatpush.bf16.msra.mxu0 %v422
    %1503 = vmatpush.bf16.msra.mxu0 %v417
    %1504 = vmatpush.bf16.msra.mxu0 %v412
    %1505 = vmatmul.bf16.gmra.mxu0 %v1444
    %v1506 = vpop.f32.mrf.mxu0
    %v1507 = vadd.f32 0.0, %v1506
    %v1508 = vpop.f32.mrf.mxu0
    %1509 = vdwg.mxu0
    %s1510 = scalar_lea.vmem [#allocation3], 40
    %v1511 = vld [vmem:[%s1510] sm:$0xff]
    %v1512 = vadd.f32 %v1455, %v1511
    %v1513 = vmul.f32 %v1512, 0.5
    %v1514 = vtanh.pop %v1513
    %v1515 = vmul.f32 %v1514, 0.5
    %v1516 = vadd.f32 %v1515, 0.5
    %v1517 = vmul.f32 %v1516, %v1443
    %v1518 = vpack.c.bf16 %v1517, %v1517
    %1519 = vmatpush.bf16.msra.mxu0 %v685
    %1520 = vmatpush.bf16.msra.mxu0 %v681
    %1521 = vmatpush.bf16.msra.mxu0 %v677
    %1522 = vmatpush.bf16.msra.mxu0 %v673
    %1523 = vmatpush.bf16.msra.mxu0 %v669
    %1524 = vmatpush.bf16.msra.mxu0 %v665
    %1525 = vmatpush.bf16.msra.mxu0 %v661
    %1526 = vmatpush.bf16.msra.mxu0 %v657
    %1527 = vmatmul.bf16.gmra.mxu0 %v1518
    %v1528 = vpop.f32.mrf.mxu0
    %v1529 = vadd.f32 0.0, %v1528
    %v1530 = vpop.f32.mrf.mxu0
    %1531 = vdwg.mxu0
    %1532 = vmatpush.bf16.msra.mxu0 %v686
    %1533 = vmatpush.bf16.msra.mxu0 %v682
    %1534 = vmatpush.bf16.msra.mxu0 %v678
    %1535 = vmatpush.bf16.msra.mxu0 %v674
    %1536 = vmatpush.bf16.msra.mxu0 %v670
    %1537 = vmatpush.bf16.msra.mxu0 %v666
    %1538 = vmatpush.bf16.msra.mxu0 %v662
    %1539 = vmatpush.bf16.msra.mxu0 %v658
    %1540 = vmatmul.bf16.gmra.mxu0 %v1518
    %v1541 = vpop.f32.mrf.mxu0
    %v1542 = vadd.f32 0.0, %v1541
    %v1543 = vpop.f32.mrf.mxu0
    %1544 = vdwg.mxu0
    %1545 = vmatpush.bf16.msra.mxu0 %v687
    %1546 = vmatpush.bf16.msra.mxu0 %v683
    %1547 = vmatpush.bf16.msra.mxu0 %v679
    %1548 = vmatpush.bf16.msra.mxu0 %v675
    %1549 = vmatpush.bf16.msra.mxu0 %v671
    %1550 = vmatpush.bf16.msra.mxu0 %v667
    %1551 = vmatpush.bf16.msra.mxu0 %v663
    %1552 = vmatpush.bf16.msra.mxu0 %v659
    %1553 = vmatmul.bf16.gmra.mxu0 %v1518
    %v1554 = vpop.f32.mrf.mxu0
    %v1555 = vadd.f32 0.0, %v1554
    %v1556 = vpop.f32.mrf.mxu0
    %1557 = vdwg.mxu0
    %1558 = vmatpush.bf16.msra.mxu0 %v688
    %1559 = vmatpush.bf16.msra.mxu0 %v684
    %1560 = vmatpush.bf16.msra.mxu0 %v680
    %1561 = vmatpush.bf16.msra.mxu0 %v676
    %1562 = vmatpush.bf16.msra.mxu0 %v672
    %1563 = vmatpush.bf16.msra.mxu0 %v668
    %1564 = vmatpush.bf16.msra.mxu0 %v664
    %1565 = vmatpush.bf16.msra.mxu0 %v660
    %1566 = vmatmul.bf16.gmra.mxu0 %v1518
    %v1567 = vpop.f32.mrf.mxu0
    %v1568 = vadd.f32 0.0, %v1567
    %v1569 = vpop.f32.mrf.mxu0
    %1570 = vdwg.mxu0
    %v1571 = vadd.f32 %v1468, %v1529
    %v1572 = vadd.f32 %v1481, %v1542
    %v1573 = vadd.f32 %v1494, %v1555
    %v1574 = vadd.f32 %v1507, %v1568
    %v1575 = vadd.f32 %v1571, %v778
    %v1576 = vadd.f32 %v1572, %v779
    %v1577 = vadd.f32 %v1573, %v780
    %v1578 = vadd.f32 %v1574, %v781
    %v1579 = vmul.f32 %v1575, 0.5
    %v1580 = vtanh.pop %v1579
    %v1581 = vmul.f32 %v1580, 0.5
    %v1582 = vadd.f32 %v1581, 0.5
    %v1583 = vmul.f32 %v1576, 0.5
    %v1584 = vtanh.pop %v1583
    %v1585 = vmul.f32 %v1584, 0.5
    %v1586 = vadd.f32 %v1585, 0.5
    %v1587 = vtanh.pop %v1577
    %v1588 = vmul.f32 %v1578, 0.5
    %v1589 = vtanh.pop %v1588
    %v1590 = vmul.f32 %v1589, 0.5
    %v1591 = vadd.f32 %v1590, 0.5
    %v1592 = vmul.f32 %v1586, %v1436
    %v1593 = vmul.f32 %v1582, %v1587
    %v1594 = vadd.f32 %v1592, %v1593
    %v1595 = vtanh.pop %v1594
    %v1596 = vmul.f32 %v1591, %v1595
    %s1597 = scalar_lea.vmem [#allocation2], 40
    %1598 = vst [vmem:[%s1597] sm:$0xff] %v1596
    %s1599 = scalar_lea.vmem %s0, 24
    %v1600 = vld [vmem:[%s1599] sm:$0xf]
    %v1601 = vunpack.c.l.bf16 %v1600
    %v1602 = vpack.c.bf16 %v1596, %v1596
    %1603 = vmatpush.bf16.msra.mxu0 %v443
    %1604 = vmatpush.bf16.msra.mxu0 %v438
    %1605 = vmatpush.bf16.msra.mxu0 %v433
    %1606 = vmatpush.bf16.msra.mxu0 %v428
    %1607 = vmatpush.bf16.msra.mxu0 %v423
    %1608 = vmatpush.bf16.msra.mxu0 %v418
    %1609 = vmatpush.bf16.msra.mxu0 %v413
    %1610 = vmatpush.bf16.msra.mxu0 %v408
    %1611 = vmatmul.bf16.gmra.mxu0 %v1602
    %v1612 = vpop.f32.mrf.mxu0
    %v1613 = vadd.f32 0.0, %v1612
    %v1614 = vpop.f32.mrf.mxu0
    %1615 = vdwg.mxu0
    %1616 = vmatpush.bf16.msra.mxu0 %v444
    %1617 = vmatpush.bf16.msra.mxu0 %v439
    %1618 = vmatpush.bf16.msra.mxu0 %v434
    %1619 = vmatpush.bf16.msra.mxu0 %v429
    %1620 = vmatpush.bf16.msra.mxu0 %v424
    %1621 = vmatpush.bf16.msra.mxu0 %v419
    %1622 = vmatpush.bf16.msra.mxu0 %v414
    %1623 = vmatpush.bf16.msra.mxu0 %v409
    %1624 = vmatmul.bf16.gmra.mxu0 %v1602
    %v1625 = vpop.f32.mrf.mxu0
    %v1626 = vadd.f32 0.0, %v1625
    %v1627 = vpop.f32.mrf.mxu0
    %1628 = vdwg.mxu0
    %1629 = vmatpush.bf16.msra.mxu0 %v445
    %1630 = vmatpush.bf16.msra.mxu0 %v440
    %1631 = vmatpush.bf16.msra.mxu0 %v435
    %1632 = vmatpush.bf16.msra.mxu0 %v430
    %1633 = vmatpush.bf16.msra.mxu0 %v425
    %1634 = vmatpush.bf16.msra.mxu0 %v420
    %1635 = vmatpush.bf16.msra.mxu0 %v415
    %1636 = vmatpush.bf16.msra.mxu0 %v410
    %1637 = vmatmul.bf16.gmra.mxu0 %v1602
    %v1638 = vpop.f32.mrf.mxu0
    %v1639 = vadd.f32 0.0, %v1638
    %v1640 = vpop.f32.mrf.mxu0
    %1641 = vdwg.mxu0
    %1642 = vmatpush.bf16.msra.mxu0 %v446
    %1643 = vmatpush.bf16.msra.mxu0 %v441
    %1644 = vmatpush.bf16.msra.mxu0 %v436
    %1645 = vmatpush.bf16.msra.mxu0 %v431
    %1646 = vmatpush.bf16.msra.mxu0 %v426
    %1647 = vmatpush.bf16.msra.mxu0 %v421
    %1648 = vmatpush.bf16.msra.mxu0 %v416
    %1649 = vmatpush.bf16.msra.mxu0 %v411
    %1650 = vmatmul.bf16.gmra.mxu0 %v1602
    %v1651 = vpop.f32.mrf.mxu0
    %v1652 = vadd.f32 0.0, %v1651
    %v1653 = vpop.f32.mrf.mxu0
    %1654 = vdwg.mxu0
    %1655 = vmatpush.bf16.msra.mxu0 %v447
    %1656 = vmatpush.bf16.msra.mxu0 %v442
    %1657 = vmatpush.bf16.msra.mxu0 %v437
    %1658 = vmatpush.bf16.msra.mxu0 %v432
    %1659 = vmatpush.bf16.msra.mxu0 %v427
    %1660 = vmatpush.bf16.msra.mxu0 %v422
    %1661 = vmatpush.bf16.msra.mxu0 %v417
    %1662 = vmatpush.bf16.msra.mxu0 %v412
    %1663 = vmatmul.bf16.gmra.mxu0 %v1602
    %v1664 = vpop.f32.mrf.mxu0
    %v1665 = vadd.f32 0.0, %v1664
    %v1666 = vpop.f32.mrf.mxu0
    %1667 = vdwg.mxu0
    %s1668 = scalar_lea.vmem [#allocation3], 48
    %v1669 = vld [vmem:[%s1668] sm:$0xff]
    %v1670 = vadd.f32 %v1613, %v1669
    %v1671 = vmul.f32 %v1670, 0.5
    %v1672 = vtanh.pop %v1671
    %v1673 = vmul.f32 %v1672, 0.5
    %v1674 = vadd.f32 %v1673, 0.5
    %v1675 = vmul.f32 %v1674, %v1601
    %v1676 = vpack.c.bf16 %v1675, %v1675
    %1677 = vmatpush.bf16.msra.mxu0 %v685
    %1678 = vmatpush.bf16.msra.mxu0 %v681
    %1679 = vmatpush.bf16.msra.mxu0 %v677
    %1680 = vmatpush.bf16.msra.mxu0 %v673
    %1681 = vmatpush.bf16.msra.mxu0 %v669
    %1682 = vmatpush.bf16.msra.mxu0 %v665
    %1683 = vmatpush.bf16.msra.mxu0 %v661
    %1684 = vmatpush.bf16.msra.mxu0 %v657
    %1685 = vmatmul.bf16.gmra.mxu0 %v1676
    %v1686 = vpop.f32.mrf.mxu0
    %v1687 = vadd.f32 0.0, %v1686
    %v1688 = vpop.f32.mrf.mxu0
    %1689 = vdwg.mxu0
    %1690 = vmatpush.bf16.msra.mxu0 %v686
    %1691 = vmatpush.bf16.msra.mxu0 %v682
    %1692 = vmatpush.bf16.msra.mxu0 %v678
    %1693 = vmatpush.bf16.msra.mxu0 %v674
    %1694 = vmatpush.bf16.msra.mxu0 %v670
    %1695 = vmatpush.bf16.msra.mxu0 %v666
    %1696 = vmatpush.bf16.msra.mxu0 %v662
    %1697 = vmatpush.bf16.msra.mxu0 %v658
    %1698 = vmatmul.bf16.gmra.mxu0 %v1676
    %v1699 = vpop.f32.mrf.mxu0
    %v1700 = vadd.f32 0.0, %v1699
    %v1701 = vpop.f32.mrf.mxu0
    %1702 = vdwg.mxu0
    %1703 = vmatpush.bf16.msra.mxu0 %v687
    %1704 = vmatpush.bf16.msra.mxu0 %v683
    %1705 = vmatpush.bf16.msra.mxu0 %v679
    %1706 = vmatpush.bf16.msra.mxu0 %v675
    %1707 = vmatpush.bf16.msra.mxu0 %v671
    %1708 = vmatpush.bf16.msra.mxu0 %v667
    %1709 = vmatpush.bf16.msra.mxu0 %v663
    %1710 = vmatpush.bf16.msra.mxu0 %v659
    %1711 = vmatmul.bf16.gmra.mxu0 %v1676
    %v1712 = vpop.f32.mrf.mxu0
    %v1713 = vadd.f32 0.0, %v1712
    %v1714 = vpop.f32.mrf.mxu0
    %1715 = vdwg.mxu0
    %1716 = vmatpush.bf16.msra.mxu0 %v688
    %1717 = vmatpush.bf16.msra.mxu0 %v684
    %1718 = vmatpush.bf16.msra.mxu0 %v680
    %1719 = vmatpush.bf16.msra.mxu0 %v676
    %1720 = vmatpush.bf16.msra.mxu0 %v672
    %1721 = vmatpush.bf16.msra.mxu0 %v668
    %1722 = vmatpush.bf16.msra.mxu0 %v664
    %1723 = vmatpush.bf16.msra.mxu0 %v660
    %1724 = vmatmul.bf16.gmra.mxu0 %v1676
    %v1725 = vpop.f32.mrf.mxu0
    %v1726 = vadd.f32 0.0, %v1725
    %v1727 = vpop.f32.mrf.mxu0
    %1728 = vdwg.mxu0
    %v1729 = vadd.f32 %v1626, %v1687
    %v1730 = vadd.f32 %v1639, %v1700
    %v1731 = vadd.f32 %v1652, %v1713
    %v1732 = vadd.f32 %v1665, %v1726
    %v1733 = vadd.f32 %v1729, %v778
    %v1734 = vadd.f32 %v1730, %v779
    %v1735 = vadd.f32 %v1731, %v780
    %v1736 = vadd.f32 %v1732, %v781
    %v1737 = vmul.f32 %v1733, 0.5
    %v1738 = vtanh.pop %v1737
    %v1739 = vmul.f32 %v1738, 0.5
    %v1740 = vadd.f32 %v1739, 0.5
    %v1741 = vmul.f32 %v1734, 0.5
    %v1742 = vtanh.pop %v1741
    %v1743 = vmul.f32 %v1742, 0.5
    %v1744 = vadd.f32 %v1743, 0.5
    %v1745 = vtanh.pop %v1735
    %v1746 = vmul.f32 %v1736, 0.5
    %v1747 = vtanh.pop %v1746
    %v1748 = vmul.f32 %v1747, 0.5
    %v1749 = vadd.f32 %v1748, 0.5
    %v1750 = vmul.f32 %v1744, %v1594
    %v1751 = vmul.f32 %v1740, %v1745
    %v1752 = vadd.f32 %v1750, %v1751
    %v1753 = vtanh.pop %v1752
    %v1754 = vmul.f32 %v1749, %v1753
    %s1755 = scalar_lea.vmem [#allocation2], 48
    %1756 = vst [vmem:[%s1755] sm:$0xff] %v1754
    %s1757 = scalar_lea.vmem %s0, 28
    %v1758 = vld [vmem:[%s1757] sm:$0xf]
    %v1759 = vunpack.c.l.bf16 %v1758
    %v1760 = vpack.c.bf16 %v1754, %v1754
    %1761 = vmatpush.bf16.msra.mxu0 %v443
    %1762 = vmatpush.bf16.msra.mxu0 %v438
    %1763 = vmatpush.bf16.msra.mxu0 %v433
    %1764 = vmatpush.bf16.msra.mxu0 %v428
    %1765 = vmatpush.bf16.msra.mxu0 %v423
    %1766 = vmatpush.bf16.msra.mxu0 %v418
    %1767 = vmatpush.bf16.msra.mxu0 %v413
    %1768 = vmatpush.bf16.msra.mxu0 %v408
    %1769 = vmatmul.bf16.gmra.mxu0 %v1760
    %v1770 = vpop.f32.mrf.mxu0
    %v1771 = vadd.f32 0.0, %v1770
    %v1772 = vpop.f32.mrf.mxu0
    %1773 = vdwg.mxu0
    %1774 = vmatpush.bf16.msra.mxu0 %v444
    %1775 = vmatpush.bf16.msra.mxu0 %v439
    %1776 = vmatpush.bf16.msra.mxu0 %v434
    %1777 = vmatpush.bf16.msra.mxu0 %v429
    %1778 = vmatpush.bf16.msra.mxu0 %v424
    %1779 = vmatpush.bf16.msra.mxu0 %v419
    %1780 = vmatpush.bf16.msra.mxu0 %v414
    %1781 = vmatpush.bf16.msra.mxu0 %v409
    %1782 = vmatmul.bf16.gmra.mxu0 %v1760
    %v1783 = vpop.f32.mrf.mxu0
    %v1784 = vadd.f32 0.0, %v1783
    %v1785 = vpop.f32.mrf.mxu0
    %1786 = vdwg.mxu0
    %1787 = vmatpush.bf16.msra.mxu0 %v445
    %1788 = vmatpush.bf16.msra.mxu0 %v440
    %1789 = vmatpush.bf16.msra.mxu0 %v435
    %1790 = vmatpush.bf16.msra.mxu0 %v430
    %1791 = vmatpush.bf16.msra.mxu0 %v425
    %1792 = vmatpush.bf16.msra.mxu0 %v420
    %1793 = vmatpush.bf16.msra.mxu0 %v415
    %1794 = vmatpush.bf16.msra.mxu0 %v410
    %1795 = vmatmul.bf16.gmra.mxu0 %v1760
    %v1796 = vpop.f32.mrf.mxu0
    %v1797 = vadd.f32 0.0, %v1796
    %v1798 = vpop.f32.mrf.mxu0
    %1799 = vdwg.mxu0
    %1800 = vmatpush.bf16.msra.mxu0 %v446
    %1801 = vmatpush.bf16.msra.mxu0 %v441
    %1802 = vmatpush.bf16.msra.mxu0 %v436
    %1803 = vmatpush.bf16.msra.mxu0 %v431
    %1804 = vmatpush.bf16.msra.mxu0 %v426
    %1805 = vmatpush.bf16.msra.mxu0 %v421
    %1806 = vmatpush.bf16.msra.mxu0 %v416
    %1807 = vmatpush.bf16.msra.mxu0 %v411
    %1808 = vmatmul.bf16.gmra.mxu0 %v1760
    %v1809 = vpop.f32.mrf.mxu0
    %v1810 = vadd.f32 0.0, %v1809
    %v1811 = vpop.f32.mrf.mxu0
    %1812 = vdwg.mxu0
    %1813 = vmatpush.bf16.msra.mxu0 %v447
    %1814 = vmatpush.bf16.msra.mxu0 %v442
    %1815 = vmatpush.bf16.msra.mxu0 %v437
    %1816 = vmatpush.bf16.msra.mxu0 %v432
    %1817 = vmatpush.bf16.msra.mxu0 %v427
    %1818 = vmatpush.bf16.msra.mxu0 %v422
    %1819 = vmatpush.bf16.msra.mxu0 %v417
    %1820 = vmatpush.bf16.msra.mxu0 %v412
    %1821 = vmatmul.bf16.gmra.mxu0 %v1760
    %v1822 = vpop.f32.mrf.mxu0
    %v1823 = vadd.f32 0.0, %v1822
    %v1824 = vpop.f32.mrf.mxu0
    %1825 = vdwg.mxu0
    %s1826 = scalar_lea.vmem [#allocation3], 56
    %v1827 = vld [vmem:[%s1826] sm:$0xff]
    %v1828 = vadd.f32 %v1771, %v1827
    %v1829 = vmul.f32 %v1828, 0.5
    %v1830 = vtanh.pop %v1829
    %v1831 = vmul.f32 %v1830, 0.5
    %v1832 = vadd.f32 %v1831, 0.5
    %v1833 = vmul.f32 %v1832, %v1759
    %v1834 = vpack.c.bf16 %v1833, %v1833
    %1835 = vmatpush.bf16.msra.mxu0 %v685
    %1836 = vmatpush.bf16.msra.mxu0 %v681
    %1837 = vmatpush.bf16.msra.mxu0 %v677
    %1838 = vmatpush.bf16.msra.mxu0 %v673
    %1839 = vmatpush.bf16.msra.mxu0 %v669
    %1840 = vmatpush.bf16.msra.mxu0 %v665
    %1841 = vmatpush.bf16.msra.mxu0 %v661
    %1842 = vmatpush.bf16.msra.mxu0 %v657
    %1843 = vmatmul.bf16.gmra.mxu0 %v1834
    %v1844 = vpop.f32.mrf.mxu0
    %v1845 = vadd.f32 0.0, %v1844
    %v1846 = vpop.f32.mrf.mxu0
    %1847 = vdwg.mxu0
    %1848 = vmatpush.bf16.msra.mxu0 %v686
    %1849 = vmatpush.bf16.msra.mxu0 %v682
    %1850 = vmatpush.bf16.msra.mxu0 %v678
    %1851 = vmatpush.bf16.msra.mxu0 %v674
    %1852 = vmatpush.bf16.msra.mxu0 %v670
    %1853 = vmatpush.bf16.msra.mxu0 %v666
    %1854 = vmatpush.bf16.msra.mxu0 %v662
    %1855 = vmatpush.bf16.msra.mxu0 %v658
    %1856 = vmatmul.bf16.gmra.mxu0 %v1834
    %v1857 = vpop.f32.mrf.mxu0
    %v1858 = vadd.f32 0.0, %v1857
    %v1859 = vpop.f32.mrf.mxu0
    %1860 = vdwg.mxu0
    %1861 = vmatpush.bf16.msra.mxu0 %v687
    %1862 = vmatpush.bf16.msra.mxu0 %v683
    %1863 = vmatpush.bf16.msra.mxu0 %v679
    %1864 = vmatpush.bf16.msra.mxu0 %v675
    %1865 = vmatpush.bf16.msra.mxu0 %v671
    %1866 = vmatpush.bf16.msra.mxu0 %v667
    %1867 = vmatpush.bf16.msra.mxu0 %v663
    %1868 = vmatpush.bf16.msra.mxu0 %v659
    %1869 = vmatmul.bf16.gmra.mxu0 %v1834
    %v1870 = vpop.f32.mrf.mxu0
    %v1871 = vadd.f32 0.0, %v1870
    %v1872 = vpop.f32.mrf.mxu0
    %1873 = vdwg.mxu0
    %1874 = vmatpush.bf16.msra.mxu0 %v688
    %1875 = vmatpush.bf16.msra.mxu0 %v684
    %1876 = vmatpush.bf16.msra.mxu0 %v680
    %1877 = vmatpush.bf16.msra.mxu0 %v676
    %1878 = vmatpush.bf16.msra.mxu0 %v672
    %1879 = vmatpush.bf16.msra.mxu0 %v668
    %1880 = vmatpush.bf16.msra.mxu0 %v664
    %1881 = vmatpush.bf16.msra.mxu0 %v660
    %1882 = vmatmul.bf16.gmra.mxu0 %v1834
    %v1883 = vpop.f32.mrf.mxu0
    %v1884 = vadd.f32 0.0, %v1883
    %v1885 = vpop.f32.mrf.mxu0
    %1886 = vdwg.mxu0
    %v1887 = vadd.f32 %v1784, %v1845
    %v1888 = vadd.f32 %v1797, %v1858
    %v1889 = vadd.f32 %v1810, %v1871
    %v1890 = vadd.f32 %v1823, %v1884
    %v1891 = vadd.f32 %v1887, %v778
    %v1892 = vadd.f32 %v1888, %v779
    %v1893 = vadd.f32 %v1889, %v780
    %v1894 = vadd.f32 %v1890, %v781
    %v1895 = vmul.f32 %v1891, 0.5
    %v1896 = vtanh.pop %v1895
    %v1897 = vmul.f32 %v1896, 0.5
    %v1898 = vadd.f32 %v1897, 0.5
    %v1899 = vmul.f32 %v1892, 0.5
    %v1900 = vtanh.pop %v1899
    %v1901 = vmul.f32 %v1900, 0.5
    %v1902 = vadd.f32 %v1901, 0.5
    %v1903 = vtanh.pop %v1893
    %v1904 = vmul.f32 %v1894, 0.5
    %v1905 = vtanh.pop %v1904
    %v1906 = vmul.f32 %v1905, 0.5
    %v1907 = vadd.f32 %v1906, 0.5
    %v1908 = vmul.f32 %v1902, %v1752
    %v1909 = vmul.f32 %v1898, %v1903
    %v1910 = vadd.f32 %v1908, %v1909
    %v1911 = vtanh.pop %v1910
    %v1912 = vmul.f32 %v1907, %v1911
    %s1913 = scalar_lea.vmem [#allocation2], 56
    %1914 = vst [vmem:[%s1913] sm:$0xff] %v1912
    %1915 = vst [vmem:[#allocation4] sm:$0xff] %v1912
    %1916 = vst [vmem:[#allocation5] sm:$0xff] %v1910
    %s1917 = scalar_lea.vmem [#allocation6], 320
    %v1918 = vld [vmem:[%s1917] sm:$0xff]
    %v1919 = vld [vmem:[%s1917 + $0x8] sm:$0xff]
    %v1920 = vld [vmem:[%s1917 + $0x10] sm:$0xf]
    %v1921 = vld [vmem:[%s1917 + $0x14] sm:$0xff]
    %v1922 = vld [vmem:[%s1917 + $0x1c] sm:$0xff]
    %v1923 = vld [vmem:[%s1917 + $0x24] sm:$0xf]
    %v1924 = vld [vmem:[%s1917 + $0x28] sm:$0xff]
    %v1925 = vld [vmem:[%s1917 + $0x30] sm:$0xff]
    %v1926 = vld [vmem:[%s1917 + $0x38] sm:$0xf]
    %v1927 = vld [vmem:[%s1917 + $0x3c] sm:$0xff]
    %v1928 = vld [vmem:[%s1917 + $0x44] sm:$0xff]
    %v1929 = vld [vmem:[%s1917 + $0x4c] sm:$0xf]
    %v1930 = vld [vmem:[%s1917 + $0x50] sm:$0xff]
    %v1931 = vld [vmem:[%s1917 + $0x58] sm:$0xff]
    %v1932 = vld [vmem:[%s1917 + $0x60] sm:$0xf]
    %v1933 = vld [vmem:[%s1917 + $0x64] sm:$0xff]
    %v1934 = vld [vmem:[%s1917 + $0x6c] sm:$0xff]
    %v1935 = vld [vmem:[%s1917 + $0x74] sm:$0xf]
    %v1936 = vld [vmem:[%s1917 + $0x78] sm:$0xff]
    %v1937 = vld [vmem:[%s1917 + $0x80] sm:$0xff]
    %v1938 = vld [vmem:[%s1917 + $0x88] sm:$0xf]
    %v1939 = vld [vmem:[%s1917 + $0x8c] sm:$0xff]
    %v1940 = vld [vmem:[%s1917 + $0x94] sm:$0xff]
    %v1941 = vld [vmem:[%s1917 + $0x9c] sm:$0xf]
    %v1942 = vld [vmem:[%s1917 + $0xa0] sm:$0xff]
    %v1943 = vld [vmem:[%s1917 + $0xa8] sm:$0xff]
    %v1944 = vld [vmem:[%s1917 + $0xb0] sm:$0xf]
    %v1945 = vld [vmem:[%s1917 + $0xb4] sm:$0xff]
    %v1946 = vld [vmem:[%s1917 + $0xbc] sm:$0xff]
    %v1947 = vld [vmem:[%s1917 + $0xc4] sm:$0xf]
    %v1948 = vld [vmem:[%s1917 + $0xc8] sm:$0xff]
    %v1949 = vld [vmem:[%s1917 + $0xd0] sm:$0xff]
    %v1950 = vld [vmem:[%s1917 + $0xd8] sm:$0xf]
    %v1951 = vld [vmem:[%s1917 + $0xdc] sm:$0xff]
    %v1952 = vld [vmem:[%s1917 + $0xe4] sm:$0xff]
    %v1953 = vld [vmem:[%s1917 + $0xec] sm:$0xf]
    %v1954 = vld [vmem:[%s1917 + $0xf0] sm:$0xff]
    %v1955 = vld [vmem:[%s1917 + $0xf8] sm:$0xff]
    %v1956 = vld [vmem:[%s1917 + $0x100] sm:$0xf]
    %v1957 = vld [vmem:[%s1917 + $0x104] sm:$0xff]
    %v1958 = vld [vmem:[%s1917 + $0x10c] sm:$0xff]
    %v1959 = vld [vmem:[%s1917 + $0x114] sm:$0xf]
    %v1960 = vld [vmem:[%s1917 + $0x118] sm:$0xff]
    %v1961 = vld [vmem:[%s1917 + $0x120] sm:$0xff]
    %v1962 = vld [vmem:[%s1917 + $0x128] sm:$0xf]
    %v1963 = vld [vmem:[%s1917 + $0x12c] sm:$0xff]
    %v1964 = vld [vmem:[%s1917 + $0x134] sm:$0xff]
    %v1965 = vld [vmem:[%s1917 + $0x13c] sm:$0xf]
    %s1966 = scalar_lea.vmem [#allocation9], 256
    %v1967 = vld [vmem:[%s1966] sm:$0xff]
    %v1968 = vld [vmem:[%s1966 + $0x8] sm:$0xff]
    %v1969 = vld [vmem:[%s1966 + $0x10] sm:$0xff]
    %v1970 = vld [vmem:[%s1966 + $0x18] sm:$0xff]
    %v1971 = vld [vmem:[%s1966 + $0x20] sm:$0xff]
    %v1972 = vld [vmem:[%s1966 + $0x28] sm:$0xff]
    %v1973 = vld [vmem:[%s1966 + $0x30] sm:$0xff]
    %v1974 = vld [vmem:[%s1966 + $0x38] sm:$0xff]
    %v1975 = vld [vmem:[%s1966 + $0x40] sm:$0xff]
    %v1976 = vld [vmem:[%s1966 + $0x48] sm:$0xff]
    %v1977 = vld [vmem:[%s1966 + $0x50] sm:$0xff]
    %v1978 = vld [vmem:[%s1966 + $0x58] sm:$0xff]
    %v1979 = vld [vmem:[%s1966 + $0x60] sm:$0xff]
    %v1980 = vld [vmem:[%s1966 + $0x68] sm:$0xff]
    %v1981 = vld [vmem:[%s1966 + $0x70] sm:$0xff]
    %v1982 = vld [vmem:[%s1966 + $0x78] sm:$0xff]
    %v1983 = vld [vmem:[%s1966 + $0x80] sm:$0xff]
    %v1984 = vld [vmem:[%s1966 + $0x88] sm:$0xff]
    %v1985 = vld [vmem:[%s1966 + $0x90] sm:$0xff]
    %v1986 = vld [vmem:[%s1966 + $0x98] sm:$0xff]
    %v1987 = vld [vmem:[%s1966 + $0xa0] sm:$0xff]
    %v1988 = vld [vmem:[%s1966 + $0xa8] sm:$0xff]
    %v1989 = vld [vmem:[%s1966 + $0xb0] sm:$0xff]
    %v1990 = vld [vmem:[%s1966 + $0xb8] sm:$0xff]
    %v1991 = vld [vmem:[%s1966 + $0xc0] sm:$0xff]
    %v1992 = vld [vmem:[%s1966 + $0xc8] sm:$0xff]
    %v1993 = vld [vmem:[%s1966 + $0xd0] sm:$0xff]
    %v1994 = vld [vmem:[%s1966 + $0xd8] sm:$0xff]
    %v1995 = vld [vmem:[%s1966 + $0xe0] sm:$0xff]
    %v1996 = vld [vmem:[%s1966 + $0xe8] sm:$0xff]
    %v1997 = vld [vmem:[%s1966 + $0xf0] sm:$0xff]
    %v1998 = vld [vmem:[%s1966 + $0xf8] sm:$0xff]
    %s1999 = scalar_lea.vmem %s3, 2
    %v2000 = vld [vmem:[%s1999] sm:$0x3]
    %s2001 = scalar_lea.vmem %s4, 1
    %v2002 = vld [vmem:[%s2001] sm:$0x1]
    %s2003 = scalar_lea.vmem %s6, 4
    %v2004 = vld [vmem:[%s2003] sm:$0xf]
    %v2005 = vperm.slane %v2000, 0
    %v2006 = vmul.f32 %v161, %v2005
    %v2007 = vmul.f32 %v166, %v2005
    %v2008 = vmul.f32 %v171, %v2005
    %v2009 = vmul.f32 %v176, %v2005
    %v2010 = vmul.f32 %v181, %v2005
    %v2011 = vmul.f32 %v186, %v2005
    %v2012 = vmul.f32 %v191, %v2005
    %v2013 = vmul.f32 %v196, %v2005
    %v2014 = vperm.slane %v2000, 1
    %v2015 = vmul.f32 %v209, %v2014
    %v2016 = vmul.f32 %v213, %v2014
    %v2017 = vmul.f32 %v217, %v2014
    %v2018 = vmul.f32 %v221, %v2014
    %v2019 = vmul.f32 %v225, %v2014
    %v2020 = vmul.f32 %v229, %v2014
    %v2021 = vmul.f32 %v233, %v2014
    %v2022 = vmul.f32 %v237, %v2014
    %v2023 = vadd.f32 %v2006, %v2015
    %v2024 = vadd.f32 %v2007, %v2016
    %v2025 = vadd.f32 %v2008, %v2017
    %v2026 = vadd.f32 %v2009, %v2018
    %v2027 = vadd.f32 %v2010, %v2019
    %v2028 = vadd.f32 %v2011, %v2020
    %v2029 = vadd.f32 %v2012, %v2021
    %v2030 = vadd.f32 %v2013, %v2022
    %v2032 = vperm.slane %v2002, 0
    %v2034 = vadd.f32 %v2023, %v2032
    %v2035 = vadd.f32 %v2024, %v2032
    %v2036 = vadd.f32 %v2025, %v2032
    %v2037 = vadd.f32 %v2026, %v2032
    %v2038 = vadd.f32 %v2027, %v2032
    %v2039 = vadd.f32 %v2028, %v2032
    %v2040 = vadd.f32 %v2029, %v2032
    %v2041 = vadd.f32 %v2030, %v2032
    %2042 = vst [vmem:[#allocation3] sm:$0xff] %v2034
    %2043 = vst [vmem:[#allocation3 + $0x8] sm:$0xff] %v2035
    %2044 = vst [vmem:[#allocation3 + $0x10] sm:$0xff] %v2036
    %2045 = vst [vmem:[#allocation3 + $0x18] sm:$0xff] %v2037
    %2046 = vst [vmem:[#allocation3 + $0x20] sm:$0xff] %v2038
    %2047 = vst [vmem:[#allocation3 + $0x28] sm:$0xff] %v2039
    %2048 = vst [vmem:[#allocation3 + $0x30] sm:$0xff] %v2040
    %2049 = vst [vmem:[#allocation3 + $0x38] sm:$0xff] %v2041
    %s2050 = scalar_lea.vmem [#allocation4], 8
    %v2051 = vld [vmem:[%s2050] sm:$0xff]
    %s2052 = scalar_lea.vmem [#allocation5], 8
    %v2053 = vld [vmem:[%s2052] sm:$0xff]
    %v2054 = vld [vmem:[#allocation2] sm:$0xff]
    %v2055 = vpack.c.bf16 %v2051, %v2051
    %v2104 = vunpack.c.l.b16 %v1918
    %v2105 = vunpack.c.h.b16 %v1918
    %v2106 = vunpack.c.l.b16 %v1919
    %v2107 = vunpack.c.h.b16 %v1919
    %v2108 = vunpack.c.l.b16 %v1920
    %v2109 = vunpack.c.l.b16 %v1921
    %v2110 = vunpack.c.h.b16 %v1921
    %v2111 = vunpack.c.l.b16 %v1922
    %v2112 = vunpack.c.h.b16 %v1922
    %v2113 = vunpack.c.l.b16 %v1923
    %v2114 = vunpack.c.l.b16 %v1924
    %v2115 = vunpack.c.h.b16 %v1924
    %v2116 = vunpack.c.l.b16 %v1925
    %v2117 = vunpack.c.h.b16 %v1925
    %v2118 = vunpack.c.l.b16 %v1926
    %v2119 = vunpack.c.l.b16 %v1927
    %v2120 = vunpack.c.h.b16 %v1927
    %v2121 = vunpack.c.l.b16 %v1928
    %v2122 = vunpack.c.h.b16 %v1928
    %v2123 = vunpack.c.l.b16 %v1929
    %v2124 = vunpack.c.l.b16 %v1930
    %v2125 = vunpack.c.h.b16 %v1930
    %v2126 = vunpack.c.l.b16 %v1931
    %v2127 = vunpack.c.h.b16 %v1931
    %v2128 = vunpack.c.l.b16 %v1932
    %v2129 = vunpack.c.l.b16 %v1933
    %v2130 = vunpack.c.h.b16 %v1933
    %v2131 = vunpack.c.l.b16 %v1934
    %v2132 = vunpack.c.h.b16 %v1934
    %v2133 = vunpack.c.l.b16 %v1935
    %v2134 = vunpack.c.l.b16 %v1936
    %v2135 = vunpack.c.h.b16 %v1936
    %v2136 = vunpack.c.l.b16 %v1937
    %v2137 = vunpack.c.h.b16 %v1937
    %v2138 = vunpack.c.l.b16 %v1938
    %v2139 = vunpack.c.l.b16 %v1939
    %v2140 = vunpack.c.h.b16 %v1939
    %v2141 = vunpack.c.l.b16 %v1940
    %v2142 = vunpack.c.h.b16 %v1940
    %v2143 = vunpack.c.l.b16 %v1941
    %v2144 = vunpack.c.l.b16 %v1942
    %v2145 = vunpack.c.h.b16 %v1942
    %v2146 = vunpack.c.l.b16 %v1943
    %v2147 = vunpack.c.h.b16 %v1943
    %v2148 = vunpack.c.l.b16 %v1944
    %v2149 = vunpack.c.l.b16 %v1945
    %v2150 = vunpack.c.h.b16 %v1945
    %v2151 = vunpack.c.l.b16 %v1946
    %v2152 = vunpack.c.h.b16 %v1946
    %v2153 = vunpack.c.l.b16 %v1947
    %v2154 = vunpack.c.l.b16 %v1948
    %v2155 = vunpack.c.h.b16 %v1948
    %v2156 = vunpack.c.l.b16 %v1949
    %v2157 = vunpack.c.h.b16 %v1949
    %v2158 = vunpack.c.l.b16 %v1950
    %v2159 = vunpack.c.l.b16 %v1951
    %v2160 = vunpack.c.h.b16 %v1951
    %v2161 = vunpack.c.l.b16 %v1952
    %v2162 = vunpack.c.h.b16 %v1952
    %v2163 = vunpack.c.l.b16 %v1953
    %v2164 = vunpack.c.l.b16 %v1954
    %v2165 = vunpack.c.h.b16 %v1954
    %v2166 = vunpack.c.l.b16 %v1955
    %v2167 = vunpack.c.h.b16 %v1955
    %v2168 = vunpack.c.l.b16 %v1956
    %v2169 = vunpack.c.l.b16 %v1957
    %v2170 = vunpack.c.h.b16 %v1957
    %v2171 = vunpack.c.l.b16 %v1958
    %v2172 = vunpack.c.h.b16 %v1958
    %v2173 = vunpack.c.l.b16 %v1959
    %v2174 = vunpack.c.l.b16 %v1960
    %v2175 = vunpack.c.h.b16 %v1960
    %v2176 = vunpack.c.l.b16 %v1961
    %v2177 = vunpack.c.h.b16 %v1961
    %v2178 = vunpack.c.l.b16 %v1962
    %v2179 = vunpack.c.l.b16 %v1963
    %v2180 = vunpack.c.h.b16 %v1963
    %v2181 = vunpack.c.l.b16 %v1964
    %v2182 = vunpack.c.h.b16 %v1964
    %v2183 = vunpack.c.l.b16 %v1965
    %v2184 = vpack.c.b16 %v2109, %v2104
    %v2185 = vpack.c.b16 %v2110, %v2105
    %v2186 = vpack.c.b16 %v2111, %v2106
    %v2187 = vpack.c.b16 %v2112, %v2107
    %v2188 = vpack.c.b16 %v2113, %v2108
    %v2189 = vpack.c.b16 %v2119, %v2114
    %v2190 = vpack.c.b16 %v2120, %v2115
    %v2191 = vpack.c.b16 %v2121, %v2116
    %v2192 = vpack.c.b16 %v2122, %v2117
    %v2193 = vpack.c.b16 %v2123, %v2118
    %v2194 = vpack.c.b16 %v2129, %v2124
    %v2195 = vpack.c.b16 %v2130, %v2125
    %v2196 = vpack.c.b16 %v2131, %v2126
    %v2197 = vpack.c.b16 %v2132, %v2127
    %v2198 = vpack.c.b16 %v2133, %v2128
    %v2199 = vpack.c.b16 %v2139, %v2134
    %v2200 = vpack.c.b16 %v2140, %v2135
    %v2201 = vpack.c.b16 %v2141, %v2136
    %v2202 = vpack.c.b16 %v2142, %v2137
    %v2203 = vpack.c.b16 %v2143, %v2138
    %v2204 = vpack.c.b16 %v2149, %v2144
    %v2205 = vpack.c.b16 %v2150, %v2145
    %v2206 = vpack.c.b16 %v2151, %v2146
    %v2207 = vpack.c.b16 %v2152, %v2147
    %v2208 = vpack.c.b16 %v2153, %v2148
    %v2209 = vpack.c.b16 %v2159, %v2154
    %v2210 = vpack.c.b16 %v2160, %v2155
    %v2211 = vpack.c.b16 %v2161, %v2156
    %v2212 = vpack.c.b16 %v2162, %v2157
    %v2213 = vpack.c.b16 %v2163, %v2158
    %v2214 = vpack.c.b16 %v2169, %v2164
    %v2215 = vpack.c.b16 %v2170, %v2165
    %v2216 = vpack.c.b16 %v2171, %v2166
    %v2217 = vpack.c.b16 %v2172, %v2167
    %v2218 = vpack.c.b16 %v2173, %v2168
    %v2219 = vpack.c.b16 %v2179, %v2174
    %v2220 = vpack.c.b16 %v2180, %v2175
    %v2221 = vpack.c.b16 %v2181, %v2176
    %v2222 = vpack.c.b16 %v2182, %v2177
    %v2223 = vpack.c.b16 %v2183, %v2178
    %2264 = vmatpush.bf16.msra.mxu0 %v2219
    %2265 = vmatpush.bf16.msra.mxu0 %v2214
    %2266 = vmatpush.bf16.msra.mxu0 %v2209
    %2267 = vmatpush.bf16.msra.mxu0 %v2204
    %2268 = vmatpush.bf16.msra.mxu0 %v2199
    %2269 = vmatpush.bf16.msra.mxu0 %v2194
    %2270 = vmatpush.bf16.msra.mxu0 %v2189
    %2271 = vmatpush.bf16.msra.mxu0 %v2184
    %2272 = vmatmul.bf16.gmra.mxu0 %v2055
    %v2273 = vpop.f32.mrf.mxu0
    %v2274 = vadd.f32 0.0, %v2273
    %v2275 = vpop.f32.mrf.mxu0
    %2276 = vdwg.mxu0
    %2277 = vmatpush.bf16.msra.mxu0 %v2220
    %2278 = vmatpush.bf16.msra.mxu0 %v2215
    %2279 = vmatpush.bf16.msra.mxu0 %v2210
    %2280 = vmatpush.bf16.msra.mxu0 %v2205
    %2281 = vmatpush.bf16.msra.mxu0 %v2200
    %2282 = vmatpush.bf16.msra.mxu0 %v2195
    %2283 = vmatpush.bf16.msra.mxu0 %v2190
    %2284 = vmatpush.bf16.msra.mxu0 %v2185
    %2285 = vmatmul.bf16.gmra.mxu0 %v2055
    %v2286 = vpop.f32.mrf.mxu0
    %v2287 = vadd.f32 0.0, %v2286
    %v2288 = vpop.f32.mrf.mxu0
    %2289 = vdwg.mxu0
    %2290 = vmatpush.bf16.msra.mxu0 %v2221
    %2291 = vmatpush.bf16.msra.mxu0 %v2216
    %2292 = vmatpush.bf16.msra.mxu0 %v2211
    %2293 = vmatpush.bf16.msra.mxu0 %v2206
    %2294 = vmatpush.bf16.msra.mxu0 %v2201
    %2295 = vmatpush.bf16.msra.mxu0 %v2196
    %2296 = vmatpush.bf16.msra.mxu0 %v2191
    %2297 = vmatpush.bf16.msra.mxu0 %v2186
    %2298 = vmatmul.bf16.gmra.mxu0 %v2055
    %v2299 = vpop.f32.mrf.mxu0
    %v2300 = vadd.f32 0.0, %v2299
    %v2301 = vpop.f32.mrf.mxu0
    %2302 = vdwg.mxu0
    %2303 = vmatpush.bf16.msra.mxu0 %v2222
    %2304 = vmatpush.bf16.msra.mxu0 %v2217
    %2305 = vmatpush.bf16.msra.mxu0 %v2212
    %2306 = vmatpush.bf16.msra.mxu0 %v2207
    %2307 = vmatpush.bf16.msra.mxu0 %v2202
    %2308 = vmatpush.bf16.msra.mxu0 %v2197
    %2309 = vmatpush.bf16.msra.mxu0 %v2192
    %2310 = vmatpush.bf16.msra.mxu0 %v2187
    %2311 = vmatmul.bf16.gmra.mxu0 %v2055
    %v2312 = vpop.f32.mrf.mxu0
    %v2313 = vadd.f32 0.0, %v2312
    %v2314 = vpop.f32.mrf.mxu0
    %2315 = vdwg.mxu0
    %2316 = vmatpush.bf16.msra.mxu0 %v2223
    %2317 = vmatpush.bf16.msra.mxu0 %v2218
    %2318 = vmatpush.bf16.msra.mxu0 %v2213
    %2319 = vmatpush.bf16.msra.mxu0 %v2208
    %2320 = vmatpush.bf16.msra.mxu0 %v2203
    %2321 = vmatpush.bf16.msra.mxu0 %v2198
    %2322 = vmatpush.bf16.msra.mxu0 %v2193
    %2323 = vmatpush.bf16.msra.mxu0 %v2188
    %2324 = vmatmul.bf16.gmra.mxu0 %v2055
    %v2325 = vpop.f32.mrf.mxu0
    %v2326 = vadd.f32 0.0, %v2325
    %v2327 = vpop.f32.mrf.mxu0
    %2328 = vdwg.mxu0
    %v2329 = vld [vmem:[#allocation3] sm:$0xff]
    %v2330 = vadd.f32 %v2274, %v2329
    %v2331 = vmul.f32 %v2330, 0.5
    %v2332 = vtanh.pop %v2331
    %v2333 = vmul.f32 %v2332, 0.5
    %v2334 = vadd.f32 %v2333, 0.5
    %v2335 = vmul.f32 %v2334, %v2054
    %v2336 = vpack.c.bf16 %v2335, %v2335
    %v2369 = vunpack.c.l.b16 %v1967
    %v2370 = vunpack.c.h.b16 %v1967
    %v2371 = vunpack.c.l.b16 %v1968
    %v2372 = vunpack.c.h.b16 %v1968
    %v2373 = vunpack.c.l.b16 %v1969
    %v2374 = vunpack.c.h.b16 %v1969
    %v2375 = vunpack.c.l.b16 %v1970
    %v2376 = vunpack.c.h.b16 %v1970
    %v2377 = vunpack.c.l.b16 %v1971
    %v2378 = vunpack.c.h.b16 %v1971
    %v2379 = vunpack.c.l.b16 %v1972
    %v2380 = vunpack.c.h.b16 %v1972
    %v2381 = vunpack.c.l.b16 %v1973
    %v2382 = vunpack.c.h.b16 %v1973
    %v2383 = vunpack.c.l.b16 %v1974
    %v2384 = vunpack.c.h.b16 %v1974
    %v2385 = vunpack.c.l.b16 %v1975
    %v2386 = vunpack.c.h.b16 %v1975
    %v2387 = vunpack.c.l.b16 %v1976
    %v2388 = vunpack.c.h.b16 %v1976
    %v2389 = vunpack.c.l.b16 %v1977
    %v2390 = vunpack.c.h.b16 %v1977
    %v2391 = vunpack.c.l.b16 %v1978
    %v2392 = vunpack.c.h.b16 %v1978
    %v2393 = vunpack.c.l.b16 %v1979
    %v2394 = vunpack.c.h.b16 %v1979
    %v2395 = vunpack.c.l.b16 %v1980
    %v2396 = vunpack.c.h.b16 %v1980
    %v2397 = vunpack.c.l.b16 %v1981
    %v2398 = vunpack.c.h.b16 %v1981
    %v2399 = vunpack.c.l.b16 %v1982
    %v2400 = vunpack.c.h.b16 %v1982
    %v2401 = vunpack.c.l.b16 %v1983
    %v2402 = vunpack.c.h.b16 %v1983
    %v2403 = vunpack.c.l.b16 %v1984
    %v2404 = vunpack.c.h.b16 %v1984
    %v2405 = vunpack.c.l.b16 %v1985
    %v2406 = vunpack.c.h.b16 %v1985
    %v2407 = vunpack.c.l.b16 %v1986
    %v2408 = vunpack.c.h.b16 %v1986
    %v2409 = vunpack.c.l.b16 %v1987
    %v2410 = vunpack.c.h.b16 %v1987
    %v2411 = vunpack.c.l.b16 %v1988
    %v2412 = vunpack.c.h.b16 %v1988
    %v2413 = vunpack.c.l.b16 %v1989
    %v2414 = vunpack.c.h.b16 %v1989
    %v2415 = vunpack.c.l.b16 %v1990
    %v2416 = vunpack.c.h.b16 %v1990
    %v2417 = vunpack.c.l.b16 %v1991
    %v2418 = vunpack.c.h.b16 %v1991
    %v2419 = vunpack.c.l.b16 %v1992
    %v2420 = vunpack.c.h.b16 %v1992
    %v2421 = vunpack.c.l.b16 %v1993
    %v2422 = vunpack.c.h.b16 %v1993
    %v2423 = vunpack.c.l.b16 %v1994
    %v2424 = vunpack.c.h.b16 %v1994
    %v2425 = vunpack.c.l.b16 %v1995
    %v2426 = vunpack.c.h.b16 %v1995
    %v2427 = vunpack.c.l.b16 %v1996
    %v2428 = vunpack.c.h.b16 %v1996
    %v2429 = vunpack.c.l.b16 %v1997
    %v2430 = vunpack.c.h.b16 %v1997
    %v2431 = vunpack.c.l.b16 %v1998
    %v2432 = vunpack.c.h.b16 %v1998
    %v2433 = vpack.c.b16 %v2373, %v2369
    %v2434 = vpack.c.b16 %v2374, %v2370
    %v2435 = vpack.c.b16 %v2375, %v2371
    %v2436 = vpack.c.b16 %v2376, %v2372
    %v2437 = vpack.c.b16 %v2381, %v2377
    %v2438 = vpack.c.b16 %v2382, %v2378
    %v2439 = vpack.c.b16 %v2383, %v2379
    %v2440 = vpack.c.b16 %v2384, %v2380
    %v2441 = vpack.c.b16 %v2389, %v2385
    %v2442 = vpack.c.b16 %v2390, %v2386
    %v2443 = vpack.c.b16 %v2391, %v2387
    %v2444 = vpack.c.b16 %v2392, %v2388
    %v2445 = vpack.c.b16 %v2397, %v2393
    %v2446 = vpack.c.b16 %v2398, %v2394
    %v2447 = vpack.c.b16 %v2399, %v2395
    %v2448 = vpack.c.b16 %v2400, %v2396
    %v2449 = vpack.c.b16 %v2405, %v2401
    %v2450 = vpack.c.b16 %v2406, %v2402
    %v2451 = vpack.c.b16 %v2407, %v2403
    %v2452 = vpack.c.b16 %v2408, %v2404
    %v2453 = vpack.c.b16 %v2413, %v2409
    %v2454 = vpack.c.b16 %v2414, %v2410
    %v2455 = vpack.c.b16 %v2415, %v2411
    %v2456 = vpack.c.b16 %v2416, %v2412
    %v2457 = vpack.c.b16 %v2421, %v2417
    %v2458 = vpack.c.b16 %v2422, %v2418
    %v2459 = vpack.c.b16 %v2423, %v2419
    %v2460 = vpack.c.b16 %v2424, %v2420
    %v2461 = vpack.c.b16 %v2429, %v2425
    %v2462 = vpack.c.b16 %v2430, %v2426
    %v2463 = vpack.c.b16 %v2431, %v2427
    %v2464 = vpack.c.b16 %v2432, %v2428
    %2497 = vmatpush.bf16.msra.mxu0 %v2461
    %2498 = vmatpush.bf16.msra.mxu0 %v2457
    %2499 = vmatpush.bf16.msra.mxu0 %v2453
    %2500 = vmatpush.bf16.msra.mxu0 %v2449
    %2501 = vmatpush.bf16.msra.mxu0 %v2445
    %2502 = vmatpush.bf16.msra.mxu0 %v2441
    %2503 = vmatpush.bf16.msra.mxu0 %v2437
    %2504 = vmatpush.bf16.msra.mxu0 %v2433
    %2505 = vmatmul.bf16.gmra.mxu0 %v2336
    %v2506 = vpop.f32.mrf.mxu0
    %v2507 = vadd.f32 0.0, %v2506
    %v2508 = vpop.f32.mrf.mxu0
    %2509 = vdwg.mxu0
    %2510 = vmatpush.bf16.msra.mxu0 %v2462
    %2511 = vmatpush.bf16.msra.mxu0 %v2458
    %2512 = vmatpush.bf16.msra.mxu0 %v2454
    %2513 = vmatpush.bf16.msra.mxu0 %v2450
    %2514 = vmatpush.bf16.msra.mxu0 %v2446
    %2515 = vmatpush.bf16.msra.mxu0 %v2442
    %2516 = vmatpush.bf16.msra.mxu0 %v2438
    %2517 = vmatpush.bf16.msra.mxu0 %v2434
    %2518 = vmatmul.bf16.gmra.mxu0 %v2336
    %v2519 = vpop.f32.mrf.mxu0
    %v2520 = vadd.f32 0.0, %v2519
    %v2521 = vpop.f32.mrf.mxu0
    %2522 = vdwg.mxu0
    %2523 = vmatpush.bf16.msra.mxu0 %v2463
    %2524 = vmatpush.bf16.msra.mxu0 %v2459
    %2525 = vmatpush.bf16.msra.mxu0 %v2455
    %2526 = vmatpush.bf16.msra.mxu0 %v2451
    %2527 = vmatpush.bf16.msra.mxu0 %v2447
    %2528 = vmatpush.bf16.msra.mxu0 %v2443
    %2529 = vmatpush.bf16.msra.mxu0 %v2439
    %2530 = vmatpush.bf16.msra.mxu0 %v2435
    %2531 = vmatmul.bf16.gmra.mxu0 %v2336
    %v2532 = vpop.f32.mrf.mxu0
    %v2533 = vadd.f32 0.0, %v2532
    %v2534 = vpop.f32.mrf.mxu0
    %2535 = vdwg.mxu0
    %2536 = vmatpush.bf16.msra.mxu0 %v2464
    %2537 = vmatpush.bf16.msra.mxu0 %v2460
    %2538 = vmatpush.bf16.msra.mxu0 %v2456
    %2539 = vmatpush.bf16.msra.mxu0 %v2452
    %2540 = vmatpush.bf16.msra.mxu0 %v2448
    %2541 = vmatpush.bf16.msra.mxu0 %v2444
    %2542 = vmatpush.bf16.msra.mxu0 %v2440
    %2543 = vmatpush.bf16.msra.mxu0 %v2436
    %2544 = vmatmul.bf16.gmra.mxu0 %v2336
    %v2545 = vpop.f32.mrf.mxu0
    %v2546 = vadd.f32 0.0, %v2545
    %v2547 = vpop.f32.mrf.mxu0
    %2548 = vdwg.mxu0
    %v2549 = vadd.f32 %v2287, %v2507
    %v2550 = vadd.f32 %v2300, %v2520
    %v2551 = vadd.f32 %v2313, %v2533
    %v2552 = vadd.f32 %v2326, %v2546
    %v2554 = vperm.slane %v2004, 0
    %v2555 = vperm.slane %v2004, 1
    %v2556 = vperm.slane %v2004, 2
    %v2557 = vperm.slane %v2004, 3
    %v2562 = vadd.f32 %v2549, %v2554
    %v2563 = vadd.f32 %v2550, %v2555
    %v2564 = vadd.f32 %v2551, %v2556
    %v2565 = vadd.f32 %v2552, %v2557
    %v2566 = vmul.f32 %v2562, 0.5
    %v2567 = vtanh.pop %v2566
    %v2568 = vmul.f32 %v2567, 0.5
    %v2569 = vadd.f32 %v2568, 0.5
    %v2570 = vmul.f32 %v2563, 0.5
    %v2571 = vtanh.pop %v2570
    %v2572 = vmul.f32 %v2571, 0.5
    %v2573 = vadd.f32 %v2572, 0.5
    %v2574 = vtanh.pop %v2564
    %v2575 = vmul.f32 %v2565, 0.5
    %v2576 = vtanh.pop %v2575
    %v2577 = vmul.f32 %v2576, 0.5
    %v2578 = vadd.f32 %v2577, 0.5
    %v2579 = vmul.f32 %v2573, %v2053
    %v2580 = vmul.f32 %v2569, %v2574
    %v2581 = vadd.f32 %v2579, %v2580
    %v2582 = vtanh.pop %v2581
    %v2583 = vmul.f32 %v2578, %v2582
    %v2584 = vpack.c.bf16 %v2583, %v2583
    %2585 = vst [vmem:[#allocation11] sm:$0xf] %v2584
    %v2586 = vld [vmem:[%s965] sm:$0xff]
    %2587 = vmatpush.bf16.msra.mxu0 %v2219
    %2588 = vmatpush.bf16.msra.mxu0 %v2214
    %2589 = vmatpush.bf16.msra.mxu0 %v2209
    %2590 = vmatpush.bf16.msra.mxu0 %v2204
    %2591 = vmatpush.bf16.msra.mxu0 %v2199
    %2592 = vmatpush.bf16.msra.mxu0 %v2194
    %2593 = vmatpush.bf16.msra.mxu0 %v2189
    %2594 = vmatpush.bf16.msra.mxu0 %v2184
    %2595 = vmatmul.bf16.gmra.mxu0 %v2584
    %v2596 = vpop.f32.mrf.mxu0
    %v2597 = vadd.f32 0.0, %v2596
    %v2598 = vpop.f32.mrf.mxu0
    %2599 = vdwg.mxu0
    %2600 = vmatpush.bf16.msra.mxu0 %v2220
    %2601 = vmatpush.bf16.msra.mxu0 %v2215
    %2602 = vmatpush.bf16.msra.mxu0 %v2210
    %2603 = vmatpush.bf16.msra.mxu0 %v2205
    %2604 = vmatpush.bf16.msra.mxu0 %v2200
    %2605 = vmatpush.bf16.msra.mxu0 %v2195
    %2606 = vmatpush.bf16.msra.mxu0 %v2190
    %2607 = vmatpush.bf16.msra.mxu0 %v2185
    %2608 = vmatmul.bf16.gmra.mxu0 %v2584
    %v2609 = vpop.f32.mrf.mxu0
    %v2610 = vadd.f32 0.0, %v2609
    %v2611 = vpop.f32.mrf.mxu0
    %2612 = vdwg.mxu0
    %2613 = vmatpush.bf16.msra.mxu0 %v2221
    %2614 = vmatpush.bf16.msra.mxu0 %v2216
    %2615 = vmatpush.bf16.msra.mxu0 %v2211
    %2616 = vmatpush.bf16.msra.mxu0 %v2206
    %2617 = vmatpush.bf16.msra.mxu0 %v2201
    %2618 = vmatpush.bf16.msra.mxu0 %v2196
    %2619 = vmatpush.bf16.msra.mxu0 %v2191
    %2620 = vmatpush.bf16.msra.mxu0 %v2186
    %2621 = vmatmul.bf16.gmra.mxu0 %v2584
    %v2622 = vpop.f32.mrf.mxu0
    %v2623 = vadd.f32 0.0, %v2622
    %v2624 = vpop.f32.mrf.mxu0
    %2625 = vdwg.mxu0
    %2626 = vmatpush.bf16.msra.mxu0 %v2222
    %2627 = vmatpush.bf16.msra.mxu0 %v2217
    %2628 = vmatpush.bf16.msra.mxu0 %v2212
    %2629 = vmatpush.bf16.msra.mxu0 %v2207
    %2630 = vmatpush.bf16.msra.mxu0 %v2202
    %2631 = vmatpush.bf16.msra.mxu0 %v2197
    %2632 = vmatpush.bf16.msra.mxu0 %v2192
    %2633 = vmatpush.bf16.msra.mxu0 %v2187
    %2634 = vmatmul.bf16.gmra.mxu0 %v2584
    %v2635 = vpop.f32.mrf.mxu0
    %v2636 = vadd.f32 0.0, %v2635
    %v2637 = vpop.f32.mrf.mxu0
    %2638 = vdwg.mxu0
    %2639 = vmatpush.bf16.msra.mxu0 %v2223
    %2640 = vmatpush.bf16.msra.mxu0 %v2218
    %2641 = vmatpush.bf16.msra.mxu0 %v2213
    %2642 = vmatpush.bf16.msra.mxu0 %v2208
    %2643 = vmatpush.bf16.msra.mxu0 %v2203
    %2644 = vmatpush.bf16.msra.mxu0 %v2198
    %2645 = vmatpush.bf16.msra.mxu0 %v2193
    %2646 = vmatpush.bf16.msra.mxu0 %v2188
    %2647 = vmatmul.bf16.gmra.mxu0 %v2584
    %v2648 = vpop.f32.mrf.mxu0
    %v2649 = vadd.f32 0.0, %v2648
    %v2650 = vpop.f32.mrf.mxu0
    %2651 = vdwg.mxu0
    %v2652 = vld [vmem:[%s878] sm:$0xff]
    %v2653 = vadd.f32 %v2597, %v2652
    %v2654 = vmul.f32 %v2653, 0.5
    %v2655 = vtanh.pop %v2654
    %v2656 = vmul.f32 %v2655, 0.5
    %v2657 = vadd.f32 %v2656, 0.5
    %v2658 = vmul.f32 %v2657, %v2586
    %v2659 = vpack.c.bf16 %v2658, %v2658
    %2660 = vmatpush.bf16.msra.mxu0 %v2461
    %2661 = vmatpush.bf16.msra.mxu0 %v2457
    %2662 = vmatpush.bf16.msra.mxu0 %v2453
    %2663 = vmatpush.bf16.msra.mxu0 %v2449
    %2664 = vmatpush.bf16.msra.mxu0 %v2445
    %2665 = vmatpush.bf16.msra.mxu0 %v2441
    %2666 = vmatpush.bf16.msra.mxu0 %v2437
    %2667 = vmatpush.bf16.msra.mxu0 %v2433
    %2668 = vmatmul.bf16.gmra.mxu0 %v2659
    %v2669 = vpop.f32.mrf.mxu0
    %v2670 = vadd.f32 0.0, %v2669
    %v2671 = vpop.f32.mrf.mxu0
    %2672 = vdwg.mxu0
    %2673 = vmatpush.bf16.msra.mxu0 %v2462
    %2674 = vmatpush.bf16.msra.mxu0 %v2458
    %2675 = vmatpush.bf16.msra.mxu0 %v2454
    %2676 = vmatpush.bf16.msra.mxu0 %v2450
    %2677 = vmatpush.bf16.msra.mxu0 %v2446
    %2678 = vmatpush.bf16.msra.mxu0 %v2442
    %2679 = vmatpush.bf16.msra.mxu0 %v2438
    %2680 = vmatpush.bf16.msra.mxu0 %v2434
    %2681 = vmatmul.bf16.gmra.mxu0 %v2659
    %v2682 = vpop.f32.mrf.mxu0
    %v2683 = vadd.f32 0.0, %v2682
    %v2684 = vpop.f32.mrf.mxu0
    %2685 = vdwg.mxu0
    %2686 = vmatpush.bf16.msra.mxu0 %v2463
    %2687 = vmatpush.bf16.msra.mxu0 %v2459
    %2688 = vmatpush.bf16.msra.mxu0 %v2455
    %2689 = vmatpush.bf16.msra.mxu0 %v2451
    %2690 = vmatpush.bf16.msra.mxu0 %v2447
    %2691 = vmatpush.bf16.msra.mxu0 %v2443
    %2692 = vmatpush.bf16.msra.mxu0 %v2439
    %2693 = vmatpush.bf16.msra.mxu0 %v2435
    %2694 = vmatmul.bf16.gmra.mxu0 %v2659
    %v2695 = vpop.f32.mrf.mxu0
    %v2696 = vadd.f32 0.0, %v2695
    %v2697 = vpop.f32.mrf.mxu0
    %2698 = vdwg.mxu0
    %2699 = vmatpush.bf16.msra.mxu0 %v2464
    %2700 = vmatpush.bf16.msra.mxu0 %v2460
    %2701 = vmatpush.bf16.msra.mxu0 %v2456
    %2702 = vmatpush.bf16.msra.mxu0 %v2452
    %2703 = vmatpush.bf16.msra.mxu0 %v2448
    %2704 = vmatpush.bf16.msra.mxu0 %v2444
    %2705 = vmatpush.bf16.msra.mxu0 %v2440
    %2706 = vmatpush.bf16.msra.mxu0 %v2436
    %2707 = vmatmul.bf16.gmra.mxu0 %v2659
    %v2708 = vpop.f32.mrf.mxu0
    %v2709 = vadd.f32 0.0, %v2708
    %v2710 = vpop.f32.mrf.mxu0
    %2711 = vdwg.mxu0
    %v2712 = vadd.f32 %v2610, %v2670
    %v2713 = vadd.f32 %v2623, %v2683
    %v2714 = vadd.f32 %v2636, %v2696
    %v2715 = vadd.f32 %v2649, %v2709
    %v2716 = vadd.f32 %v2712, %v2554
    %v2717 = vadd.f32 %v2713, %v2555
    %v2718 = vadd.f32 %v2714, %v2556
    %v2719 = vadd.f32 %v2715, %v2557
    %v2720 = vmul.f32 %v2716, 0.5
    %v2721 = vtanh.pop %v2720
    %v2722 = vmul.f32 %v2721, 0.5
    %v2723 = vadd.f32 %v2722, 0.5
    %v2724 = vmul.f32 %v2717, 0.5
    %v2725 = vtanh.pop %v2724
    %v2726 = vmul.f32 %v2725, 0.5
    %v2727 = vadd.f32 %v2726, 0.5
    %v2728 = vtanh.pop %v2718
    %v2729 = vmul.f32 %v2719, 0.5
    %v2730 = vtanh.pop %v2729
    %v2731 = vmul.f32 %v2730, 0.5
    %v2732 = vadd.f32 %v2731, 0.5
    %v2733 = vmul.f32 %v2727, %v2581
    %v2734 = vmul.f32 %v2723, %v2728
    %v2735 = vadd.f32 %v2733, %v2734
    %v2736 = vtanh.pop %v2735
    %v2737 = vmul.f32 %v2732, %v2736
    %v2738 = vpack.c.bf16 %v2737, %v2737
    %s2739 = scalar_lea.vmem [#allocation11], 4
    %2740 = vst [vmem:[%s2739] sm:$0xf] %v2738
    %v2741 = vld [vmem:[%s1123] sm:$0xff]
    %2742 = vmatpush.bf16.msra.mxu0 %v2219
    %2743 = vmatpush.bf16.msra.mxu0 %v2214
    %2744 = vmatpush.bf16.msra.mxu0 %v2209
    %2745 = vmatpush.bf16.msra.mxu0 %v2204
    %2746 = vmatpush.bf16.msra.mxu0 %v2199
    %2747 = vmatpush.bf16.msra.mxu0 %v2194
    %2748 = vmatpush.bf16.msra.mxu0 %v2189
    %2749 = vmatpush.bf16.msra.mxu0 %v2184
    %2750 = vmatmul.bf16.gmra.mxu0 %v2738
    %v2751 = vpop.f32.mrf.mxu0
    %v2752 = vadd.f32 0.0, %v2751
    %v2753 = vpop.f32.mrf.mxu0
    %2754 = vdwg.mxu0
    %2755 = vmatpush.bf16.msra.mxu0 %v2220
    %2756 = vmatpush.bf16.msra.mxu0 %v2215
    %2757 = vmatpush.bf16.msra.mxu0 %v2210
    %2758 = vmatpush.bf16.msra.mxu0 %v2205
    %2759 = vmatpush.bf16.msra.mxu0 %v2200
    %2760 = vmatpush.bf16.msra.mxu0 %v2195
    %2761 = vmatpush.bf16.msra.mxu0 %v2190
    %2762 = vmatpush.bf16.msra.mxu0 %v2185
    %2763 = vmatmul.bf16.gmra.mxu0 %v2738
    %v2764 = vpop.f32.mrf.mxu0
    %v2765 = vadd.f32 0.0, %v2764
    %v2766 = vpop.f32.mrf.mxu0
    %2767 = vdwg.mxu0
    %2768 = vmatpush.bf16.msra.mxu0 %v2221
    %2769 = vmatpush.bf16.msra.mxu0 %v2216
    %2770 = vmatpush.bf16.msra.mxu0 %v2211
    %2771 = vmatpush.bf16.msra.mxu0 %v2206
    %2772 = vmatpush.bf16.msra.mxu0 %v2201
    %2773 = vmatpush.bf16.msra.mxu0 %v2196
    %2774 = vmatpush.bf16.msra.mxu0 %v2191
    %2775 = vmatpush.bf16.msra.mxu0 %v2186
    %2776 = vmatmul.bf16.gmra.mxu0 %v2738
    %v2777 = vpop.f32.mrf.mxu0
    %v2778 = vadd.f32 0.0, %v2777
    %v2779 = vpop.f32.mrf.mxu0
    %2780 = vdwg.mxu0
    %2781 = vmatpush.bf16.msra.mxu0 %v2222
    %2782 = vmatpush.bf16.msra.mxu0 %v2217
    %2783 = vmatpush.bf16.msra.mxu0 %v2212
    %2784 = vmatpush.bf16.msra.mxu0 %v2207
    %2785 = vmatpush.bf16.msra.mxu0 %v2202
    %2786 = vmatpush.bf16.msra.mxu0 %v2197
    %2787 = vmatpush.bf16.msra.mxu0 %v2192
    %2788 = vmatpush.bf16.msra.mxu0 %v2187
    %2789 = vmatmul.bf16.gmra.mxu0 %v2738
    %v2790 = vpop.f32.mrf.mxu0
    %v2791 = vadd.f32 0.0, %v2790
    %v2792 = vpop.f32.mrf.mxu0
    %2793 = vdwg.mxu0
    %2794 = vmatpush.bf16.msra.mxu0 %v2223
    %2795 = vmatpush.bf16.msra.mxu0 %v2218
    %2796 = vmatpush.bf16.msra.mxu0 %v2213
    %2797 = vmatpush.bf16.msra.mxu0 %v2208
    %2798 = vmatpush.bf16.msra.mxu0 %v2203
    %2799 = vmatpush.bf16.msra.mxu0 %v2198
    %2800 = vmatpush.bf16.msra.mxu0 %v2193
    %2801 = vmatpush.bf16.msra.mxu0 %v2188
    %2802 = vmatmul.bf16.gmra.mxu0 %v2738
    %v2803 = vpop.f32.mrf.mxu0
    %v2804 = vadd.f32 0.0, %v2803
    %v2805 = vpop.f32.mrf.mxu0
    %2806 = vdwg.mxu0
    %v2807 = vld [vmem:[%s1036] sm:$0xff]
    %v2808 = vadd.f32 %v2752, %v2807
    %v2809 = vmul.f32 %v2808, 0.5
    %v2810 = vtanh.pop %v2809
    %v2811 = vmul.f32 %v2810, 0.5
    %v2812 = vadd.f32 %v2811, 0.5
    %v2813 = vmul.f32 %v2812, %v2741
    %v2814 = vpack.c.bf16 %v2813, %v2813
    %2815 = vmatpush.bf16.msra.mxu0 %v2461
    %2816 = vmatpush.bf16.msra.mxu0 %v2457
    %2817 = vmatpush.bf16.msra.mxu0 %v2453
    %2818 = vmatpush.bf16.msra.mxu0 %v2449
    %2819 = vmatpush.bf16.msra.mxu0 %v2445
    %2820 = vmatpush.bf16.msra.mxu0 %v2441
    %2821 = vmatpush.bf16.msra.mxu0 %v2437
    %2822 = vmatpush.bf16.msra.mxu0 %v2433
    %2823 = vmatmul.bf16.gmra.mxu0 %v2814
    %v2824 = vpop.f32.mrf.mxu0
    %v2825 = vadd.f32 0.0, %v2824
    %v2826 = vpop.f32.mrf.mxu0
    %2827 = vdwg.mxu0
    %2828 = vmatpush.bf16.msra.mxu0 %v2462
    %2829 = vmatpush.bf16.msra.mxu0 %v2458
    %2830 = vmatpush.bf16.msra.mxu0 %v2454
    %2831 = vmatpush.bf16.msra.mxu0 %v2450
    %2832 = vmatpush.bf16.msra.mxu0 %v2446
    %2833 = vmatpush.bf16.msra.mxu0 %v2442
    %2834 = vmatpush.bf16.msra.mxu0 %v2438
    %2835 = vmatpush.bf16.msra.mxu0 %v2434
    %2836 = vmatmul.bf16.gmra.mxu0 %v2814
    %v2837 = vpop.f32.mrf.mxu0
    %v2838 = vadd.f32 0.0, %v2837
    %v2839 = vpop.f32.mrf.mxu0
    %2840 = vdwg.mxu0
    %2841 = vmatpush.bf16.msra.mxu0 %v2463
    %2842 = vmatpush.bf16.msra.mxu0 %v2459
    %2843 = vmatpush.bf16.msra.mxu0 %v2455
    %2844 = vmatpush.bf16.msra.mxu0 %v2451
    %2845 = vmatpush.bf16.msra.mxu0 %v2447
    %2846 = vmatpush.bf16.msra.mxu0 %v2443
    %2847 = vmatpush.bf16.msra.mxu0 %v2439
    %2848 = vmatpush.bf16.msra.mxu0 %v2435
    %2849 = vmatmul.bf16.gmra.mxu0 %v2814
    %v2850 = vpop.f32.mrf.mxu0
    %v2851 = vadd.f32 0.0, %v2850
    %v2852 = vpop.f32.mrf.mxu0
    %2853 = vdwg.mxu0
    %2854 = vmatpush.bf16.msra.mxu0 %v2464
    %2855 = vmatpush.bf16.msra.mxu0 %v2460
    %2856 = vmatpush.bf16.msra.mxu0 %v2456
    %2857 = vmatpush.bf16.msra.mxu0 %v2452
    %2858 = vmatpush.bf16.msra.mxu0 %v2448
    %2859 = vmatpush.bf16.msra.mxu0 %v2444
    %2860 = vmatpush.bf16.msra.mxu0 %v2440
    %2861 = vmatpush.bf16.msra.mxu0 %v2436
    %2862 = vmatmul.bf16.gmra.mxu0 %v2814
    %v2863 = vpop.f32.mrf.mxu0
    %v2864 = vadd.f32 0.0, %v2863
    %v2865 = vpop.f32.mrf.mxu0
    %2866 = vdwg.mxu0
    %v2867 = vadd.f32 %v2765, %v2825
    %v2868 = vadd.f32 %v2778, %v2838
    %v2869 = vadd.f32 %v2791, %v2851
    %v2870 = vadd.f32 %v2804, %v2864
    %v2871 = vadd.f32 %v2867, %v2554
    %v2872 = vadd.f32 %v2868, %v2555
    %v2873 = vadd.f32 %v2869, %v2556
    %v2874 = vadd.f32 %v2870, %v2557
    %v2875 = vmul.f32 %v2871, 0.5
    %v2876 = vtanh.pop %v2875
    %v2877 = vmul.f32 %v2876, 0.5
    %v2878 = vadd.f32 %v2877, 0.5
    %v2879 = vmul.f32 %v2872, 0.5
    %v2880 = vtanh.pop %v2879
    %v2881 = vmul.f32 %v2880, 0.5
    %v2882 = vadd.f32 %v2881, 0.5
    %v2883 = vtanh.pop %v2873
    %v2884 = vmul.f32 %v2874, 0.5
    %v2885 = vtanh.pop %v2884
    %v2886 = vmul.f32 %v2885, 0.5
    %v2887 = vadd.f32 %v2886, 0.5
    %v2888 = vmul.f32 %v2882, %v2735
    %v2889 = vmul.f32 %v2878, %v2883
    %v2890 = vadd.f32 %v2888, %v2889
    %v2891 = vtanh.pop %v2890
    %v2892 = vmul.f32 %v2887, %v2891
    %v2893 = vpack.c.bf16 %v2892, %v2892
    %s2894 = scalar_lea.vmem [#allocation11], 8
    %2895 = vst [vmem:[%s2894] sm:$0xf] %v2893
    %v2896 = vld [vmem:[%s1281] sm:$0xff]
    %2897 = vmatpush.bf16.msra.mxu0 %v2219
    %2898 = vmatpush.bf16.msra.mxu0 %v2214
    %2899 = vmatpush.bf16.msra.mxu0 %v2209
    %2900 = vmatpush.bf16.msra.mxu0 %v2204
    %2901 = vmatpush.bf16.msra.mxu0 %v2199
    %2902 = vmatpush.bf16.msra.mxu0 %v2194
    %2903 = vmatpush.bf16.msra.mxu0 %v2189
    %2904 = vmatpush.bf16.msra.mxu0 %v2184
    %2905 = vmatmul.bf16.gmra.mxu0 %v2893
    %v2906 = vpop.f32.mrf.mxu0
    %v2907 = vadd.f32 0.0, %v2906
    %v2908 = vpop.f32.mrf.mxu0
    %2909 = vdwg.mxu0
    %2910 = vmatpush.bf16.msra.mxu0 %v2220
    %2911 = vmatpush.bf16.msra.mxu0 %v2215
    %2912 = vmatpush.bf16.msra.mxu0 %v2210
    %2913 = vmatpush.bf16.msra.mxu0 %v2205
    %2914 = vmatpush.bf16.msra.mxu0 %v2200
    %2915 = vmatpush.bf16.msra.mxu0 %v2195
    %2916 = vmatpush.bf16.msra.mxu0 %v2190
    %2917 = vmatpush.bf16.msra.mxu0 %v2185
    %2918 = vmatmul.bf16.gmra.mxu0 %v2893
    %v2919 = vpop.f32.mrf.mxu0
    %v2920 = vadd.f32 0.0, %v2919
    %v2921 = vpop.f32.mrf.mxu0
    %2922 = vdwg.mxu0
    %2923 = vmatpush.bf16.msra.mxu0 %v2221
    %2924 = vmatpush.bf16.msra.mxu0 %v2216
    %2925 = vmatpush.bf16.msra.mxu0 %v2211
    %2926 = vmatpush.bf16.msra.mxu0 %v2206
    %2927 = vmatpush.bf16.msra.mxu0 %v2201
    %2928 = vmatpush.bf16.msra.mxu0 %v2196
    %2929 = vmatpush.bf16.msra.mxu0 %v2191
    %2930 = vmatpush.bf16.msra.mxu0 %v2186
    %2931 = vmatmul.bf16.gmra.mxu0 %v2893
    %v2932 = vpop.f32.mrf.mxu0
    %v2933 = vadd.f32 0.0, %v2932
    %v2934 = vpop.f32.mrf.mxu0
    %2935 = vdwg.mxu0
    %2936 = vmatpush.bf16.msra.mxu0 %v2222
    %2937 = vmatpush.bf16.msra.mxu0 %v2217
    %2938 = vmatpush.bf16.msra.mxu0 %v2212
    %2939 = vmatpush.bf16.msra.mxu0 %v2207
    %2940 = vmatpush.bf16.msra.mxu0 %v2202
    %2941 = vmatpush.bf16.msra.mxu0 %v2197
    %2942 = vmatpush.bf16.msra.mxu0 %v2192
    %2943 = vmatpush.bf16.msra.mxu0 %v2187
    %2944 = vmatmul.bf16.gmra.mxu0 %v2893
    %v2945 = vpop.f32.mrf.mxu0
    %v2946 = vadd.f32 0.0, %v2945
    %v2947 = vpop.f32.mrf.mxu0
    %2948 = vdwg.mxu0
    %2949 = vmatpush.bf16.msra.mxu0 %v2223
    %2950 = vmatpush.bf16.msra.mxu0 %v2218
    %2951 = vmatpush.bf16.msra.mxu0 %v2213
    %2952 = vmatpush.bf16.msra.mxu0 %v2208
    %2953 = vmatpush.bf16.msra.mxu0 %v2203
    %2954 = vmatpush.bf16.msra.mxu0 %v2198
    %2955 = vmatpush.bf16.msra.mxu0 %v2193
    %2956 = vmatpush.bf16.msra.mxu0 %v2188
    %2957 = vmatmul.bf16.gmra.mxu0 %v2893
    %v2958 = vpop.f32.mrf.mxu0
    %v2959 = vadd.f32 0.0, %v2958
    %v2960 = vpop.f32.mrf.mxu0
    %2961 = vdwg.mxu0
    %v2962 = vld [vmem:[%s1194] sm:$0xff]
    %v2963 = vadd.f32 %v2907, %v2962
    %v2964 = vmul.f32 %v2963, 0.5
    %v2965 = vtanh.pop %v2964
    %v2966 = vmul.f32 %v2965, 0.5
    %v2967 = vadd.f32 %v2966, 0.5
    %v2968 = vmul.f32 %v2967, %v2896
    %v2969 = vpack.c.bf16 %v2968, %v2968
    %2970 = vmatpush.bf16.msra.mxu0 %v2461
    %2971 = vmatpush.bf16.msra.mxu0 %v2457
    %2972 = vmatpush.bf16.msra.mxu0 %v2453
    %2973 = vmatpush.bf16.msra.mxu0 %v2449
    %2974 = vmatpush.bf16.msra.mxu0 %v2445
    %2975 = vmatpush.bf16.msra.mxu0 %v2441
    %2976 = vmatpush.bf16.msra.mxu0 %v2437
    %2977 = vmatpush.bf16.msra.mxu0 %v2433
    %2978 = vmatmul.bf16.gmra.mxu0 %v2969
    %v2979 = vpop.f32.mrf.mxu0
    %v2980 = vadd.f32 0.0, %v2979
    %v2981 = vpop.f32.mrf.mxu0
    %2982 = vdwg.mxu0
    %2983 = vmatpush.bf16.msra.mxu0 %v2462
    %2984 = vmatpush.bf16.msra.mxu0 %v2458
    %2985 = vmatpush.bf16.msra.mxu0 %v2454
    %2986 = vmatpush.bf16.msra.mxu0 %v2450
    %2987 = vmatpush.bf16.msra.mxu0 %v2446
    %2988 = vmatpush.bf16.msra.mxu0 %v2442
    %2989 = vmatpush.bf16.msra.mxu0 %v2438
    %2990 = vmatpush.bf16.msra.mxu0 %v2434
    %2991 = vmatmul.bf16.gmra.mxu0 %v2969
    %v2992 = vpop.f32.mrf.mxu0
    %v2993 = vadd.f32 0.0, %v2992
    %v2994 = vpop.f32.mrf.mxu0
    %2995 = vdwg.mxu0
    %2996 = vmatpush.bf16.msra.mxu0 %v2463
    %2997 = vmatpush.bf16.msra.mxu0 %v2459
    %2998 = vmatpush.bf16.msra.mxu0 %v2455
    %2999 = vmatpush.bf16.msra.mxu0 %v2451
    %3000 = vmatpush.bf16.msra.mxu0 %v2447
    %3001 = vmatpush.bf16.msra.mxu0 %v2443
    %3002 = vmatpush.bf16.msra.mxu0 %v2439
    %3003 = vmatpush.bf16.msra.mxu0 %v2435
    %3004 = vmatmul.bf16.gmra.mxu0 %v2969
    %v3005 = vpop.f32.mrf.mxu0
    %v3006 = vadd.f32 0.0, %v3005
    %v3007 = vpop.f32.mrf.mxu0
    %3008 = vdwg.mxu0
    %3009 = vmatpush.bf16.msra.mxu0 %v2464
    %3010 = vmatpush.bf16.msra.mxu0 %v2460
    %3011 = vmatpush.bf16.msra.mxu0 %v2456
    %3012 = vmatpush.bf16.msra.mxu0 %v2452
    %3013 = vmatpush.bf16.msra.mxu0 %v2448
    %3014 = vmatpush.bf16.msra.mxu0 %v2444
    %3015 = vmatpush.bf16.msra.mxu0 %v2440
    %3016 = vmatpush.bf16.msra.mxu0 %v2436
    %3017 = vmatmul.bf16.gmra.mxu0 %v2969
    %v3018 = vpop.f32.mrf.mxu0
    %v3019 = vadd.f32 0.0, %v3018
    %v3020 = vpop.f32.mrf.mxu0
    %3021 = vdwg.mxu0
    %v3022 = vadd.f32 %v2920, %v2980
    %v3023 = vadd.f32 %v2933, %v2993
    %v3024 = vadd.f32 %v2946, %v3006
    %v3025 = vadd.f32 %v2959, %v3019
    %v3026 = vadd.f32 %v3022, %v2554
    %v3027 = vadd.f32 %v3023, %v2555
    %v3028 = vadd.f32 %v3024, %v2556
    %v3029 = vadd.f32 %v3025, %v2557
    %v3030 = vmul.f32 %v3026, 0.5
    %v3031 = vtanh.pop %v3030
    %v3032 = vmul.f32 %v3031, 0.5
    %v3033 = vadd.f32 %v3032, 0.5
    %v3034 = vmul.f32 %v3027, 0.5
    %v3035 = vtanh.pop %v3034
    %v3036 = vmul.f32 %v3035, 0.5
    %v3037 = vadd.f32 %v3036, 0.5
    %v3038 = vtanh.pop %v3028
    %v3039 = vmul.f32 %v3029, 0.5
    %v3040 = vtanh.pop %v3039
    %v3041 = vmul.f32 %v3040, 0.5
    %v3042 = vadd.f32 %v3041, 0.5
    %v3043 = vmul.f32 %v3037, %v2890
    %v3044 = vmul.f32 %v3033, %v3038
    %v3045 = vadd.f32 %v3043, %v3044
    %v3046 = vtanh.pop %v3045
    %v3047 = vmul.f32 %v3042, %v3046
    %v3048 = vpack.c.bf16 %v3047, %v3047
    %s3049 = scalar_lea.vmem [#allocation11], 12
    %3050 = vst [vmem:[%s3049] sm:$0xf] %v3048
    %v3051 = vld [vmem:[%s1439] sm:$0xff]
    %3052 = vmatpush.bf16.msra.mxu0 %v2219
    %3053 = vmatpush.bf16.msra.mxu0 %v2214
    %3054 = vmatpush.bf16.msra.mxu0 %v2209
    %3055 = vmatpush.bf16.msra.mxu0 %v2204
    %3056 = vmatpush.bf16.msra.mxu0 %v2199
    %3057 = vmatpush.bf16.msra.mxu0 %v2194
    %3058 = vmatpush.bf16.msra.mxu0 %v2189
    %3059 = vmatpush.bf16.msra.mxu0 %v2184
    %3060 = vmatmul.bf16.gmra.mxu0 %v3048
    %v3061 = vpop.f32.mrf.mxu0
    %v3062 = vadd.f32 0.0, %v3061
    %v3063 = vpop.f32.mrf.mxu0
    %3064 = vdwg.mxu0
    %3065 = vmatpush.bf16.msra.mxu0 %v2220
    %3066 = vmatpush.bf16.msra.mxu0 %v2215
    %3067 = vmatpush.bf16.msra.mxu0 %v2210
    %3068 = vmatpush.bf16.msra.mxu0 %v2205
    %3069 = vmatpush.bf16.msra.mxu0 %v2200
    %3070 = vmatpush.bf16.msra.mxu0 %v2195
    %3071 = vmatpush.bf16.msra.mxu0 %v2190
    %3072 = vmatpush.bf16.msra.mxu0 %v2185
    %3073 = vmatmul.bf16.gmra.mxu0 %v3048
    %v3074 = vpop.f32.mrf.mxu0
    %v3075 = vadd.f32 0.0, %v3074
    %v3076 = vpop.f32.mrf.mxu0
    %3077 = vdwg.mxu0
    %3078 = vmatpush.bf16.msra.mxu0 %v2221
    %3079 = vmatpush.bf16.msra.mxu0 %v2216
    %3080 = vmatpush.bf16.msra.mxu0 %v2211
    %3081 = vmatpush.bf16.msra.mxu0 %v2206
    %3082 = vmatpush.bf16.msra.mxu0 %v2201
    %3083 = vmatpush.bf16.msra.mxu0 %v2196
    %3084 = vmatpush.bf16.msra.mxu0 %v2191
    %3085 = vmatpush.bf16.msra.mxu0 %v2186
    %3086 = vmatmul.bf16.gmra.mxu0 %v3048
    %v3087 = vpop.f32.mrf.mxu0
    %v3088 = vadd.f32 0.0, %v3087
    %v3089 = vpop.f32.mrf.mxu0
    %3090 = vdwg.mxu0
    %3091 = vmatpush.bf16.msra.mxu0 %v2222
    %3092 = vmatpush.bf16.msra.mxu0 %v2217
    %3093 = vmatpush.bf16.msra.mxu0 %v2212
    %3094 = vmatpush.bf16.msra.mxu0 %v2207
    %3095 = vmatpush.bf16.msra.mxu0 %v2202
    %3096 = vmatpush.bf16.msra.mxu0 %v2197
    %3097 = vmatpush.bf16.msra.mxu0 %v2192
    %3098 = vmatpush.bf16.msra.mxu0 %v2187
    %3099 = vmatmul.bf16.gmra.mxu0 %v3048
    %v3100 = vpop.f32.mrf.mxu0
    %v3101 = vadd.f32 0.0, %v3100
    %v3102 = vpop.f32.mrf.mxu0
    %3103 = vdwg.mxu0
    %3104 = vmatpush.bf16.msra.mxu0 %v2223
    %3105 = vmatpush.bf16.msra.mxu0 %v2218
    %3106 = vmatpush.bf16.msra.mxu0 %v2213
    %3107 = vmatpush.bf16.msra.mxu0 %v2208
    %3108 = vmatpush.bf16.msra.mxu0 %v2203
    %3109 = vmatpush.bf16.msra.mxu0 %v2198
    %3110 = vmatpush.bf16.msra.mxu0 %v2193
    %3111 = vmatpush.bf16.msra.mxu0 %v2188
    %3112 = vmatmul.bf16.gmra.mxu0 %v3048
    %v3113 = vpop.f32.mrf.mxu0
    %v3114 = vadd.f32 0.0, %v3113
    %v3115 = vpop.f32.mrf.mxu0
    %3116 = vdwg.mxu0
    %v3117 = vld [vmem:[%s1352] sm:$0xff]
    %v3118 = vadd.f32 %v3062, %v3117
    %v3119 = vmul.f32 %v3118, 0.5
    %v3120 = vtanh.pop %v3119
    %v3121 = vmul.f32 %v3120, 0.5
    %v3122 = vadd.f32 %v3121, 0.5
    %v3123 = vmul.f32 %v3122, %v3051
    %v3124 = vpack.c.bf16 %v3123, %v3123
    %3125 = vmatpush.bf16.msra.mxu0 %v2461
    %3126 = vmatpush.bf16.msra.mxu0 %v2457
    %3127 = vmatpush.bf16.msra.mxu0 %v2453
    %3128 = vmatpush.bf16.msra.mxu0 %v2449
    %3129 = vmatpush.bf16.msra.mxu0 %v2445
    %3130 = vmatpush.bf16.msra.mxu0 %v2441
    %3131 = vmatpush.bf16.msra.mxu0 %v2437
    %3132 = vmatpush.bf16.msra.mxu0 %v2433
    %3133 = vmatmul.bf16.gmra.mxu0 %v3124
    %v3134 = vpop.f32.mrf.mxu0
    %v3135 = vadd.f32 0.0, %v3134
    %v3136 = vpop.f32.mrf.mxu0
    %3137 = vdwg.mxu0
    %3138 = vmatpush.bf16.msra.mxu0 %v2462
    %3139 = vmatpush.bf16.msra.mxu0 %v2458
    %3140 = vmatpush.bf16.msra.mxu0 %v2454
    %3141 = vmatpush.bf16.msra.mxu0 %v2450
    %3142 = vmatpush.bf16.msra.mxu0 %v2446
    %3143 = vmatpush.bf16.msra.mxu0 %v2442
    %3144 = vmatpush.bf16.msra.mxu0 %v2438
    %3145 = vmatpush.bf16.msra.mxu0 %v2434
    %3146 = vmatmul.bf16.gmra.mxu0 %v3124
    %v3147 = vpop.f32.mrf.mxu0
    %v3148 = vadd.f32 0.0, %v3147
    %v3149 = vpop.f32.mrf.mxu0
    %3150 = vdwg.mxu0
    %3151 = vmatpush.bf16.msra.mxu0 %v2463
    %3152 = vmatpush.bf16.msra.mxu0 %v2459
    %3153 = vmatpush.bf16.msra.mxu0 %v2455
    %3154 = vmatpush.bf16.msra.mxu0 %v2451
    %3155 = vmatpush.bf16.msra.mxu0 %v2447
    %3156 = vmatpush.bf16.msra.mxu0 %v2443
    %3157 = vmatpush.bf16.msra.mxu0 %v2439
    %3158 = vmatpush.bf16.msra.mxu0 %v2435
    %3159 = vmatmul.bf16.gmra.mxu0 %v3124
    %v3160 = vpop.f32.mrf.mxu0
    %v3161 = vadd.f32 0.0, %v3160
    %v3162 = vpop.f32.mrf.mxu0
    %3163 = vdwg.mxu0
    %3164 = vmatpush.bf16.msra.mxu0 %v2464
    %3165 = vmatpush.bf16.msra.mxu0 %v2460
    %3166 = vmatpush.bf16.msra.mxu0 %v2456
    %3167 = vmatpush.bf16.msra.mxu0 %v2452
    %3168 = vmatpush.bf16.msra.mxu0 %v2448
    %3169 = vmatpush.bf16.msra.mxu0 %v2444
    %3170 = vmatpush.bf16.msra.mxu0 %v2440
    %3171 = vmatpush.bf16.msra.mxu0 %v2436
    %3172 = vmatmul.bf16.gmra.mxu0 %v3124
    %v3173 = vpop.f32.mrf.mxu0
    %v3174 = vadd.f32 0.0, %v3173
    %v3175 = vpop.f32.mrf.mxu0
    %3176 = vdwg.mxu0
    %v3177 = vadd.f32 %v3075, %v3135
    %v3178 = vadd.f32 %v3088, %v3148
    %v3179 = vadd.f32 %v3101, %v3161
    %v3180 = vadd.f32 %v3114, %v3174
    %v3181 = vadd.f32 %v3177, %v2554
    %v3182 = vadd.f32 %v3178, %v2555
    %v3183 = vadd.f32 %v3179, %v2556
    %v3184 = vadd.f32 %v3180, %v2557
    %v3185 = vmul.f32 %v3181, 0.5
    %v3186 = vtanh.pop %v3185
    %v3187 = vmul.f32 %v3186, 0.5
    %v3188 = vadd.f32 %v3187, 0.5
    %v3189 = vmul.f32 %v3182, 0.5
    %v3190 = vtanh.pop %v3189
    %v3191 = vmul.f32 %v3190, 0.5
    %v3192 = vadd.f32 %v3191, 0.5
    %v3193 = vtanh.pop %v3183
    %v3194 = vmul.f32 %v3184, 0.5
    %v3195 = vtanh.pop %v3194
    %v3196 = vmul.f32 %v3195, 0.5
    %v3197 = vadd.f32 %v3196, 0.5
    %v3198 = vmul.f32 %v3192, %v3045
    %v3199 = vmul.f32 %v3188, %v3193
    %v3200 = vadd.f32 %v3198, %v3199
    %v3201 = vtanh.pop %v3200
    %v3202 = vmul.f32 %v3197, %v3201
    %v3203 = vpack.c.bf16 %v3202, %v3202
    %s3204 = scalar_lea.vmem [#allocation11], 16
    %3205 = vst [vmem:[%s3204] sm:$0xf] %v3203
    %v3206 = vld [vmem:[%s1597] sm:$0xff]
    %3207 = vmatpush.bf16.msra.mxu0 %v2219
    %3208 = vmatpush.bf16.msra.mxu0 %v2214
    %3209 = vmatpush.bf16.msra.mxu0 %v2209
    %3210 = vmatpush.bf16.msra.mxu0 %v2204
    %3211 = vmatpush.bf16.msra.mxu0 %v2199
    %3212 = vmatpush.bf16.msra.mxu0 %v2194
    %3213 = vmatpush.bf16.msra.mxu0 %v2189
    %3214 = vmatpush.bf16.msra.mxu0 %v2184
    %3215 = vmatmul.bf16.gmra.mxu0 %v3203
    %v3216 = vpop.f32.mrf.mxu0
    %v3217 = vadd.f32 0.0, %v3216
    %v3218 = vpop.f32.mrf.mxu0
    %3219 = vdwg.mxu0
    %3220 = vmatpush.bf16.msra.mxu0 %v2220
    %3221 = vmatpush.bf16.msra.mxu0 %v2215
    %3222 = vmatpush.bf16.msra.mxu0 %v2210
    %3223 = vmatpush.bf16.msra.mxu0 %v2205
    %3224 = vmatpush.bf16.msra.mxu0 %v2200
    %3225 = vmatpush.bf16.msra.mxu0 %v2195
    %3226 = vmatpush.bf16.msra.mxu0 %v2190
    %3227 = vmatpush.bf16.msra.mxu0 %v2185
    %3228 = vmatmul.bf16.gmra.mxu0 %v3203
    %v3229 = vpop.f32.mrf.mxu0
    %v3230 = vadd.f32 0.0, %v3229
    %v3231 = vpop.f32.mrf.mxu0
    %3232 = vdwg.mxu0
    %3233 = vmatpush.bf16.msra.mxu0 %v2221
    %3234 = vmatpush.bf16.msra.mxu0 %v2216
    %3235 = vmatpush.bf16.msra.mxu0 %v2211
    %3236 = vmatpush.bf16.msra.mxu0 %v2206
    %3237 = vmatpush.bf16.msra.mxu0 %v2201
    %3238 = vmatpush.bf16.msra.mxu0 %v2196
    %3239 = vmatpush.bf16.msra.mxu0 %v2191
    %3240 = vmatpush.bf16.msra.mxu0 %v2186
    %3241 = vmatmul.bf16.gmra.mxu0 %v3203
    %v3242 = vpop.f32.mrf.mxu0
    %v3243 = vadd.f32 0.0, %v3242
    %v3244 = vpop.f32.mrf.mxu0
    %3245 = vdwg.mxu0
    %3246 = vmatpush.bf16.msra.mxu0 %v2222
    %3247 = vmatpush.bf16.msra.mxu0 %v2217
    %3248 = vmatpush.bf16.msra.mxu0 %v2212
    %3249 = vmatpush.bf16.msra.mxu0 %v2207
    %3250 = vmatpush.bf16.msra.mxu0 %v2202
    %3251 = vmatpush.bf16.msra.mxu0 %v2197
    %3252 = vmatpush.bf16.msra.mxu0 %v2192
    %3253 = vmatpush.bf16.msra.mxu0 %v2187
    %3254 = vmatmul.bf16.gmra.mxu0 %v3203
    %v3255 = vpop.f32.mrf.mxu0
    %v3256 = vadd.f32 0.0, %v3255
    %v3257 = vpop.f32.mrf.mxu0
    %3258 = vdwg.mxu0
    %3259 = vmatpush.bf16.msra.mxu0 %v2223
    %3260 = vmatpush.bf16.msra.mxu0 %v2218
    %3261 = vmatpush.bf16.msra.mxu0 %v2213
    %3262 = vmatpush.bf16.msra.mxu0 %v2208
    %3263 = vmatpush.bf16.msra.mxu0 %v2203
    %3264 = vmatpush.bf16.msra.mxu0 %v2198
    %3265 = vmatpush.bf16.msra.mxu0 %v2193
    %3266 = vmatpush.bf16.msra.mxu0 %v2188
    %3267 = vmatmul.bf16.gmra.mxu0 %v3203
    %v3268 = vpop.f32.mrf.mxu0
    %v3269 = vadd.f32 0.0, %v3268
    %v3270 = vpop.f32.mrf.mxu0
    %3271 = vdwg.mxu0
    %v3272 = vld [vmem:[%s1510] sm:$0xff]
    %v3273 = vadd.f32 %v3217, %v3272
    %v3274 = vmul.f32 %v3273, 0.5
    %v3275 = vtanh.pop %v3274
    %v3276 = vmul.f32 %v3275, 0.5
    %v3277 = vadd.f32 %v3276, 0.5
    %v3278 = vmul.f32 %v3277, %v3206
    %v3279 = vpack.c.bf16 %v3278, %v3278
    %3280 = vmatpush.bf16.msra.mxu0 %v2461
    %3281 = vmatpush.bf16.msra.mxu0 %v2457
    %3282 = vmatpush.bf16.msra.mxu0 %v2453
    %3283 = vmatpush.bf16.msra.mxu0 %v2449
    %3284 = vmatpush.bf16.msra.mxu0 %v2445
    %3285 = vmatpush.bf16.msra.mxu0 %v2441
    %3286 = vmatpush.bf16.msra.mxu0 %v2437
    %3287 = vmatpush.bf16.msra.mxu0 %v2433
    %3288 = vmatmul.bf16.gmra.mxu0 %v3279
    %v3289 = vpop.f32.mrf.mxu0
    %v3290 = vadd.f32 0.0, %v3289
    %v3291 = vpop.f32.mrf.mxu0
    %3292 = vdwg.mxu0
    %3293 = vmatpush.bf16.msra.mxu0 %v2462
    %3294 = vmatpush.bf16.msra.mxu0 %v2458
    %3295 = vmatpush.bf16.msra.mxu0 %v2454
    %3296 = vmatpush.bf16.msra.mxu0 %v2450
    %3297 = vmatpush.bf16.msra.mxu0 %v2446
    %3298 = vmatpush.bf16.msra.mxu0 %v2442
    %3299 = vmatpush.bf16.msra.mxu0 %v2438
    %3300 = vmatpush.bf16.msra.mxu0 %v2434
    %3301 = vmatmul.bf16.gmra.mxu0 %v3279
    %v3302 = vpop.f32.mrf.mxu0
    %v3303 = vadd.f32 0.0, %v3302
    %v3304 = vpop.f32.mrf.mxu0
    %3305 = vdwg.mxu0
    %3306 = vmatpush.bf16.msra.mxu0 %v2463
    %3307 = vmatpush.bf16.msra.mxu0 %v2459
    %3308 = vmatpush.bf16.msra.mxu0 %v2455
    %3309 = vmatpush.bf16.msra.mxu0 %v2451
    %3310 = vmatpush.bf16.msra.mxu0 %v2447
    %3311 = vmatpush.bf16.msra.mxu0 %v2443
    %3312 = vmatpush.bf16.msra.mxu0 %v2439
    %3313 = vmatpush.bf16.msra.mxu0 %v2435
    %3314 = vmatmul.bf16.gmra.mxu0 %v3279
    %v3315 = vpop.f32.mrf.mxu0
    %v3316 = vadd.f32 0.0, %v3315
    %v3317 = vpop.f32.mrf.mxu0
    %3318 = vdwg.mxu0
    %3319 = vmatpush.bf16.msra.mxu0 %v2464
    %3320 = vmatpush.bf16.msra.mxu0 %v2460
    %3321 = vmatpush.bf16.msra.mxu0 %v2456
    %3322 = vmatpush.bf16.msra.mxu0 %v2452
    %3323 = vmatpush.bf16.msra.mxu0 %v2448
    %3324 = vmatpush.bf16.msra.mxu0 %v2444
    %3325 = vmatpush.bf16.msra.mxu0 %v2440
    %3326 = vmatpush.bf16.msra.mxu0 %v2436
    %3327 = vmatmul.bf16.gmra.mxu0 %v3279
    %v3328 = vpop.f32.mrf.mxu0
    %v3329 = vadd.f32 0.0, %v3328
    %v3330 = vpop.f32.mrf.mxu0
    %3331 = vdwg.mxu0
    %v3332 = vadd.f32 %v3230, %v3290
    %v3333 = vadd.f32 %v3243, %v3303
    %v3334 = vadd.f32 %v3256, %v3316
    %v3335 = vadd.f32 %v3269, %v3329
    %v3336 = vadd.f32 %v3332, %v2554
    %v3337 = vadd.f32 %v3333, %v2555
    %v3338 = vadd.f32 %v3334, %v2556
    %v3339 = vadd.f32 %v3335, %v2557
    %v3340 = vmul.f32 %v3336, 0.5
    %v3341 = vtanh.pop %v3340
    %v3342 = vmul.f32 %v3341, 0.5
    %v3343 = vadd.f32 %v3342, 0.5
    %v3344 = vmul.f32 %v3337, 0.5
    %v3345 = vtanh.pop %v3344
    %v3346 = vmul.f32 %v3345, 0.5
    %v3347 = vadd.f32 %v3346, 0.5
    %v3348 = vtanh.pop %v3338
    %v3349 = vmul.f32 %v3339, 0.5
    %v3350 = vtanh.pop %v3349
    %v3351 = vmul.f32 %v3350, 0.5
    %v3352 = vadd.f32 %v3351, 0.5
    %v3353 = vmul.f32 %v3347, %v3200
    %v3354 = vmul.f32 %v3343, %v3348
    %v3355 = vadd.f32 %v3353, %v3354
    %v3356 = vtanh.pop %v3355
    %v3357 = vmul.f32 %v3352, %v3356
    %v3358 = vpack.c.bf16 %v3357, %v3357
    %s3359 = scalar_lea.vmem [#allocation11], 20
    %3360 = vst [vmem:[%s3359] sm:$0xf] %v3358
    %v3361 = vld [vmem:[%s1755] sm:$0xff]
    %3362 = vmatpush.bf16.msra.mxu0 %v2219
    %3363 = vmatpush.bf16.msra.mxu0 %v2214
    %3364 = vmatpush.bf16.msra.mxu0 %v2209
    %3365 = vmatpush.bf16.msra.mxu0 %v2204
    %3366 = vmatpush.bf16.msra.mxu0 %v2199
    %3367 = vmatpush.bf16.msra.mxu0 %v2194
    %3368 = vmatpush.bf16.msra.mxu0 %v2189
    %3369 = vmatpush.bf16.msra.mxu0 %v2184
    %3370 = vmatmul.bf16.gmra.mxu0 %v3358
    %v3371 = vpop.f32.mrf.mxu0
    %v3372 = vadd.f32 0.0, %v3371
    %v3373 = vpop.f32.mrf.mxu0
    %3374 = vdwg.mxu0
    %3375 = vmatpush.bf16.msra.mxu0 %v2220
    %3376 = vmatpush.bf16.msra.mxu0 %v2215
    %3377 = vmatpush.bf16.msra.mxu0 %v2210
    %3378 = vmatpush.bf16.msra.mxu0 %v2205
    %3379 = vmatpush.bf16.msra.mxu0 %v2200
    %3380 = vmatpush.bf16.msra.mxu0 %v2195
    %3381 = vmatpush.bf16.msra.mxu0 %v2190
    %3382 = vmatpush.bf16.msra.mxu0 %v2185
    %3383 = vmatmul.bf16.gmra.mxu0 %v3358
    %v3384 = vpop.f32.mrf.mxu0
    %v3385 = vadd.f32 0.0, %v3384
    %v3386 = vpop.f32.mrf.mxu0
    %3387 = vdwg.mxu0
    %3388 = vmatpush.bf16.msra.mxu0 %v2221
    %3389 = vmatpush.bf16.msra.mxu0 %v2216
    %3390 = vmatpush.bf16.msra.mxu0 %v2211
    %3391 = vmatpush.bf16.msra.mxu0 %v2206
    %3392 = vmatpush.bf16.msra.mxu0 %v2201
    %3393 = vmatpush.bf16.msra.mxu0 %v2196
    %3394 = vmatpush.bf16.msra.mxu0 %v2191
    %3395 = vmatpush.bf16.msra.mxu0 %v2186
    %3396 = vmatmul.bf16.gmra.mxu0 %v3358
    %v3397 = vpop.f32.mrf.mxu0
    %v3398 = vadd.f32 0.0, %v3397
    %v3399 = vpop.f32.mrf.mxu0
    %3400 = vdwg.mxu0
    %3401 = vmatpush.bf16.msra.mxu0 %v2222
    %3402 = vmatpush.bf16.msra.mxu0 %v2217
    %3403 = vmatpush.bf16.msra.mxu0 %v2212
    %3404 = vmatpush.bf16.msra.mxu0 %v2207
    %3405 = vmatpush.bf16.msra.mxu0 %v2202
    %3406 = vmatpush.bf16.msra.mxu0 %v2197
    %3407 = vmatpush.bf16.msra.mxu0 %v2192
    %3408 = vmatpush.bf16.msra.mxu0 %v2187
    %3409 = vmatmul.bf16.gmra.mxu0 %v3358
    %v3410 = vpop.f32.mrf.mxu0
    %v3411 = vadd.f32 0.0, %v3410
    %v3412 = vpop.f32.mrf.mxu0
    %3413 = vdwg.mxu0
    %3414 = vmatpush.bf16.msra.mxu0 %v2223
    %3415 = vmatpush.bf16.msra.mxu0 %v2218
    %3416 = vmatpush.bf16.msra.mxu0 %v2213
    %3417 = vmatpush.bf16.msra.mxu0 %v2208
    %3418 = vmatpush.bf16.msra.mxu0 %v2203
    %3419 = vmatpush.bf16.msra.mxu0 %v2198
    %3420 = vmatpush.bf16.msra.mxu0 %v2193
    %3421 = vmatpush.bf16.msra.mxu0 %v2188
    %3422 = vmatmul.bf16.gmra.mxu0 %v3358
    %v3423 = vpop.f32.mrf.mxu0
    %v3424 = vadd.f32 0.0, %v3423
    %v3425 = vpop.f32.mrf.mxu0
    %3426 = vdwg.mxu0
    %v3427 = vld [vmem:[%s1668] sm:$0xff]
    %v3428 = vadd.f32 %v3372, %v3427
    %v3429 = vmul.f32 %v3428, 0.5
    %v3430 = vtanh.pop %v3429
    %v3431 = vmul.f32 %v3430, 0.5
    %v3432 = vadd.f32 %v3431, 0.5
    %v3433 = vmul.f32 %v3432, %v3361
    %v3434 = vpack.c.bf16 %v3433, %v3433
    %3435 = vmatpush.bf16.msra.mxu0 %v2461
    %3436 = vmatpush.bf16.msra.mxu0 %v2457
    %3437 = vmatpush.bf16.msra.mxu0 %v2453
    %3438 = vmatpush.bf16.msra.mxu0 %v2449
    %3439 = vmatpush.bf16.msra.mxu0 %v2445
    %3440 = vmatpush.bf16.msra.mxu0 %v2441
    %3441 = vmatpush.bf16.msra.mxu0 %v2437
    %3442 = vmatpush.bf16.msra.mxu0 %v2433
    %3443 = vmatmul.bf16.gmra.mxu0 %v3434
    %v3444 = vpop.f32.mrf.mxu0
    %v3445 = vadd.f32 0.0, %v3444
    %v3446 = vpop.f32.mrf.mxu0
    %3447 = vdwg.mxu0
    %3448 = vmatpush.bf16.msra.mxu0 %v2462
    %3449 = vmatpush.bf16.msra.mxu0 %v2458
    %3450 = vmatpush.bf16.msra.mxu0 %v2454
    %3451 = vmatpush.bf16.msra.mxu0 %v2450
    %3452 = vmatpush.bf16.msra.mxu0 %v2446
    %3453 = vmatpush.bf16.msra.mxu0 %v2442
    %3454 = vmatpush.bf16.msra.mxu0 %v2438
    %3455 = vmatpush.bf16.msra.mxu0 %v2434
    %3456 = vmatmul.bf16.gmra.mxu0 %v3434
    %v3457 = vpop.f32.mrf.mxu0
    %v3458 = vadd.f32 0.0, %v3457
    %v3459 = vpop.f32.mrf.mxu0
    %3460 = vdwg.mxu0
    %3461 = vmatpush.bf16.msra.mxu0 %v2463
    %3462 = vmatpush.bf16.msra.mxu0 %v2459
    %3463 = vmatpush.bf16.msra.mxu0 %v2455
    %3464 = vmatpush.bf16.msra.mxu0 %v2451
    %3465 = vmatpush.bf16.msra.mxu0 %v2447
    %3466 = vmatpush.bf16.msra.mxu0 %v2443
    %3467 = vmatpush.bf16.msra.mxu0 %v2439
    %3468 = vmatpush.bf16.msra.mxu0 %v2435
    %3469 = vmatmul.bf16.gmra.mxu0 %v3434
    %v3470 = vpop.f32.mrf.mxu0
    %v3471 = vadd.f32 0.0, %v3470
    %v3472 = vpop.f32.mrf.mxu0
    %3473 = vdwg.mxu0
    %3474 = vmatpush.bf16.msra.mxu0 %v2464
    %3475 = vmatpush.bf16.msra.mxu0 %v2460
    %3476 = vmatpush.bf16.msra.mxu0 %v2456
    %3477 = vmatpush.bf16.msra.mxu0 %v2452
    %3478 = vmatpush.bf16.msra.mxu0 %v2448
    %3479 = vmatpush.bf16.msra.mxu0 %v2444
    %3480 = vmatpush.bf16.msra.mxu0 %v2440
    %3481 = vmatpush.bf16.msra.mxu0 %v2436
    %3482 = vmatmul.bf16.gmra.mxu0 %v3434
    %v3483 = vpop.f32.mrf.mxu0
    %v3484 = vadd.f32 0.0, %v3483
    %v3485 = vpop.f32.mrf.mxu0
    %3486 = vdwg.mxu0
    %v3487 = vadd.f32 %v3385, %v3445
    %v3488 = vadd.f32 %v3398, %v3458
    %v3489 = vadd.f32 %v3411, %v3471
    %v3490 = vadd.f32 %v3424, %v3484
    %v3491 = vadd.f32 %v3487, %v2554
    %v3492 = vadd.f32 %v3488, %v2555
    %v3493 = vadd.f32 %v3489, %v2556
    %v3494 = vadd.f32 %v3490, %v2557
    %v3495 = vmul.f32 %v3491, 0.5
    %v3496 = vtanh.pop %v3495
    %v3497 = vmul.f32 %v3496, 0.5
    %v3498 = vadd.f32 %v3497, 0.5
    %v3499 = vmul.f32 %v3492, 0.5
    %v3500 = vtanh.pop %v3499
    %v3501 = vmul.f32 %v3500, 0.5
    %v3502 = vadd.f32 %v3501, 0.5
    %v3503 = vtanh.pop %v3493
    %v3504 = vmul.f32 %v3494, 0.5
    %v3505 = vtanh.pop %v3504
    %v3506 = vmul.f32 %v3505, 0.5
    %v3507 = vadd.f32 %v3506, 0.5
    %v3508 = vmul.f32 %v3502, %v3355
    %v3509 = vmul.f32 %v3498, %v3503
    %v3510 = vadd.f32 %v3508, %v3509
    %v3511 = vtanh.pop %v3510
    %v3512 = vmul.f32 %v3507, %v3511
    %v3513 = vpack.c.bf16 %v3512, %v3512
    %s3514 = scalar_lea.vmem [#allocation11], 24
    %3515 = vst [vmem:[%s3514] sm:$0xf] %v3513
    %v3516 = vld [vmem:[%s1913] sm:$0xff]
    %3517 = vmatpush.bf16.msra.mxu0 %v2219
    %3518 = vmatpush.bf16.msra.mxu0 %v2214
    %3519 = vmatpush.bf16.msra.mxu0 %v2209
    %3520 = vmatpush.bf16.msra.mxu0 %v2204
    %3521 = vmatpush.bf16.msra.mxu0 %v2199
    %3522 = vmatpush.bf16.msra.mxu0 %v2194
    %3523 = vmatpush.bf16.msra.mxu0 %v2189
    %3524 = vmatpush.bf16.msra.mxu0 %v2184
    %3525 = vmatmul.bf16.gmra.mxu0 %v3513
    %v3526 = vpop.f32.mrf.mxu0
    %v3527 = vadd.f32 0.0, %v3526
    %v3528 = vpop.f32.mrf.mxu0
    %3529 = vdwg.mxu0
    %3530 = vmatpush.bf16.msra.mxu0 %v2220
    %3531 = vmatpush.bf16.msra.mxu0 %v2215
    %3532 = vmatpush.bf16.msra.mxu0 %v2210
    %3533 = vmatpush.bf16.msra.mxu0 %v2205
    %3534 = vmatpush.bf16.msra.mxu0 %v2200
    %3535 = vmatpush.bf16.msra.mxu0 %v2195
    %3536 = vmatpush.bf16.msra.mxu0 %v2190
    %3537 = vmatpush.bf16.msra.mxu0 %v2185
    %3538 = vmatmul.bf16.gmra.mxu0 %v3513
    %v3539 = vpop.f32.mrf.mxu0
    %v3540 = vadd.f32 0.0, %v3539
    %v3541 = vpop.f32.mrf.mxu0
    %3542 = vdwg.mxu0
    %3543 = vmatpush.bf16.msra.mxu0 %v2221
    %3544 = vmatpush.bf16.msra.mxu0 %v2216
    %3545 = vmatpush.bf16.msra.mxu0 %v2211
    %3546 = vmatpush.bf16.msra.mxu0 %v2206
    %3547 = vmatpush.bf16.msra.mxu0 %v2201
    %3548 = vmatpush.bf16.msra.mxu0 %v2196
    %3549 = vmatpush.bf16.msra.mxu0 %v2191
    %3550 = vmatpush.bf16.msra.mxu0 %v2186
    %3551 = vmatmul.bf16.gmra.mxu0 %v3513
    %v3552 = vpop.f32.mrf.mxu0
    %v3553 = vadd.f32 0.0, %v3552
    %v3554 = vpop.f32.mrf.mxu0
    %3555 = vdwg.mxu0
    %3556 = vmatpush.bf16.msra.mxu0 %v2222
    %3557 = vmatpush.bf16.msra.mxu0 %v2217
    %3558 = vmatpush.bf16.msra.mxu0 %v2212
    %3559 = vmatpush.bf16.msra.mxu0 %v2207
    %3560 = vmatpush.bf16.msra.mxu0 %v2202
    %3561 = vmatpush.bf16.msra.mxu0 %v2197
    %3562 = vmatpush.bf16.msra.mxu0 %v2192
    %3563 = vmatpush.bf16.msra.mxu0 %v2187
    %3564 = vmatmul.bf16.gmra.mxu0 %v3513
    %v3565 = vpop.f32.mrf.mxu0
    %v3566 = vadd.f32 0.0, %v3565
    %v3567 = vpop.f32.mrf.mxu0
    %3568 = vdwg.mxu0
    %3569 = vmatpush.bf16.msra.mxu0 %v2223
    %3570 = vmatpush.bf16.msra.mxu0 %v2218
    %3571 = vmatpush.bf16.msra.mxu0 %v2213
    %3572 = vmatpush.bf16.msra.mxu0 %v2208
    %3573 = vmatpush.bf16.msra.mxu0 %v2203
    %3574 = vmatpush.bf16.msra.mxu0 %v2198
    %3575 = vmatpush.bf16.msra.mxu0 %v2193
    %3576 = vmatpush.bf16.msra.mxu0 %v2188
    %3577 = vmatmul.bf16.gmra.mxu0 %v3513
    %v3578 = vpop.f32.mrf.mxu0
    %v3579 = vadd.f32 0.0, %v3578
    %v3580 = vpop.f32.mrf.mxu0
    %3581 = vdwg.mxu0
    %v3582 = vld [vmem:[%s1826] sm:$0xff]
    %v3583 = vadd.f32 %v3527, %v3582
    %v3584 = vmul.f32 %v3583, 0.5
    %v3585 = vtanh.pop %v3584
    %v3586 = vmul.f32 %v3585, 0.5
    %v3587 = vadd.f32 %v3586, 0.5
    %v3588 = vmul.f32 %v3587, %v3516
    %v3589 = vpack.c.bf16 %v3588, %v3588
    %3590 = vmatpush.bf16.msra.mxu0 %v2461
    %3591 = vmatpush.bf16.msra.mxu0 %v2457
    %3592 = vmatpush.bf16.msra.mxu0 %v2453
    %3593 = vmatpush.bf16.msra.mxu0 %v2449
    %3594 = vmatpush.bf16.msra.mxu0 %v2445
    %3595 = vmatpush.bf16.msra.mxu0 %v2441
    %3596 = vmatpush.bf16.msra.mxu0 %v2437
    %3597 = vmatpush.bf16.msra.mxu0 %v2433
    %3598 = vmatmul.bf16.gmra.mxu0 %v3589
    %v3599 = vpop.f32.mrf.mxu0
    %v3600 = vadd.f32 0.0, %v3599
    %v3601 = vpop.f32.mrf.mxu0
    %3602 = vdwg.mxu0
    %3603 = vmatpush.bf16.msra.mxu0 %v2462
    %3604 = vmatpush.bf16.msra.mxu0 %v2458
    %3605 = vmatpush.bf16.msra.mxu0 %v2454
    %3606 = vmatpush.bf16.msra.mxu0 %v2450
    %3607 = vmatpush.bf16.msra.mxu0 %v2446
    %3608 = vmatpush.bf16.msra.mxu0 %v2442
    %3609 = vmatpush.bf16.msra.mxu0 %v2438
    %3610 = vmatpush.bf16.msra.mxu0 %v2434
    %3611 = vmatmul.bf16.gmra.mxu0 %v3589
    %v3612 = vpop.f32.mrf.mxu0
    %v3613 = vadd.f32 0.0, %v3612
    %v3614 = vpop.f32.mrf.mxu0
    %3615 = vdwg.mxu0
    %3616 = vmatpush.bf16.msra.mxu0 %v2463
    %3617 = vmatpush.bf16.msra.mxu0 %v2459
    %3618 = vmatpush.bf16.msra.mxu0 %v2455
    %3619 = vmatpush.bf16.msra.mxu0 %v2451
    %3620 = vmatpush.bf16.msra.mxu0 %v2447
    %3621 = vmatpush.bf16.msra.mxu0 %v2443
    %3622 = vmatpush.bf16.msra.mxu0 %v2439
    %3623 = vmatpush.bf16.msra.mxu0 %v2435
    %3624 = vmatmul.bf16.gmra.mxu0 %v3589
    %v3625 = vpop.f32.mrf.mxu0
    %v3626 = vadd.f32 0.0, %v3625
    %v3627 = vpop.f32.mrf.mxu0
    %3628 = vdwg.mxu0
    %3629 = vmatpush.bf16.msra.mxu0 %v2464
    %3630 = vmatpush.bf16.msra.mxu0 %v2460
    %3631 = vmatpush.bf16.msra.mxu0 %v2456
    %3632 = vmatpush.bf16.msra.mxu0 %v2452
    %3633 = vmatpush.bf16.msra.mxu0 %v2448
    %3634 = vmatpush.bf16.msra.mxu0 %v2444
    %3635 = vmatpush.bf16.msra.mxu0 %v2440
    %3636 = vmatpush.bf16.msra.mxu0 %v2436
    %3637 = vmatmul.bf16.gmra.mxu0 %v3589
    %v3638 = vpop.f32.mrf.mxu0
    %v3639 = vadd.f32 0.0, %v3638
    %v3640 = vpop.f32.mrf.mxu0
    %3641 = vdwg.mxu0
    %v3642 = vadd.f32 %v3540, %v3600
    %v3643 = vadd.f32 %v3553, %v3613
    %v3644 = vadd.f32 %v3566, %v3626
    %v3645 = vadd.f32 %v3579, %v3639
    %v3646 = vadd.f32 %v3642, %v2554
    %v3647 = vadd.f32 %v3643, %v2555
    %v3648 = vadd.f32 %v3644, %v2556
    %v3649 = vadd.f32 %v3645, %v2557
    %v3650 = vmul.f32 %v3646, 0.5
    %v3651 = vtanh.pop %v3650
    %v3652 = vmul.f32 %v3651, 0.5
    %v3653 = vadd.f32 %v3652, 0.5
    %v3654 = vmul.f32 %v3647, 0.5
    %v3655 = vtanh.pop %v3654
    %v3656 = vmul.f32 %v3655, 0.5
    %v3657 = vadd.f32 %v3656, 0.5
    %v3658 = vtanh.pop %v3648
    %v3659 = vmul.f32 %v3649, 0.5
    %v3660 = vtanh.pop %v3659
    %v3661 = vmul.f32 %v3660, 0.5
    %v3662 = vadd.f32 %v3661, 0.5
    %v3663 = vmul.f32 %v3657, %v3510
    %v3664 = vmul.f32 %v3653, %v3658
    %v3665 = vadd.f32 %v3663, %v3664
    %v3666 = vtanh.pop %v3665
    %v3667 = vmul.f32 %v3662, %v3666
    %v3668 = vpack.c.bf16 %v3667, %v3667
    %s3669 = scalar_lea.vmem [#allocation11], 28
    %3670 = vst [vmem:[%s3669] sm:$0xf] %v3668
    %3671 = vst [vmem:[%s2050] sm:$0xff] %v3667
    %3672 = vst [vmem:[%s2052] sm:$0xff] %v3665
    // Predicated region
    $region42: #{tpu_custom_call.1} parent=1 // pred_check
      _
    $region43: #{tpu_custom_call.1} parent=1 // pred_check_branch
      %3674 = sbr.rel (0) target = $region45
    $region44: #{tpu_custom_call.1} parent=1 // pred_region
      %3676 = vsyncadd [#allocation8], 0
      %s3677 = sshll.u32 [#allocation11], 4
      %s3678 = int_to_ptr.vmem [resolvable:$true] %s3677
      %s3679 = sshll.u32 %s7, 4
      %s3680 = int_to_ptr.hbm [resolvable:$true] %s3679
      %3685 = dma.vmem_to_hbm [thread:$0]  %s3678, 512, %s3680, [#allocation8], 64, 64, 4
    $region45: #{tpu_custom_call.1} parent=1 // pred_fallthru
      _
    // Predicated region
    $region46: #{tpu_custom_call.1} parent=1 // pred_check
      _
    $region47: #{tpu_custom_call.1} parent=1 // pred_check_branch
      %3687 = sbr.rel (0) target = $region49
    $region48: #{tpu_custom_call.1} parent=1 // pred_region
      %3689 = dma.done [#allocation8], 512
    $region49: #{tpu_custom_call.1} parent=1 // pred_fallthru
      _
    %3690 = vsyncpa [#allocation7], 1
    %3691 = vsyncpa [#allocation10], 1
    %3692 = vsyncpa [#allocation8], 1

// kernel: tpu_custom_call.1
$region0: #{tpu_custom_call.1}
  #allocation0 [shape = 'u32[]', space=smem, size = 0x4, offset = 0x4, fixed_abs, tag = 'smem constant byte address 0x4 - core index']
  #allocation1 [shape = 'u32[72,128]{1,0:T(1,128)}', space=vmem, size = 0x9000, scoped, tag = 'internal scratch']
  #allocation2 [shape = 'f32[8,8,128]{2,1,0:T(8,128)}', space=vmem, size = 0x8000, scoped, tag = 'scratch operand']
  #allocation3 [shape = 'f32[8,8,128]{2,1,0:T(8,128)}', space=vmem, size = 0x8000, scoped, tag = 'scratch operand']
  #allocation4 [shape = 'f32[2,8,128]{2,1,0:T(8,128)}', space=vmem, size = 0x2000, scoped, tag = 'scratch operand']
  #allocation5 [shape = 'f32[2,8,128]{2,1,0:T(8,128)}', space=vmem, size = 0x2000, scoped, tag = 'scratch operand']
  %s0 = inlined_call_operand.vmem [shape: bf16[8,8,128], index: 0, kind: input, shape index: {}]
  %s1 = inlined_call_operand.vmem [shape: f32[8,8,2], index: 1, kind: input, shape index: {}]
  %s2 = inlined_call_operand.hbm [shape: bf16[2,128,640], index: 2, kind: input, shape index: {}]
  %s3 = inlined_call_operand.vmem [shape: f32[2,2,128], index: 3, kind: input, shape index: {}]
  %s4 = inlined_call_operand.vmem [shape: f32[2,1,128], index: 4, kind: input, shape index: {}]
  %s5 = inlined_call_operand.hbm [shape: bf16[2,128,512], index: 5, kind: input, shape index: {}]
  %s6 = inlined_call_operand.vmem [shape: f32[2,1,512], index: 6, kind: input, shape index: {}]
  %s7 = inlined_call_operand.hbm [shape: bf16[8,8,128], index: 7, kind: output, shape index: {}]
  %s8 = sld [smem:[#allocation0]]
  $region50: #{tpu_custom_call.1} parent=0
    _
  %s10 = ssub.s32 1, %s8
  %s11 = scalar_select 0, %s10, %s8
  $region1: #{tpu_custom_call.1} parent=0
    #allocation6 [shape = 'u8[327680]{0}', space=vmem, size = 0x50000, scoped, tag = 'input window, operand 2, single buffered']
    #allocation7 [shape = 's32[1]{0}', space=sflag, size = 0x4, scoped, tag = 'scoped memory for tpu_custom_call.1']
    #allocation8 [shape = 's32[1]{0}', space=sflag, size = 0x4, scoped, tag = 'scoped memory for tpu_custom_call.1']
    #allocation9 [shape = 'u8[262144]{0}', space=vmem, size = 0x40000, scoped, tag = 'input window, operand 5, single buffered']
    #allocation10 [shape = 's32[1]{0}', space=sflag, size = 0x4, scoped, tag = 'scoped memory for tpu_custom_call.1']
    #allocation11 [shape = 'u8[16384]{0}', space=vmem, size = 0x4000, scoped, tag = 'output window, operand 0, single buffered']
    %12 = vsyncpa [#allocation7], 0
    %13 = vsyncpa [#allocation10], 0
    %14 = vsyncpa [#allocation8], 0
    // Predicated region
    $region2: #{tpu_custom_call.1} parent=1 // pred_check
      _
    $region3: #{tpu_custom_call.1} parent=1 // pred_check_branch
      %16 = sbr.rel (0) target = $region5
    $region4: #{tpu_custom_call.1} parent=1 // pred_region
      _
    $region5: #{tpu_custom_call.1} parent=1 // pred_fallthru
      _
    // Predicated region
    $region6: #{tpu_custom_call.1} parent=1 // pred_check
      _
    $region7: #{tpu_custom_call.1} parent=1 // pred_check_branch
      %18 = sbr.rel (0) target = $region9
    $region8: #{tpu_custom_call.1} parent=1 // pred_region
      _
    $region9: #{tpu_custom_call.1} parent=1 // pred_fallthru
      _
    // Predicated region
    $region10: #{tpu_custom_call.1} parent=1 // pred_check
      _
    $region11: #{tpu_custom_call.1} parent=1 // pred_check_branch
      %20 = sbr.rel (0) target = $region13
    $region12: #{tpu_custom_call.1} parent=1 // pred_region
      %22 = vsyncadd [#allocation7], 0
      %s23 = sshll.u32 %s2, 4
      %s24 = int_to_ptr.hbm [resolvable:$true] %s23
      %s25 = sshll.u32 [#allocation6], 4
      %s26 = int_to_ptr.vmem [resolvable:$true] %s25
      %31 = dma.hbm_to_vmem [thread:$0]  %s24, 10240, %s26, [#allocation7], 320, 320, 20
    $region13: #{tpu_custom_call.1} parent=1 // pred_fallthru
      _
    // Predicated region
    $region14: #{tpu_custom_call.1} parent=1 // pred_check
      _
    $region15: #{tpu_custom_call.1} parent=1 // pred_check_branch
      %33 = sbr.rel (0) target = $region17
    $region16: #{tpu_custom_call.1} parent=1 // pred_region
      _
    $region17: #{tpu_custom_call.1} parent=1 // pred_fallthru
      _
    // Predicated region
    $region18: #{tpu_custom_call.1} parent=1 // pred_check
      _
    $region19: #{tpu_custom_call.1} parent=1 // pred_check_branch
      %35 = sbr.rel (0) target = $region21
    $region20: #{tpu_custom_call.1} parent=1 // pred_region
      _
    $region21: #{tpu_custom_call.1} parent=1 // pred_fallthru
      _
    // Predicated region
    $region22: #{tpu_custom_call.1} parent=1 // pred_check
      _
    $region23: #{tpu_custom_call.1} parent=1 // pred_check_branch
      %37 = sbr.rel (0) target = $region25
    $region24: #{tpu_custom_call.1} parent=1 // pred_region
      %39 = vsyncadd [#allocation10], 0
      %s40 = sshll.u32 %s5, 4
      %s41 = int_to_ptr.hbm [resolvable:$true] %s40
      %s42 = sshll.u32 [#allocation9], 4
      %s43 = int_to_ptr.vmem [resolvable:$true] %s42
      %48 = dma.hbm_to_vmem [thread:$0]  %s41, 8192, %s43, [#allocation10], 256, 256, 16
    $region25: #{tpu_custom_call.1} parent=1 // pred_fallthru
      _
    // Predicated region
    $region26: #{tpu_custom_call.1} parent=1 // pred_check
      _
    $region27: #{tpu_custom_call.1} parent=1 // pred_check_branch
      %50 = sbr.rel (0) target = $region29
    $region28: #{tpu_custom_call.1} parent=1 // pred_region
      _
    $region29: #{tpu_custom_call.1} parent=1 // pred_fallthru
      _
    // Predicated region
    $region30: #{tpu_custom_call.1} parent=1 // pred_check
      _
    $region31: #{tpu_custom_call.1} parent=1 // pred_check_branch
      %52 = sbr.rel (0) target = $region33
    $region32: #{tpu_custom_call.1} parent=1 // pred_region
      %54 = dma.done [#allocation7], 10240
    $region33: #{tpu_custom_call.1} parent=1 // pred_fallthru
      _
    // Predicated region
    $region34: #{tpu_custom_call.1} parent=1 // pred_check
      _
    $region35: #{tpu_custom_call.1} parent=1 // pred_check_branch
      %56 = sbr.rel (0) target = $region37
    $region36: #{tpu_custom_call.1} parent=1 // pred_region
      %58 = dma.done [#allocation10], 8192
    $region37: #{tpu_custom_call.1} parent=1 // pred_fallthru
      _
    %p59 = scmp.eq.s32.totalorder 0, 0
    // Predicated region
    $region38: #{tpu_custom_call.1} parent=1 // pred_check
      %p60 = pneg %p59
    $region39: #{tpu_custom_call.1} parent=1 // pred_check_branch
      %62 = sbr.rel (%p60) target = $region41
    $region40: #{tpu_custom_call.1} parent=1 // pred_region
      %63 = vst [vmem:[#allocation4] sm:$0xff] 0.0
      %64 = vst [vmem:[#allocation4 + $0x8] sm:$0xff] 0.0
      %65 = vst [vmem:[#allocation5] sm:$0xff] 0.0
      %66 = vst [vmem:[#allocation5 + $0x8] sm:$0xff] 0.0
    $region41: #{tpu_custom_call.1} parent=1 // pred_fallthru
      _
    %v67 = vld [vmem:[%s1] sm:$0xff]
    %v68 = vld [vmem:[%s1 + $0x8] sm:$0xff]
    %v69 = vld [vmem:[%s1 + $0x10] sm:$0xff]
    %v70 = vld [vmem:[%s1 + $0x18] sm:$0xff]
    %v71 = vld [vmem:[%s1 + $0x20] sm:$0xff]
    %v72 = vld [vmem:[%s1 + $0x28] sm:$0xff]
    %v73 = vld [vmem:[%s1 + $0x30] sm:$0xff]
    %v74 = vld [vmem:[%s1 + $0x38] sm:$0xff]
    %v75 = vld [vmem:[#allocation6] sm:$0xff]
    %v76 = vld [vmem:[#allocation6 + $0x8] sm:$0xff]
    %v77 = vld [vmem:[#allocation6 + $0x10] sm:$0xf]
    %v78 = vld [vmem:[#allocation6 + $0x14] sm:$0xff]
    %v79 = vld [vmem:[#allocation6 + $0x1c] sm:$0xff]
    %v80 = vld [vmem:[#allocation6 + $0x24] sm:$0xf]
    %v81 = vld [vmem:[#allocation6 + $0x28] sm:$0xff]
    %v82 = vld [vmem:[#allocation6 + $0x30] sm:$0xff]
    %v83 = vld [vmem:[#allocation6 + $0x38] sm:$0xf]
    %v84 = vld [vmem:[#allocation6 + $0x3c] sm:$0xff]
    %v85 = vld [vmem:[#allocation6 + $0x44] sm:$0xff]
    %v86 = vld [vmem:[#allocation6 + $0x4c] sm:$0xf]
    %v87 = vld [vmem:[#allocation6 + $0x50] sm:$0xff]
    %v88 = vld [vmem:[#allocation6 + $0x58] sm:$0xff]
    %v89 = vld [vmem:[#allocation6 + $0x60] sm:$0xf]
    %v90 = vld [vmem:[#allocation6 + $0x64] sm:$0xff]
    %v91 = vld [vmem:[#allocation6 + $0x6c] sm:$0xff]
    %v92 = vld [vmem:[#allocation6 + $0x74] sm:$0xf]
    %v93 = vld [vmem:[#allocation6 + $0x78] sm:$0xff]
    %v94 = vld [vmem:[#allocation6 + $0x80] sm:$0xff]
    %v95 = vld [vmem:[#allocation6 + $0x88] sm:$0xf]
    %v96 = vld [vmem:[#allocation6 + $0x8c] sm:$0xff]
    %v97 = vld [vmem:[#allocation6 + $0x94] sm:$0xff]
    %v98 = vld [vmem:[#allocation6 + $0x9c] sm:$0xf]
    %v99 = vld [vmem:[#allocation6 + $0xa0] sm:$0xff]
    %v100 = vld [vmem:[#allocation6 + $0xa8] sm:$0xff]
    %v101 = vld [vmem:[#allocation6 + $0xb0] sm:$0xf]
    %v102 = vld [vmem:[#allocation6 + $0xb4] sm:$0xff]
    %v103 = vld [vmem:[#allocation6 + $0xbc] sm:$0xff]
    %v104 = vld [vmem:[#allocation6 + $0xc4] sm:$0xf]
    %v105 = vld [vmem:[#allocation6 + $0xc8] sm:$0xff]
    %v106 = vld [vmem:[#allocation6 + $0xd0] sm:$0xff]
    %v107 = vld [vmem:[#allocation6 + $0xd8] sm:$0xf]
    %v108 = vld [vmem:[#allocation6 + $0xdc] sm:$0xff]
    %v109 = vld [vmem:[#allocation6 + $0xe4] sm:$0xff]
    %v110 = vld [vmem:[#allocation6 + $0xec] sm:$0xf]
    %v111 = vld [vmem:[#allocation6 + $0xf0] sm:$0xff]
    %v112 = vld [vmem:[#allocation6 + $0xf8] sm:$0xff]
    %v113 = vld [vmem:[#allocation6 + $0x100] sm:$0xf]
    %v114 = vld [vmem:[#allocation6 + $0x104] sm:$0xff]
    %v115 = vld [vmem:[#allocation6 + $0x10c] sm:$0xff]
    %v116 = vld [vmem:[#allocation6 + $0x114] sm:$0xf]
    %v117 = vld [vmem:[#allocation6 + $0x118] sm:$0xff]
    %v118 = vld [vmem:[#allocation6 + $0x120] sm:$0xff]
    %v119 = vld [vmem:[#allocation6 + $0x128] sm:$0xf]
    %v120 = vld [vmem:[#allocation6 + $0x12c] sm:$0xff]
    %v121 = vld [vmem:[#allocation6 + $0x134] sm:$0xff]
    %v122 = vld [vmem:[#allocation6 + $0x13c] sm:$0xf]
    %v123 = vld [vmem:[#allocation9] sm:$0xff]
    %v124 = vld [vmem:[#allocation9 + $0x8] sm:$0xff]
    %v125 = vld [vmem:[#allocation9 + $0x10] sm:$0xff]
    %v126 = vld [vmem:[#allocation9 + $0x18] sm:$0xff]
    %v127 = vld [vmem:[#allocation9 + $0x20] sm:$0xff]
    %v128 = vld [vmem:[#allocation9 + $0x28] sm:$0xff]
    %v129 = vld [vmem:[#allocation9 + $0x30] sm:$0xff]
    %v130 = vld [vmem:[#allocation9 + $0x38] sm:$0xff]
    %v131 = vld [vmem:[#allocation9 + $0x40] sm:$0xff]
    %v132 = vld [vmem:[#allocation9 + $0x48] sm:$0xff]
    %v133 = vld [vmem:[#allocation9 + $0x50] sm:$0xff]
    %v134 = vld [vmem:[#allocation9 + $0x58] sm:$0xff]
    %v135 = vld [vmem:[#allocation9 + $0x60] sm:$0xff]
    %v136 = vld [vmem:[#allocation9 + $0x68] sm:$0xff]
    %v137 = vld [vmem:[#allocation9 + $0x70] sm:$0xff]
    %v138 = vld [vmem:[#allocation9 + $0x78] sm:$0xff]
    %v139 = vld [vmem:[#allocation9 + $0x80] sm:$0xff]
    %v140 = vld [vmem:[#allocation9 + $0x88] sm:$0xff]
    %v141 = vld [vmem:[#allocation9 + $0x90] sm:$0xff]
    %v142 = vld [vmem:[#allocation9 + $0x98] sm:$0xff]
    %v143 = vld [vmem:[#allocation9 + $0xa0] sm:$0xff]
    %v144 = vld [vmem:[#allocation9 + $0xa8] sm:$0xff]
    %v145 = vld [vmem:[#allocation9 + $0xb0] sm:$0xff]
    %v146 = vld [vmem:[#allocation9 + $0xb8] sm:$0xff]
    %v147 = vld [vmem:[#allocation9 + $0xc0] sm:$0xff]
    %v148 = vld [vmem:[#allocation9 + $0xc8] sm:$0xff]
    %v149 = vld [vmem:[#allocation9 + $0xd0] sm:$0xff]
    %v150 = vld [vmem:[#allocation9 + $0xd8] sm:$0xff]
    %v151 = vld [vmem:[#allocation9 + $0xe0] sm:$0xff]
    %v152 = vld [vmem:[#allocation9 + $0xe8] sm:$0xff]
    %v153 = vld [vmem:[#allocation9 + $0xf0] sm:$0xff]
    %v154 = vld [vmem:[#allocation9 + $0xf8] sm:$0xff]
    %v155 = vld [vmem:[%s3] sm:$0x3]
    %v156 = vld [vmem:[%s4] sm:$0x1]
    %v157 = vld [vmem:[%s6] sm:$0xf]
    %159 = vset.pattern.permute.xlu0 0
    %160 = vperm.xlu0 %159, %v67
    %v161 = vpop.permute.xlu0 %160
    %164 = vset.pattern.permute.xlu0 0
    %165 = vperm.xlu0 %164, %v68
    %v166 = vpop.permute.xlu0 %165
    %169 = vset.pattern.permute.xlu0 0
    %170 = vperm.xlu0 %169, %v69
    %v171 = vpop.permute.xlu0 %170
    %174 = vset.pattern.permute.xlu0 0
    %175 = vperm.xlu0 %174, %v70
    %v176 = vpop.permute.xlu0 %175
    %179 = vset.pattern.permute.xlu0 0
    %180 = vperm.xlu0 %179, %v71
    %v181 = vpop.permute.xlu0 %180
    %184 = vset.pattern.permute.xlu0 0
    %185 = vperm.xlu0 %184, %v72
    %v186 = vpop.permute.xlu0 %185
    %189 = vset.pattern.permute.xlu0 0
    %190 = vperm.xlu0 %189, %v73
    %v191 = vpop.permute.xlu0 %190
    %194 = vset.pattern.permute.xlu0 0
    %195 = vperm.xlu0 %194, %v74
    %v196 = vpop.permute.xlu0 %195
    %v198 = vperm.slane %v155, 0
    %v199 = vmul.f32 %v161, %v198
    %v200 = vmul.f32 %v166, %v198
    %v201 = vmul.f32 %v171, %v198
    %v202 = vmul.f32 %v176, %v198
    %v203 = vmul.f32 %v181, %v198
    %v204 = vmul.f32 %v186, %v198
    %v205 = vmul.f32 %v191, %v198
    %v206 = vmul.f32 %v196, %v198
    %207 = vset.pattern.permute.xlu0 1
    %208 = vperm.xlu0 %207, %v67
    %v209 = vpop.permute.xlu0 %208
    %211 = vset.pattern.permute.xlu0 1
    %212 = vperm.xlu0 %211, %v68
    %v213 = vpop.permute.xlu0 %212
    %215 = vset.pattern.permute.xlu0 1
    %216 = vperm.xlu0 %215, %v69
    %v217 = vpop.permute.xlu0 %216
    %219 = vset.pattern.permute.xlu0 1
    %220 = vperm.xlu0 %219, %v70
    %v221 = vpop.permute.xlu0 %220
    %223 = vset.pattern.permute.xlu0 1
    %224 = vperm.xlu0 %223, %v71
    %v225 = vpop.permute.xlu0 %224
    %227 = vset.pattern.permute.xlu0 1
    %228 = vperm.xlu0 %227, %v72
    %v229 = vpop.permute.xlu0 %228
    %231 = vset.pattern.permute.xlu0 1
    %232 = vperm.xlu0 %231, %v73
    %v233 = vpop.permute.xlu0 %232
    %235 = vset.pattern.permute.xlu0 1
    %236 = vperm.xlu0 %235, %v74
    %v237 = vpop.permute.xlu0 %236
    %v239 = vperm.slane %v155, 1
    %v240 = vmul.f32 %v209, %v239
    %v241 = vmul.f32 %v213, %v239
    %v242 = vmul.f32 %v217, %v239
    %v243 = vmul.f32 %v221, %v239
    %v244 = vmul.f32 %v225, %v239
    %v245 = vmul.f32 %v229, %v239
    %v246 = vmul.f32 %v233, %v239
    %v247 = vmul.f32 %v237, %v239
    %v248 = vadd.f32 %v199, %v240
    %v249 = vadd.f32 %v200, %v241
    %v250 = vadd.f32 %v201, %v242
    %v251 = vadd.f32 %v202, %v243
    %v252 = vadd.f32 %v203, %v244
    %v253 = vadd.f32 %v204, %v245
    %v254 = vadd.f32 %v205, %v246
    %v255 = vadd.f32 %v206, %v247
    %v257 = vperm.slane %v156, 0
    %v259 = vadd.f32 %v248, %v257
    %v260 = vadd.f32 %v249, %v257
    %v261 = vadd.f32 %v250, %v257
    %v262 = vadd.f32 %v251, %v257
    %v263 = vadd.f32 %v252, %v257
    %v264 = vadd.f32 %v253, %v257
    %v265 = vadd.f32 %v254, %v257
    %v266 = vadd.f32 %v255, %v257
    %267 = vst [vmem:[#allocation3] sm:$0xff] %v259
    %268 = vst [vmem:[#allocation3 + $0x8] sm:$0xff] %v260
    %269 = vst [vmem:[#allocation3 + $0x10] sm:$0xff] %v261
    %270 = vst [vmem:[#allocation3 + $0x18] sm:$0xff] %v262
    %271 = vst [vmem:[#allocation3 + $0x20] sm:$0xff] %v263
    %272 = vst [vmem:[#allocation3 + $0x28] sm:$0xff] %v264
    %273 = vst [vmem:[#allocation3 + $0x30] sm:$0xff] %v265
    %274 = vst [vmem:[#allocation3 + $0x38] sm:$0xff] %v266
    %v275 = vld [vmem:[#allocation4] sm:$0xff]
    %v276 = vld [vmem:[#allocation5] sm:$0xff]
    %v277 = vld [vmem:[%s0] sm:$0xf]
    %v278 = vunpack.c.l.bf16 %v277
    %v279 = vpack.c.bf16 %v275, %v275
    %v328 = vunpack.c.l.b16 %v75
    %v329 = vunpack.c.h.b16 %v75
    %v330 = vunpack.c.l.b16 %v76
    %v331 = vunpack.c.h.b16 %v76
    %v332 = vunpack.c.l.b16 %v77
    %v333 = vunpack.c.l.b16 %v78
    %v334 = vunpack.c.h.b16 %v78
    %v335 = vunpack.c.l.b16 %v79
    %v336 = vunpack.c.h.b16 %v79
    %v337 = vunpack.c.l.b16 %v80
    %v338 = vunpack.c.l.b16 %v81
    %v339 = vunpack.c.h.b16 %v81
    %v340 = vunpack.c.l.b16 %v82
    %v341 = vunpack.c.h.b16 %v82
    %v342 = vunpack.c.l.b16 %v83
    %v343 = vunpack.c.l.b16 %v84
    %v344 = vunpack.c.h.b16 %v84
    %v345 = vunpack.c.l.b16 %v85
    %v346 = vunpack.c.h.b16 %v85
    %v347 = vunpack.c.l.b16 %v86
    %v348 = vunpack.c.l.b16 %v87
    %v349 = vunpack.c.h.b16 %v87
    %v350 = vunpack.c.l.b16 %v88
    %v351 = vunpack.c.h.b16 %v88
    %v352 = vunpack.c.l.b16 %v89
    %v353 = vunpack.c.l.b16 %v90
    %v354 = vunpack.c.h.b16 %v90
    %v355 = vunpack.c.l.b16 %v91
    %v356 = vunpack.c.h.b16 %v91
    %v357 = vunpack.c.l.b16 %v92
    %v358 = vunpack.c.l.b16 %v93
    %v359 = vunpack.c.h.b16 %v93
    %v360 = vunpack.c.l.b16 %v94
    %v361 = vunpack.c.h.b16 %v94
    %v362 = vunpack.c.l.b16 %v95
    %v363 = vunpack.c.l.b16 %v96
    %v364 = vunpack.c.h.b16 %v96
    %v365 = vunpack.c.l.b16 %v97
    %v366 = vunpack.c.h.b16 %v97
    %v367 = vunpack.c.l.b16 %v98
    %v368 = vunpack.c.l.b16 %v99
    %v369 = vunpack.c.h.b16 %v99
    %v370 = vunpack.c.l.b16 %v100
    %v371 = vunpack.c.h.b16 %v100
    %v372 = vunpack.c.l.b16 %v101
    %v373 = vunpack.c.l.b16 %v102
    %v374 = vunpack.c.h.b16 %v102
    %v375 = vunpack.c.l.b16 %v103
    %v376 = vunpack.c.h.b16 %v103
    %v377 = vunpack.c.l.b16 %v104
    %v378 = vunpack.c.l.b16 %v105
    %v379 = vunpack.c.h.b16 %v105
    %v380 = vunpack.c.l.b16 %v106
    %v381 = vunpack.c.h.b16 %v106
    %v382 = vunpack.c.l.b16 %v107
    %v383 = vunpack.c.l.b16 %v108
    %v384 = vunpack.c.h.b16 %v108
    %v385 = vunpack.c.l.b16 %v109
    %v386 = vunpack.c.h.b16 %v109
    %v387 = vunpack.c.l.b16 %v110
    %v388 = vunpack.c.l.b16 %v111
    %v389 = vunpack.c.h.b16 %v111
    %v390 = vunpack.c.l.b16 %v112
    %v391 = vunpack.c.h.b16 %v112
    %v392 = vunpack.c.l.b16 %v113
    %v393 = vunpack.c.l.b16 %v114
    %v394 = vunpack.c.h.b16 %v114
    %v395 = vunpack.c.l.b16 %v115
    %v396 = vunpack.c.h.b16 %v115
    %v397 = vunpack.c.l.b16 %v116
    %v398 = vunpack.c.l.b16 %v117
    %v399 = vunpack.c.h.b16 %v117
    %v400 = vunpack.c.l.b16 %v118
    %v401 = vunpack.c.h.b16 %v118
    %v402 = vunpack.c.l.b16 %v119
    %v403 = vunpack.c.l.b16 %v120
    %v404 = vunpack.c.h.b16 %v120
    %v405 = vunpack.c.l.b16 %v121
    %v406 = vunpack.c.h.b16 %v121
    %v407 = vunpack.c.l.b16 %v122
    %v408 = vpack.c.b16 %v333, %v328
    %v409 = vpack.c.b16 %v334, %v329
    %v410 = vpack.c.b16 %v335, %v330
    %v411 = vpack.c.b16 %v336, %v331
    %v412 = vpack.c.b16 %v337, %v332
    %v413 = vpack.c.b16 %v343, %v338
    %v414 = vpack.c.b16 %v344, %v339
    %v415 = vpack.c.b16 %v345, %v340
    %v416 = vpack.c.b16 %v346, %v341
    %v417 = vpack.c.b16 %v347, %v342
    %v418 = vpack.c.b16 %v353, %v348
    %v419 = vpack.c.b16 %v354, %v349
    %v420 = vpack.c.b16 %v355, %v350
    %v421 = vpack.c.b16 %v356, %v351
    %v422 = vpack.c.b16 %v357, %v352
    %v423 = vpack.c.b16 %v363, %v358
    %v424 = vpack.c.b16 %v364, %v359
    %v425 = vpack.c.b16 %v365, %v360
    %v426 = vpack.c.b16 %v366, %v361
    %v427 = vpack.c.b16 %v367, %v362
    %v428 = vpack.c.b16 %v373, %v368
    %v429 = vpack.c.b16 %v374, %v369
    %v430 = vpack.c.b16 %v375, %v370
    %v431 = vpack.c.b16 %v376, %v371
    %v432 = vpack.c.b16 %v377, %v372
    %v433 = vpack.c.b16 %v383, %v378
    %v434 = vpack.c.b16 %v384, %v379
    %v435 = vpack.c.b16 %v385, %v380
    %v436 = vpack.c.b16 %v386, %v381
    %v437 = vpack.c.b16 %v387, %v382
    %v438 = vpack.c.b16 %v393, %v388
    %v439 = vpack.c.b16 %v394, %v389
    %v440 = vpack.c.b16 %v395, %v390
    %v441 = vpack.c.b16 %v396, %v391
    %v442 = vpack.c.b16 %v397, %v392
    %v443 = vpack.c.b16 %v403, %v398
    %v444 = vpack.c.b16 %v404, %v399
    %v445 = vpack.c.b16 %v405, %v400
    %v446 = vpack.c.b16 %v406, %v401
    %v447 = vpack.c.b16 %v407, %v402
    %488 = vmatpush.bf16.msra.mxu0 %v443
    %489 = vmatpush.bf16.msra.mxu0 %v438
    %490 = vmatpush.bf16.msra.mxu0 %v433
    %491 = vmatpush.bf16.msra.mxu0 %v428
    %492 = vmatpush.bf16.msra.mxu0 %v423
    %493 = vmatpush.bf16.msra.mxu0 %v418
    %494 = vmatpush.bf16.msra.mxu0 %v413
    %495 = vmatpush.bf16.msra.mxu0 %v408
    %496 = vmatmul.bf16.gmra.mxu0 %v279
    %v497 = vpop.f32.mrf.mxu0
    %v498 = vadd.f32 0.0, %v497
    %v499 = vpop.f32.mrf.mxu0
    %500 = vdwg.mxu0
    %501 = vmatpush.bf16.msra.mxu0 %v444
    %502 = vmatpush.bf16.msra.mxu0 %v439
    %503 = vmatpush.bf16.msra.mxu0 %v434
    %504 = vmatpush.bf16.msra.mxu0 %v429
    %505 = vmatpush.bf16.msra.mxu0 %v424
    %506 = vmatpush.bf16.msra.mxu0 %v419
    %507 = vmatpush.bf16.msra.mxu0 %v414
    %508 = vmatpush.bf16.msra.mxu0 %v409
    %509 = vmatmul.bf16.gmra.mxu0 %v279
    %v510 = vpop.f32.mrf.mxu0
    %v511 = vadd.f32 0.0, %v510
    %v512 = vpop.f32.mrf.mxu0
    %513 = vdwg.mxu0
    %514 = vmatpush.bf16.msra.mxu0 %v445
    %515 = vmatpush.bf16.msra.mxu0 %v440
    %516 = vmatpush.bf16.msra.mxu0 %v435
    %517 = vmatpush.bf16.msra.mxu0 %v430
    %518 = vmatpush.bf16.msra.mxu0 %v425
    %519 = vmatpush.bf16.msra.mxu0 %v420
    %520 = vmatpush.bf16.msra.mxu0 %v415
    %521 = vmatpush.bf16.msra.mxu0 %v410
    %522 = vmatmul.bf16.gmra.mxu0 %v279
    %v523 = vpop.f32.mrf.mxu0
    %v524 = vadd.f32 0.0, %v523
    %v525 = vpop.f32.mrf.mxu0
    %526 = vdwg.mxu0
    %527 = vmatpush.bf16.msra.mxu0 %v446
    %528 = vmatpush.bf16.msra.mxu0 %v441
    %529 = vmatpush.bf16.msra.mxu0 %v436
    %530 = vmatpush.bf16.msra.mxu0 %v431
    %531 = vmatpush.bf16.msra.mxu0 %v426
    %532 = vmatpush.bf16.msra.mxu0 %v421
    %533 = vmatpush.bf16.msra.mxu0 %v416
    %534 = vmatpush.bf16.msra.mxu0 %v411
    %535 = vmatmul.bf16.gmra.mxu0 %v279
    %v536 = vpop.f32.mrf.mxu0
    %v537 = vadd.f32 0.0, %v536
    %v538 = vpop.f32.mrf.mxu0
    %539 = vdwg.mxu0
    %540 = vmatpush.bf16.msra.mxu0 %v447
    %541 = vmatpush.bf16.msra.mxu0 %v442
    %542 = vmatpush.bf16.msra.mxu0 %v437
    %543 = vmatpush.bf16.msra.mxu0 %v432
    %544 = vmatpush.bf16.msra.mxu0 %v427
    %545 = vmatpush.bf16.msra.mxu0 %v422
    %546 = vmatpush.bf16.msra.mxu0 %v417
    %547 = vmatpush.bf16.msra.mxu0 %v412
    %548 = vmatmul.bf16.gmra.mxu0 %v279
    %v549 = vpop.f32.mrf.mxu0
    %v550 = vadd.f32 0.0, %v549
    %v551 = vpop.f32.mrf.mxu0
    %552 = vdwg.mxu0
    %v553 = vld [vmem:[#allocation3] sm:$0xff]
    %v554 = vadd.f32 %v498, %v553
    %v555 = vmul.f32 %v554, 0.5
    %v556 = vtanh.pop %v555
    %v557 = vmul.f32 %v556, 0.5
    %v558 = vadd.f32 %v557, 0.5
    %v559 = vmul.f32 %v558, %v278
    %v560 = vpack.c.bf16 %v559, %v559
    %v593 = vunpack.c.l.b16 %v123
    %v594 = vunpack.c.h.b16 %v123
    %v595 = vunpack.c.l.b16 %v124
    %v596 = vunpack.c.h.b16 %v124
    %v597 = vunpack.c.l.b16 %v125
    %v598 = vunpack.c.h.b16 %v125
    %v599 = vunpack.c.l.b16 %v126
    %v600 = vunpack.c.h.b16 %v126
    %v601 = vunpack.c.l.b16 %v127
    %v602 = vunpack.c.h.b16 %v127
    %v603 = vunpack.c.l.b16 %v128
    %v604 = vunpack.c.h.b16 %v128
    %v605 = vunpack.c.l.b16 %v129
    %v606 = vunpack.c.h.b16 %v129
    %v607 = vunpack.c.l.b16 %v130
    %v608 = vunpack.c.h.b16 %v130
    %v609 = vunpack.c.l.b16 %v131
    %v610 = vunpack.c.h.b16 %v131
    %v611 = vunpack.c.l.b16 %v132
    %v612 = vunpack.c.h.b16 %v132
    %v613 = vunpack.c.l.b16 %v133
    %v614 = vunpack.c.h.b16 %v133
    %v615 = vunpack.c.l.b16 %v134
    %v616 = vunpack.c.h.b16 %v134
    %v617 = vunpack.c.l.b16 %v135
    %v618 = vunpack.c.h.b16 %v135
    %v619 = vunpack.c.l.b16 %v136
    %v620 = vunpack.c.h.b16 %v136
    %v621 = vunpack.c.l.b16 %v137
    %v622 = vunpack.c.h.b16 %v137
    %v623 = vunpack.c.l.b16 %v138
    %v624 = vunpack.c.h.b16 %v138
    %v625 = vunpack.c.l.b16 %v139
    %v626 = vunpack.c.h.b16 %v139
    %v627 = vunpack.c.l.b16 %v140
    %v628 = vunpack.c.h.b16 %v140
    %v629 = vunpack.c.l.b16 %v141
    %v630 = vunpack.c.h.b16 %v141
    %v631 = vunpack.c.l.b16 %v142
    %v632 = vunpack.c.h.b16 %v142
    %v633 = vunpack.c.l.b16 %v143
    %v634 = vunpack.c.h.b16 %v143
    %v635 = vunpack.c.l.b16 %v144
    %v636 = vunpack.c.h.b16 %v144
    %v637 = vunpack.c.l.b16 %v145
    %v638 = vunpack.c.h.b16 %v145
    %v639 = vunpack.c.l.b16 %v146
    %v640 = vunpack.c.h.b16 %v146
    %v641 = vunpack.c.l.b16 %v147
    %v642 = vunpack.c.h.b16 %v147
    %v643 = vunpack.c.l.b16 %v148
    %v644 = vunpack.c.h.b16 %v148
    %v645 = vunpack.c.l.b16 %v149
    %v646 = vunpack.c.h.b16 %v149
    %v647 = vunpack.c.l.b16 %v150
    %v648 = vunpack.c.h.b16 %v150
    %v649 = vunpack.c.l.b16 %v151
    %v650 = vunpack.c.h.b16 %v151
    %v651 = vunpack.c.l.b16 %v152
    %v652 = vunpack.c.h.b16 %v152
    %v653 = vunpack.c.l.b16 %v153
    %v654 = vunpack.c.h.b16 %v153
    %v655 = vunpack.c.l.b16 %v154
    %v656 = vunpack.c.h.b16 %v154
    %v657 = vpack.c.b16 %v597, %v593
    %v658 = vpack.c.b16 %v598, %v594
    %v659 = vpack.c.b16 %v599, %v595
    %v660 = vpack.c.b16 %v600, %v596
    %v661 = vpack.c.b16 %v605, %v601
    %v662 = vpack.c.b16 %v606, %v602
    %v663 = vpack.c.b16 %v607, %v603
    %v664 = vpack.c.b16 %v608, %v604
    %v665 = vpack.c.b16 %v613, %v609
    %v666 = vpack.c.b16 %v614, %v610
    %v667 = vpack.c.b16 %v615, %v611
    %v668 = vpack.c.b16 %v616, %v612
    %v669 = vpack.c.b16 %v621, %v617
    %v670 = vpack.c.b16 %v622, %v618
    %v671 = vpack.c.b16 %v623, %v619
    %v672 = vpack.c.b16 %v624, %v620
    %v673 = vpack.c.b16 %v629, %v625
    %v674 = vpack.c.b16 %v630, %v626
    %v675 = vpack.c.b16 %v631, %v627
    %v676 = vpack.c.b16 %v632, %v628
    %v677 = vpack.c.b16 %v637, %v633
    %v678 = vpack.c.b16 %v638, %v634
    %v679 = vpack.c.b16 %v639, %v635
    %v680 = vpack.c.b16 %v640, %v636
    %v681 = vpack.c.b16 %v645, %v641
    %v682 = vpack.c.b16 %v646, %v642
    %v683 = vpack.c.b16 %v647, %v643
    %v684 = vpack.c.b16 %v648, %v644
    %v685 = vpack.c.b16 %v653, %v649
    %v686 = vpack.c.b16 %v654, %v650
    %v687 = vpack.c.b16 %v655, %v651
    %v688 = vpack.c.b16 %v656, %v652
    %721 = vmatpush.bf16.msra.mxu0 %v685
    %722 = vmatpush.bf16.msra.mxu0 %v681
    %723 = vmatpush.bf16.msra.mxu0 %v677
    %724 = vmatpush.bf16.msra.mxu0 %v673
    %725 = vmatpush.bf16.msra.mxu0 %v669
    %726 = vmatpush.bf16.msra.mxu0 %v665
    %727 = vmatpush.bf16.msra.mxu0 %v661
    %728 = vmatpush.bf16.msra.mxu0 %v657
    %729 = vmatmul.bf16.gmra.mxu0 %v560
    %v730 = vpop.f32.mrf.mxu0
    %v731 = vadd.f32 0.0, %v730
    %v732 = vpop.f32.mrf.mxu0
    %733 = vdwg.mxu0
    %734 = vmatpush.bf16.msra.mxu0 %v686
    %735 = vmatpush.bf16.msra.mxu0 %v682
    %736 = vmatpush.bf16.msra.mxu0 %v678
    %737 = vmatpush.bf16.msra.mxu0 %v674
    %738 = vmatpush.bf16.msra.mxu0 %v670
    %739 = vmatpush.bf16.msra.mxu0 %v666
    %740 = vmatpush.bf16.msra.mxu0 %v662
    %741 = vmatpush.bf16.msra.mxu0 %v658
    %742 = vmatmul.bf16.gmra.mxu0 %v560
    %v743 = vpop.f32.mrf.mxu0
    %v744 = vadd.f32 0.0, %v743
    %v745 = vpop.f32.mrf.mxu0
    %746 = vdwg.mxu0
    %747 = vmatpush.bf16.msra.mxu0 %v687
    %748 = vmatpush.bf16.msra.mxu0 %v683
    %749 = vmatpush.bf16.msra.mxu0 %v679
    %750 = vmatpush.bf16.msra.mxu0 %v675
    %751 = vmatpush.bf16.msra.mxu0 %v671
    %752 = vmatpush.bf16.msra.mxu0 %v667
    %753 = vmatpush.bf16.msra.mxu0 %v663
    %754 = vmatpush.bf16.msra.mxu0 %v659
    %755 = vmatmul.bf16.gmra.mxu0 %v560
    %v756 = vpop.f32.mrf.mxu0
    %v757 = vadd.f32 0.0, %v756
    %v758 = vpop.f32.mrf.mxu0
    %759 = vdwg.mxu0
    %760 = vmatpush.bf16.msra.mxu0 %v688
    %761 = vmatpush.bf16.msra.mxu0 %v684
    %762 = vmatpush.bf16.msra.mxu0 %v680
    %763 = vmatpush.bf16.msra.mxu0 %v676
    %764 = vmatpush.bf16.msra.mxu0 %v672
    %765 = vmatpush.bf16.msra.mxu0 %v668
    %766 = vmatpush.bf16.msra.mxu0 %v664
    %767 = vmatpush.bf16.msra.mxu0 %v660
    %768 = vmatmul.bf16.gmra.mxu0 %v560
    %v769 = vpop.f32.mrf.mxu0
    %v770 = vadd.f32 0.0, %v769
    %v771 = vpop.f32.mrf.mxu0
    %772 = vdwg.mxu0
    %v773 = vadd.f32 %v511, %v731
    %v774 = vadd.f32 %v524, %v744
    %v775 = vadd.f32 %v537, %v757
    %v776 = vadd.f32 %v550, %v770
    %v778 = vperm.slane %v157, 0
    %v779 = vperm.slane %v157, 1
    %v780 = vperm.slane %v157, 2
    %v781 = vperm.slane %v157, 3
    %v786 = vadd.f32 %v773, %v778
    %v787 = vadd.f32 %v774, %v779
    %v788 = vadd.f32 %v775, %v780
    %v789 = vadd.f32 %v776, %v781
    %v790 = vmul.f32 %v786, 0.5
    %v791 = vtanh.pop %v790
    %v792 = vmul.f32 %v791, 0.5
    %v793 = vadd.f32 %v792, 0.5
    %v794 = vmul.f32 %v787, 0.5
    %v795 = vtanh.pop %v794
    %v796 = vmul.f32 %v795, 0.5
    %v797 = vadd.f32 %v796, 0.5
    %v798 = vtanh.pop %v788
    %v799 = vmul.f32 %v789, 0.5
    %v800 = vtanh.pop %v799
    %v801 = vmul.f32 %v800, 0.5
    %v802 = vadd.f32 %v801, 0.5
    %v803 = vmul.f32 %v797, %v276
    %v804 = vmul.f32 %v793, %v798
    %v805 = vadd.f32 %v803, %v804
    %v806 = vtanh.pop %v805
    %v807 = vmul.f32 %v802, %v806
    %808 = vst [vmem:[#allocation2] sm:$0xff] %v807
    %s809 = scalar_lea.vmem %s0, 4
    %v810 = vld [vmem:[%s809] sm:$0xf]
    %v811 = vunpack.c.l.bf16 %v810
    %v812 = vpack.c.bf16 %v807, %v807
    %813 = vmatpush.bf16.msra.mxu0 %v443
    %814 = vmatpush.bf16.msra.mxu0 %v438
    %815 = vmatpush.bf16.msra.mxu0 %v433
    %816 = vmatpush.bf16.msra.mxu0 %v428
    %817 = vmatpush.bf16.msra.mxu0 %v423
    %818 = vmatpush.bf16.msra.mxu0 %v418
    %819 = vmatpush.bf16.msra.mxu0 %v413
    %820 = vmatpush.bf16.msra.mxu0 %v408
    %821 = vmatmul.bf16.gmra.mxu0 %v812
    %v822 = vpop.f32.mrf.mxu0
    %v823 = vadd.f32 0.0, %v822
    %v824 = vpop.f32.mrf.mxu0
    %825 = vdwg.mxu0
    %826 = vmatpush.bf16.msra.mxu0 %v444
    %827 = vmatpush.bf16.msra.mxu0 %v439
    %828 = vmatpush.bf16.msra.mxu0 %v434
    %829 = vmatpush.bf16.msra.mxu0 %v429
    %830 = vmatpush.bf16.msra.mxu0 %v424
    %831 = vmatpush.bf16.msra.mxu0 %v419
    %832 = vmatpush.bf16.msra.mxu0 %v414
    %833 = vmatpush.bf16.msra.mxu0 %v409
    %834 = vmatmul.bf16.gmra.mxu0 %v812
    %v835 = vpop.f32.mrf.mxu0
    %v836 = vadd.f32 0.0, %v835
    %v837 = vpop.f32.mrf.mxu0
    %838 = vdwg.mxu0
    %839 = vmatpush.bf16.msra.mxu0 %v445
    %840 = vmatpush.bf16.msra.mxu0 %v440
    %841 = vmatpush.bf16.msra.mxu0 %v435
    %842 = vmatpush.bf16.msra.mxu0 %v430
    %843 = vmatpush.bf16.msra.mxu0 %v425
    %844 = vmatpush.bf16.msra.mxu0 %v420
    %845 = vmatpush.bf16.msra.mxu0 %v415
    %846 = vmatpush.bf16.msra.mxu0 %v410
    %847 = vmatmul.bf16.gmra.mxu0 %v812
    %v848 = vpop.f32.mrf.mxu0
    %v849 = vadd.f32 0.0, %v848
    %v850 = vpop.f32.mrf.mxu0
    %851 = vdwg.mxu0
    %852 = vmatpush.bf16.msra.mxu0 %v446
    %853 = vmatpush.bf16.msra.mxu0 %v441
    %854 = vmatpush.bf16.msra.mxu0 %v436
    %855 = vmatpush.bf16.msra.mxu0 %v431
    %856 = vmatpush.bf16.msra.mxu0 %v426
    %857 = vmatpush.bf16.msra.mxu0 %v421
    %858 = vmatpush.bf16.msra.mxu0 %v416
    %859 = vmatpush.bf16.msra.mxu0 %v411
    %860 = vmatmul.bf16.gmra.mxu0 %v812
    %v861 = vpop.f32.mrf.mxu0
    %v862 = vadd.f32 0.0, %v861
    %v863 = vpop.f32.mrf.mxu0
    %864 = vdwg.mxu0
    %865 = vmatpush.bf16.msra.mxu0 %v447
    %866 = vmatpush.bf16.msra.mxu0 %v442
    %867 = vmatpush.bf16.msra.mxu0 %v437
    %868 = vmatpush.bf16.msra.mxu0 %v432
    %869 = vmatpush.bf16.msra.mxu0 %v427
    %870 = vmatpush.bf16.msra.mxu0 %v422
    %871 = vmatpush.bf16.msra.mxu0 %v417
    %872 = vmatpush.bf16.msra.mxu0 %v412
    %873 = vmatmul.bf16.gmra.mxu0 %v812
    %v874 = vpop.f32.mrf.mxu0
    %v875 = vadd.f32 0.0, %v874
    %v876 = vpop.f32.mrf.mxu0
    %877 = vdwg.mxu0
    %s878 = scalar_lea.vmem [#allocation3], 8
    %v879 = vld [vmem:[%s878] sm:$0xff]
    %v880 = vadd.f32 %v823, %v879
    %v881 = vmul.f32 %v880, 0.5
    %v882 = vtanh.pop %v881
    %v883 = vmul.f32 %v882, 0.5
    %v884 = vadd.f32 %v883, 0.5
    %v885 = vmul.f32 %v884, %v811
    %v886 = vpack.c.bf16 %v885, %v885
    %887 = vmatpush.bf16.msra.mxu0 %v685
    %888 = vmatpush.bf16.msra.mxu0 %v681
    %889 = vmatpush.bf16.msra.mxu0 %v677
    %890 = vmatpush.bf16.msra.mxu0 %v673
    %891 = vmatpush.bf16.msra.mxu0 %v669
    %892 = vmatpush.bf16.msra.mxu0 %v665
    %893 = vmatpush.bf16.msra.mxu0 %v661
    %894 = vmatpush.bf16.msra.mxu0 %v657
    %895 = vmatmul.bf16.gmra.mxu0 %v886
    %v896 = vpop.f32.mrf.mxu0
    %v897 = vadd.f32 0.0, %v896
    %v898 = vpop.f32.mrf.mxu0
    %899 = vdwg.mxu0
    %900 = vmatpush.bf16.msra.mxu0 %v686
    %901 = vmatpush.bf16.msra.mxu0 %v682
    %902 = vmatpush.bf16.msra.mxu0 %v678
    %903 = vmatpush.bf16.msra.mxu0 %v674
    %904 = vmatpush.bf16.msra.mxu0 %v670
    %905 = vmatpush.bf16.msra.mxu0 %v666
    %906 = vmatpush.bf16.msra.mxu0 %v662
    %907 = vmatpush.bf16.msra.mxu0 %v658
    %908 = vmatmul.bf16.gmra.mxu0 %v886
    %v909 = vpop.f32.mrf.mxu0
    %v910 = vadd.f32 0.0, %v909
    %v911 = vpop.f32.mrf.mxu0
    %912 = vdwg.mxu0
    %913 = vmatpush.bf16.msra.mxu0 %v687
    %914 = vmatpush.bf16.msra.mxu0 %v683
    %915 = vmatpush.bf16.msra.mxu0 %v679
    %916 = vmatpush.bf16.msra.mxu0 %v675
    %917 = vmatpush.bf16.msra.mxu0 %v671
    %918 = vmatpush.bf16.msra.mxu0 %v667
    %919 = vmatpush.bf16.msra.mxu0 %v663
    %920 = vmatpush.bf16.msra.mxu0 %v659
    %921 = vmatmul.bf16.gmra.mxu0 %v886
    %v922 = vpop.f32.mrf.mxu0
    %v923 = vadd.f32 0.0, %v922
    %v924 = vpop.f32.mrf.mxu0
    %925 = vdwg.mxu0
    %926 = vmatpush.bf16.msra.mxu0 %v688
    %927 = vmatpush.bf16.msra.mxu0 %v684
    %928 = vmatpush.bf16.msra.mxu0 %v680
    %929 = vmatpush.bf16.msra.mxu0 %v676
    %930 = vmatpush.bf16.msra.mxu0 %v672
    %931 = vmatpush.bf16.msra.mxu0 %v668
    %932 = vmatpush.bf16.msra.mxu0 %v664
    %933 = vmatpush.bf16.msra.mxu0 %v660
    %934 = vmatmul.bf16.gmra.mxu0 %v886
    %v935 = vpop.f32.mrf.mxu0
    %v936 = vadd.f32 0.0, %v935
    %v937 = vpop.f32.mrf.mxu0
    %938 = vdwg.mxu0
    %v939 = vadd.f32 %v836, %v897
    %v940 = vadd.f32 %v849, %v910
    %v941 = vadd.f32 %v862, %v923
    %v942 = vadd.f32 %v875, %v936
    %v943 = vadd.f32 %v939, %v778
    %v944 = vadd.f32 %v940, %v779
    %v945 = vadd.f32 %v941, %v780
    %v946 = vadd.f32 %v942, %v781
    %v947 = vmul.f32 %v943, 0.5
    %v948 = vtanh.pop %v947
    %v949 = vmul.f32 %v948, 0.5
    %v950 = vadd.f32 %v949, 0.5
    %v951 = vmul.f32 %v944, 0.5
    %v952 = vtanh.pop %v951
    %v953 = vmul.f32 %v952, 0.5
    %v954 = vadd.f32 %v953, 0.5
    %v955 = vtanh.pop %v945
    %v956 = vmul.f32 %v946, 0.5
    %v957 = vtanh.pop %v956
    %v958 = vmul.f32 %v957, 0.5
    %v959 = vadd.f32 %v958, 0.5
    %v960 = vmul.f32 %v954, %v805
    %v961 = vmul.f32 %v950, %v955
    %v962 = vadd.f32 %v960, %v961
    %v963 = vtanh.pop %v962
    %v964 = vmul.f32 %v959, %v963
    %s965 = scalar_lea.vmem [#allocation2], 8
    %966 = vst [vmem:[%s965] sm:$0xff] %v964
    %s967 = scalar_lea.vmem %s0, 8
    %v968 = vld [vmem:[%s967] sm:$0xf]
    %v969 = vunpack.c.l.bf16 %v968
    %v970 = vpack.c.bf16 %v964, %v964
    %971 = vmatpush.bf16.msra.mxu0 %v443
    %972 = vmatpush.bf16.msra.mxu0 %v438
    %973 = vmatpush.bf16.msra.mxu0 %v433
    %974 = vmatpush.bf16.msra.mxu0 %v428
    %975 = vmatpush.bf16.msra.mxu0 %v423
    %976 = vmatpush.bf16.msra.mxu0 %v418
    %977 = vmatpush.bf16.msra.mxu0 %v413
    %978 = vmatpush.bf16.msra.mxu0 %v408
    %979 = vmatmul.bf16.gmra.mxu0 %v970
    %v980 = vpop.f32.mrf.mxu0
    %v981 = vadd.f32 0.0, %v980
    %v982 = vpop.f32.mrf.mxu0
    %983 = vdwg.mxu0
    %984 = vmatpush.bf16.msra.mxu0 %v444
    %985 = vmatpush.bf16.msra.mxu0 %v439
    %986 = vmatpush.bf16.msra.mxu0 %v434
    %987 = vmatpush.bf16.msra.mxu0 %v429
    %988 = vmatpush.bf16.msra.mxu0 %v424
    %989 = vmatpush.bf16.msra.mxu0 %v419
    %990 = vmatpush.bf16.msra.mxu0 %v414
    %991 = vmatpush.bf16.msra.mxu0 %v409
    %992 = vmatmul.bf16.gmra.mxu0 %v970
    %v993 = vpop.f32.mrf.mxu0
    %v994 = vadd.f32 0.0, %v993
    %v995 = vpop.f32.mrf.mxu0
    %996 = vdwg.mxu0
    %997 = vmatpush.bf16.msra.mxu0 %v445
    %998 = vmatpush.bf16.msra.mxu0 %v440
    %999 = vmatpush.bf16.msra.mxu0 %v435
    %1000 = vmatpush.bf16.msra.mxu0 %v430
    %1001 = vmatpush.bf16.msra.mxu0 %v425
    %1002 = vmatpush.bf16.msra.mxu0 %v420
    %1003 = vmatpush.bf16.msra.mxu0 %v415
    %1004 = vmatpush.bf16.msra.mxu0 %v410
    %1005 = vmatmul.bf16.gmra.mxu0 %v970
    %v1006 = vpop.f32.mrf.mxu0
    %v1007 = vadd.f32 0.0, %v1006
    %v1008 = vpop.f32.mrf.mxu0
    %1009 = vdwg.mxu0
    %1010 = vmatpush.bf16.msra.mxu0 %v446
    %1011 = vmatpush.bf16.msra.mxu0 %v441
    %1012 = vmatpush.bf16.msra.mxu0 %v436
    %1013 = vmatpush.bf16.msra.mxu0 %v431
    %1014 = vmatpush.bf16.msra.mxu0 %v426
    %1015 = vmatpush.bf16.msra.mxu0 %v421
    %1016 = vmatpush.bf16.msra.mxu0 %v416
    %1017 = vmatpush.bf16.msra.mxu0 %v411
    %1018 = vmatmul.bf16.gmra.mxu0 %v970
    %v1019 = vpop.f32.mrf.mxu0
    %v1020 = vadd.f32 0.0, %v1019
    %v1021 = vpop.f32.mrf.mxu0
    %1022 = vdwg.mxu0
    %1023 = vmatpush.bf16.msra.mxu0 %v447
    %1024 = vmatpush.bf16.msra.mxu0 %v442
    %1025 = vmatpush.bf16.msra.mxu0 %v437
    %1026 = vmatpush.bf16.msra.mxu0 %v432
    %1027 = vmatpush.bf16.msra.mxu0 %v427
    %1028 = vmatpush.bf16.msra.mxu0 %v422
    %1029 = vmatpush.bf16.msra.mxu0 %v417
    %1030 = vmatpush.bf16.msra.mxu0 %v412
    %1031 = vmatmul.bf16.gmra.mxu0 %v970
    %v1032 = vpop.f32.mrf.mxu0
    %v1033 = vadd.f32 0.0, %v1032
    %v1034 = vpop.f32.mrf.mxu0
    %1035 = vdwg.mxu0
    %s1036 = scalar_lea.vmem [#allocation3], 16
    %v1037 = vld [vmem:[%s1036] sm:$0xff]
    %v1038 = vadd.f32 %v981, %v1037
    %v1039 = vmul.f32 %v1038, 0.5
    %v1040 = vtanh.pop %v1039
    %v1041 = vmul.f32 %v1040, 0.5
    %v1042 = vadd.f32 %v1041, 0.5
    %v1043 = vmul.f32 %v1042, %v969
    %v1044 = vpack.c.bf16 %v1043, %v1043
    %1045 = vmatpush.bf16.msra.mxu0 %v685
    %1046 = vmatpush.bf16.msra.mxu0 %v681
    %1047 = vmatpush.bf16.msra.mxu0 %v677
    %1048 = vmatpush.bf16.msra.mxu0 %v673
    %1049 = vmatpush.bf16.msra.mxu0 %v669
    %1050 = vmatpush.bf16.msra.mxu0 %v665
    %1051 = vmatpush.bf16.msra.mxu0 %v661
    %1052 = vmatpush.bf16.msra.mxu0 %v657
    %1053 = vmatmul.bf16.gmra.mxu0 %v1044
    %v1054 = vpop.f32.mrf.mxu0
    %v1055 = vadd.f32 0.0, %v1054
    %v1056 = vpop.f32.mrf.mxu0
    %1057 = vdwg.mxu0
    %1058 = vmatpush.bf16.msra.mxu0 %v686
    %1059 = vmatpush.bf16.msra.mxu0 %v682
    %1060 = vmatpush.bf16.msra.mxu0 %v678
    %1061 = vmatpush.bf16.msra.mxu0 %v674
    %1062 = vmatpush.bf16.msra.mxu0 %v670
    %1063 = vmatpush.bf16.msra.mxu0 %v666
    %1064 = vmatpush.bf16.msra.mxu0 %v662
    %1065 = vmatpush.bf16.msra.mxu0 %v658
    %1066 = vmatmul.bf16.gmra.mxu0 %v1044
    %v1067 = vpop.f32.mrf.mxu0
    %v1068 = vadd.f32 0.0, %v1067
    %v1069 = vpop.f32.mrf.mxu0
    %1070 = vdwg.mxu0
    %1071 = vmatpush.bf16.msra.mxu0 %v687
    %1072 = vmatpush.bf16.msra.mxu0 %v683
    %1073 = vmatpush.bf16.msra.mxu0 %v679
    %1074 = vmatpush.bf16.msra.mxu0 %v675
    %1075 = vmatpush.bf16.msra.mxu0 %v671
    %1076 = vmatpush.bf16.msra.mxu0 %v667
    %1077 = vmatpush.bf16.msra.mxu0 %v663
    %1078 = vmatpush.bf16.msra.mxu0 %v659
    %1079 = vmatmul.bf16.gmra.mxu0 %v1044
    %v1080 = vpop.f32.mrf.mxu0
    %v1081 = vadd.f32 0.0, %v1080
    %v1082 = vpop.f32.mrf.mxu0
    %1083 = vdwg.mxu0
    %1084 = vmatpush.bf16.msra.mxu0 %v688
    %1085 = vmatpush.bf16.msra.mxu0 %v684
    %1086 = vmatpush.bf16.msra.mxu0 %v680
    %1087 = vmatpush.bf16.msra.mxu0 %v676
    %1088 = vmatpush.bf16.msra.mxu0 %v672
    %1089 = vmatpush.bf16.msra.mxu0 %v668
    %1090 = vmatpush.bf16.msra.mxu0 %v664
    %1091 = vmatpush.bf16.msra.mxu0 %v660
    %1092 = vmatmul.bf16.gmra.mxu0 %v1044
    %v1093 = vpop.f32.mrf.mxu0
    %v1094 = vadd.f32 0.0, %v1093
    %v1095 = vpop.f32.mrf.mxu0
    %1096 = vdwg.mxu0
    %v1097 = vadd.f32 %v994, %v1055
    %v1098 = vadd.f32 %v1007, %v1068
    %v1099 = vadd.f32 %v1020, %v1081
    %v1100 = vadd.f32 %v1033, %v1094
    %v1101 = vadd.f32 %v1097, %v778
    %v1102 = vadd.f32 %v1098, %v779
    %v1103 = vadd.f32 %v1099, %v780
    %v1104 = vadd.f32 %v1100, %v781
    %v1105 = vmul.f32 %v1101, 0.5
    %v1106 = vtanh.pop %v1105
    %v1107 = vmul.f32 %v1106, 0.5
    %v1108 = vadd.f32 %v1107, 0.5
    %v1109 = vmul.f32 %v1102, 0.5
    %v1110 = vtanh.pop %v1109
    %v1111 = vmul.f32 %v1110, 0.5
    %v1112 = vadd.f32 %v1111, 0.5
    %v1113 = vtanh.pop %v1103
    %v1114 = vmul.f32 %v1104, 0.5
    %v1115 = vtanh.pop %v1114
    %v1116 = vmul.f32 %v1115, 0.5
    %v1117 = vadd.f32 %v1116, 0.5
    %v1118 = vmul.f32 %v1112, %v962
    %v1119 = vmul.f32 %v1108, %v1113
    %v1120 = vadd.f32 %v1118, %v1119
    %v1121 = vtanh.pop %v1120
    %v1122 = vmul.f32 %v1117, %v1121
    %s1123 = scalar_lea.vmem [#allocation2], 16
    %1124 = vst [vmem:[%s1123] sm:$0xff] %v1122
    %s1125 = scalar_lea.vmem %s0, 12
    %v1126 = vld [vmem:[%s1125] sm:$0xf]
    %v1127 = vunpack.c.l.bf16 %v1126
    %v1128 = vpack.c.bf16 %v1122, %v1122
    %1129 = vmatpush.bf16.msra.mxu0 %v443
    %1130 = vmatpush.bf16.msra.mxu0 %v438
    %1131 = vmatpush.bf16.msra.mxu0 %v433
    %1132 = vmatpush.bf16.msra.mxu0 %v428
    %1133 = vmatpush.bf16.msra.mxu0 %v423
    %1134 = vmatpush.bf16.msra.mxu0 %v418
    %1135 = vmatpush.bf16.msra.mxu0 %v413
    %1136 = vmatpush.bf16.msra.mxu0 %v408
    %1137 = vmatmul.bf16.gmra.mxu0 %v1128
    %v1138 = vpop.f32.mrf.mxu0
    %v1139 = vadd.f32 0.0, %v1138
    %v1140 = vpop.f32.mrf.mxu0
    %1141 = vdwg.mxu0
    %1142 = vmatpush.bf16.msra.mxu0 %v444
    %1143 = vmatpush.bf16.msra.mxu0 %v439
    %1144 = vmatpush.bf16.msra.mxu0 %v434
    %1145 = vmatpush.bf16.msra.mxu0 %v429
    %1146 = vmatpush.bf16.msra.mxu0 %v424
    %1147 = vmatpush.bf16.msra.mxu0 %v419
    %1148 = vmatpush.bf16.msra.mxu0 %v414
    %1149 = vmatpush.bf16.msra.mxu0 %v409
    %1150 = vmatmul.bf16.gmra.mxu0 %v1128
    %v1151 = vpop.f32.mrf.mxu0
    %v1152 = vadd.f32 0.0, %v1151
    %v1153 = vpop.f32.mrf.mxu0
    %1154 = vdwg.mxu0
    %1155 = vmatpush.bf16.msra.mxu0 %v445
    %1156 = vmatpush.bf16.msra.mxu0 %v440
    %1157 = vmatpush.bf16.msra.mxu0 %v435
    %1158 = vmatpush.bf16.msra.mxu0 %v430
    %1159 = vmatpush.bf16.msra.mxu0 %v425
    %1160 = vmatpush.bf16.msra.mxu0 %v420
    %1161 = vmatpush.bf16.msra.mxu0 %v415
    %1162 = vmatpush.bf16.msra.mxu0 %v410
    %1163 = vmatmul.bf16.gmra.mxu0 %v1128
    %v1164 = vpop.f32.mrf.mxu0
    %v1165 = vadd.f32 0.0, %v1164
    %v1166 = vpop.f32.mrf.mxu0
    %1167 = vdwg.mxu0
    %1168 = vmatpush.bf16.msra.mxu0 %v446
    %1169 = vmatpush.bf16.msra.mxu0 %v441
    %1170 = vmatpush.bf16.msra.mxu0 %v436
    %1171 = vmatpush.bf16.msra.mxu0 %v431
    %1172 = vmatpush.bf16.msra.mxu0 %v426
    %1173 = vmatpush.bf16.msra.mxu0 %v421
    %1174 = vmatpush.bf16.msra.mxu0 %v416
    %1175 = vmatpush.bf16.msra.mxu0 %v411
    %1176 = vmatmul.bf16.gmra.mxu0 %v1128
    %v1177 = vpop.f32.mrf.mxu0
    %v1178 = vadd.f32 0.0, %v1177
    %v1179 = vpop.f32.mrf.mxu0
    %1180 = vdwg.mxu0
    %1181 = vmatpush.bf16.msra.mxu0 %v447
    %1182 = vmatpush.bf16.msra.mxu0 %v442
    %1183 = vmatpush.bf16.msra.mxu0 %v437
    %1184 = vmatpush.bf16.msra.mxu0 %v432
    %1185 = vmatpush.bf16.msra.mxu0 %v427
    %1186 = vmatpush.bf16.msra.mxu0 %v422
    %1187 = vmatpush.bf16.msra.mxu0 %v417
    %1188 = vmatpush.bf16.msra.mxu0 %v412
    %1189 = vmatmul.bf16.gmra.mxu0 %v1128
    %v1190 = vpop.f32.mrf.mxu0
    %v1191 = vadd.f32 0.0, %v1190
    %v1192 = vpop.f32.mrf.mxu0
    %1193 = vdwg.mxu0
    %s1194 = scalar_lea.vmem [#allocation3], 24
    %v1195 = vld [vmem:[%s1194] sm:$0xff]
    %v1196 = vadd.f32 %v1139, %v1195
    %v1197 = vmul.f32 %v1196, 0.5
    %v1198 = vtanh.pop %v1197
    %v1199 = vmul.f32 %v1198, 0.5
    %v1200 = vadd.f32 %v1199, 0.5
    %v1201 = vmul.f32 %v1200, %v1127
    %v1202 = vpack.c.bf16 %v1201, %v1201
    %1203 = vmatpush.bf16.msra.mxu0 %v685
    %1204 = vmatpush.bf16.msra.mxu0 %v681
    %1205 = vmatpush.bf16.msra.mxu0 %v677
    %1206 = vmatpush.bf16.msra.mxu0 %v673
    %1207 = vmatpush.bf16.msra.mxu0 %v669
    %1208 = vmatpush.bf16.msra.mxu0 %v665
    %1209 = vmatpush.bf16.msra.mxu0 %v661
    %1210 = vmatpush.bf16.msra.mxu0 %v657
    %1211 = vmatmul.bf16.gmra.mxu0 %v1202
    %v1212 = vpop.f32.mrf.mxu0
    %v1213 = vadd.f32 0.0, %v1212
    %v1214 = vpop.f32.mrf.mxu0
    %1215 = vdwg.mxu0
    %1216 = vmatpush.bf16.msra.mxu0 %v686
    %1217 = vmatpush.bf16.msra.mxu0 %v682
    %1218 = vmatpush.bf16.msra.mxu0 %v678
    %1219 = vmatpush.bf16.msra.mxu0 %v674
    %1220 = vmatpush.bf16.msra.mxu0 %v670
    %1221 = vmatpush.bf16.msra.mxu0 %v666
    %1222 = vmatpush.bf16.msra.mxu0 %v662
    %1223 = vmatpush.bf16.msra.mxu0 %v658
    %1224 = vmatmul.bf16.gmra.mxu0 %v1202
    %v1225 = vpop.f32.mrf.mxu0
    %v1226 = vadd.f32 0.0, %v1225
    %v1227 = vpop.f32.mrf.mxu0
    %1228 = vdwg.mxu0
    %1229 = vmatpush.bf16.msra.mxu0 %v687
    %1230 = vmatpush.bf16.msra.mxu0 %v683
    %1231 = vmatpush.bf16.msra.mxu0 %v679
    %1232 = vmatpush.bf16.msra.mxu0 %v675
    %1233 = vmatpush.bf16.msra.mxu0 %v671
    %1234 = vmatpush.bf16.msra.mxu0 %v667
    %1235 = vmatpush.bf16.msra.mxu0 %v663
    %1236 = vmatpush.bf16.msra.mxu0 %v659
    %1237 = vmatmul.bf16.gmra.mxu0 %v1202
    %v1238 = vpop.f32.mrf.mxu0
    %v1239 = vadd.f32 0.0, %v1238
    %v1240 = vpop.f32.mrf.mxu0
    %1241 = vdwg.mxu0
    %1242 = vmatpush.bf16.msra.mxu0 %v688
    %1243 = vmatpush.bf16.msra.mxu0 %v684
    %1244 = vmatpush.bf16.msra.mxu0 %v680
    %1245 = vmatpush.bf16.msra.mxu0 %v676
    %1246 = vmatpush.bf16.msra.mxu0 %v672
    %1247 = vmatpush.bf16.msra.mxu0 %v668
    %1248 = vmatpush.bf16.msra.mxu0 %v664
    %1249 = vmatpush.bf16.msra.mxu0 %v660
    %1250 = vmatmul.bf16.gmra.mxu0 %v1202
    %v1251 = vpop.f32.mrf.mxu0
    %v1252 = vadd.f32 0.0, %v1251
    %v1253 = vpop.f32.mrf.mxu0
    %1254 = vdwg.mxu0
    %v1255 = vadd.f32 %v1152, %v1213
    %v1256 = vadd.f32 %v1165, %v1226
    %v1257 = vadd.f32 %v1178, %v1239
    %v1258 = vadd.f32 %v1191, %v1252
    %v1259 = vadd.f32 %v1255, %v778
    %v1260 = vadd.f32 %v1256, %v779
    %v1261 = vadd.f32 %v1257, %v780
    %v1262 = vadd.f32 %v1258, %v781
    %v1263 = vmul.f32 %v1259, 0.5
    %v1264 = vtanh.pop %v1263
    %v1265 = vmul.f32 %v1264, 0.5
    %v1266 = vadd.f32 %v1265, 0.5
    %v1267 = vmul.f32 %v1260, 0.5
    %v1268 = vtanh.pop %v1267
    %v1269 = vmul.f32 %v1268, 0.5
    %v1270 = vadd.f32 %v1269, 0.5
    %v1271 = vtanh.pop %v1261
    %v1272 = vmul.f32 %v1262, 0.5
    %v1273 = vtanh.pop %v1272
    %v1274 = vmul.f32 %v1273, 0.5
    %v1275 = vadd.f32 %v1274, 0.5
    %v1276 = vmul.f32 %v1270, %v1120
    %v1277 = vmul.f32 %v1266, %v1271
    %v1278 = vadd.f32 %v1276, %v1277
    %v1279 = vtanh.pop %v1278
    %v1280 = vmul.f32 %v1275, %v1279
    %s1281 = scalar_lea.vmem [#allocation2], 24
    %1282 = vst [vmem:[%s1281] sm:$0xff] %v1280
    %s1283 = scalar_lea.vmem %s0, 16
    %v1284 = vld [vmem:[%s1283] sm:$0xf]
    %v1285 = vunpack.c.l.bf16 %v1284
    %v1286 = vpack.c.bf16 %v1280, %v1280
    %1287 = vmatpush.bf16.msra.mxu0 %v443
    %1288 = vmatpush.bf16.msra.mxu0 %v438
    %1289 = vmatpush.bf16.msra.mxu0 %v433
    %1290 = vmatpush.bf16.msra.mxu0 %v428
    %1291 = vmatpush.bf16.msra.mxu0 %v423
    %1292 = vmatpush.bf16.msra.mxu0 %v418
    %1293 = vmatpush.bf16.msra.mxu0 %v413
    %1294 = vmatpush.bf16.msra.mxu0 %v408
    %1295 = vmatmul.bf16.gmra.mxu0 %v1286
    %v1296 = vpop.f32.mrf.mxu0
    %v1297 = vadd.f32 0.0, %v1296
    %v1298 = vpop.f32.mrf.mxu0
    %1299 = vdwg.mxu0
    %1300 = vmatpush.bf16.msra.mxu0 %v444
    %1301 = vmatpush.bf16.msra.mxu0 %v439
    %1302 = vmatpush.bf16.msra.mxu0 %v434
    %1303 = vmatpush.bf16.msra.mxu0 %v429
    %1304 = vmatpush.bf16.msra.mxu0 %v424
    %1305 = vmatpush.bf16.msra.mxu0 %v419
    %1306 = vmatpush.bf16.msra.mxu0 %v414
    %1307 = vmatpush.bf16.msra.mxu0 %v409
    %1308 = vmatmul.bf16.gmra.mxu0 %v1286
    %v1309 = vpop.f32.mrf.mxu0
    %v1310 = vadd.f32 0.0, %v1309
    %v1311 = vpop.f32.mrf.mxu0
    %1312 = vdwg.mxu0
    %1313 = vmatpush.bf16.msra.mxu0 %v445
    %1314 = vmatpush.bf16.msra.mxu0 %v440
    %1315 = vmatpush.bf16.msra.mxu0 %v435
    %1316 = vmatpush.bf16.msra.mxu0 %v430
    %1317 = vmatpush.bf16.msra.mxu0 %v425
    %1318 = vmatpush.bf16.msra.mxu0 %v420
    %1319 = vmatpush.bf16.msra.mxu0 %v415
    %1320 = vmatpush.bf16.msra.mxu0 %v410
    %1321 = vmatmul.bf16.gmra.mxu0 %v1286
    %v1322 = vpop.f32.mrf.mxu0
    %v1323 = vadd.f32 0.0, %v1322
    %v1324 = vpop.f32.mrf.mxu0
    %1325 = vdwg.mxu0
    %1326 = vmatpush.bf16.msra.mxu0 %v446
    %1327 = vmatpush.bf16.msra.mxu0 %v441
    %1328 = vmatpush.bf16.msra.mxu0 %v436
    %1329 = vmatpush.bf16.msra.mxu0 %v431
    %1330 = vmatpush.bf16.msra.mxu0 %v426
    %1331 = vmatpush.bf16.msra.mxu0 %v421
    %1332 = vmatpush.bf16.msra.mxu0 %v416
    %1333 = vmatpush.bf16.msra.mxu0 %v411
    %1334 = vmatmul.bf16.gmra.mxu0 %v1286
    %v1335 = vpop.f32.mrf.mxu0
    %v1336 = vadd.f32 0.0, %v1335
    %v1337 = vpop.f32.mrf.mxu0
    %1338 = vdwg.mxu0
    %1339 = vmatpush.bf16.msra.mxu0 %v447
    %1340 = vmatpush.bf16.msra.mxu0 %v442
    %1341 = vmatpush.bf16.msra.mxu0 %v437
    %1342 = vmatpush.bf16.msra.mxu0 %v432
    %1343 = vmatpush.bf16.msra.mxu0 %v427
    %1344 = vmatpush.bf16.msra.mxu0 %v422
    %1345 = vmatpush.bf16.msra.mxu0 %v417
    %1346 = vmatpush.bf16.msra.mxu0 %v412
    %1347 = vmatmul.bf16.gmra.mxu0 %v1286
    %v1348 = vpop.f32.mrf.mxu0
    %v1349 = vadd.f32 0.0, %v1348
    %v1350 = vpop.f32.mrf.mxu0
    %1351 = vdwg.mxu0
    %s1352 = scalar_lea.vmem [#allocation3], 32
    %v1353 = vld [vmem:[%s1352] sm:$0xff]
    %v1354 = vadd.f32 %v1297, %v1353
    %v1355 = vmul.f32 %v1354, 0.5
    %v1356 = vtanh.pop %v1355
    %v1357 = vmul.f32 %v1356, 0.5
    %v1358 = vadd.f32 %v1357, 0.5
    %v1359 = vmul.f32 %v1358, %v1285
    %v1360 = vpack.c.bf16 %v1359, %v1359
    %1361 = vmatpush.bf16.msra.mxu0 %v685
    %1362 = vmatpush.bf16.msra.mxu0 %v681
    %1363 = vmatpush.bf16.msra.mxu0 %v677
    %1364 = vmatpush.bf16.msra.mxu0 %v673
    %1365 = vmatpush.bf16.msra.mxu0 %v669
    %1366 = vmatpush.bf16.msra.mxu0 %v665
    %1367 = vmatpush.bf16.msra.mxu0 %v661
    %1368 = vmatpush.bf16.msra.mxu0 %v657
    %1369 = vmatmul.bf16.gmra.mxu0 %v1360
    %v1370 = vpop.f32.mrf.mxu0
    %v1371 = vadd.f32 0.0, %v1370
    %v1372 = vpop.f32.mrf.mxu0
    %1373 = vdwg.mxu0
    %1374 = vmatpush.bf16.msra.mxu0 %v686
    %1375 = vmatpush.bf16.msra.mxu0 %v682
    %1376 = vmatpush.bf16.msra.mxu0 %v678
    %1377 = vmatpush.bf16.msra.mxu0 %v674
    %1378 = vmatpush.bf16.msra.mxu0 %v670
    %1379 = vmatpush.bf16.msra.mxu0 %v666
    %1380 = vmatpush.bf16.msra.mxu0 %v662
    %1381 = vmatpush.bf16.msra.mxu0 %v658
    %1382 = vmatmul.bf16.gmra.mxu0 %v1360
    %v1383 = vpop.f32.mrf.mxu0
    %v1384 = vadd.f32 0.0, %v1383
    %v1385 = vpop.f32.mrf.mxu0
    %1386 = vdwg.mxu0
    %1387 = vmatpush.bf16.msra.mxu0 %v687
    %1388 = vmatpush.bf16.msra.mxu0 %v683
    %1389 = vmatpush.bf16.msra.mxu0 %v679
    %1390 = vmatpush.bf16.msra.mxu0 %v675
    %1391 = vmatpush.bf16.msra.mxu0 %v671
    %1392 = vmatpush.bf16.msra.mxu0 %v667
    %1393 = vmatpush.bf16.msra.mxu0 %v663
    %1394 = vmatpush.bf16.msra.mxu0 %v659
    %1395 = vmatmul.bf16.gmra.mxu0 %v1360
    %v1396 = vpop.f32.mrf.mxu0
    %v1397 = vadd.f32 0.0, %v1396
    %v1398 = vpop.f32.mrf.mxu0
    %1399 = vdwg.mxu0
    %1400 = vmatpush.bf16.msra.mxu0 %v688
    %1401 = vmatpush.bf16.msra.mxu0 %v684
    %1402 = vmatpush.bf16.msra.mxu0 %v680
    %1403 = vmatpush.bf16.msra.mxu0 %v676
    %1404 = vmatpush.bf16.msra.mxu0 %v672
    %1405 = vmatpush.bf16.msra.mxu0 %v668
    %1406 = vmatpush.bf16.msra.mxu0 %v664
    %1407 = vmatpush.bf16.msra.mxu0 %v660
    %1408 = vmatmul.bf16.gmra.mxu0 %v1360
    %v1409 = vpop.f32.mrf.mxu0
    %v1410 = vadd.f32 0.0, %v1409
    %v1411 = vpop.f32.mrf.mxu0
    %1412 = vdwg.mxu0
    %v1413 = vadd.f32 %v1310, %v1371
    %v1414 = vadd.f32 %v1323, %v1384
    %v1415 = vadd.f32 %v1336, %v1397
    %v1416 = vadd.f32 %v1349, %v1410
    %v1417 = vadd.f32 %v1413, %v778
    %v1418 = vadd.f32 %v1414, %v779
    %v1419 = vadd.f32 %v1415, %v780
    %v1420 = vadd.f32 %v1416, %v781
    %v1421 = vmul.f32 %v1417, 0.5
    %v1422 = vtanh.pop %v1421
    %v1423 = vmul.f32 %v1422, 0.5
    %v1424 = vadd.f32 %v1423, 0.5
    %v1425 = vmul.f32 %v1418, 0.5
    %v1426 = vtanh.pop %v1425
    %v1427 = vmul.f32 %v1426, 0.5
    %v1428 = vadd.f32 %v1427, 0.5
    %v1429 = vtanh.pop %v1419
    %v1430 = vmul.f32 %v1420, 0.5
    %v1431 = vtanh.pop %v1430
    %v1432 = vmul.f32 %v1431, 0.5
    %v1433 = vadd.f32 %v1432, 0.5
    %v1434 = vmul.f32 %v1428, %v1278
    %v1435 = vmul.f32 %v1424, %v1429
    %v1436 = vadd.f32 %v1434, %v1435
    %v1437 = vtanh.pop %v1436
    %v1438 = vmul.f32 %v1433, %v1437
    %s1439 = scalar_lea.vmem [#allocation2], 32
    %1440 = vst [vmem:[%s1439] sm:$0xff] %v1438
    %s1441 = scalar_lea.vmem %s0, 20
    %v1442 = vld [vmem:[%s1441] sm:$0xf]
    %v1443 = vunpack.c.l.bf16 %v1442
    %v1444 = vpack.c.bf16 %v1438, %v1438
    %1445 = vmatpush.bf16.msra.mxu0 %v443
    %1446 = vmatpush.bf16.msra.mxu0 %v438
    %1447 = vmatpush.bf16.msra.mxu0 %v433
    %1448 = vmatpush.bf16.msra.mxu0 %v428
    %1449 = vmatpush.bf16.msra.mxu0 %v423
    %1450 = vmatpush.bf16.msra.mxu0 %v418
    %1451 = vmatpush.bf16.msra.mxu0 %v413
    %1452 = vmatpush.bf16.msra.mxu0 %v408
    %1453 = vmatmul.bf16.gmra.mxu0 %v1444
    %v1454 = vpop.f32.mrf.mxu0
    %v1455 = vadd.f32 0.0, %v1454
    %v1456 = vpop.f32.mrf.mxu0
    %1457 = vdwg.mxu0
    %1458 = vmatpush.bf16.msra.mxu0 %v444
    %1459 = vmatpush.bf16.msra.mxu0 %v439
    %1460 = vmatpush.bf16.msra.mxu0 %v434
    %1461 = vmatpush.bf16.msra.mxu0 %v429
    %1462 = vmatpush.bf16.msra.mxu0 %v424
    %1463 = vmatpush.bf16.msra.mxu0 %v419
    %1464 = vmatpush.bf16.msra.mxu0 %v414
    %1465 = vmatpush.bf16.msra.mxu0 %v409
    %1466 = vmatmul.bf16.gmra.mxu0 %v1444
    %v1467 = vpop.f32.mrf.mxu0
    %v1468 = vadd.f32 0.0, %v1467
    %v1469 = vpop.f32.mrf.mxu0
    %1470 = vdwg.mxu0
    %1471 = vmatpush.bf16.msra.mxu0 %v445
    %1472 = vmatpush.bf16.msra.mxu0 %v440
    %1473 = vmatpush.bf16.msra.mxu0 %v435
    %1474 = vmatpush.bf16.msra.mxu0 %v430
    %1475 = vmatpush.bf16.msra.mxu0 %v425
    %1476 = vmatpush.bf16.msra.mxu0 %v420
    %1477 = vmatpush.bf16.msra.mxu0 %v415
    %1478 = vmatpush.bf16.msra.mxu0 %v410
    %1479 = vmatmul.bf16.gmra.mxu0 %v1444
    %v1480 = vpop.f32.mrf.mxu0
    %v1481 = vadd.f32 0.0, %v1480
    %v1482 = vpop.f32.mrf.mxu0
    %1483 = vdwg.mxu0
    %1484 = vmatpush.bf16.msra.mxu0 %v446
    %1485 = vmatpush.bf16.msra.mxu0 %v441
    %1486 = vmatpush.bf16.msra.mxu0 %v436
    %1487 = vmatpush.bf16.msra.mxu0 %v431
    %1488 = vmatpush.bf16.msra.mxu0 %v426
    %1489 = vmatpush.bf16.msra.mxu0 %v421
    %1490 = vmatpush.bf16.msra.mxu0 %v416
    %1491 = vmatpush.bf16.msra.mxu0 %v411
    %1492 = vmatmul.bf16.gmra.mxu0 %v1444
    %v1493 = vpop.f32.mrf.mxu0
    %v1494 = vadd.f32 0.0, %v1493
    %v1495 = vpop.f32.mrf.mxu0
    %1496 = vdwg.mxu0
    %1497 = vmatpush.bf16.msra.mxu0 %v447
    %1498 = vmatpush.bf16.msra.mxu0 %v442
    %1499 = vmatpush.bf16.msra.mxu0 %v437
    %1500 = vmatpush.bf16.msra.mxu0 %v432
    %1501 = vmatpush.bf16.msra.mxu0 %v427
    %1502 = vmatpush.bf16.msra.mxu0 %v422
    %1503 = vmatpush.bf16.msra.mxu0 %v417
    %1504 = vmatpush.bf16.msra.mxu0 %v412
    %1505 = vmatmul.bf16.gmra.mxu0 %v1444
    %v1506 = vpop.f32.mrf.mxu0
    %v1507 = vadd.f32 0.0, %v1506
    %v1508 = vpop.f32.mrf.mxu0
    %1509 = vdwg.mxu0
    %s1510 = scalar_lea.vmem [#allocation3], 40
    %v1511 = vld [vmem:[%s1510] sm:$0xff]
    %v1512 = vadd.f32 %v1455, %v1511
    %v1513 = vmul.f32 %v1512, 0.5
    %v1514 = vtanh.pop %v1513
    %v1515 = vmul.f32 %v1514, 0.5
    %v1516 = vadd.f32 %v1515, 0.5
    %v1517 = vmul.f32 %v1516, %v1443
    %v1518 = vpack.c.bf16 %v1517, %v1517
    %1519 = vmatpush.bf16.msra.mxu0 %v685
    %1520 = vmatpush.bf16.msra.mxu0 %v681
    %1521 = vmatpush.bf16.msra.mxu0 %v677
    %1522 = vmatpush.bf16.msra.mxu0 %v673
    %1523 = vmatpush.bf16.msra.mxu0 %v669
    %1524 = vmatpush.bf16.msra.mxu0 %v665
    %1525 = vmatpush.bf16.msra.mxu0 %v661
    %1526 = vmatpush.bf16.msra.mxu0 %v657
    %1527 = vmatmul.bf16.gmra.mxu0 %v1518
    %v1528 = vpop.f32.mrf.mxu0
    %v1529 = vadd.f32 0.0, %v1528
    %v1530 = vpop.f32.mrf.mxu0
    %1531 = vdwg.mxu0
    %1532 = vmatpush.bf16.msra.mxu0 %v686
    %1533 = vmatpush.bf16.msra.mxu0 %v682
    %1534 = vmatpush.bf16.msra.mxu0 %v678
    %1535 = vmatpush.bf16.msra.mxu0 %v674
    %1536 = vmatpush.bf16.msra.mxu0 %v670
    %1537 = vmatpush.bf16.msra.mxu0 %v666
    %1538 = vmatpush.bf16.msra.mxu0 %v662
    %1539 = vmatpush.bf16.msra.mxu0 %v658
    %1540 = vmatmul.bf16.gmra.mxu0 %v1518
    %v1541 = vpop.f32.mrf.mxu0
    %v1542 = vadd.f32 0.0, %v1541
    %v1543 = vpop.f32.mrf.mxu0
    %1544 = vdwg.mxu0
    %1545 = vmatpush.bf16.msra.mxu0 %v687
    %1546 = vmatpush.bf16.msra.mxu0 %v683
    %1547 = vmatpush.bf16.msra.mxu0 %v679
    %1548 = vmatpush.bf16.msra.mxu0 %v675
    %1549 = vmatpush.bf16.msra.mxu0 %v671
    %1550 = vmatpush.bf16.msra.mxu0 %v667
    %1551 = vmatpush.bf16.msra.mxu0 %v663
    %1552 = vmatpush.bf16.msra.mxu0 %v659
    %1553 = vmatmul.bf16.gmra.mxu0 %v1518
    %v1554 = vpop.f32.mrf.mxu0
    %v1555 = vadd.f32 0.0, %v1554
    %v1556 = vpop.f32.mrf.mxu0
    %1557 = vdwg.mxu0
    %1558 = vmatpush.bf16.msra.mxu0 %v688
    %1559 = vmatpush.bf16.msra.mxu0 %v684
    %1560 = vmatpush.bf16.msra.mxu0 %v680
    %1561 = vmatpush.bf16.msra.mxu0 %v676
    %1562 = vmatpush.bf16.msra.mxu0 %v672
    %1563 = vmatpush.bf16.msra.mxu0 %v668
    %1564 = vmatpush.bf16.msra.mxu0 %v664
    %1565 = vmatpush.bf16.msra.mxu0 %v660
    %1566 = vmatmul.bf16.gmra.mxu0 %v1518
    %v1567 = vpop.f32.mrf.mxu0
    %v1568 = vadd.f32 0.0, %v1567
    %v1569 = vpop.f32.mrf.mxu0
    %1570 = vdwg.mxu0
    %v1571 = vadd.f32 %v1468, %v1529
    %v1572 = vadd.f32 %v1481, %v1542
    %v1573 = vadd.f32 %v1494, %v1555
    %v1574 = vadd.f32 %v1507, %v1568
    %v1575 = vadd.f32 %v1571, %v778
    %v1576 = vadd.f32 %v1572, %v779
    %v1577 = vadd.f32 %v1573, %v780
    %v1578 = vadd.f32 %v1574, %v781
    %v1579 = vmul.f32 %v1575, 0.5
    %v1580 = vtanh.pop %v1579
    %v1581 = vmul.f32 %v1580, 0.5
    %v1582 = vadd.f32 %v1581, 0.5
    %v1583 = vmul.f32 %v1576, 0.5
    %v1584 = vtanh.pop %v1583
    %v1585 = vmul.f32 %v1584, 0.5
    %v1586 = vadd.f32 %v1585, 0.5
    %v1587 = vtanh.pop %v1577
    %v1588 = vmul.f32 %v1578, 0.5
    %v1589 = vtanh.pop %v1588
    %v1590 = vmul.f32 %v1589, 0.5
    %v1591 = vadd.f32 %v1590, 0.5
    %v1592 = vmul.f32 %v1586, %v1436
    %v1593 = vmul.f32 %v1582, %v1587
    %v1594 = vadd.f32 %v1592, %v1593
    %v1595 = vtanh.pop %v1594
    %v1596 = vmul.f32 %v1591, %v1595
    %s1597 = scalar_lea.vmem [#allocation2], 40
    %1598 = vst [vmem:[%s1597] sm:$0xff] %v1596
    %s1599 = scalar_lea.vmem %s0, 24
    %v1600 = vld [vmem:[%s1599] sm:$0xf]
    %v1601 = vunpack.c.l.bf16 %v1600
    %v1602 = vpack.c.bf16 %v1596, %v1596
    %1603 = vmatpush.bf16.msra.mxu0 %v443
    %1604 = vmatpush.bf16.msra.mxu0 %v438
    %1605 = vmatpush.bf16.msra.mxu0 %v433
    %1606 = vmatpush.bf16.msra.mxu0 %v428
    %1607 = vmatpush.bf16.msra.mxu0 %v423
    %1608 = vmatpush.bf16.msra.mxu0 %v418
    %1609 = vmatpush.bf16.msra.mxu0 %v413
    %1610 = vmatpush.bf16.msra.mxu0 %v408
    %1611 = vmatmul.bf16.gmra.mxu0 %v1602
    %v1612 = vpop.f32.mrf.mxu0
    %v1613 = vadd.f32 0.0, %v1612
    %v1614 = vpop.f32.mrf.mxu0
    %1615 = vdwg.mxu0
    %1616 = vmatpush.bf16.msra.mxu0 %v444
    %1617 = vmatpush.bf16.msra.mxu0 %v439
    %1618 = vmatpush.bf16.msra.mxu0 %v434
    %1619 = vmatpush.bf16.msra.mxu0 %v429
    %1620 = vmatpush.bf16.msra.mxu0 %v424
    %1621 = vmatpush.bf16.msra.mxu0 %v419
    %1622 = vmatpush.bf16.msra.mxu0 %v414
    %1623 = vmatpush.bf16.msra.mxu0 %v409
    %1624 = vmatmul.bf16.gmra.mxu0 %v1602
    %v1625 = vpop.f32.mrf.mxu0
    %v1626 = vadd.f32 0.0, %v1625
    %v1627 = vpop.f32.mrf.mxu0
    %1628 = vdwg.mxu0
    %1629 = vmatpush.bf16.msra.mxu0 %v445
    %1630 = vmatpush.bf16.msra.mxu0 %v440
    %1631 = vmatpush.bf16.msra.mxu0 %v435
    %1632 = vmatpush.bf16.msra.mxu0 %v430
    %1633 = vmatpush.bf16.msra.mxu0 %v425
    %1634 = vmatpush.bf16.msra.mxu0 %v420
    %1635 = vmatpush.bf16.msra.mxu0 %v415
    %1636 = vmatpush.bf16.msra.mxu0 %v410
    %1637 = vmatmul.bf16.gmra.mxu0 %v1602
    %v1638 = vpop.f32.mrf.mxu0
    %v1639 = vadd.f32 0.0, %v1638
    %v1640 = vpop.f32.mrf.mxu0
    %1641 = vdwg.mxu0
    %1642 = vmatpush.bf16.msra.mxu0 %v446
    %1643 = vmatpush.bf16.msra.mxu0 %v441
    %1644 = vmatpush.bf16.msra.mxu0 %v436
    %1645 = vmatpush.bf16.msra.mxu0 %v431
    %1646 = vmatpush.bf16.msra.mxu0 %v426
    %1647 = vmatpush.bf16.msra.mxu0 %v421
    %1648 = vmatpush.bf16.msra.mxu0 %v416
    %1649 = vmatpush.bf16.msra.mxu0 %v411
    %1650 = vmatmul.bf16.gmra.mxu0 %v1602
    %v1651 = vpop.f32.mrf.mxu0
    %v1652 = vadd.f32 0.0, %v1651
    %v1653 = vpop.f32.mrf.mxu0
    %1654 = vdwg.mxu0
    %1655 = vmatpush.bf16.msra.mxu0 %v447
    %1656 = vmatpush.bf16.msra.mxu0 %v442
    %1657 = vmatpush.bf16.msra.mxu0 %v437
    %1658 = vmatpush.bf16.msra.mxu0 %v432
    %1659 = vmatpush.bf16.msra.mxu0 %v427
    %1660 = vmatpush.bf16.msra.mxu0 %v422
    %1661 = vmatpush.bf16.msra.mxu0 %v417
    %1662 = vmatpush.bf16.msra.mxu0 %v412
    %1663 = vmatmul.bf16.gmra.mxu0 %v1602
    %v1664 = vpop.f32.mrf.mxu0
    %v1665 = vadd.f32 0.0, %v1664
    %v1666 = vpop.f32.mrf.mxu0
    %1667 = vdwg.mxu0
    %s1668 = scalar_lea.vmem [#allocation3], 48
    %v1669 = vld [vmem:[%s1668] sm:$0xff]
    %v1670 = vadd.f32 %v1613, %v1669
    %v1671 = vmul.f32 %v1670, 0.5
    %v1672 = vtanh.pop %v1671
    %v1673 = vmul.f32 %v1672, 0.5
    %v1674 = vadd.f32 %v1673, 0.5
    %v1675 = vmul.f32 %v1674, %v1601
    %v1676 = vpack.c.bf16 %v1675, %v1675
    %1677 = vmatpush.bf16.msra.mxu0 %v685
    %1678 = vmatpush.bf16.msra.mxu0 %v681
    %1679 = vmatpush.bf16.msra.mxu0 %v677
    %1680 = vmatpush.bf16.msra.mxu0 %v673
    %1681 = vmatpush.bf16.msra.mxu0 %v669
    %1682 = vmatpush.bf16.msra.mxu0 %v665
    %1683 = vmatpush.bf16.msra.mxu0 %v661
    %1684 = vmatpush.bf16.msra.mxu0 %v657
    %1685 = vmatmul.bf16.gmra.mxu0 %v1676
    %v1686 = vpop.f32.mrf.mxu0
    %v1687 = vadd.f32 0.0, %v1686
    %v1688 = vpop.f32.mrf.mxu0
    %1689 = vdwg.mxu0
    %1690 = vmatpush.bf16.msra.mxu0 %v686
    %1691 = vmatpush.bf16.msra.mxu0 %v682
    %1692 = vmatpush.bf16.msra.mxu0 %v678
    %1693 = vmatpush.bf16.msra.mxu0 %v674
    %1694 = vmatpush.bf16.msra.mxu0 %v670
    %1695 = vmatpush.bf16.msra.mxu0 %v666
    %1696 = vmatpush.bf16.msra.mxu0 %v662
    %1697 = vmatpush.bf16.msra.mxu0 %v658
    %1698 = vmatmul.bf16.gmra.mxu0 %v1676
    %v1699 = vpop.f32.mrf.mxu0
    %v1700 = vadd.f32 0.0, %v1699
    %v1701 = vpop.f32.mrf.mxu0
    %1702 = vdwg.mxu0
    %1703 = vmatpush.bf16.msra.mxu0 %v687
    %1704 = vmatpush.bf16.msra.mxu0 %v683
    %1705 = vmatpush.bf16.msra.mxu0 %v679
    %1706 = vmatpush.bf16.msra.mxu0 %v675
    %1707 = vmatpush.bf16.msra.mxu0 %v671
    %1708 = vmatpush.bf16.msra.mxu0 %v667
    %1709 = vmatpush.bf16.msra.mxu0 %v663
    %1710 = vmatpush.bf16.msra.mxu0 %v659
    %1711 = vmatmul.bf16.gmra.mxu0 %v1676
    %v1712 = vpop.f32.mrf.mxu0
    %v1713 = vadd.f32 0.0, %v1712
    %v1714 = vpop.f32.mrf.mxu0
    %1715 = vdwg.mxu0
    %1716 = vmatpush.bf16.msra.mxu0 %v688
    %1717 = vmatpush.bf16.msra.mxu0 %v684
    %1718 = vmatpush.bf16.msra.mxu0 %v680
    %1719 = vmatpush.bf16.msra.mxu0 %v676
    %1720 = vmatpush.bf16.msra.mxu0 %v672
    %1721 = vmatpush.bf16.msra.mxu0 %v668
    %1722 = vmatpush.bf16.msra.mxu0 %v664
    %1723 = vmatpush.bf16.msra.mxu0 %v660
    %1724 = vmatmul.bf16.gmra.mxu0 %v1676
    %v1725 = vpop.f32.mrf.mxu0
    %v1726 = vadd.f32 0.0, %v1725
    %v1727 = vpop.f32.mrf.mxu0
    %1728 = vdwg.mxu0
    %v1729 = vadd.f32 %v1626, %v1687
    %v1730 = vadd.f32 %v1639, %v1700
    %v1731 = vadd.f32 %v1652, %v1713
    %v1732 = vadd.f32 %v1665, %v1726
    %v1733 = vadd.f32 %v1729, %v778
    %v1734 = vadd.f32 %v1730, %v779
    %v1735 = vadd.f32 %v1731, %v780
    %v1736 = vadd.f32 %v1732, %v781
    %v1737 = vmul.f32 %v1733, 0.5
    %v1738 = vtanh.pop %v1737
    %v1739 = vmul.f32 %v1738, 0.5
    %v1740 = vadd.f32 %v1739, 0.5
    %v1741 = vmul.f32 %v1734, 0.5
    %v1742 = vtanh.pop %v1741
    %v1743 = vmul.f32 %v1742, 0.5
    %v1744 = vadd.f32 %v1743, 0.5
    %v1745 = vtanh.pop %v1735
    %v1746 = vmul.f32 %v1736, 0.5
    %v1747 = vtanh.pop %v1746
    %v1748 = vmul.f32 %v1747, 0.5
    %v1749 = vadd.f32 %v1748, 0.5
    %v1750 = vmul.f32 %v1744, %v1594
    %v1751 = vmul.f32 %v1740, %v1745
    %v1752 = vadd.f32 %v1750, %v1751
    %v1753 = vtanh.pop %v1752
    %v1754 = vmul.f32 %v1749, %v1753
    %s1755 = scalar_lea.vmem [#allocation2], 48
    %1756 = vst [vmem:[%s1755] sm:$0xff] %v1754
    %s1757 = scalar_lea.vmem %s0, 28
    %v1758 = vld [vmem:[%s1757] sm:$0xf]
    %v1759 = vunpack.c.l.bf16 %v1758
    %v1760 = vpack.c.bf16 %v1754, %v1754
    %1761 = vmatpush.bf16.msra.mxu0 %v443
    %1762 = vmatpush.bf16.msra.mxu0 %v438
    %1763 = vmatpush.bf16.msra.mxu0 %v433
    %1764 = vmatpush.bf16.msra.mxu0 %v428
    %1765 = vmatpush.bf16.msra.mxu0 %v423
    %1766 = vmatpush.bf16.msra.mxu0 %v418
    %1767 = vmatpush.bf16.msra.mxu0 %v413
    %1768 = vmatpush.bf16.msra.mxu0 %v408
    %1769 = vmatmul.bf16.gmra.mxu0 %v1760
    %v1770 = vpop.f32.mrf.mxu0
    %v1771 = vadd.f32 0.0, %v1770
    %v1772 = vpop.f32.mrf.mxu0
    %1773 = vdwg.mxu0
    %1774 = vmatpush.bf16.msra.mxu0 %v444
    %1775 = vmatpush.bf16.msra.mxu0 %v439
    %1776 = vmatpush.bf16.msra.mxu0 %v434
    %1777 = vmatpush.bf16.msra.mxu0 %v429
    %1778 = vmatpush.bf16.msra.mxu0 %v424
    %1779 = vmatpush.bf16.msra.mxu0 %v419
    %1780 = vmatpush.bf16.msra.mxu0 %v414
    %1781 = vmatpush.bf16.msra.mxu0 %v409
    %1782 = vmatmul.bf16.gmra.mxu0 %v1760
    %v1783 = vpop.f32.mrf.mxu0
    %v1784 = vadd.f32 0.0, %v1783
    %v1785 = vpop.f32.mrf.mxu0
    %1786 = vdwg.mxu0
    %1787 = vmatpush.bf16.msra.mxu0 %v445
    %1788 = vmatpush.bf16.msra.mxu0 %v440
    %1789 = vmatpush.bf16.msra.mxu0 %v435
    %1790 = vmatpush.bf16.msra.mxu0 %v430
    %1791 = vmatpush.bf16.msra.mxu0 %v425
    %1792 = vmatpush.bf16.msra.mxu0 %v420
    %1793 = vmatpush.bf16.msra.mxu0 %v415
    %1794 = vmatpush.bf16.msra.mxu0 %v410
    %1795 = vmatmul.bf16.gmra.mxu0 %v1760
    %v1796 = vpop.f32.mrf.mxu0
    %v1797 = vadd.f32 0.0, %v1796
    %v1798 = vpop.f32.mrf.mxu0
    %1799 = vdwg.mxu0
    %1800 = vmatpush.bf16.msra.mxu0 %v446
    %1801 = vmatpush.bf16.msra.mxu0 %v441
    %1802 = vmatpush.bf16.msra.mxu0 %v436
    %1803 = vmatpush.bf16.msra.mxu0 %v431
    %1804 = vmatpush.bf16.msra.mxu0 %v426
    %1805 = vmatpush.bf16.msra.mxu0 %v421
    %1806 = vmatpush.bf16.msra.mxu0 %v416
    %1807 = vmatpush.bf16.msra.mxu0 %v411
    %1808 = vmatmul.bf16.gmra.mxu0 %v1760
    %v1809 = vpop.f32.mrf.mxu0
    %v1810 = vadd.f32 0.0, %v1809
    %v1811 = vpop.f32.mrf.mxu0
    %1812 = vdwg.mxu0
    %1813 = vmatpush.bf16.msra.mxu0 %v447
    %1814 = vmatpush.bf16.msra.mxu0 %v442
    %1815 = vmatpush.bf16.msra.mxu0 %v437
    %1816 = vmatpush.bf16.msra.mxu0 %v432
    %1817 = vmatpush.bf16.msra.mxu0 %v427
    %1818 = vmatpush.bf16.msra.mxu0 %v422
    %1819 = vmatpush.bf16.msra.mxu0 %v417
    %1820 = vmatpush.bf16.msra.mxu0 %v412
    %1821 = vmatmul.bf16.gmra.mxu0 %v1760
    %v1822 = vpop.f32.mrf.mxu0
    %v1823 = vadd.f32 0.0, %v1822
    %v1824 = vpop.f32.mrf.mxu0
    %1825 = vdwg.mxu0
    %s1826 = scalar_lea.vmem [#allocation3], 56
    %v1827 = vld [vmem:[%s1826] sm:$0xff]
    %v1828 = vadd.f32 %v1771, %v1827
    %v1829 = vmul.f32 %v1828, 0.5
    %v1830 = vtanh.pop %v1829
    %v1831 = vmul.f32 %v1830, 0.5
    %v1832 = vadd.f32 %v1831, 0.5
    %v1833 = vmul.f32 %v1832, %v1759
    %v1834 = vpack.c.bf16 %v1833, %v1833
    %1835 = vmatpush.bf16.msra.mxu0 %v685
    %1836 = vmatpush.bf16.msra.mxu0 %v681
    %1837 = vmatpush.bf16.msra.mxu0 %v677
    %1838 = vmatpush.bf16.msra.mxu0 %v673
    %1839 = vmatpush.bf16.msra.mxu0 %v669
    %1840 = vmatpush.bf16.msra.mxu0 %v665
    %1841 = vmatpush.bf16.msra.mxu0 %v661
    %1842 = vmatpush.bf16.msra.mxu0 %v657
    %1843 = vmatmul.bf16.gmra.mxu0 %v1834
    %v1844 = vpop.f32.mrf.mxu0
    %v1845 = vadd.f32 0.0, %v1844
    %v1846 = vpop.f32.mrf.mxu0
    %1847 = vdwg.mxu0
    %1848 = vmatpush.bf16.msra.mxu0 %v686
    %1849 = vmatpush.bf16.msra.mxu0 %v682
    %1850 = vmatpush.bf16.msra.mxu0 %v678
    %1851 = vmatpush.bf16.msra.mxu0 %v674
    %1852 = vmatpush.bf16.msra.mxu0 %v670
    %1853 = vmatpush.bf16.msra.mxu0 %v666
    %1854 = vmatpush.bf16.msra.mxu0 %v662
    %1855 = vmatpush.bf16.msra.mxu0 %v658
    %1856 = vmatmul.bf16.gmra.mxu0 %v1834
    %v1857 = vpop.f32.mrf.mxu0
    %v1858 = vadd.f32 0.0, %v1857
    %v1859 = vpop.f32.mrf.mxu0
    %1860 = vdwg.mxu0
    %1861 = vmatpush.bf16.msra.mxu0 %v687
    %1862 = vmatpush.bf16.msra.mxu0 %v683
    %1863 = vmatpush.bf16.msra.mxu0 %v679
    %1864 = vmatpush.bf16.msra.mxu0 %v675
    %1865 = vmatpush.bf16.msra.mxu0 %v671
    %1866 = vmatpush.bf16.msra.mxu0 %v667
    %1867 = vmatpush.bf16.msra.mxu0 %v663
    %1868 = vmatpush.bf16.msra.mxu0 %v659
    %1869 = vmatmul.bf16.gmra.mxu0 %v1834
    %v1870 = vpop.f32.mrf.mxu0
    %v1871 = vadd.f32 0.0, %v1870
    %v1872 = vpop.f32.mrf.mxu0
    %1873 = vdwg.mxu0
    %1874 = vmatpush.bf16.msra.mxu0 %v688
    %1875 = vmatpush.bf16.msra.mxu0 %v684
    %1876 = vmatpush.bf16.msra.mxu0 %v680
    %1877 = vmatpush.bf16.msra.mxu0 %v676
    %1878 = vmatpush.bf16.msra.mxu0 %v672
    %1879 = vmatpush.bf16.msra.mxu0 %v668
    %1880 = vmatpush.bf16.msra.mxu0 %v664
    %1881 = vmatpush.bf16.msra.mxu0 %v660
    %1882 = vmatmul.bf16.gmra.mxu0 %v1834
    %v1883 = vpop.f32.mrf.mxu0
    %v1884 = vadd.f32 0.0, %v1883
    %v1885 = vpop.f32.mrf.mxu0
    %1886 = vdwg.mxu0
    %v1887 = vadd.f32 %v1784, %v1845
    %v1888 = vadd.f32 %v1797, %v1858
    %v1889 = vadd.f32 %v1810, %v1871
    %v1890 = vadd.f32 %v1823, %v1884
    %v1891 = vadd.f32 %v1887, %v778
    %v1892 = vadd.f32 %v1888, %v779
    %v1893 = vadd.f32 %v1889, %v780
    %v1894 = vadd.f32 %v1890, %v781
    %v1895 = vmul.f32 %v1891, 0.5
    %v1896 = vtanh.pop %v1895
    %v1897 = vmul.f32 %v1896, 0.5
    %v1898 = vadd.f32 %v1897, 0.5
    %v1899 = vmul.f32 %v1892, 0.5
    %v1900 = vtanh.pop %v1899
    %v1901 = vmul.f32 %v1900, 0.5
    %v1902 = vadd.f32 %v1901, 0.5
    %v1903 = vtanh.pop %v1893
    %v1904 = vmul.f32 %v1894, 0.5
    %v1905 = vtanh.pop %v1904
    %v1906 = vmul.f32 %v1905, 0.5
    %v1907 = vadd.f32 %v1906, 0.5
    %v1908 = vmul.f32 %v1902, %v1752
    %v1909 = vmul.f32 %v1898, %v1903
    %v1910 = vadd.f32 %v1908, %v1909
    %v1911 = vtanh.pop %v1910
    %v1912 = vmul.f32 %v1907, %v1911
    %s1913 = scalar_lea.vmem [#allocation2], 56
    %1914 = vst [vmem:[%s1913] sm:$0xff] %v1912
    %1915 = vst [vmem:[#allocation4] sm:$0xff] %v1912
    %1916 = vst [vmem:[#allocation5] sm:$0xff] %v1910
    %s1917 = scalar_lea.vmem [#allocation6], 320
    %v1918 = vld [vmem:[%s1917] sm:$0xff]
    %v1919 = vld [vmem:[%s1917 + $0x8] sm:$0xff]
    %v1920 = vld [vmem:[%s1917 + $0x10] sm:$0xf]
    %v1921 = vld [vmem:[%s1917 + $0x14] sm:$0xff]
    %v1922 = vld [vmem:[%s1917 + $0x1c] sm:$0xff]
    %v1923 = vld [vmem:[%s1917 + $0x24] sm:$0xf]
    %v1924 = vld [vmem:[%s1917 + $0x28] sm:$0xff]
    %v1925 = vld [vmem:[%s1917 + $0x30] sm:$0xff]
    %v1926 = vld [vmem:[%s1917 + $0x38] sm:$0xf]
    %v1927 = vld [vmem:[%s1917 + $0x3c] sm:$0xff]
    %v1928 = vld [vmem:[%s1917 + $0x44] sm:$0xff]
    %v1929 = vld [vmem:[%s1917 + $0x4c] sm:$0xf]
    %v1930 = vld [vmem:[%s1917 + $0x50] sm:$0xff]
    %v1931 = vld [vmem:[%s1917 + $0x58] sm:$0xff]
    %v1932 = vld [vmem:[%s1917 + $0x60] sm:$0xf]
    %v1933 = vld [vmem:[%s1917 + $0x64] sm:$0xff]
    %v1934 = vld [vmem:[%s1917 + $0x6c] sm:$0xff]
    %v1935 = vld [vmem:[%s1917 + $0x74] sm:$0xf]
    %v1936 = vld [vmem:[%s1917 + $0x78] sm:$0xff]
    %v1937 = vld [vmem:[%s1917 + $0x80] sm:$0xff]
    %v1938 = vld [vmem:[%s1917 + $0x88] sm:$0xf]
    %v1939 = vld [vmem:[%s1917 + $0x8c] sm:$0xff]
    %v1940 = vld [vmem:[%s1917 + $0x94] sm:$0xff]
    %v1941 = vld [vmem:[%s1917 + $0x9c] sm:$0xf]
    %v1942 = vld [vmem:[%s1917 + $0xa0] sm:$0xff]
    %v1943 = vld [vmem:[%s1917 + $0xa8] sm:$0xff]
    %v1944 = vld [vmem:[%s1917 + $0xb0] sm:$0xf]
    %v1945 = vld [vmem:[%s1917 + $0xb4] sm:$0xff]
    %v1946 = vld [vmem:[%s1917 + $0xbc] sm:$0xff]
    %v1947 = vld [vmem:[%s1917 + $0xc4] sm:$0xf]
    %v1948 = vld [vmem:[%s1917 + $0xc8] sm:$0xff]
    %v1949 = vld [vmem:[%s1917 + $0xd0] sm:$0xff]
    %v1950 = vld [vmem:[%s1917 + $0xd8] sm:$0xf]
    %v1951 = vld [vmem:[%s1917 + $0xdc] sm:$0xff]
    %v1952 = vld [vmem:[%s1917 + $0xe4] sm:$0xff]
    %v1953 = vld [vmem:[%s1917 + $0xec] sm:$0xf]
    %v1954 = vld [vmem:[%s1917 + $0xf0] sm:$0xff]
    %v1955 = vld [vmem:[%s1917 + $0xf8] sm:$0xff]
    %v1956 = vld [vmem:[%s1917 + $0x100] sm:$0xf]
    %v1957 = vld [vmem:[%s1917 + $0x104] sm:$0xff]
    %v1958 = vld [vmem:[%s1917 + $0x10c] sm:$0xff]
    %v1959 = vld [vmem:[%s1917 + $0x114] sm:$0xf]
    %v1960 = vld [vmem:[%s1917 + $0x118] sm:$0xff]
    %v1961 = vld [vmem:[%s1917 + $0x120] sm:$0xff]
    %v1962 = vld [vmem:[%s1917 + $0x128] sm:$0xf]
    %v1963 = vld [vmem:[%s1917 + $0x12c] sm:$0xff]
    %v1964 = vld [vmem:[%s1917 + $0x134] sm:$0xff]
    %v1965 = vld [vmem:[%s1917 + $0x13c] sm:$0xf]
    %s1966 = scalar_lea.vmem [#allocation9], 256
    %v1967 = vld [vmem:[%s1966] sm:$0xff]
    %v1968 = vld [vmem:[%s1966 + $0x8] sm:$0xff]
    %v1969 = vld [vmem:[%s1966 + $0x10] sm:$0xff]
    %v1970 = vld [vmem:[%s1966 + $0x18] sm:$0xff]
    %v1971 = vld [vmem:[%s1966 + $0x20] sm:$0xff]
    %v1972 = vld [vmem:[%s1966 + $0x28] sm:$0xff]
    %v1973 = vld [vmem:[%s1966 + $0x30] sm:$0xff]
    %v1974 = vld [vmem:[%s1966 + $0x38] sm:$0xff]
    %v1975 = vld [vmem:[%s1966 + $0x40] sm:$0xff]
    %v1976 = vld [vmem:[%s1966 + $0x48] sm:$0xff]
    %v1977 = vld [vmem:[%s1966 + $0x50] sm:$0xff]
    %v1978 = vld [vmem:[%s1966 + $0x58] sm:$0xff]
    %v1979 = vld [vmem:[%s1966 + $0x60] sm:$0xff]
    %v1980 = vld [vmem:[%s1966 + $0x68] sm:$0xff]
    %v1981 = vld [vmem:[%s1966 + $0x70] sm:$0xff]
    %v1982 = vld [vmem:[%s1966 + $0x78] sm:$0xff]
    %v1983 = vld [vmem:[%s1966 + $0x80] sm:$0xff]
    %v1984 = vld [vmem:[%s1966 + $0x88] sm:$0xff]
    %v1985 = vld [vmem:[%s1966 + $0x90] sm:$0xff]
    %v1986 = vld [vmem:[%s1966 + $0x98] sm:$0xff]
    %v1987 = vld [vmem:[%s1966 + $0xa0] sm:$0xff]
    %v1988 = vld [vmem:[%s1966 + $0xa8] sm:$0xff]
    %v1989 = vld [vmem:[%s1966 + $0xb0] sm:$0xff]
    %v1990 = vld [vmem:[%s1966 + $0xb8] sm:$0xff]
    %v1991 = vld [vmem:[%s1966 + $0xc0] sm:$0xff]
    %v1992 = vld [vmem:[%s1966 + $0xc8] sm:$0xff]
    %v1993 = vld [vmem:[%s1966 + $0xd0] sm:$0xff]
    %v1994 = vld [vmem:[%s1966 + $0xd8] sm:$0xff]
    %v1995 = vld [vmem:[%s1966 + $0xe0] sm:$0xff]
    %v1996 = vld [vmem:[%s1966 + $0xe8] sm:$0xff]
    %v1997 = vld [vmem:[%s1966 + $0xf0] sm:$0xff]
    %v1998 = vld [vmem:[%s1966 + $0xf8] sm:$0xff]
    %s1999 = scalar_lea.vmem %s3, 2
    %v2000 = vld [vmem:[%s1999] sm:$0x3]
    %s2001 = scalar_lea.vmem %s4, 1
    %v2002 = vld [vmem:[%s2001] sm:$0x1]
    %s2003 = scalar_lea.vmem %s6, 4
    %v2004 = vld [vmem:[%s2003] sm:$0xf]
    %v2005 = vperm.slane %v2000, 0
    %v2006 = vmul.f32 %v161, %v2005
    %v2007 = vmul.f32 %v166, %v2005
    %v2008 = vmul.f32 %v171, %v2005
    %v2009 = vmul.f32 %v176, %v2005
    %v2010 = vmul.f32 %v181, %v2005
    %v2011 = vmul.f32 %v186, %v2005
    %v2012 = vmul.f32 %v191, %v2005
    %v2013 = vmul.f32 %v196, %v2005
    %v2014 = vperm.slane %v2000, 1
    %v2015 = vmul.f32 %v209, %v2014
    %v2016 = vmul.f32 %v213, %v2014
    %v2017 = vmul.f32 %v217, %v2014
    %v2018 = vmul.f32 %v221, %v2014
    %v2019 = vmul.f32 %v225, %v2014
    %v2020 = vmul.f32 %v229, %v2014
    %v2021 = vmul.f32 %v233, %v2014
    %v2022 = vmul.f32 %v237, %v2014
    %v2023 = vadd.f32 %v2006, %v2015
    %v2024 = vadd.f32 %v2007, %v2016
    %v2025 = vadd.f32 %v2008, %v2017
    %v2026 = vadd.f32 %v2009, %v2018
    %v2027 = vadd.f32 %v2010, %v2019
    %v2028 = vadd.f32 %v2011, %v2020
    %v2029 = vadd.f32 %v2012, %v2021
    %v2030 = vadd.f32 %v2013, %v2022
    %v2032 = vperm.slane %v2002, 0
    %v2034 = vadd.f32 %v2023, %v2032
    %v2035 = vadd.f32 %v2024, %v2032
    %v2036 = vadd.f32 %v2025, %v2032
    %v2037 = vadd.f32 %v2026, %v2032
    %v2038 = vadd.f32 %v2027, %v2032
    %v2039 = vadd.f32 %v2028, %v2032
    %v2040 = vadd.f32 %v2029, %v2032
    %v2041 = vadd.f32 %v2030, %v2032
    %2042 = vst [vmem:[#allocation3] sm:$0xff] %v2034
    %2043 = vst [vmem:[#allocation3 + $0x8] sm:$0xff] %v2035
    %2044 = vst [vmem:[#allocation3 + $0x10] sm:$0xff] %v2036
    %2045 = vst [vmem:[#allocation3 + $0x18] sm:$0xff] %v2037
    %2046 = vst [vmem:[#allocation3 + $0x20] sm:$0xff] %v2038
    %2047 = vst [vmem:[#allocation3 + $0x28] sm:$0xff] %v2039
    %2048 = vst [vmem:[#allocation3 + $0x30] sm:$0xff] %v2040
    %2049 = vst [vmem:[#allocation3 + $0x38] sm:$0xff] %v2041
    %s2050 = scalar_lea.vmem [#allocation4], 8
    %v2051 = vld [vmem:[%s2050] sm:$0xff]
    %s2052 = scalar_lea.vmem [#allocation5], 8
    %v2053 = vld [vmem:[%s2052] sm:$0xff]
    %v2054 = vld [vmem:[#allocation2] sm:$0xff]
    %v2055 = vpack.c.bf16 %v2051, %v2051
    %v2104 = vunpack.c.l.b16 %v1918
    %v2105 = vunpack.c.h.b16 %v1918
    %v2106 = vunpack.c.l.b16 %v1919
    %v2107 = vunpack.c.h.b16 %v1919
    %v2108 = vunpack.c.l.b16 %v1920
    %v2109 = vunpack.c.l.b16 %v1921
    %v2110 = vunpack.c.h.b16 %v1921
    %v2111 = vunpack.c.l.b16 %v1922
    %v2112 = vunpack.c.h.b16 %v1922
    %v2113 = vunpack.c.l.b16 %v1923
    %v2114 = vunpack.c.l.b16 %v1924
    %v2115 = vunpack.c.h.b16 %v1924
    %v2116 = vunpack.c.l.b16 %v1925
    %v2117 = vunpack.c.h.b16 %v1925
    %v2118 = vunpack.c.l.b16 %v1926
    %v2119 = vunpack.c.l.b16 %v1927
    %v2120 = vunpack.c.h.b16 %v1927
    %v2121 = vunpack.c.l.b16 %v1928
    %v2122 = vunpack.c.h.b16 %v1928
    %v2123 = vunpack.c.l.b16 %v1929
    %v2124 = vunpack.c.l.b16 %v1930
    %v2125 = vunpack.c.h.b16 %v1930
    %v2126 = vunpack.c.l.b16 %v1931
    %v2127 = vunpack.c.h.b16 %v1931
    %v2128 = vunpack.c.l.b16 %v1932
    %v2129 = vunpack.c.l.b16 %v1933
    %v2130 = vunpack.c.h.b16 %v1933
    %v2131 = vunpack.c.l.b16 %v1934
    %v2132 = vunpack.c.h.b16 %v1934
    %v2133 = vunpack.c.l.b16 %v1935
    %v2134 = vunpack.c.l.b16 %v1936
    %v2135 = vunpack.c.h.b16 %v1936
    %v2136 = vunpack.c.l.b16 %v1937
    %v2137 = vunpack.c.h.b16 %v1937
    %v2138 = vunpack.c.l.b16 %v1938
    %v2139 = vunpack.c.l.b16 %v1939
    %v2140 = vunpack.c.h.b16 %v1939
    %v2141 = vunpack.c.l.b16 %v1940
    %v2142 = vunpack.c.h.b16 %v1940
    %v2143 = vunpack.c.l.b16 %v1941
    %v2144 = vunpack.c.l.b16 %v1942
    %v2145 = vunpack.c.h.b16 %v1942
    %v2146 = vunpack.c.l.b16 %v1943
    %v2147 = vunpack.c.h.b16 %v1943
    %v2148 = vunpack.c.l.b16 %v1944
    %v2149 = vunpack.c.l.b16 %v1945
    %v2150 = vunpack.c.h.b16 %v1945
    %v2151 = vunpack.c.l.b16 %v1946
    %v2152 = vunpack.c.h.b16 %v1946
    %v2153 = vunpack.c.l.b16 %v1947
    %v2154 = vunpack.c.l.b16 %v1948
    %v2155 = vunpack.c.h.b16 %v1948
    %v2156 = vunpack.c.l.b16 %v1949
    %v2157 = vunpack.c.h.b16 %v1949
    %v2158 = vunpack.c.l.b16 %v1950
    %v2159 = vunpack.c.l.b16 %v1951
    %v2160 = vunpack.c.h.b16 %v1951
    %v2161 = vunpack.c.l.b16 %v1952
    %v2162 = vunpack.c.h.b16 %v1952
    %v2163 = vunpack.c.l.b16 %v1953
    %v2164 = vunpack.c.l.b16 %v1954
    %v2165 = vunpack.c.h.b16 %v1954
    %v2166 = vunpack.c.l.b16 %v1955
    %v2167 = vunpack.c.h.b16 %v1955
    %v2168 = vunpack.c.l.b16 %v1956
    %v2169 = vunpack.c.l.b16 %v1957
    %v2170 = vunpack.c.h.b16 %v1957
    %v2171 = vunpack.c.l.b16 %v1958
    %v2172 = vunpack.c.h.b16 %v1958
    %v2173 = vunpack.c.l.b16 %v1959
    %v2174 = vunpack.c.l.b16 %v1960
    %v2175 = vunpack.c.h.b16 %v1960
    %v2176 = vunpack.c.l.b16 %v1961
    %v2177 = vunpack.c.h.b16 %v1961
    %v2178 = vunpack.c.l.b16 %v1962
    %v2179 = vunpack.c.l.b16 %v1963
    %v2180 = vunpack.c.h.b16 %v1963
    %v2181 = vunpack.c.l.b16 %v1964
    %v2182 = vunpack.c.h.b16 %v1964
    %v2183 = vunpack.c.l.b16 %v1965
    %v2184 = vpack.c.b16 %v2109, %v2104
    %v2185 = vpack.c.b16 %v2110, %v2105
    %v2186 = vpack.c.b16 %v2111, %v2106
    %v2187 = vpack.c.b16 %v2112, %v2107
    %v2188 = vpack.c.b16 %v2113, %v2108
    %v2189 = vpack.c.b16 %v2119, %v2114
    %v2190 = vpack.c.b16 %v2120, %v2115
    %v2191 = vpack.c.b16 %v2121, %v2116
    %v2192 = vpack.c.b16 %v2122, %v2117
    %v2193 = vpack.c.b16 %v2123, %v2118
    %v2194 = vpack.c.b16 %v2129, %v2124
    %v2195 = vpack.c.b16 %v2130, %v2125
    %v2196 = vpack.c.b16 %v2131, %v2126
    %v2197 = vpack.c.b16 %v2132, %v2127
    %v2198 = vpack.c.b16 %v2133, %v2128
    %v2199 = vpack.c.b16 %v2139, %v2134
    %v2200 = vpack.c.b16 %v2140, %v2135
    %v2201 = vpack.c.b16 %v2141, %v2136
    %v2202 = vpack.c.b16 %v2142, %v2137
    %v2203 = vpack.c.b16 %v2143, %v2138
    %v2204 = vpack.c.b16 %v2149, %v2144
    %v2205 = vpack.c.b16 %v2150, %v2145
    %v2206 = vpack.c.b16 %v2151, %v2146
    %v2207 = vpack.c.b16 %v2152, %v2147
    %v2208 = vpack.c.b16 %v2153, %v2148
    %v2209 = vpack.c.b16 %v2159, %v2154
    %v2210 = vpack.c.b16 %v2160, %v2155
    %v2211 = vpack.c.b16 %v2161, %v2156
    %v2212 = vpack.c.b16 %v2162, %v2157
    %v2213 = vpack.c.b16 %v2163, %v2158
    %v2214 = vpack.c.b16 %v2169, %v2164
    %v2215 = vpack.c.b16 %v2170, %v2165
    %v2216 = vpack.c.b16 %v2171, %v2166
    %v2217 = vpack.c.b16 %v2172, %v2167
    %v2218 = vpack.c.b16 %v2173, %v2168
    %v2219 = vpack.c.b16 %v2179, %v2174
    %v2220 = vpack.c.b16 %v2180, %v2175
    %v2221 = vpack.c.b16 %v2181, %v2176
    %v2222 = vpack.c.b16 %v2182, %v2177
    %v2223 = vpack.c.b16 %v2183, %v2178
    %2264 = vmatpush.bf16.msra.mxu0 %v2219
    %2265 = vmatpush.bf16.msra.mxu0 %v2214
    %2266 = vmatpush.bf16.msra.mxu0 %v2209
    %2267 = vmatpush.bf16.msra.mxu0 %v2204
    %2268 = vmatpush.bf16.msra.mxu0 %v2199
    %2269 = vmatpush.bf16.msra.mxu0 %v2194
    %2270 = vmatpush.bf16.msra.mxu0 %v2189
    %2271 = vmatpush.bf16.msra.mxu0 %v2184
    %2272 = vmatmul.bf16.gmra.mxu0 %v2055
    %v2273 = vpop.f32.mrf.mxu0
    %v2274 = vadd.f32 0.0, %v2273
    %v2275 = vpop.f32.mrf.mxu0
    %2276 = vdwg.mxu0
    %2277 = vmatpush.bf16.msra.mxu0 %v2220
    %2278 = vmatpush.bf16.msra.mxu0 %v2215
    %2279 = vmatpush.bf16.msra.mxu0 %v2210
    %2280 = vmatpush.bf16.msra.mxu0 %v2205
    %2281 = vmatpush.bf16.msra.mxu0 %v2200
    %2282 = vmatpush.bf16.msra.mxu0 %v2195
    %2283 = vmatpush.bf16.msra.mxu0 %v2190
    %2284 = vmatpush.bf16.msra.mxu0 %v2185
    %2285 = vmatmul.bf16.gmra.mxu0 %v2055
    %v2286 = vpop.f32.mrf.mxu0
    %v2287 = vadd.f32 0.0, %v2286
    %v2288 = vpop.f32.mrf.mxu0
    %2289 = vdwg.mxu0
    %2290 = vmatpush.bf16.msra.mxu0 %v2221
    %2291 = vmatpush.bf16.msra.mxu0 %v2216
    %2292 = vmatpush.bf16.msra.mxu0 %v2211
    %2293 = vmatpush.bf16.msra.mxu0 %v2206
    %2294 = vmatpush.bf16.msra.mxu0 %v2201
    %2295 = vmatpush.bf16.msra.mxu0 %v2196
    %2296 = vmatpush.bf16.msra.mxu0 %v2191
    %2297 = vmatpush.bf16.msra.mxu0 %v2186
    %2298 = vmatmul.bf16.gmra.mxu0 %v2055
    %v2299 = vpop.f32.mrf.mxu0
    %v2300 = vadd.f32 0.0, %v2299
    %v2301 = vpop.f32.mrf.mxu0
    %2302 = vdwg.mxu0
    %2303 = vmatpush.bf16.msra.mxu0 %v2222
    %2304 = vmatpush.bf16.msra.mxu0 %v2217
    %2305 = vmatpush.bf16.msra.mxu0 %v2212
    %2306 = vmatpush.bf16.msra.mxu0 %v2207
    %2307 = vmatpush.bf16.msra.mxu0 %v2202
    %2308 = vmatpush.bf16.msra.mxu0 %v2197
    %2309 = vmatpush.bf16.msra.mxu0 %v2192
    %2310 = vmatpush.bf16.msra.mxu0 %v2187
    %2311 = vmatmul.bf16.gmra.mxu0 %v2055
    %v2312 = vpop.f32.mrf.mxu0
    %v2313 = vadd.f32 0.0, %v2312
    %v2314 = vpop.f32.mrf.mxu0
    %2315 = vdwg.mxu0
    %2316 = vmatpush.bf16.msra.mxu0 %v2223
    %2317 = vmatpush.bf16.msra.mxu0 %v2218
    %2318 = vmatpush.bf16.msra.mxu0 %v2213
    %2319 = vmatpush.bf16.msra.mxu0 %v2208
    %2320 = vmatpush.bf16.msra.mxu0 %v2203
    %2321 = vmatpush.bf16.msra.mxu0 %v2198
    %2322 = vmatpush.bf16.msra.mxu0 %v2193
    %2323 = vmatpush.bf16.msra.mxu0 %v2188
    %2324 = vmatmul.bf16.gmra.mxu0 %v2055
    %v2325 = vpop.f32.mrf.mxu0
    %v2326 = vadd.f32 0.0, %v2325
    %v2327 = vpop.f32.mrf.mxu0
    %2328 = vdwg.mxu0
    %v2329 = vld [vmem:[#allocation3] sm:$0xff]
    %v2330 = vadd.f32 %v2274, %v2329
    %v2331 = vmul.f32 %v2330, 0.5
    %v2332 = vtanh.pop %v2331
    %v2333 = vmul.f32 %v2332, 0.5
    %v2334 = vadd.f32 %v2333, 0.5
    %v2335 = vmul.f32 %v2334, %v2054
    %v2336 = vpack.c.bf16 %v2335, %v2335
    %v2369 = vunpack.c.l.b16 %v1967
    %v2370 = vunpack.c.h.b16 %v1967
    %v2371 = vunpack.c.l.b16 %v1968
    %v2372 = vunpack.c.h.b16 %v1968
    %v2373 = vunpack.c.l.b16 %v1969
    %v2374 = vunpack.c.h.b16 %v1969
    %v2375 = vunpack.c.l.b16 %v1970
    %v2376 = vunpack.c.h.b16 %v1970
    %v2377 = vunpack.c.l.b16 %v1971
    %v2378 = vunpack.c.h.b16 %v1971
    %v2379 = vunpack.c.l.b16 %v1972
    %v2380 = vunpack.c.h.b16 %v1972
    %v2381 = vunpack.c.l.b16 %v1973
    %v2382 = vunpack.c.h.b16 %v1973
    %v2383 = vunpack.c.l.b16 %v1974
    %v2384 = vunpack.c.h.b16 %v1974
    %v2385 = vunpack.c.l.b16 %v1975
    %v2386 = vunpack.c.h.b16 %v1975
    %v2387 = vunpack.c.l.b16 %v1976
    %v2388 = vunpack.c.h.b16 %v1976
    %v2389 = vunpack.c.l.b16 %v1977
    %v2390 = vunpack.c.h.b16 %v1977
    %v2391 = vunpack.c.l.b16 %v1978
    %v2392 = vunpack.c.h.b16 %v1978
    %v2393 = vunpack.c.l.b16 %v1979
    %v2394 = vunpack.c.h.b16 %v1979
    %v2395 = vunpack.c.l.b16 %v1980
    %v2396 = vunpack.c.h.b16 %v1980
    %v2397 = vunpack.c.l.b16 %v1981
    %v2398 = vunpack.c.h.b16 %v1981
    %v2399 = vunpack.c.l.b16 %v1982
    %v2400 = vunpack.c.h.b16 %v1982
    %v2401 = vunpack.c.l.b16 %v1983
    %v2402 = vunpack.c.h.b16 %v1983
    %v2403 = vunpack.c.l.b16 %v1984
    %v2404 = vunpack.c.h.b16 %v1984
    %v2405 = vunpack.c.l.b16 %v1985
    %v2406 = vunpack.c.h.b16 %v1985
    %v2407 = vunpack.c.l.b16 %v1986
    %v2408 = vunpack.c.h.b16 %v1986
    %v2409 = vunpack.c.l.b16 %v1987
    %v2410 = vunpack.c.h.b16 %v1987
    %v2411 = vunpack.c.l.b16 %v1988
    %v2412 = vunpack.c.h.b16 %v1988
    %v2413 = vunpack.c.l.b16 %v1989
    %v2414 = vunpack.c.h.b16 %v1989
    %v2415 = vunpack.c.l.b16 %v1990
    %v2416 = vunpack.c.h.b16 %v1990
    %v2417 = vunpack.c.l.b16 %v1991
    %v2418 = vunpack.c.h.b16 %v1991
    %v2419 = vunpack.c.l.b16 %v1992
    %v2420 = vunpack.c.h.b16 %v1992
    %v2421 = vunpack.c.l.b16 %v1993
    %v2422 = vunpack.c.h.b16 %v1993
    %v2423 = vunpack.c.l.b16 %v1994
    %v2424 = vunpack.c.h.b16 %v1994
    %v2425 = vunpack.c.l.b16 %v1995
    %v2426 = vunpack.c.h.b16 %v1995
    %v2427 = vunpack.c.l.b16 %v1996
    %v2428 = vunpack.c.h.b16 %v1996
    %v2429 = vunpack.c.l.b16 %v1997
    %v2430 = vunpack.c.h.b16 %v1997
    %v2431 = vunpack.c.l.b16 %v1998
    %v2432 = vunpack.c.h.b16 %v1998
    %v2433 = vpack.c.b16 %v2373, %v2369
    %v2434 = vpack.c.b16 %v2374, %v2370
    %v2435 = vpack.c.b16 %v2375, %v2371
    %v2436 = vpack.c.b16 %v2376, %v2372
    %v2437 = vpack.c.b16 %v2381, %v2377
    %v2438 = vpack.c.b16 %v2382, %v2378
    %v2439 = vpack.c.b16 %v2383, %v2379
    %v2440 = vpack.c.b16 %v2384, %v2380
    %v2441 = vpack.c.b16 %v2389, %v2385
    %v2442 = vpack.c.b16 %v2390, %v2386
    %v2443 = vpack.c.b16 %v2391, %v2387
    %v2444 = vpack.c.b16 %v2392, %v2388
    %v2445 = vpack.c.b16 %v2397, %v2393
    %v2446 = vpack.c.b16 %v2398, %v2394
    %v2447 = vpack.c.b16 %v2399, %v2395
    %v2448 = vpack.c.b16 %v2400, %v2396
    %v2449 = vpack.c.b16 %v2405, %v2401
    %v2450 = vpack.c.b16 %v2406, %v2402
    %v2451 = vpack.c.b16 %v2407, %v2403
    %v2452 = vpack.c.b16 %v2408, %v2404
    %v2453 = vpack.c.b16 %v2413, %v2409
    %v2454 = vpack.c.b16 %v2414, %v2410
    %v2455 = vpack.c.b16 %v2415, %v2411
    %v2456 = vpack.c.b16 %v2416, %v2412
    %v2457 = vpack.c.b16 %v2421, %v2417
    %v2458 = vpack.c.b16 %v2422, %v2418
    %v2459 = vpack.c.b16 %v2423, %v2419
    %v2460 = vpack.c.b16 %v2424, %v2420
    %v2461 = vpack.c.b16 %v2429, %v2425
    %v2462 = vpack.c.b16 %v2430, %v2426
    %v2463 = vpack.c.b16 %v2431, %v2427
    %v2464 = vpack.c.b16 %v2432, %v2428
    %2497 = vmatpush.bf16.msra.mxu0 %v2461
    %2498 = vmatpush.bf16.msra.mxu0 %v2457
    %2499 = vmatpush.bf16.msra.mxu0 %v2453
    %2500 = vmatpush.bf16.msra.mxu0 %v2449
    %2501 = vmatpush.bf16.msra.mxu0 %v2445
    %2502 = vmatpush.bf16.msra.mxu0 %v2441
    %2503 = vmatpush.bf16.msra.mxu0 %v2437
    %2504 = vmatpush.bf16.msra.mxu0 %v2433
    %2505 = vmatmul.bf16.gmra.mxu0 %v2336
    %v2506 = vpop.f32.mrf.mxu0
    %v2507 = vadd.f32 0.0, %v2506
    %v2508 = vpop.f32.mrf.mxu0
    %2509 = vdwg.mxu0
    %2510 = vmatpush.bf16.msra.mxu0 %v2462
    %2511 = vmatpush.bf16.msra.mxu0 %v2458
    %2512 = vmatpush.bf16.msra.mxu0 %v2454
    %2513 = vmatpush.bf16.msra.mxu0 %v2450
    %2514 = vmatpush.bf16.msra.mxu0 %v2446
    %2515 = vmatpush.bf16.msra.mxu0 %v2442
    %2516 = vmatpush.bf16.msra.mxu0 %v2438
    %2517 = vmatpush.bf16.msra.mxu0 %v2434
    %2518 = vmatmul.bf16.gmra.mxu0 %v2336
    %v2519 = vpop.f32.mrf.mxu0
    %v2520 = vadd.f32 0.0, %v2519
    %v2521 = vpop.f32.mrf.mxu0
    %2522 = vdwg.mxu0
    %2523 = vmatpush.bf16.msra.mxu0 %v2463
    %2524 = vmatpush.bf16.msra.mxu0 %v2459
    %2525 = vmatpush.bf16.msra.mxu0 %v2455
    %2526 = vmatpush.bf16.msra.mxu0 %v2451
    %2527 = vmatpush.bf16.msra.mxu0 %v2447
    %2528 = vmatpush.bf16.msra.mxu0 %v2443
    %2529 = vmatpush.bf16.msra.mxu0 %v2439
    %2530 = vmatpush.bf16.msra.mxu0 %v2435
    %2531 = vmatmul.bf16.gmra.mxu0 %v2336
    %v2532 = vpop.f32.mrf.mxu0
    %v2533 = vadd.f32 0.0, %v2532
    %v2534 = vpop.f32.mrf.mxu0
    %2535 = vdwg.mxu0
    %2536 = vmatpush.bf16.msra.mxu0 %v2464
    %2537 = vmatpush.bf16.msra.mxu0 %v2460
    %2538 = vmatpush.bf16.msra.mxu0 %v2456
    %2539 = vmatpush.bf16.msra.mxu0 %v2452
    %2540 = vmatpush.bf16.msra.mxu0 %v2448
    %2541 = vmatpush.bf16.msra.mxu0 %v2444
    %2542 = vmatpush.bf16.msra.mxu0 %v2440
    %2543 = vmatpush.bf16.msra.mxu0 %v2436
    %2544 = vmatmul.bf16.gmra.mxu0 %v2336
    %v2545 = vpop.f32.mrf.mxu0
    %v2546 = vadd.f32 0.0, %v2545
    %v2547 = vpop.f32.mrf.mxu0
    %2548 = vdwg.mxu0
    %v2549 = vadd.f32 %v2287, %v2507
    %v2550 = vadd.f32 %v2300, %v2520
    %v2551 = vadd.f32 %v2313, %v2533
    %v2552 = vadd.f32 %v2326, %v2546
    %v2554 = vperm.slane %v2004, 0
    %v2555 = vperm.slane %v2004, 1
    %v2556 = vperm.slane %v2004, 2
    %v2557 = vperm.slane %v2004, 3
    %v2562 = vadd.f32 %v2549, %v2554
    %v2563 = vadd.f32 %v2550, %v2555
    %v2564 = vadd.f32 %v2551, %v2556
    %v2565 = vadd.f32 %v2552, %v2557
    %v2566 = vmul.f32 %v2562, 0.5
    %v2567 = vtanh.pop %v2566
    %v2568 = vmul.f32 %v2567, 0.5
    %v2569 = vadd.f32 %v2568, 0.5
    %v2570 = vmul.f32 %v2563, 0.5
    %v2571 = vtanh.pop %v2570
    %v2572 = vmul.f32 %v2571, 0.5
    %v2573 = vadd.f32 %v2572, 0.5
    %v2574 = vtanh.pop %v2564
    %v2575 = vmul.f32 %v2565, 0.5
    %v2576 = vtanh.pop %v2575
    %v2577 = vmul.f32 %v2576, 0.5
    %v2578 = vadd.f32 %v2577, 0.5
    %v2579 = vmul.f32 %v2573, %v2053
    %v2580 = vmul.f32 %v2569, %v2574
    %v2581 = vadd.f32 %v2579, %v2580
    %v2582 = vtanh.pop %v2581
    %v2583 = vmul.f32 %v2578, %v2582
    %v2584 = vpack.c.bf16 %v2583, %v2583
    %2585 = vst [vmem:[#allocation11] sm:$0xf] %v2584
    %v2586 = vld [vmem:[%s965] sm:$0xff]
    %2587 = vmatpush.bf16.msra.mxu0 %v2219
    %2588 = vmatpush.bf16.msra.mxu0 %v2214
    %2589 = vmatpush.bf16.msra.mxu0 %v2209
    %2590 = vmatpush.bf16.msra.mxu0 %v2204
    %2591 = vmatpush.bf16.msra.mxu0 %v2199
    %2592 = vmatpush.bf16.msra.mxu0 %v2194
    %2593 = vmatpush.bf16.msra.mxu0 %v2189
    %2594 = vmatpush.bf16.msra.mxu0 %v2184
    %2595 = vmatmul.bf16.gmra.mxu0 %v2584
    %v2596 = vpop.f32.mrf.mxu0
    %v2597 = vadd.f32 0.0, %v2596
    %v2598 = vpop.f32.mrf.mxu0
    %2599 = vdwg.mxu0
    %2600 = vmatpush.bf16.msra.mxu0 %v2220
    %2601 = vmatpush.bf16.msra.mxu0 %v2215
    %2602 = vmatpush.bf16.msra.mxu0 %v2210
    %2603 = vmatpush.bf16.msra.mxu0 %v2205
    %2604 = vmatpush.bf16.msra.mxu0 %v2200
    %2605 = vmatpush.bf16.msra.mxu0 %v2195
    %2606 = vmatpush.bf16.msra.mxu0 %v2190
    %2607 = vmatpush.bf16.msra.mxu0 %v2185
    %2608 = vmatmul.bf16.gmra.mxu0 %v2584
    %v2609 = vpop.f32.mrf.mxu0
    %v2610 = vadd.f32 0.0, %v2609
    %v2611 = vpop.f32.mrf.mxu0
    %2612 = vdwg.mxu0
    %2613 = vmatpush.bf16.msra.mxu0 %v2221
    %2614 = vmatpush.bf16.msra.mxu0 %v2216
    %2615 = vmatpush.bf16.msra.mxu0 %v2211
    %2616 = vmatpush.bf16.msra.mxu0 %v2206
    %2617 = vmatpush.bf16.msra.mxu0 %v2201
    %2618 = vmatpush.bf16.msra.mxu0 %v2196
    %2619 = vmatpush.bf16.msra.mxu0 %v2191
    %2620 = vmatpush.bf16.msra.mxu0 %v2186
    %2621 = vmatmul.bf16.gmra.mxu0 %v2584
    %v2622 = vpop.f32.mrf.mxu0
    %v2623 = vadd.f32 0.0, %v2622
    %v2624 = vpop.f32.mrf.mxu0
    %2625 = vdwg.mxu0
    %2626 = vmatpush.bf16.msra.mxu0 %v2222
    %2627 = vmatpush.bf16.msra.mxu0 %v2217
    %2628 = vmatpush.bf16.msra.mxu0 %v2212
    %2629 = vmatpush.bf16.msra.mxu0 %v2207
    %2630 = vmatpush.bf16.msra.mxu0 %v2202
    %2631 = vmatpush.bf16.msra.mxu0 %v2197
    %2632 = vmatpush.bf16.msra.mxu0 %v2192
    %2633 = vmatpush.bf16.msra.mxu0 %v2187
    %2634 = vmatmul.bf16.gmra.mxu0 %v2584
    %v2635 = vpop.f32.mrf.mxu0
    %v2636 = vadd.f32 0.0, %v2635
    %v2637 = vpop.f32.mrf.mxu0
    %2638 = vdwg.mxu0
    %2639 = vmatpush.bf16.msra.mxu0 %v2223
    %2640 = vmatpush.bf16.msra.mxu0 %v2218
    %2641 = vmatpush.bf16.msra.mxu0 %v2213
    %2642 = vmatpush.bf16.msra.mxu0 %v2208
    %2643 = vmatpush.bf16.msra.mxu0 %v2203
    %2644 = vmatpush.bf16.msra.mxu0 %v2198
    %2645 = vmatpush.bf16.msra.mxu0 %v2193
    %2646 = vmatpush.bf16.msra.mxu0 %v2188
    %2647 = vmatmul.bf16.gmra.mxu0 %v2584
    %v2648 = vpop.f32.mrf.mxu0
    %v2649 = vadd.f32 0.0, %v2648
    %v2650 = vpop.f32.mrf.mxu0
    %2651 = vdwg.mxu0
    %v2652 = vld [vmem:[%s878] sm:$0xff]
    %v2653 = vadd.f32 %v2597, %v2652
    %v2654 = vmul.f32 %v2653, 0.5
    %v2655 = vtanh.pop %v2654
    %v2656 = vmul.f32 %v2655, 0.5
    %v2657 = vadd.f32 %v2656, 0.5
    %v2658 = vmul.f32 %v2657, %v2586
    %v2659 = vpack.c.bf16 %v2658, %v2658
    %2660 = vmatpush.bf16.msra.mxu0 %v2461
    %2661 = vmatpush.bf16.msra.mxu0 %v2457
    %2662 = vmatpush.bf16.msra.mxu0 %v2453
    %2663 = vmatpush.bf16.msra.mxu0 %v2449
    %2664 = vmatpush.bf16.msra.mxu0 %v2445
    %2665 = vmatpush.bf16.msra.mxu0 %v2441
    %2666 = vmatpush.bf16.msra.mxu0 %v2437
    %2667 = vmatpush.bf16.msra.mxu0 %v2433
    %2668 = vmatmul.bf16.gmra.mxu0 %v2659
    %v2669 = vpop.f32.mrf.mxu0
    %v2670 = vadd.f32 0.0, %v2669
    %v2671 = vpop.f32.mrf.mxu0
    %2672 = vdwg.mxu0
    %2673 = vmatpush.bf16.msra.mxu0 %v2462
    %2674 = vmatpush.bf16.msra.mxu0 %v2458
    %2675 = vmatpush.bf16.msra.mxu0 %v2454
    %2676 = vmatpush.bf16.msra.mxu0 %v2450
    %2677 = vmatpush.bf16.msra.mxu0 %v2446
    %2678 = vmatpush.bf16.msra.mxu0 %v2442
    %2679 = vmatpush.bf16.msra.mxu0 %v2438
    %2680 = vmatpush.bf16.msra.mxu0 %v2434
    %2681 = vmatmul.bf16.gmra.mxu0 %v2659
    %v2682 = vpop.f32.mrf.mxu0
    %v2683 = vadd.f32 0.0, %v2682
    %v2684 = vpop.f32.mrf.mxu0
    %2685 = vdwg.mxu0
    %2686 = vmatpush.bf16.msra.mxu0 %v2463
    %2687 = vmatpush.bf16.msra.mxu0 %v2459
    %2688 = vmatpush.bf16.msra.mxu0 %v2455
    %2689 = vmatpush.bf16.msra.mxu0 %v2451
    %2690 = vmatpush.bf16.msra.mxu0 %v2447
    %2691 = vmatpush.bf16.msra.mxu0 %v2443
    %2692 = vmatpush.bf16.msra.mxu0 %v2439
    %2693 = vmatpush.bf16.msra.mxu0 %v2435
    %2694 = vmatmul.bf16.gmra.mxu0 %v2659
    %v2695 = vpop.f32.mrf.mxu0
    %v2696 = vadd.f32 0.0, %v2695
    %v2697 = vpop.f32.mrf.mxu0
    %2698 = vdwg.mxu0
    %2699 = vmatpush.bf16.msra.mxu0 %v2464
    %2700 = vmatpush.bf16.msra.mxu0 %v2460
    %2701 = vmatpush.bf16.msra.mxu0 %v2456
    %2702 = vmatpush.bf16.msra.mxu0 %v2452
    %2703 = vmatpush.bf16.msra.mxu0 %v2448
    %2704 = vmatpush.bf16.msra.mxu0 %v2444
    %2705 = vmatpush.bf16.msra.mxu0 %v2440
    %2706 = vmatpush.bf16.msra.mxu0 %v2436
    %2707 = vmatmul.bf16.gmra.mxu0 %v2659
    %v2708 = vpop.f32.mrf.mxu0
    %v2709 = vadd.f32 0.0, %v2708
    %v2710 = vpop.f32.mrf.mxu0
    %2711 = vdwg.mxu0
    %v2712 = vadd.f32 %v2610, %v2670
    %v2713 = vadd.f32 %v2623, %v2683
    %v2714 = vadd.f32 %v2636, %v2696
    %v2715 = vadd.f32 %v2649, %v2709
    %v2716 = vadd.f32 %v2712, %v2554
    %v2717 = vadd.f32 %v2713, %v2555
    %v2718 = vadd.f32 %v2714, %v2556
    %v2719 = vadd.f32 %v2715, %v2557
    %v2720 = vmul.f32 %v2716, 0.5
    %v2721 = vtanh.pop %v2720
    %v2722 = vmul.f32 %v2721, 0.5
    %v2723 = vadd.f32 %v2722, 0.5
    %v2724 = vmul.f32 %v2717, 0.5
    %v2725 = vtanh.pop %v2724
    %v2726 = vmul.f32 %v2725, 0.5
    %v2727 = vadd.f32 %v2726, 0.5
    %v2728 = vtanh.pop %v2718
    %v2729 = vmul.f32 %v2719, 0.5
    %v2730 = vtanh.pop %v2729
    %v2731 = vmul.f32 %v2730, 0.5
    %v2732 = vadd.f32 %v2731, 0.5
    %v2733 = vmul.f32 %v2727, %v2581
    %v2734 = vmul.f32 %v2723, %v2728
    %v2735 = vadd.f32 %v2733, %v2734
    %v2736 = vtanh.pop %v2735
    %v2737 = vmul.f32 %v2732, %v2736
    %v2738 = vpack.c.bf16 %v2737, %v2737
    %s2739 = scalar_lea.vmem [#allocation11], 4
    %2740 = vst [vmem:[%s2739] sm:$0xf] %v2738
    %v2741 = vld [vmem:[%s1123] sm:$0xff]
    %2742 = vmatpush.bf16.msra.mxu0 %v2219
    %2743 = vmatpush.bf16.msra.mxu0 %v2214
    %2744 = vmatpush.bf16.msra.mxu0 %v2209
    %2745 = vmatpush.bf16.msra.mxu0 %v2204
    %2746 = vmatpush.bf16.msra.mxu0 %v2199
    %2747 = vmatpush.bf16.msra.mxu0 %v2194
    %2748 = vmatpush.bf16.msra.mxu0 %v2189
    %2749 = vmatpush.bf16.msra.mxu0 %v2184
    %2750 = vmatmul.bf16.gmra.mxu0 %v2738
    %v2751 = vpop.f32.mrf.mxu0
    %v2752 = vadd.f32 0.0, %v2751
    %v2753 = vpop.f32.mrf.mxu0
    %2754 = vdwg.mxu0
    %2755 = vmatpush.bf16.msra.mxu0 %v2220
    %2756 = vmatpush.bf16.msra.mxu0 %v2215
    %2757 = vmatpush.bf16.msra.mxu0 %v2210
    %2758 = vmatpush.bf16.msra.mxu0 %v2205
    %2759 = vmatpush.bf16.msra.mxu0 %v2200
    %2760 = vmatpush.bf16.msra.mxu0 %v2195
    %2761 = vmatpush.bf16.msra.mxu0 %v2190
    %2762 = vmatpush.bf16.msra.mxu0 %v2185
    %2763 = vmatmul.bf16.gmra.mxu0 %v2738
    %v2764 = vpop.f32.mrf.mxu0
    %v2765 = vadd.f32 0.0, %v2764
    %v2766 = vpop.f32.mrf.mxu0
    %2767 = vdwg.mxu0
    %2768 = vmatpush.bf16.msra.mxu0 %v2221
    %2769 = vmatpush.bf16.msra.mxu0 %v2216
    %2770 = vmatpush.bf16.msra.mxu0 %v2211
    %2771 = vmatpush.bf16.msra.mxu0 %v2206
    %2772 = vmatpush.bf16.msra.mxu0 %v2201
    %2773 = vmatpush.bf16.msra.mxu0 %v2196
    %2774 = vmatpush.bf16.msra.mxu0 %v2191
    %2775 = vmatpush.bf16.msra.mxu0 %v2186
    %2776 = vmatmul.bf16.gmra.mxu0 %v2738
    %v2777 = vpop.f32.mrf.mxu0
    %v2778 = vadd.f32 0.0, %v2777
    %v2779 = vpop.f32.mrf.mxu0
    %2780 = vdwg.mxu0
    %2781 = vmatpush.bf16.msra.mxu0 %v2222
    %2782 = vmatpush.bf16.msra.mxu0 %v2217
    %2783 = vmatpush.bf16.msra.mxu0 %v2212
    %2784 = vmatpush.bf16.msra.mxu0 %v2207
    %2785 = vmatpush.bf16.msra.mxu0 %v2202
    %2786 = vmatpush.bf16.msra.mxu0 %v2197
    %2787 = vmatpush.bf16.msra.mxu0 %v2192
    %2788 = vmatpush.bf16.msra.mxu0 %v2187
    %2789 = vmatmul.bf16.gmra.mxu0 %v2738
    %v2790 = vpop.f32.mrf.mxu0
    %v2791 = vadd.f32 0.0, %v2790
    %v2792 = vpop.f32.mrf.mxu0
    %2793 = vdwg.mxu0
    %2794 = vmatpush.bf16.msra.mxu0 %v2223
    %2795 = vmatpush.bf16.msra.mxu0 %v2218
    %2796 = vmatpush.bf16.msra.mxu0 %v2213
    %2797 = vmatpush.bf16.msra.mxu0 %v2208
    %2798 = vmatpush.bf16.msra.mxu0 %v2203
    %2799 = vmatpush.bf16.msra.mxu0 %v2198
    %2800 = vmatpush.bf16.msra.mxu0 %v2193
    %2801 = vmatpush.bf16.msra.mxu0 %v2188
    %2802 = vmatmul.bf16.gmra.mxu0 %v2738
    %v2803 = vpop.f32.mrf.mxu0
    %v2804 = vadd.f32 0.0, %v2803
    %v2805 = vpop.f32.mrf.mxu0
    %2806 = vdwg.mxu0
    %v2807 = vld [vmem:[%s1036] sm:$0xff]
    %v2808 = vadd.f32 %v2752, %v2807
    %v2809 = vmul.f32 %v2808, 0.5
    %v2810 = vtanh.pop %v2809
    %v2811 = vmul.f32 %v2810, 0.5
    %v2812 = vadd.f32 %v2811, 0.5
    %v2813 = vmul.f32 %v2812, %v2741
    %v2814 = vpack.c.bf16 %v2813, %v2813
    %2815 = vmatpush.bf16.msra.mxu0 %v2461
    %2816 = vmatpush.bf16.msra.mxu0 %v2457
    %2817 = vmatpush.bf16.msra.mxu0 %v2453
    %2818 = vmatpush.bf16.msra.mxu0 %v2449
    %2819 = vmatpush.bf16.msra.mxu0 %v2445
    %2820 = vmatpush.bf16.msra.mxu0 %v2441
    %2821 = vmatpush.bf16.msra.mxu0 %v2437
    %2822 = vmatpush.bf16.msra.mxu0 %v2433
    %2823 = vmatmul.bf16.gmra.mxu0 %v2814
    %v2824 = vpop.f32.mrf.mxu0
    %v2825 = vadd.f32 0.0, %v2824
    %v2826 = vpop.f32.mrf.mxu0
    %2827 = vdwg.mxu0
    %2828 = vmatpush.bf16.msra.mxu0 %v2462
    %2829 = vmatpush.bf16.msra.mxu0 %v2458
    %2830 = vmatpush.bf16.msra.mxu0 %v2454
    %2831 = vmatpush.bf16.msra.mxu0 %v2450
    %2832 = vmatpush.bf16.msra.mxu0 %v2446
    %2833 = vmatpush.bf16.msra.mxu0 %v2442
    %2834 = vmatpush.bf16.msra.mxu0 %v2438
    %2835 = vmatpush.bf16.msra.mxu0 %v2434
    %2836 = vmatmul.bf16.gmra.mxu0 %v2814
    %v2837 = vpop.f32.mrf.mxu0
    %v2838 = vadd.f32 0.0, %v2837
    %v2839 = vpop.f32.mrf.mxu0
    %2840 = vdwg.mxu0
    %2841 = vmatpush.bf16.msra.mxu0 %v2463
    %2842 = vmatpush.bf16.msra.mxu0 %v2459
    %2843 = vmatpush.bf16.msra.mxu0 %v2455
    %2844 = vmatpush.bf16.msra.mxu0 %v2451
    %2845 = vmatpush.bf16.msra.mxu0 %v2447
    %2846 = vmatpush.bf16.msra.mxu0 %v2443
    %2847 = vmatpush.bf16.msra.mxu0 %v2439
    %2848 = vmatpush.bf16.msra.mxu0 %v2435
    %2849 = vmatmul.bf16.gmra.mxu0 %v2814
    %v2850 = vpop.f32.mrf.mxu0
    %v2851 = vadd.f32 0.0, %v2850
    %v2852 = vpop.f32.mrf.mxu0
    %2853 = vdwg.mxu0
    %2854 = vmatpush.bf16.msra.mxu0 %v2464
    %2855 = vmatpush.bf16.msra.mxu0 %v2460
    %2856 = vmatpush.bf16.msra.mxu0 %v2456
    %2857 = vmatpush.bf16.msra.mxu0 %v2452
    %2858 = vmatpush.bf16.msra.mxu0 %v2448
    %2859 = vmatpush.bf16.msra.mxu0 %v2444
    %2860 = vmatpush.bf16.msra.mxu0 %v2440
    %2861 = vmatpush.bf16.msra.mxu0 %v2436
    %2862 = vmatmul.bf16.gmra.mxu0 %v2814
    %v2863 = vpop.f32.mrf.mxu0
    %v2864 = vadd.f32 0.0, %v2863
    %v2865 = vpop.f32.mrf.mxu0
    %2866 = vdwg.mxu0
    %v2867 = vadd.f32 %v2765, %v2825
    %v2868 = vadd.f32 %v2778, %v2838
    %v2869 = vadd.f32 %v2791, %v2851
    %v2870 = vadd.f32 %v2804, %v2864
    %v2871 = vadd.f32 %v2867, %v2554
    %v2872 = vadd.f32 %v2868, %v2555
    %v2873 = vadd.f32 %v2869, %v2556
    %v2874 = vadd.f32 %v2870, %v2557
    %v2875 = vmul.f32 %v2871, 0.5
    %v2876 = vtanh.pop %v2875
    %v2877 = vmul.f32 %v2876, 0.5
    %v2878 = vadd.f32 %v2877, 0.5
    %v2879 = vmul.f32 %v2872, 0.5
    %v2880 = vtanh.pop %v2879
    %v2881 = vmul.f32 %v2880, 0.5
    %v2882 = vadd.f32 %v2881, 0.5
    %v2883 = vtanh.pop %v2873
    %v2884 = vmul.f32 %v2874, 0.5
    %v2885 = vtanh.pop %v2884
    %v2886 = vmul.f32 %v2885, 0.5
    %v2887 = vadd.f32 %v2886, 0.5
    %v2888 = vmul.f32 %v2882, %v2735
    %v2889 = vmul.f32 %v2878, %v2883
    %v2890 = vadd.f32 %v2888, %v2889
    %v2891 = vtanh.pop %v2890
    %v2892 = vmul.f32 %v2887, %v2891
    %v2893 = vpack.c.bf16 %v2892, %v2892
    %s2894 = scalar_lea.vmem [#allocation11], 8
    %2895 = vst [vmem:[%s2894] sm:$0xf] %v2893
    %v2896 = vld [vmem:[%s1281] sm:$0xff]
    %2897 = vmatpush.bf16.msra.mxu0 %v2219
    %2898 = vmatpush.bf16.msra.mxu0 %v2214
    %2899 = vmatpush.bf16.msra.mxu0 %v2209
    %2900 = vmatpush.bf16.msra.mxu0 %v2204
    %2901 = vmatpush.bf16.msra.mxu0 %v2199
    %2902 = vmatpush.bf16.msra.mxu0 %v2194
    %2903 = vmatpush.bf16.msra.mxu0 %v2189
    %2904 = vmatpush.bf16.msra.mxu0 %v2184
    %2905 = vmatmul.bf16.gmra.mxu0 %v2893
    %v2906 = vpop.f32.mrf.mxu0
    %v2907 = vadd.f32 0.0, %v2906
    %v2908 = vpop.f32.mrf.mxu0
    %2909 = vdwg.mxu0
    %2910 = vmatpush.bf16.msra.mxu0 %v2220
    %2911 = vmatpush.bf16.msra.mxu0 %v2215
    %2912 = vmatpush.bf16.msra.mxu0 %v2210
    %2913 = vmatpush.bf16.msra.mxu0 %v2205
    %2914 = vmatpush.bf16.msra.mxu0 %v2200
    %2915 = vmatpush.bf16.msra.mxu0 %v2195
    %2916 = vmatpush.bf16.msra.mxu0 %v2190
    %2917 = vmatpush.bf16.msra.mxu0 %v2185
    %2918 = vmatmul.bf16.gmra.mxu0 %v2893
    %v2919 = vpop.f32.mrf.mxu0
    %v2920 = vadd.f32 0.0, %v2919
    %v2921 = vpop.f32.mrf.mxu0
    %2922 = vdwg.mxu0
    %2923 = vmatpush.bf16.msra.mxu0 %v2221
    %2924 = vmatpush.bf16.msra.mxu0 %v2216
    %2925 = vmatpush.bf16.msra.mxu0 %v2211
    %2926 = vmatpush.bf16.msra.mxu0 %v2206
    %2927 = vmatpush.bf16.msra.mxu0 %v2201
    %2928 = vmatpush.bf16.msra.mxu0 %v2196
    %2929 = vmatpush.bf16.msra.mxu0 %v2191
    %2930 = vmatpush.bf16.msra.mxu0 %v2186
    %2931 = vmatmul.bf16.gmra.mxu0 %v2893
    %v2932 = vpop.f32.mrf.mxu0
    %v2933 = vadd.f32 0.0, %v2932
    %v2934 = vpop.f32.mrf.mxu0
    %2935 = vdwg.mxu0
    %2936 = vmatpush.bf16.msra.mxu0 %v2222
    %2937 = vmatpush.bf16.msra.mxu0 %v2217
    %2938 = vmatpush.bf16.msra.mxu0 %v2212
    %2939 = vmatpush.bf16.msra.mxu0 %v2207
    %2940 = vmatpush.bf16.msra.mxu0 %v2202
    %2941 = vmatpush.bf16.msra.mxu0 %v2197
    %2942 = vmatpush.bf16.msra.mxu0 %v2192
    %2943 = vmatpush.bf16.msra.mxu0 %v2187
    %2944 = vmatmul.bf16.gmra.mxu0 %v2893
    %v2945 = vpop.f32.mrf.mxu0
    %v2946 = vadd.f32 0.0, %v2945
    %v2947 = vpop.f32.mrf.mxu0
    %2948 = vdwg.mxu0
    %2949 = vmatpush.bf16.msra.mxu0 %v2223
    %2950 = vmatpush.bf16.msra.mxu0 %v2218
    %2951 = vmatpush.bf16.msra.mxu0 %v2213
    %2952 = vmatpush.bf16.msra.mxu0 %v2208
    %2953 = vmatpush.bf16.msra.mxu0 %v2203
    %2954 = vmatpush.bf16.msra.mxu0 %v2198
    %2955 = vmatpush.bf16.msra.mxu0 %v2193
    %2956 = vmatpush.bf16.msra.mxu0 %v2188
    %2957 = vmatmul.bf16.gmra.mxu0 %v2893
    %v2958 = vpop.f32.mrf.mxu0
    %v2959 = vadd.f32 0.0, %v2958
    %v2960 = vpop.f32.mrf.mxu0
    %2961 = vdwg.mxu0
    %v2962 = vld [vmem:[%s1194] sm:$0xff]
    %v2963 = vadd.f32 %v2907, %v2962
    %v2964 = vmul.f32 %v2963, 0.5
    %v2965 = vtanh.pop %v2964
    %v2966 = vmul.f32 %v2965, 0.5
    %v2967 = vadd.f32 %v2966, 0.5
    %v2968 = vmul.f32 %v2967, %v2896
    %v2969 = vpack.c.bf16 %v2968, %v2968
    %2970 = vmatpush.bf16.msra.mxu0 %v2461
    %2971 = vmatpush.bf16.msra.mxu0 %v2457
    %2972 = vmatpush.bf16.msra.mxu0 %v2453
    %2973 = vmatpush.bf16.msra.mxu0 %v2449
    %2974 = vmatpush.bf16.msra.mxu0 %v2445
    %2975 = vmatpush.bf16.msra.mxu0 %v2441
    %2976 = vmatpush.bf16.msra.mxu0 %v2437
    %2977 = vmatpush.bf16.msra.mxu0 %v2433
    %2978 = vmatmul.bf16.gmra.mxu0 %v2969
    %v2979 = vpop.f32.mrf.mxu0
    %v2980 = vadd.f32 0.0, %v2979
    %v2981 = vpop.f32.mrf.mxu0
    %2982 = vdwg.mxu0
    %2983 = vmatpush.bf16.msra.mxu0 %v2462
    %2984 = vmatpush.bf16.msra.mxu0 %v2458
    %2985 = vmatpush.bf16.msra.mxu0 %v2454
    %2986 = vmatpush.bf16.msra.mxu0 %v2450
    %2987 = vmatpush.bf16.msra.mxu0 %v2446
    %2988 = vmatpush.bf16.msra.mxu0 %v2442
    %2989 = vmatpush.bf16.msra.mxu0 %v2438
    %2990 = vmatpush.bf16.msra.mxu0 %v2434
    %2991 = vmatmul.bf16.gmra.mxu0 %v2969
    %v2992 = vpop.f32.mrf.mxu0
    %v2993 = vadd.f32 0.0, %v2992
    %v2994 = vpop.f32.mrf.mxu0
    %2995 = vdwg.mxu0
    %2996 = vmatpush.bf16.msra.mxu0 %v2463
    %2997 = vmatpush.bf16.msra.mxu0 %v2459
    %2998 = vmatpush.bf16.msra.mxu0 %v2455
    %2999 = vmatpush.bf16.msra.mxu0 %v2451
    %3000 = vmatpush.bf16.msra.mxu0 %v2447
    %3001 = vmatpush.bf16.msra.mxu0 %v2443
    %3002 = vmatpush.bf16.msra.mxu0 %v2439
    %3003 = vmatpush.bf16.msra.mxu0 %v2435
    %3004 = vmatmul.bf16.gmra.mxu0 %v2969
    %v3005 = vpop.f32.mrf.mxu0
    %v3006 = vadd.f32 0.0, %v3005
    %v3007 = vpop.f32.mrf.mxu0
    %3008 = vdwg.mxu0
    %3009 = vmatpush.bf16.msra.mxu0 %v2464
    %3010 = vmatpush.bf16.msra.mxu0 %v2460
    %3011 = vmatpush.bf16.msra.mxu0 %v2456
    %3012 = vmatpush.bf16.msra.mxu0 %v2452
    %3013 = vmatpush.bf16.msra.mxu0 %v2448
    %3014 = vmatpush.bf16.msra.mxu0 %v2444
    %3015 = vmatpush.bf16.msra.mxu0 %v2440
    %3016 = vmatpush.bf16.msra.mxu0 %v2436
    %3017 = vmatmul.bf16.gmra.mxu0 %v2969
    %v3018 = vpop.f32.mrf.mxu0
    %v3019 = vadd.f32 0.0, %v3018
    %v3020 = vpop.f32.mrf.mxu0
    %3021 = vdwg.mxu0
    %v3022 = vadd.f32 %v2920, %v2980
    %v3023 = vadd.f32 %v2933, %v2993
    %v3024 = vadd.f32 %v2946, %v3006
    %v3025 = vadd.f32 %v2959, %v3019
    %v3026 = vadd.f32 %v3022, %v2554
    %v3027 = vadd.f32 %v3023, %v2555
    %v3028 = vadd.f32 %v3024, %v2556
    %v3029 = vadd.f32 %v3025, %v2557
    %v3030 = vmul.f32 %v3026, 0.5
    %v3031 = vtanh.pop %v3030
    %v3032 = vmul.f32 %v3031, 0.5
    %v3033 = vadd.f32 %v3032, 0.5
    %v3034 = vmul.f32 %v3027, 0.5
    %v3035 = vtanh.pop %v3034
    %v3036 = vmul.f32 %v3035, 0.5
    %v3037 = vadd.f32 %v3036, 0.5
    %v3038 = vtanh.pop %v3028
    %v3039 = vmul.f32 %v3029, 0.5
    %v3040 = vtanh.pop %v3039
    %v3041 = vmul.f32 %v3040, 0.5
    %v3042 = vadd.f32 %v3041, 0.5
    %v3043 = vmul.f32 %v3037, %v2890
    %v3044 = vmul.f32 %v3033, %v3038
    %v3045 = vadd.f32 %v3043, %v3044
    %v3046 = vtanh.pop %v3045
    %v3047 = vmul.f32 %v3042, %v3046
    %v3048 = vpack.c.bf16 %v3047, %v3047
    %s3049 = scalar_lea.vmem [#allocation11], 12
    %3050 = vst [vmem:[%s3049] sm:$0xf] %v3048
    %v3051 = vld [vmem:[%s1439] sm:$0xff]
    %3052 = vmatpush.bf16.msra.mxu0 %v2219
    %3053 = vmatpush.bf16.msra.mxu0 %v2214
    %3054 = vmatpush.bf16.msra.mxu0 %v2209
    %3055 = vmatpush.bf16.msra.mxu0 %v2204
    %3056 = vmatpush.bf16.msra.mxu0 %v2199
    %3057 = vmatpush.bf16.msra.mxu0 %v2194
    %3058 = vmatpush.bf16.msra.mxu0 %v2189
    %3059 = vmatpush.bf16.msra.mxu0 %v2184
    %3060 = vmatmul.bf16.gmra.mxu0 %v3048
    %v3061 = vpop.f32.mrf.mxu0
    %v3062 = vadd.f32 0.0, %v3061
    %v3063 = vpop.f32.mrf.mxu0
    %3064 = vdwg.mxu0
    %3065 = vmatpush.bf16.msra.mxu0 %v2220
    %3066 = vmatpush.bf16.msra.mxu0 %v2215
    %3067 = vmatpush.bf16.msra.mxu0 %v2210
    %3068 = vmatpush.bf16.msra.mxu0 %v2205
    %3069 = vmatpush.bf16.msra.mxu0 %v2200
    %3070 = vmatpush.bf16.msra.mxu0 %v2195
    %3071 = vmatpush.bf16.msra.mxu0 %v2190
    %3072 = vmatpush.bf16.msra.mxu0 %v2185
    %3073 = vmatmul.bf16.gmra.mxu0 %v3048
    %v3074 = vpop.f32.mrf.mxu0
    %v3075 = vadd.f32 0.0, %v3074
    %v3076 = vpop.f32.mrf.mxu0
    %3077 = vdwg.mxu0
    %3078 = vmatpush.bf16.msra.mxu0 %v2221
    %3079 = vmatpush.bf16.msra.mxu0 %v2216
    %3080 = vmatpush.bf16.msra.mxu0 %v2211
    %3081 = vmatpush.bf16.msra.mxu0 %v2206
    %3082 = vmatpush.bf16.msra.mxu0 %v2201
    %3083 = vmatpush.bf16.msra.mxu0 %v2196
    %3084 = vmatpush.bf16.msra.mxu0 %v2191
    %3085 = vmatpush.bf16.msra.mxu0 %v2186
    %3086 = vmatmul.bf16.gmra.mxu0 %v3048
    %v3087 = vpop.f32.mrf.mxu0
    %v3088 = vadd.f32 0.0, %v3087
    %v3089 = vpop.f32.mrf.mxu0
    %3090 = vdwg.mxu0
    %3091 = vmatpush.bf16.msra.mxu0 %v2222
    %3092 = vmatpush.bf16.msra.mxu0 %v2217
    %3093 = vmatpush.bf16.msra.mxu0 %v2212
    %3094 = vmatpush.bf16.msra.mxu0 %v2207
    %3095 = vmatpush.bf16.msra.mxu0 %v2202
    %3096 = vmatpush.bf16.msra.mxu0 %v2197
    %3097 = vmatpush.bf16.msra.mxu0 %v2192
    %3098 = vmatpush.bf16.msra.mxu0 %v2187
    %3099 = vmatmul.bf16.gmra.mxu0 %v3048
    %v3100 = vpop.f32.mrf.mxu0
    %v3101 = vadd.f32 0.0, %v3100
    %v3102 = vpop.f32.mrf.mxu0
    %3103 = vdwg.mxu0
    %3104 = vmatpush.bf16.msra.mxu0 %v2223
    %3105 = vmatpush.bf16.msra.mxu0 %v2218
    %3106 = vmatpush.bf16.msra.mxu0 %v2213
    %3107 = vmatpush.bf16.msra.mxu0 %v2208
    %3108 = vmatpush.bf16.msra.mxu0 %v2203
    %3109 = vmatpush.bf16.msra.mxu0 %v2198
    %3110 = vmatpush.bf16.msra.mxu0 %v2193
    %3111 = vmatpush.bf16.msra.mxu0 %v2188
    %3112 = vmatmul.bf16.gmra.mxu0 %v3048
    %v3113 = vpop.f32.mrf.mxu0
    %v3114 = vadd.f32 0.0, %v3113
    %v3115 = vpop.f32.mrf.mxu0
    %3116 = vdwg.mxu0
    %v3117 = vld [vmem:[%s1352] sm:$0xff]
    %v3118 = vadd.f32 %v3062, %v3117
    %v3119 = vmul.f32 %v3118, 0.5
    %v3120 = vtanh.pop %v3119
    %v3121 = vmul.f32 %v3120, 0.5
    %v3122 = vadd.f32 %v3121, 0.5
    %v3123 = vmul.f32 %v3122, %v3051
    %v3124 = vpack.c.bf16 %v3123, %v3123
    %3125 = vmatpush.bf16.msra.mxu0 %v2461
    %3126 = vmatpush.bf16.msra.mxu0 %v2457
    %3127 = vmatpush.bf16.msra.mxu0 %v2453
    %3128 = vmatpush.bf16.msra.mxu0 %v2449
    %3129 = vmatpush.bf16.msra.mxu0 %v2445
    %3130 = vmatpush.bf16.msra.mxu0 %v2441
    %3131 = vmatpush.bf16.msra.mxu0 %v2437
    %3132 = vmatpush.bf16.msra.mxu0 %v2433
    %3133 = vmatmul.bf16.gmra.mxu0 %v3124
    %v3134 = vpop.f32.mrf.mxu0
    %v3135 = vadd.f32 0.0, %v3134
    %v3136 = vpop.f32.mrf.mxu0
    %3137 = vdwg.mxu0
    %3138 = vmatpush.bf16.msra.mxu0 %v2462
    %3139 = vmatpush.bf16.msra.mxu0 %v2458
    %3140 = vmatpush.bf16.msra.mxu0 %v2454
    %3141 = vmatpush.bf16.msra.mxu0 %v2450
    %3142 = vmatpush.bf16.msra.mxu0 %v2446
    %3143 = vmatpush.bf16.msra.mxu0 %v2442
    %3144 = vmatpush.bf16.msra.mxu0 %v2438
    %3145 = vmatpush.bf16.msra.mxu0 %v2434
    %3146 = vmatmul.bf16.gmra.mxu0 %v3124
    %v3147 = vpop.f32.mrf.mxu0
    %v3148 = vadd.f32 0.0, %v3147
    %v3149 = vpop.f32.mrf.mxu0
    %3150 = vdwg.mxu0
    %3151 = vmatpush.bf16.msra.mxu0 %v2463
    %3152 = vmatpush.bf16.msra.mxu0 %v2459
    %3153 = vmatpush.bf16.msra.mxu0 %v2455
    %3154 = vmatpush.bf16.msra.mxu0 %v2451
    %3155 = vmatpush.bf16.msra.mxu0 %v2447
    %3156 = vmatpush.bf16.msra.mxu0 %v2443
    %3157 = vmatpush.bf16.msra.mxu0 %v2439
    %3158 = vmatpush.bf16.msra.mxu0 %v2435
    %3159 = vmatmul.bf16.gmra.mxu0 %v3124
    %v3160 = vpop.f32.mrf.mxu0
    %v3161 = vadd.f32 0.0, %v3160
    %v3162 = vpop.f32.mrf.mxu0
    %3163 = vdwg.mxu0
    %3164 = vmatpush.bf16.msra.mxu0 %v2464
    %3165 = vmatpush.bf16.msra.mxu0 %v2460
    %3166 = vmatpush.bf16.msra.mxu0 %v2456
    %3167 = vmatpush.bf16.msra.mxu0 %v2452
    %3168 = vmatpush.bf16.msra.mxu0 %v2448
    %3169 = vmatpush.bf16.msra.mxu0 %v2444
    %3170 = vmatpush.bf16.msra.mxu0 %v2440
    %3171 = vmatpush.bf16.msra.mxu0 %v2436
    %3172 = vmatmul.bf16.gmra.mxu0 %v3124
    %v3173 = vpop.f32.mrf.mxu0
    %v3174 = vadd.f32 0.0, %v3173
    %v3175 = vpop.f32.mrf.mxu0
    %3176 = vdwg.mxu0
    %v3177 = vadd.f32 %v3075, %v3135
    %v3178 = vadd.f32 %v3088, %v3148
    %v3179 = vadd.f32 %v3101, %v3161
    %v3180 = vadd.f32 %v3114, %v3174
    %v3181 = vadd.f32 %v3177, %v2554
    %v3182 = vadd.f32 %v3178, %v2555
    %v3183 = vadd.f32 %v3179, %v2556
    %v3184 = vadd.f32 %v3180, %v2557
    %v3185 = vmul.f32 %v3181, 0.5
    %v3186 = vtanh.pop %v3185
    %v3187 = vmul.f32 %v3186, 0.5
    %v3188 = vadd.f32 %v3187, 0.5
    %v3189 = vmul.f32 %v3182, 0.5
    %v3190 = vtanh.pop %v3189
    %v3191 = vmul.f32 %v3190, 0.5
    %v3192 = vadd.f32 %v3191, 0.5
    %v3193 = vtanh.pop %v3183
    %v3194 = vmul.f32 %v3184, 0.5
    %v3195 = vtanh.pop %v3194
    %v3196 = vmul.f32 %v3195, 0.5
    %v3197 = vadd.f32 %v3196, 0.5
    %v3198 = vmul.f32 %v3192, %v3045
    %v3199 = vmul.f32 %v3188, %v3193
    %v3200 = vadd.f32 %v3198, %v3199
    %v3201 = vtanh.pop %v3200
    %v3202 = vmul.f32 %v3197, %v3201
    %v3203 = vpack.c.bf16 %v3202, %v3202
    %s3204 = scalar_lea.vmem [#allocation11], 16
    %3205 = vst [vmem:[%s3204] sm:$0xf] %v3203
    %v3206 = vld [vmem:[%s1597] sm:$0xff]
    %3207 = vmatpush.bf16.msra.mxu0 %v2219
    %3208 = vmatpush.bf16.msra.mxu0 %v2214
    %3209 = vmatpush.bf16.msra.mxu0 %v2209
    %3210 = vmatpush.bf16.msra.mxu0 %v2204
    %3211 = vmatpush.bf16.msra.mxu0 %v2199
    %3212 = vmatpush.bf16.msra.mxu0 %v2194
    %3213 = vmatpush.bf16.msra.mxu0 %v2189
    %3214 = vmatpush.bf16.msra.mxu0 %v2184
    %3215 = vmatmul.bf16.gmra.mxu0 %v3203
    %v3216 = vpop.f32.mrf.mxu0
    %v3217 = vadd.f32 0.0, %v3216
    %v3218 = vpop.f32.mrf.mxu0
    %3219 = vdwg.mxu0
    %3220 = vmatpush.bf16.msra.mxu0 %v2220
    %3221 = vmatpush.bf16.msra.mxu0 %v2215
    %3222 = vmatpush.bf16.msra.mxu0 %v2210
    %3223 = vmatpush.bf16.msra.mxu0 %v2205
    %3224 = vmatpush.bf16.msra.mxu0 %v2200
    %3225 = vmatpush.bf16.msra.mxu0 %v2195
    %3226 = vmatpush.bf16.msra.mxu0 %v2190
    %3227 = vmatpush.bf16.msra.mxu0 %v2185
    %3228 = vmatmul.bf16.gmra.mxu0 %v3203
    %v3229 = vpop.f32.mrf.mxu0
    %v3230 = vadd.f32 0.0, %v3229
    %v3231 = vpop.f32.mrf.mxu0
    %3232 = vdwg.mxu0
    %3233 = vmatpush.bf16.msra.mxu0 %v2221
    %3234 = vmatpush.bf16.msra.mxu0 %v2216
    %3235 = vmatpush.bf16.msra.mxu0 %v2211
    %3236 = vmatpush.bf16.msra.mxu0 %v2206
    %3237 = vmatpush.bf16.msra.mxu0 %v2201
    %3238 = vmatpush.bf16.msra.mxu0 %v2196
    %3239 = vmatpush.bf16.msra.mxu0 %v2191
    %3240 = vmatpush.bf16.msra.mxu0 %v2186
    %3241 = vmatmul.bf16.gmra.mxu0 %v3203
    %v3242 = vpop.f32.mrf.mxu0
    %v3243 = vadd.f32 0.0, %v3242
    %v3244 = vpop.f32.mrf.mxu0
    %3245 = vdwg.mxu0
    %3246 = vmatpush.bf16.msra.mxu0 %v2222
    %3247 = vmatpush.bf16.msra.mxu0 %v2217
    %3248 = vmatpush.bf16.msra.mxu0 %v2212
    %3249 = vmatpush.bf16.msra.mxu0 %v2207
    %3250 = vmatpush.bf16.msra.mxu0 %v2202
    %3251 = vmatpush.bf16.msra.mxu0 %v2197
    %3252 = vmatpush.bf16.msra.mxu0 %v2192
    %3253 = vmatpush.bf16.msra.mxu0 %v2187
    %3254 = vmatmul.bf16.gmra.mxu0 %v3203
    %v3255 = vpop.f32.mrf.mxu0
    %v3256 = vadd.f32 0.0, %v3255
    %v3257 = vpop.f32.mrf.mxu0
    %3258 = vdwg.mxu0
    %3259 = vmatpush.bf16.msra.mxu0 %v2223
    %3260 = vmatpush.bf16.msra.mxu0 %v2218
    %3261 = vmatpush.bf16.msra.mxu0 %v2213
    %3262 = vmatpush.bf16.msra.mxu0 %v2208
    %3263 = vmatpush.bf16.msra.mxu0 %v2203
    %3264 = vmatpush.bf16.msra.mxu0 %v2198
    %3265 = vmatpush.bf16.msra.mxu0 %v2193
    %3266 = vmatpush.bf16.msra.mxu0 %v2188
    %3267 = vmatmul.bf16.gmra.mxu0 %v3203
    %v3268 = vpop.f32.mrf.mxu0
    %v3269 = vadd.f32 0.0, %v3268
    %v3270 = vpop.f32.mrf.mxu0
    %3271 = vdwg.mxu0
    %v3272 = vld [vmem:[%s1510] sm:$0xff]
    %v3273 = vadd.f32 %v3217, %v3272
    %v3274 = vmul.f32 %v3273, 0.5
    %v3275 = vtanh.pop %v3274
    %v3276 = vmul.f32 %v3275, 0.5
    %v3277 = vadd.f32 %v3276, 0.5
    %v3278 = vmul.f32 %v3277, %v3206
    %v3279 = vpack.c.bf16 %v3278, %v3278
    %3280 = vmatpush.bf16.msra.mxu0 %v2461
    %3281 = vmatpush.bf16.msra.mxu0 %v2457
    %3282 = vmatpush.bf16.msra.mxu0 %v2453
    %3283 = vmatpush.bf16.msra.mxu0 %v2449
    %3284 = vmatpush.bf16.msra.mxu0 %v2445
    %3285 = vmatpush.bf16.msra.mxu0 %v2441
    %3286 = vmatpush.bf16.msra.mxu0 %v2437
    %3287 = vmatpush.bf16.msra.mxu0 %v2433
    %3288 = vmatmul.bf16.gmra.mxu0 %v3279
    %v3289 = vpop.f32.mrf.mxu0
    %v3290 = vadd.f32 0.0, %v3289
    %v3291 = vpop.f32.mrf.mxu0
    %3292 = vdwg.mxu0
    %3293 = vmatpush.bf16.msra.mxu0 %v2462
    %3294 = vmatpush.bf16.msra.mxu0 %v2458
    %3295 = vmatpush.bf16.msra.mxu0 %v2454
    %3296 = vmatpush.bf16.msra.mxu0 %v2450
    %3297 = vmatpush.bf16.msra.mxu0 %v2446
    %3298 = vmatpush.bf16.msra.mxu0 %v2442
    %3299 = vmatpush.bf16.msra.mxu0 %v2438
    %3300 = vmatpush.bf16.msra.mxu0 %v2434
    %3301 = vmatmul.bf16.gmra.mxu0 %v3279
    %v3302 = vpop.f32.mrf.mxu0
    %v3303 = vadd.f32 0.0, %v3302
    %v3304 = vpop.f32.mrf.mxu0
    %3305 = vdwg.mxu0
    %3306 = vmatpush.bf16.msra.mxu0 %v2463
    %3307 = vmatpush.bf16.msra.mxu0 %v2459
    %3308 = vmatpush.bf16.msra.mxu0 %v2455
    %3309 = vmatpush.bf16.msra.mxu0 %v2451
    %3310 = vmatpush.bf16.msra.mxu0 %v2447
    %3311 = vmatpush.bf16.msra.mxu0 %v2443
    %3312 = vmatpush.bf16.msra.mxu0 %v2439
    %3313 = vmatpush.bf16.msra.mxu0 %v2435
    %3314 = vmatmul.bf16.gmra.mxu0 %v3279
    %v3315 = vpop.f32.mrf.mxu0
    %v3316 = vadd.f32 0.0, %v3315
    %v3317 = vpop.f32.mrf.mxu0
    %3318 = vdwg.mxu0
    %3319 = vmatpush.bf16.msra.mxu0 %v2464
    %3320 = vmatpush.bf16.msra.mxu0 %v2460
    %3321 = vmatpush.bf16.msra.mxu0 %v2456
    %3322 = vmatpush.bf16.msra.mxu0 %v2452
    %3323 = vmatpush.bf16.msra.mxu0 %v2448
    %3324 = vmatpush.bf16.msra.mxu0 %v2444
    %3325 = vmatpush.bf16.msra.mxu0 %v2440
    %3326 = vmatpush.bf16.msra.mxu0 %v2436
    %3327 = vmatmul.bf16.gmra.mxu0 %v3279
    %v3328 = vpop.f32.mrf.mxu0
    %v3329 = vadd.f32 0.0, %v3328
    %v3330 = vpop.f32.mrf.mxu0
    %3331 = vdwg.mxu0
    %v3332 = vadd.f32 %v3230, %v3290
    %v3333 = vadd.f32 %v3243, %v3303
    %v3334 = vadd.f32 %v3256, %v3316
    %v3335 = vadd.f32 %v3269, %v3329
    %v3336 = vadd.f32 %v3332, %v2554
    %v3337 = vadd.f32 %v3333, %v2555
    %v3338 = vadd.f32 %v3334, %v2556
    %v3339 = vadd.f32 %v3335, %v2557
    %v3340 = vmul.f32 %v3336, 0.5
    %v3341 = vtanh.pop %v3340
    %v3342 = vmul.f32 %v3341, 0.5
    %v3343 = vadd.f32 %v3342, 0.5
    %v3344 = vmul.f32 %v3337, 0.5
    %v3345 = vtanh.pop %v3344
    %v3346 = vmul.f32 %v3345, 0.5
    %v3347 = vadd.f32 %v3346, 0.5
    %v3348 = vtanh.pop %v3338
    %v3349 = vmul.f32 %v3339, 0.5
    %v3350 = vtanh.pop %v3349
    %v3351 = vmul.f32 %v3350, 0.5
    %v3352 = vadd.f32 %v3351, 0.5
    %v3353 = vmul.f32 %v3347, %v3200
    %v3354 = vmul.f32 %v3343, %v3348
    %v3355 = vadd.f32 %v3353, %v3354
    %v3356 = vtanh.pop %v3355
    %v3357 = vmul.f32 %v3352, %v3356
    %v3358 = vpack.c.bf16 %v3357, %v3357
    %s3359 = scalar_lea.vmem [#allocation11], 20
    %3360 = vst [vmem:[%s3359] sm:$0xf] %v3358
    %v3361 = vld [vmem:[%s1755] sm:$0xff]
    %3362 = vmatpush.bf16.msra.mxu0 %v2219
    %3363 = vmatpush.bf16.msra.mxu0 %v2214
    %3364 = vmatpush.bf16.msra.mxu0 %v2209
    %3365 = vmatpush.bf16.msra.mxu0 %v2204
    %3366 = vmatpush.bf16.msra.mxu0 %v2199
    %3367 = vmatpush.bf16.msra.mxu0 %v2194
    %3368 = vmatpush.bf16.msra.mxu0 %v2189
    %3369 = vmatpush.bf16.msra.mxu0 %v2184
    %3370 = vmatmul.bf16.gmra.mxu0 %v3358
    %v3371 = vpop.f32.mrf.mxu0
    %v3372 = vadd.f32 0.0, %v3371
    %v3373 = vpop.f32.mrf.mxu0
    %3374 = vdwg.mxu0
    %3375 = vmatpush.bf16.msra.mxu0 %v2220
    %3376 = vmatpush.bf16.msra.mxu0 %v2215
    %3377 = vmatpush.bf16.msra.mxu0 %v2210
    %3378 = vmatpush.bf16.msra.mxu0 %v2205
    %3379 = vmatpush.bf16.msra.mxu0 %v2200
    %3380 = vmatpush.bf16.msra.mxu0 %v2195
    %3381 = vmatpush.bf16.msra.mxu0 %v2190
    %3382 = vmatpush.bf16.msra.mxu0 %v2185
    %3383 = vmatmul.bf16.gmra.mxu0 %v3358
    %v3384 = vpop.f32.mrf.mxu0
    %v3385 = vadd.f32 0.0, %v3384
    %v3386 = vpop.f32.mrf.mxu0
    %3387 = vdwg.mxu0
    %3388 = vmatpush.bf16.msra.mxu0 %v2221
    %3389 = vmatpush.bf16.msra.mxu0 %v2216
    %3390 = vmatpush.bf16.msra.mxu0 %v2211
    %3391 = vmatpush.bf16.msra.mxu0 %v2206
    %3392 = vmatpush.bf16.msra.mxu0 %v2201
    %3393 = vmatpush.bf16.msra.mxu0 %v2196
    %3394 = vmatpush.bf16.msra.mxu0 %v2191
    %3395 = vmatpush.bf16.msra.mxu0 %v2186
    %3396 = vmatmul.bf16.gmra.mxu0 %v3358
    %v3397 = vpop.f32.mrf.mxu0
    %v3398 = vadd.f32 0.0, %v3397
    %v3399 = vpop.f32.mrf.mxu0
    %3400 = vdwg.mxu0
    %3401 = vmatpush.bf16.msra.mxu0 %v2222
    %3402 = vmatpush.bf16.msra.mxu0 %v2217
    %3403 = vmatpush.bf16.msra.mxu0 %v2212
    %3404 = vmatpush.bf16.msra.mxu0 %v2207
    %3405 = vmatpush.bf16.msra.mxu0 %v2202
    %3406 = vmatpush.bf16.msra.mxu0 %v2197
    %3407 = vmatpush.bf16.msra.mxu0 %v2192
    %3408 = vmatpush.bf16.msra.mxu0 %v2187
    %3409 = vmatmul.bf16.gmra.mxu0 %v3358
    %v3410 = vpop.f32.mrf.mxu0
    %v3411 = vadd.f32 0.0, %v3410
    %v3412 = vpop.f32.mrf.mxu0
    %3413 = vdwg.mxu0
    %3414 = vmatpush.bf16.msra.mxu0 %v2223
    %3415 = vmatpush.bf16.msra.mxu0 %v2218
    %3416 = vmatpush.bf16.msra.mxu0 %v2213
    %3417 = vmatpush.bf16.msra.mxu0 %v2208
    %3418 = vmatpush.bf16.msra.mxu0 %v2203
    %3419 = vmatpush.bf16.msra.mxu0 %v2198
    %3420 = vmatpush.bf16.msra.mxu0 %v2193
    %3421 = vmatpush.bf16.msra.mxu0 %v2188
    %3422 = vmatmul.bf16.gmra.mxu0 %v3358
    %v3423 = vpop.f32.mrf.mxu0
    %v3424 = vadd.f32 0.0, %v3423
    %v3425 = vpop.f32.mrf.mxu0
    %3426 = vdwg.mxu0
    %v3427 = vld [vmem:[%s1668] sm:$0xff]
    %v3428 = vadd.f32 %v3372, %v3427
    %v3429 = vmul.f32 %v3428, 0.5
    %v3430 = vtanh.pop %v3429
    %v3431 = vmul.f32 %v3430, 0.5
    %v3432 = vadd.f32 %v3431, 0.5
    %v3433 = vmul.f32 %v3432, %v3361
    %v3434 = vpack.c.bf16 %v3433, %v3433
    %3435 = vmatpush.bf16.msra.mxu0 %v2461
    %3436 = vmatpush.bf16.msra.mxu0 %v2457
    %3437 = vmatpush.bf16.msra.mxu0 %v2453
    %3438 = vmatpush.bf16.msra.mxu0 %v2449
    %3439 = vmatpush.bf16.msra.mxu0 %v2445
    %3440 = vmatpush.bf16.msra.mxu0 %v2441
    %3441 = vmatpush.bf16.msra.mxu0 %v2437
    %3442 = vmatpush.bf16.msra.mxu0 %v2433
    %3443 = vmatmul.bf16.gmra.mxu0 %v3434
    %v3444 = vpop.f32.mrf.mxu0
    %v3445 = vadd.f32 0.0, %v3444
    %v3446 = vpop.f32.mrf.mxu0
    %3447 = vdwg.mxu0
    %3448 = vmatpush.bf16.msra.mxu0 %v2462
    %3449 = vmatpush.bf16.msra.mxu0 %v2458
    %3450 = vmatpush.bf16.msra.mxu0 %v2454
    %3451 = vmatpush.bf16.msra.mxu0 %v2450
    %3452 = vmatpush.bf16.msra.mxu0 %v2446
    %3453 = vmatpush.bf16.msra.mxu0 %v2442
    %3454 = vmatpush.bf16.msra.mxu0 %v2438
    %3455 = vmatpush.bf16.msra.mxu0 %v2434
    %3456 = vmatmul.bf16.gmra.mxu0 %v3434
    %v3457 = vpop.f32.mrf.mxu0
    %v3458 = vadd.f32 0.0, %v3457
    %v3459 = vpop.f32.mrf.mxu0
    %3460 = vdwg.mxu0
    %3461 = vmatpush.bf16.msra.mxu0 %v2463
    %3462 = vmatpush.bf16.msra.mxu0 %v2459
    %3463 = vmatpush.bf16.msra.mxu0 %v2455
    %3464 = vmatpush.bf16.msra.mxu0 %v2451
    %3465 = vmatpush.bf16.msra.mxu0 %v2447
    %3466 = vmatpush.bf16.msra.mxu0 %v2443
    %3467 = vmatpush.bf16.msra.mxu0 %v2439
    %3468 = vmatpush.bf16.msra.mxu0 %v2435
    %3469 = vmatmul.bf16.gmra.mxu0 %v3434
    %v3470 = vpop.f32.mrf.mxu0
    %v3471 = vadd.f32 0.0, %v3470
    %v3472 = vpop.f32.mrf.mxu0
    %3473 = vdwg.mxu0
    %3474 = vmatpush.bf16.msra.mxu0 %v2464
    %3475 = vmatpush.bf16.msra.mxu0 %v2460
    %3476 = vmatpush.bf16.msra.mxu0 %v2456
    %3477 = vmatpush.bf16.msra.mxu0 %v2452
    %3478 = vmatpush.bf16.msra.mxu0 %v2448
    %3479 = vmatpush.bf16.msra.mxu0 %v2444
    %3480 = vmatpush.bf16.msra.mxu0 %v2440
    %3481 = vmatpush.bf16.msra.mxu0 %v2436
    %3482 = vmatmul.bf16.gmra.mxu0 %v3434
    %v3483 = vpop.f32.mrf.mxu0
    %v3484 = vadd.f32 0.0, %v3483
    %v3485 = vpop.f32.mrf.mxu0
    %3486 = vdwg.mxu0
    %v3487 = vadd.f32 %v3385, %v3445
    %v3488 = vadd.f32 %v3398, %v3458
    %v3489 = vadd.f32 %v3411, %v3471
    %v3490 = vadd.f32 %v3424, %v3484
    %v3491 = vadd.f32 %v3487, %v2554
    %v3492 = vadd.f32 %v3488, %v2555
    %v3493 = vadd.f32 %v3489, %v2556
    %v3494 = vadd.f32 %v3490, %v2557
    %v3495 = vmul.f32 %v3491, 0.5
    %v3496 = vtanh.pop %v3495
    %v3497 = vmul.f32 %v3496, 0.5
    %v3498 = vadd.f32 %v3497, 0.5
    %v3499 = vmul.f32 %v3492, 0.5
    %v3500 = vtanh.pop %v3499
    %v3501 = vmul.f32 %v3500, 0.5
    %v3502 = vadd.f32 %v3501, 0.5
    %v3503 = vtanh.pop %v3493
    %v3504 = vmul.f32 %v3494, 0.5
    %v3505 = vtanh.pop %v3504
    %v3506 = vmul.f32 %v3505, 0.5
    %v3507 = vadd.f32 %v3506, 0.5
    %v3508 = vmul.f32 %v3502, %v3355
    %v3509 = vmul.f32 %v3498, %v3503
    %v3510 = vadd.f32 %v3508, %v3509
    %v3511 = vtanh.pop %v3510
    %v3512 = vmul.f32 %v3507, %v3511
    %v3513 = vpack.c.bf16 %v3512, %v3512
    %s3514 = scalar_lea.vmem [#allocation11], 24
    %3515 = vst [vmem:[%s3514] sm:$0xf] %v3513
    %v3516 = vld [vmem:[%s1913] sm:$0xff]
    %3517 = vmatpush.bf16.msra.mxu0 %v2219
    %3518 = vmatpush.bf16.msra.mxu0 %v2214
    %3519 = vmatpush.bf16.msra.mxu0 %v2209
    %3520 = vmatpush.bf16.msra.mxu0 %v2204
    %3521 = vmatpush.bf16.msra.mxu0 %v2199
    %3522 = vmatpush.bf16.msra.mxu0 %v2194
    %3523 = vmatpush.bf16.msra.mxu0 %v2189
    %3524 = vmatpush.bf16.msra.mxu0 %v2184
    %3525 = vmatmul.bf16.gmra.mxu0 %v3513
    %v3526 = vpop.f32.mrf.mxu0
    %v3527 = vadd.f32 0.0, %v3526
    %v3528 = vpop.f32.mrf.mxu0
    %3529 = vdwg.mxu0
    %3530 = vmatpush.bf16.msra.mxu0 %v2220
    %3531 = vmatpush.bf16.msra.mxu0 %v2215
    %3532 = vmatpush.bf16.msra.mxu0 %v2210
    %3533 = vmatpush.bf16.msra.mxu0 %v2205
    %3534 = vmatpush.bf16.msra.mxu0 %v2200
    %3535 = vmatpush.bf16.msra.mxu0 %v2195
    %3536 = vmatpush.bf16.msra.mxu0 %v2190
    %3537 = vmatpush.bf16.msra.mxu0 %v2185
    %3538 = vmatmul.bf16.gmra.mxu0 %v3513
    %v3539 = vpop.f32.mrf.mxu0
    %v3540 = vadd.f32 0.0, %v3539
    %v3541 = vpop.f32.mrf.mxu0
    %3542 = vdwg.mxu0
    %3543 = vmatpush.bf16.msra.mxu0 %v2221
    %3544 = vmatpush.bf16.msra.mxu0 %v2216
    %3545 = vmatpush.bf16.msra.mxu0 %v2211
    %3546 = vmatpush.bf16.msra.mxu0 %v2206
    %3547 = vmatpush.bf16.msra.mxu0 %v2201
    %3548 = vmatpush.bf16.msra.mxu0 %v2196
    %3549 = vmatpush.bf16.msra.mxu0 %v2191
    %3550 = vmatpush.bf16.msra.mxu0 %v2186
    %3551 = vmatmul.bf16.gmra.mxu0 %v3513
    %v3552 = vpop.f32.mrf.mxu0
    %v3553 = vadd.f32 0.0, %v3552
    %v3554 = vpop.f32.mrf.mxu0
    %3555 = vdwg.mxu0
    %3556 = vmatpush.bf16.msra.mxu0 %v2222
    %3557 = vmatpush.bf16.msra.mxu0 %v2217
    %3558 = vmatpush.bf16.msra.mxu0 %v2212
    %3559 = vmatpush.bf16.msra.mxu0 %v2207
    %3560 = vmatpush.bf16.msra.mxu0 %v2202
    %3561 = vmatpush.bf16.msra.mxu0 %v2197
    %3562 = vmatpush.bf16.msra.mxu0 %v2192
    %3563 = vmatpush.bf16.msra.mxu0 %v2187
    %3564 = vmatmul.bf16.gmra.mxu0 %v3513
    %v3565 = vpop.f32.mrf.mxu0
    %v3566 = vadd.f32 0.0, %v3565
    %v3567 = vpop.f32.mrf.mxu0
    %3568 = vdwg.mxu0
    %3569 = vmatpush.bf16.msra.mxu0 %v2223
    %3570 = vmatpush.bf16.msra.mxu0 %v2218
    %3571 = vmatpush.bf16.msra.mxu0 %v2213
    %3572 = vmatpush.bf16.msra.mxu0 %v2208
    %3573 = vmatpush.bf16.msra.mxu0 %v2203
    %3574 = vmatpush.bf16.msra.mxu0 %v2198
    %3575 = vmatpush.bf16.msra.mxu0 %v2193
    %3576 = vmatpush.bf16.msra.mxu0 %v2188
    %3577 = vmatmul.bf16.gmra.mxu0 %v3513
    %v3578 = vpop.f32.mrf.mxu0
    %v3579 = vadd.f32 0.0, %v3578
    %v3580 = vpop.f32.mrf.mxu0
    %3581 = vdwg.mxu0
    %v3582 = vld [vmem:[%s1826] sm:$0xff]
    %v3583 = vadd.f32 %v3527, %v3582
    %v3584 = vmul.f32 %v3583, 0.5
    %v3585 = vtanh.pop %v3584
    %v3586 = vmul.f32 %v3585, 0.5
    %v3587 = vadd.f32 %v3586, 0.5
    %v3588 = vmul.f32 %v3587, %v3516
    %v3589 = vpack.c.bf16 %v3588, %v3588
    %3590 = vmatpush.bf16.msra.mxu0 %v2461
    %3591 = vmatpush.bf16.msra.mxu0 %v2457
    %3592 = vmatpush.bf16.msra.mxu0 %v2453
    %3593 = vmatpush.bf16.msra.mxu0 %v2449
    %3594 = vmatpush.bf16.msra.mxu0 %v2445
    %3595 = vmatpush.bf16.msra.mxu0 %v2441
    %3596 = vmatpush.bf16.msra.mxu0 %v2437
    %3597 = vmatpush.bf16.msra.mxu0 %v2433
    %3598 = vmatmul.bf16.gmra.mxu0 %v3589
    %v3599 = vpop.f32.mrf.mxu0
    %v3600 = vadd.f32 0.0, %v3599
    %v3601 = vpop.f32.mrf.mxu0
    %3602 = vdwg.mxu0
    %3603 = vmatpush.bf16.msra.mxu0 %v2462
    %3604 = vmatpush.bf16.msra.mxu0 %v2458
    %3605 = vmatpush.bf16.msra.mxu0 %v2454
    %3606 = vmatpush.bf16.msra.mxu0 %v2450
    %3607 = vmatpush.bf16.msra.mxu0 %v2446
    %3608 = vmatpush.bf16.msra.mxu0 %v2442
    %3609 = vmatpush.bf16.msra.mxu0 %v2438
    %3610 = vmatpush.bf16.msra.mxu0 %v2434
    %3611 = vmatmul.bf16.gmra.mxu0 %v3589
    %v3612 = vpop.f32.mrf.mxu0
    %v3613 = vadd.f32 0.0, %v3612
    %v3614 = vpop.f32.mrf.mxu0
    %3615 = vdwg.mxu0
    %3616 = vmatpush.bf16.msra.mxu0 %v2463
    %3617 = vmatpush.bf16.msra.mxu0 %v2459
    %3618 = vmatpush.bf16.msra.mxu0 %v2455
    %3619 = vmatpush.bf16.msra.mxu0 %v2451
    %3620 = vmatpush.bf16.msra.mxu0 %v2447
    %3621 = vmatpush.bf16.msra.mxu0 %v2443
    %3622 = vmatpush.bf16.msra.mxu0 %v2439
    %3623 = vmatpush.bf16.msra.mxu0 %v2435
    %3624 = vmatmul.bf16.gmra.mxu0 %v3589
    %v3625 = vpop.f32.mrf.mxu0
    %v3626 = vadd.f32 0.0, %v3625
    %v3627 = vpop.f32.mrf.mxu0
    %3628 = vdwg.mxu0
    %3629 = vmatpush.bf16.msra.mxu0 %v2464
    %3630 = vmatpush.bf16.msra.mxu0 %v2460
    %3631 = vmatpush.bf16.msra.mxu0 %v2456
    %3632 = vmatpush.bf16.msra.mxu0 %v2452
    %3633 = vmatpush.bf16.msra.mxu0 %v2448
    %3634 = vmatpush.bf16.msra.mxu0 %v2444
    %3635 = vmatpush.bf16.msra.mxu0 %v2440
    %3636 = vmatpush.bf16.msra.mxu0 %v2436
    %3637 = vmatmul.bf16.gmra.mxu0 %v3589
    %v3638 = vpop.f32.mrf.mxu0
    %v3639 = vadd.f32 0.0, %v3638
    %v3640 = vpop.f32.mrf.mxu0
    %3641 = vdwg.mxu0
    %v3642 = vadd.f32 %v3540, %v3600
    %v3643 = vadd.f32 %v3553, %v3613
    %v3644 = vadd.f32 %v3566, %v3626
    %v3645 = vadd.f32 %v3579, %v3639
    %v3646 = vadd.f32 %v3642, %v2554
    %v3647 = vadd.f32 %v3643, %v2555
    %v3648 = vadd.f32 %v3644, %v2556
    %v3649 = vadd.f32 %v3645, %v2557
    %v3650 = vmul.f32 %v3646, 0.5
    %v3651 = vtanh.pop %v3650
    %v3652 = vmul.f32 %v3651, 0.5
    %v3653 = vadd.f32 %v3652, 0.5
    %v3654 = vmul.f32 %v3647, 0.5
    %v3655 = vtanh.pop %v3654
    %v3656 = vmul.f32 %v3655, 0.5
    %v3657 = vadd.f32 %v3656, 0.5
    %v3658 = vtanh.pop %v3648
    %v3659 = vmul.f32 %v3649, 0.5
    %v3660 = vtanh.pop %v3659
    %v3661 = vmul.f32 %v3660, 0.5
    %v3662 = vadd.f32 %v3661, 0.5
    %v3663 = vmul.f32 %v3657, %v3510
    %v3664 = vmul.f32 %v3653, %v3658
    %v3665 = vadd.f32 %v3663, %v3664
    %v3666 = vtanh.pop %v3665
    %v3667 = vmul.f32 %v3662, %v3666
    %v3668 = vpack.c.bf16 %v3667, %v3667
    %s3669 = scalar_lea.vmem [#allocation11], 28
    %3670 = vst [vmem:[%s3669] sm:$0xf] %v3668
    %3671 = vst [vmem:[%s2050] sm:$0xff] %v3667
    %3672 = vst [vmem:[%s2052] sm:$0xff] %v3665
    // Predicated region
    $region42: #{tpu_custom_call.1} parent=1 // pred_check
      _
    $region43: #{tpu_custom_call.1} parent=1 // pred_check_branch
      %3674 = sbr.rel (0) target = $region45
    $region44: #{tpu_custom_call.1} parent=1 // pred_region
      %3676 = vsyncadd [#allocation8], 0
      %s3677 = sshll.u32 [#allocation11], 4
      %s3678 = int_to_ptr.vmem [resolvable:$true] %s3677
      %s3679 = sshll.u32 %s7, 4
      %s3680 = int_to_ptr.hbm [resolvable:$true] %s3679
      %3685 = dma.vmem_to_hbm [thread:$0]  %s3678, 512, %s3680, [#allocation8], 64, 64, 4
    $region45: #{tpu_custom_call.1} parent=1 // pred_fallthru
      _
    // Predicated region
    $region46: #{tpu_custom_call.1} parent=1 // pred_check
      _
    $region47: #{tpu_custom_call.1} parent=1 // pred_check_branch
      %3687 = sbr.rel (0) target = $region49
    $region48: #{tpu_custom_call.1} parent=1 // pred_region
      %3689 = dma.done [#allocation8], 512
    $region49: #{tpu_custom_call.1} parent=1 // pred_fallthru
      _
    %3690 = vsyncpa [#allocation7], 1
    %3691 = vsyncpa [#allocation10], 1
    %3692 = vsyncpa [#allocation8], 1

</llo_original>
